<compile_context>
chip_gen: v6e
topology: v6e:2x2x1
jax: 0.10.0
libtpu: 0.0.40
codegen_flags: <defaults>
</compile_context>

<pallas_src>
import functools

import jax
import jax.numpy as jnp
from jax.experimental import pallas as pl
from jax.experimental.pallas import tpu as pltpu

CIN = 4      # refinement input channels: left RGB (3) + disparity (1)
CHID = 32    # hidden channels of the refinement head


def _fused_refinement_kernel(x_ref, w1_ref, w2_ref, w3_ref,
                             b1_ref, b2_ref, b3_ref,
                             o_ref, h1_ref, h2_ref, *, TH, W, H):
    """One (batch, row-tile) grid step of the fused Refinement head.

    x_ref : ((Hp+6)*CIN, W+2) f32  zero-padded input, sublane = padded_row*CIN + ch
                                   (resident in VMEM across the row-tile axis)
    wX_ref: (3, Cout', 3*Cin) bf16 packed weights, wX[kx, co, ky*Cin + ci]
    bX_ref: (Cout, 1) f32          biases
    o_ref : (TH, W) f32            pred_height rows of this tile (lane dense)
    h1_ref: ((TH+4)*CHID, W+2) bf16 scratch -- conv1 rows (2-row halo each side)
    h2_ref: ((TH+2)*CHID, W+2) bf16 scratch -- conv2 rows (1-row halo each side)
    """
    t = pl.program_id(1)
    row0 = t * TH                       # first output image row of this tile

    # Zero scratch once per tile: the two width-padding columns (0 and W+1)
    # must be zero; every other element is overwritten below.
    h1_ref[...] = jnp.zeros_like(h1_ref)
    h2_ref[...] = jnp.zeros_like(h2_ref)

    def tap_dots(w_ref, slab):
        # 3x3 conv of one output row: sum over the 3 kx taps of a
        # (Cout, 3*Cin) x (3*Cin, W) MXU matmul (ky, ci folded into K).
        acc = jnp.dot(w_ref[0], slab[:, 0:W], preferred_element_type=jnp.float32)
        acc = acc + jnp.dot(w_ref[1], slab[:, 1:W + 1],
                            preferred_element_type=jnp.float32)
        acc = acc + jnp.dot(w_ref[2], slab[:, 2:W + 2],
                            preferred_element_type=jnp.float32)
        return acc

    # ---- conv1: CIN -> CHID (+ReLU), TH+4 rows ------------------------------
    base = pl.multiple_of(t * (TH * CIN), 8)
    for r in range(TH + 4):
        img_row = row0 - 2 + r
        slab = x_ref[pl.ds(base + r * CIN, 3 * CIN), :].astype(jnp.bfloat16)
        acc = tap_dots(w1_ref, slab) + b1_ref[...]
        # rows outside the image must be ZERO inputs to conv2 (padding=1).
        val = jnp.where(jnp.logical_and(img_row >= 0, img_row < H),
                        jnp.maximum(acc, 0.0), 0.0)
        h1_ref[r * CHID:(r + 1) * CHID, 1:W + 1] = val.astype(h1_ref.dtype)

    # ---- conv2: CHID -> CHID (+ReLU), TH+2 rows -----------------------------
    for r in range(TH + 2):
        img_row = row0 - 1 + r
        slab = h1_ref[r * CHID:(r + 3) * CHID, :]
        acc = tap_dots(w2_ref, slab) + b2_ref[...]
        val = jnp.where(jnp.logical_and(img_row >= 0, img_row < H),
                        jnp.maximum(acc, 0.0), 0.0)
        h2_ref[r * CHID:(r + 1) * CHID, 1:W + 1] = val.astype(h2_ref.dtype)

    # ---- conv3: CHID -> 1, fused sigmoid()*10, lane-dense row stores --------
    for r in range(TH):
        slab = h2_ref[r * CHID:(r + 3) * CHID, :]
        acc = tap_dots(w3_ref, slab)[0:1, :] + b3_ref[...]       # (1, W)
        o_ref[r:r + 1, :] = (jax.nn.sigmoid(acc) * 10.0).astype(o_ref.dtype)


def _pack_conv(w, b, pad_cout_to=None):
    """Torch-layout (Cout, Cin, 3, 3) conv weights -> packed (3, Cout', 3*Cin)
    bf16 with w[kx, co, ky*Cin + ci] (Cout optionally zero-padded for sublane
    alignment), plus the bias as (Cout, 1) f32."""
    cout, cin = w.shape[0], w.shape[1]
    wp = jnp.transpose(w, (3, 0, 2, 1)).reshape(3, cout, 3 * cin)
    if pad_cout_to is not None and pad_cout_to > cout:
        wp = jnp.pad(wp, ((0, 0), (0, pad_cout_to - cout), (0, 0)))
    return wp.astype(jnp.bfloat16), b.reshape(cout, 1).astype(jnp.float32)


@functools.partial(jax.jit, static_argnames=("tile_h",))
def coex_height_forward(params, left, disp_est, tile_h=8):
    """Inference branch of CoExHeight.forward.

    left     : (N, 3, H, W) f32  left RGB image (NCHW, as in the PyTorch ref)
    disp_est : (N, H, W)    f32  disparity estimate (stands in for
                                 DispProcessor's inference_disp['disp_est'])
    tile_h   : output rows per grid step (multiple of 8).  Re-derive per
               generation / resolution: v7x has 64 MiB VMEM vs 128 on v5e/v6e.
    """
    # TODO(synk): CoExBackbone / CoExCostProcessor / CoExDispProcessor are not
    # defined in the reference snippet -- disp_est is taken as an input instead
    # of being produced by the (undefined) CoEx stereo stack.
    N, _, H, W = left.shape
    TH = tile_h
    assert TH % 8 == 0, "tile_h must be a multiple of 8 (sublane tiling)"
    T = pl.cdiv(H, TH)
    Hp = T * TH
    Wp = W + 2

    # torch.cat([left, disp.unsqueeze(1)], dim=1) plus the 3-row / 1-col halo
    # needed by the three stacked 3x3 convs, channels interleaved into the
    # sublane dim (sublane = padded_row*4 + channel, lanes = width).  This is a
    # single cheap pass over the 4-channel input; the 32-channel intermediates
    # never reach HBM.
    x = jnp.concatenate([left, disp_est[:, None]], axis=1)            # (N,4,H,W)
    x = jnp.pad(x, ((0, 0), (0, 0), (3, 3 + Hp - H), (1, 1)))          # (N,4,Hp+6,Wp)
    x = jnp.transpose(x, (0, 2, 1, 3)).reshape(N, (Hp + 6) * CIN, Wp)

    w1, b1 = _pack_conv(*params["conv1"])
    w2, b2 = _pack_conv(*params["conv2"])
    w3, b3 = _pack_conv(*params["conv3"], pad_cout_to=8)

    kern = functools.partial(_fused_refinement_kernel, TH=TH, W=W, H=H)
    fixed3 = lambda n, t: (0, 0, 0)
    fixed2 = lambda n, t: (0, 0)

    pred = pl.pallas_call(
        kern,
        out_shape=jax.ShapeDtypeStruct((N, Hp, W), jnp.float32),
        grid_spec=pltpu.PrefetchScalarGridSpec(
            num_scalar_prefetch=0,
            grid=(N, T),
            in_specs=[
                # padded 4-channel input: VMEM-resident across row tiles
                # (index map ignores t -> fetched once per batch element).
                pl.BlockSpec((None, (Hp + 6) * CIN, Wp), lambda n, t: (n, 0, 0)),
                pl.BlockSpec((3, CHID, 3 * CIN), fixed3),
                pl.BlockSpec((3, CHID, 3 * CHID), fixed3),
                pl.BlockSpec((3, 8, 3 * CHID), fixed3),
                pl.BlockSpec((CHID, 1), fixed2),
                pl.BlockSpec((CHID, 1), fixed2),
                pl.BlockSpec((1, 1), fixed2),
            ],
            out_specs=pl.BlockSpec((None, TH, W), lambda n, t: (n, t, 0)),
            scratch_shapes=[
                pltpu.VMEM(((TH + 4) * CHID, Wp), jnp.bfloat16),
                pltpu.VMEM(((TH + 2) * CHID, Wp), jnp.bfloat16),
            ],
        ),
        compiler_params=pltpu.CompilerParams(
            # batch and row-tile axes are independent -> megacore-shardable.
            dimension_semantics=("parallel", "parallel"),
            vmem_limit_bytes=64 * 1024 * 1024,
        ),
    )(x, w1, w2, w3, b1, b2, b3)

    # .squeeze(1) in the PyTorch ref == the lane-dense (N, H, W) map here.
    return {"disp_pred": disp_est, "pred_height": pred[:, :H, :]}


def init_refinement_params(key):
    # TODO(synk): the exact Refinement(in_channels=4) head is not defined in the
    # reference snippet (it is loaded from an rbhm checkpoint); a representative
    # 3-layer 3x3 conv head (4 -> 32 -> 32 -> 1) with Kaiming-uniform-like init
    # is used, kept in the PyTorch (Cout, Cin, kH, kW) layout.
    def conv_init(k, cin, cout):
        kw, kb = jax.random.split(k)
        scale = 1.0 / jnp.sqrt(9.0 * cin)
        w = jax.random.uniform(kw, (cout, cin, 3, 3), jnp.float32, -scale, scale)
        b = jax.random.uniform(kb, (cout,), jnp.float32, -scale, scale)
        return w, b
    k1, k2, k3 = jax.random.split(key, 3)
    return {"conv1": conv_init(k1, CIN, CHID),
            "conv2": conv_init(k2, CHID, CHID),
            "conv3": conv_init(k3, CHID, 1)}


def _reference_forward(params, left, disp_est):
    """Pure-JAX reference (mimics the kernel's bf16 storage / f32 accumulation)."""
    def conv(x, w, b):
        y = jax.lax.conv_general_dilated(
            x.astype(jnp.bfloat16), w.astype(jnp.bfloat16),
            window_strides=(1, 1), padding=((1, 1), (1, 1)),
            dimension_numbers=("NCHW", "OIHW", "NCHW"),
            preferred_element_type=jnp.float32)
        return y + b[None, :, None, None]

    x = jnp.concatenate([left, disp_est[:, None]], axis=1)
    h = jnp.maximum(conv(x, *params["conv1"]), 0.0).astype(jnp.bfloat16)
    h = jnp.maximum(conv(h, *params["conv2"]), 0.0).astype(jnp.bfloat16)
    y = conv(h, *params["conv3"])
    return jax.nn.sigmoid(y[:, 0]) * 10.0


if __name__ == "__main__":
    key = jax.random.PRNGKey(0)
    k_params, k_left, k_disp = jax.random.split(key, 3)

    N, H, W = 2, 16, 16
    params = init_refinement_params(k_params)
    left = jax.random.normal(k_left, (N, 3, H, W), jnp.float32)
    disp_est = jax.random.uniform(k_disp, (N, H, W), jnp.float32,
                                  minval=0.0, maxval=192.0)

    out = coex_height_forward(params, left, disp_est)   # tile_h=8 -> 2 row tiles
    jax.block_until_ready(out)

    pred = out["pred_height"]
    assert pred.shape == (N, H, W)
    assert out["disp_pred"].shape == (N, H, W)
    assert bool(jnp.all(jnp.isfinite(pred)))
    assert bool(jnp.all(pred >= 0.0)) and bool(jnp.all(pred <= 10.0))

    ref = _reference_forward(params, left, disp_est)
    max_err = float(jnp.max(jnp.abs(pred - ref)))
    assert max_err < 5e-2, f"kernel/reference mismatch: max|err|={max_err}"
    print("KERNEL_OK")
</pallas_src>

<mosaic_0001>
module attributes {stable_mosaic.version = 11 : i64} {
  func.func @_fused_refinement_kernel(%arg0: i32, %arg1: i32, %arg2: memref<1x88x18xf32, #tpu.memory_space<vmem>>, %arg3: memref<3x32x12xbf16, #tpu.memory_space<vmem>>, %arg4: memref<3x32x96xbf16, #tpu.memory_space<vmem>>, %arg5: memref<3x8x96xbf16, #tpu.memory_space<vmem>>, %arg6: memref<32x1xf32, #tpu.memory_space<vmem>>, %arg7: memref<32x1xf32, #tpu.memory_space<vmem>>, %arg8: memref<1x1xf32, #tpu.memory_space<vmem>>, %arg9: memref<1x8x16xf32, #tpu.memory_space<vmem>>, %arg10: memref<384x18xbf16, #tpu.memory_space<vmem>>, %arg11: memref<320x18xbf16, #tpu.memory_space<vmem>>) attributes {dimension_semantics = [#tpu.dimension_semantics<parallel>, #tpu.dimension_semantics<parallel>], iteration_bounds = array<i64: 2, 2>, scalar_prefetch = 0 : i64, scratch_operands = 2 : i64, tpu.core_type = #tpu.core_type<tc>, window_params = [{transform_indices = @transform_0, window_bounds = array<i64: 1, 88, 18>}, {pipeline_mode = #tpu.pipeline_mode<synchronous>, transform_indices = @transform_1, window_bounds = array<i64: 3, 32, 12>}, {pipeline_mode = #tpu.pipeline_mode<synchronous>, transform_indices = @transform_2, window_bounds = array<i64: 3, 32, 96>}, {pipeline_mode = #tpu.pipeline_mode<synchronous>, transform_indices = @transform_3, window_bounds = array<i64: 3, 8, 96>}, {pipeline_mode = #tpu.pipeline_mode<synchronous>, transform_indices = @transform_4, window_bounds = array<i64: 32, 1>}, {pipeline_mode = #tpu.pipeline_mode<synchronous>, transform_indices = @transform_5, window_bounds = array<i64: 32, 1>}, {pipeline_mode = #tpu.pipeline_mode<synchronous>, transform_indices = @transform_6, window_bounds = array<i64: 1, 1>}, {transform_indices = @transform_7, window_bounds = array<i64: 1, 8, 16>}]} {
    %c8_i32 = arith.constant 8 : i32
    %0 = arith.muli %arg1, %c8_i32 : i32
    %cst = arith.constant 0.000000e+00 : bf16
    %1 = vector.broadcast %cst : bf16 to vector<384x18xbf16>
    %c0 = arith.constant 0 : index
    %c0_0 = arith.constant 0 : index
    %2 = vector.load %arg10[%c0, %c0_0] : memref<384x18xbf16, #tpu.memory_space<vmem>>, vector<384x18xbf16>
    tpu.vector_store %arg10[%c0, %c0_0], %1 {strides = array<i32>} : memref<384x18xbf16, #tpu.memory_space<vmem>>, vector<384x18xbf16>,
    %cst_1 = arith.constant 0.000000e+00 : bf16
    %3 = vector.broadcast %cst_1 : bf16 to vector<320x18xbf16>
    %c0_2 = arith.constant 0 : index
    %c0_3 = arith.constant 0 : index
    %4 = vector.load %arg11[%c0_2, %c0_3] : memref<320x18xbf16, #tpu.memory_space<vmem>>, vector<320x18xbf16>
    tpu.vector_store %arg11[%c0_2, %c0_3], %3 {strides = array<i32>} : memref<320x18xbf16, #tpu.memory_space<vmem>>, vector<320x18xbf16>,
    %c32_i32 = arith.constant 32 : i32
    %5 = arith.muli %arg1, %c32_i32 : i32
    %6 = tpu.assume_multiple %5, 8 : i32
    %c2_i32 = arith.constant 2 : i32
    %7 = arith.subi %0, %c2_i32 : i32
    %c0_i32 = arith.constant 0 : i32
    %8 = arith.addi %7, %c0_i32 : i32
    %c0_i32_4 = arith.constant 0 : i32
    %9 = arith.addi %6, %c0_i32_4 : i32
    %c0_5 = arith.constant 0 : index
    %10 = arith.index_cast %9 : i32 to index
    %c0_6 = arith.constant 0 : index
    %11 = vector.load %arg2[%c0_5, %10, %c0_6] : memref<1x88x18xf32, #tpu.memory_space<vmem>>, vector<1x12x18xf32>
    %12 = vector.shape_cast %11 : vector<1x12x18xf32> to vector<12x18xf32>
    %13 = arith.truncf %12 : vector<12x18xf32> to vector<12x18xbf16>
    %c0_7 = arith.constant 0 : index
    %c0_8 = arith.constant 0 : index
    %c0_9 = arith.constant 0 : index
    %14 = vector.load %arg3[%c0_7, %c0_8, %c0_9] : memref<3x32x12xbf16, #tpu.memory_space<vmem>>, vector<1x32x12xbf16>
    %15 = vector.shape_cast %14 : vector<1x32x12xbf16> to vector<32x12xbf16>
    %16 = vector.extract_strided_slice %13 {offsets = [0, 0], sizes = [12, 16], strides = [1, 1]} : vector<12x18xbf16> to vector<12x16xbf16>
    %cst_10 = arith.constant dense<0.000000e+00> : vector<32x16xf32>
    %17 = tpu.matmul %15, %16, %cst_10 {dimension_numbers = #tpu.dot_dimension_numbers<[1], [0], [0], [1], [0, 0, 1, 1], [], []>} : vector<32x12xbf16>, vector<12x16xbf16>, vector<32x16xf32> -> vector<32x16xf32>
    %c1 = arith.constant 1 : index
    %c0_11 = arith.constant 0 : index
    %c0_12 = arith.constant 0 : index
    %18 = vector.load %arg3[%c1, %c0_11, %c0_12] : memref<3x32x12xbf16, #tpu.memory_space<vmem>>, vector<1x32x12xbf16>
    %19 = vector.shape_cast %18 : vector<1x32x12xbf16> to vector<32x12xbf16>
    %20 = vector.extract_strided_slice %13 {offsets = [0, 1], sizes = [12, 16], strides = [1, 1]} : vector<12x18xbf16> to vector<12x16xbf16>
    %cst_13 = arith.constant dense<0.000000e+00> : vector<32x16xf32>
    %21 = tpu.matmul %19, %20, %cst_13 {dimension_numbers = #tpu.dot_dimension_numbers<[1], [0], [0], [1], [0, 0, 1, 1], [], []>} : vector<32x12xbf16>, vector<12x16xbf16>, vector<32x16xf32> -> vector<32x16xf32>
    %22 = arith.addf %17, %21 : vector<32x16xf32>
    %c2 = arith.constant 2 : index
    %c0_14 = arith.constant 0 : index
    %c0_15 = arith.constant 0 : index
    %23 = vector.load %arg3[%c2, %c0_14, %c0_15] : memref<3x32x12xbf16, #tpu.memory_space<vmem>>, vector<1x32x12xbf16>
    %24 = vector.shape_cast %23 : vector<1x32x12xbf16> to vector<32x12xbf16>
    %25 = vector.extract_strided_slice %13 {offsets = [0, 2], sizes = [12, 16], strides = [1, 1]} : vector<12x18xbf16> to vector<12x16xbf16>
    %cst_16 = arith.constant dense<0.000000e+00> : vector<32x16xf32>
    %26 = tpu.matmul %24, %25, %cst_16 {dimension_numbers = #tpu.dot_dimension_numbers<[1], [0], [0], [1], [0, 0, 1, 1], [], []>} : vector<32x12xbf16>, vector<12x16xbf16>, vector<32x16xf32> -> vector<32x16xf32>
    %27 = arith.addf %22, %26 : vector<32x16xf32>
    %c0_17 = arith.constant 0 : index
    %c0_18 = arith.constant 0 : index
    %28 = vector.load %arg6[%c0_17, %c0_18] : memref<32x1xf32, #tpu.memory_space<vmem>>, vector<32x1xf32>
    %29 = vector.broadcast %28 : vector<32x1xf32> to vector<32x16xf32>
    %30 = arith.addf %27, %29 : vector<32x16xf32>
    %c0_i32_19 = arith.constant 0 : i32
    %31 = arith.cmpi sge, %8, %c0_i32_19 : i32
    %c16_i32 = arith.constant 16 : i32
    %32 = arith.cmpi slt, %8, %c16_i32 : i32
    %33 = arith.andi %31, %32 : i1
    %cst_20 = arith.constant 0.000000e+00 : f32
    %34 = vector.broadcast %cst_20 : f32 to vector<32x16xf32>
    %35 = arith.maximumf %30, %34 : vector<32x16xf32>
    %cst_21 = arith.constant 0.000000e+00 : f32
    %36 = vector.broadcast %cst_21 : f32 to vector<32x16xf32>
    %37 = arith.select %33, %35, %36 : vector<32x16xf32>
    %38 = arith.truncf %37 : vector<32x16xf32> to vector<32x16xbf16>
    %c0_22 = arith.constant 0 : index
    %c1_23 = arith.constant 1 : index
    %39 = vector.load %arg10[%c0_22, %c1_23] : memref<384x18xbf16, #tpu.memory_space<vmem>>, vector<32x16xbf16>
    tpu.vector_store %arg10[%c0_22, %c1_23], %38 {strides = array<i32>} : memref<384x18xbf16, #tpu.memory_space<vmem>>, vector<32x16xbf16>,
    %c2_i32_24 = arith.constant 2 : i32
    %40 = arith.subi %0, %c2_i32_24 : i32
    %c1_i32 = arith.constant 1 : i32
    %41 = arith.addi %40, %c1_i32 : i32
    %c4_i32 = arith.constant 4 : i32
    %42 = arith.addi %6, %c4_i32 : i32
    %c0_25 = arith.constant 0 : index
    %43 = arith.index_cast %42 : i32 to index
    %c0_26 = arith.constant 0 : index
    %44 = vector.load %arg2[%c0_25, %43, %c0_26] : memref<1x88x18xf32, #tpu.memory_space<vmem>>, vector<1x12x18xf32>
    %45 = vector.shape_cast %44 : vector<1x12x18xf32> to vector<12x18xf32>
    %46 = arith.truncf %45 : vector<12x18xf32> to vector<12x18xbf16>
    %c0_27 = arith.constant 0 : index
    %c0_28 = arith.constant 0 : index
    %c0_29 = arith.constant 0 : index
    %47 = vector.load %arg3[%c0_27, %c0_28, %c0_29] : memref<3x32x12xbf16, #tpu.memory_space<vmem>>, vector<1x32x12xbf16>
    %48 = vector.shape_cast %47 : vector<1x32x12xbf16> to vector<32x12xbf16>
    %49 = vector.extract_strided_slice %46 {offsets = [0, 0], sizes = [12, 16], strides = [1, 1]} : vector<12x18xbf16> to vector<12x16xbf16>
    %cst_30 = arith.constant dense<0.000000e+00> : vector<32x16xf32>
    %50 = tpu.matmul %48, %49, %cst_30 {dimension_numbers = #tpu.dot_dimension_numbers<[1], [0], [0], [1], [0, 0, 1, 1], [], []>} : vector<32x12xbf16>, vector<12x16xbf16>, vector<32x16xf32> -> vector<32x16xf32>
    %c1_31 = arith.constant 1 : index
    %c0_32 = arith.constant 0 : index
    %c0_33 = arith.constant 0 : index
    %51 = vector.load %arg3[%c1_31, %c0_32, %c0_33] : memref<3x32x12xbf16, #tpu.memory_space<vmem>>, vector<1x32x12xbf16>
    %52 = vector.shape_cast %51 : vector<1x32x12xbf16> to vector<32x12xbf16>
    %53 = vector.extract_strided_slice %46 {offsets = [0, 1], sizes = [12, 16], strides = [1, 1]} : vector<12x18xbf16> to vector<12x16xbf16>
    %cst_34 = arith.constant dense<0.000000e+00> : vector<32x16xf32>
    %54 = tpu.matmul %52, %53, %cst_34 {dimension_numbers = #tpu.dot_dimension_numbers<[1], [0], [0], [1], [0, 0, 1, 1], [], []>} : vector<32x12xbf16>, vector<12x16xbf16>, vector<32x16xf32> -> vector<32x16xf32>
    %55 = arith.addf %50, %54 : vector<32x16xf32>
    %c2_35 = arith.constant 2 : index
    %c0_36 = arith.constant 0 : index
    %c0_37 = arith.constant 0 : index
    %56 = vector.load %arg3[%c2_35, %c0_36, %c0_37] : memref<3x32x12xbf16, #tpu.memory_space<vmem>>, vector<1x32x12xbf16>
    %57 = vector.shape_cast %56 : vector<1x32x12xbf16> to vector<32x12xbf16>
    %58 = vector.extract_strided_slice %46 {offsets = [0, 2], sizes = [12, 16], strides = [1, 1]} : vector<12x18xbf16> to vector<12x16xbf16>
    %cst_38 = arith.constant dense<0.000000e+00> : vector<32x16xf32>
    %59 = tpu.matmul %57, %58, %cst_38 {dimension_numbers = #tpu.dot_dimension_numbers<[1], [0], [0], [1], [0, 0, 1, 1], [], []>} : vector<32x12xbf16>, vector<12x16xbf16>, vector<32x16xf32> -> vector<32x16xf32>
    %60 = arith.addf %55, %59 : vector<32x16xf32>
    %c0_39 = arith.constant 0 : index
    %c0_40 = arith.constant 0 : index
    %61 = vector.load %arg6[%c0_39, %c0_40] : memref<32x1xf32, #tpu.memory_space<vmem>>, vector<32x1xf32>
    %62 = vector.broadcast %61 : vector<32x1xf32> to vector<32x16xf32>
    %63 = arith.addf %60, %62 : vector<32x16xf32>
    %c0_i32_41 = arith.constant 0 : i32
    %64 = arith.cmpi sge, %41, %c0_i32_41 : i32
    %c16_i32_42 = arith.constant 16 : i32
    %65 = arith.cmpi slt, %41, %c16_i32_42 : i32
    %66 = arith.andi %64, %65 : i1
    %cst_43 = arith.constant 0.000000e+00 : f32
    %67 = vector.broadcast %cst_43 : f32 to vector<32x16xf32>
    %68 = arith.maximumf %63, %67 : vector<32x16xf32>
    %cst_44 = arith.constant 0.000000e+00 : f32
    %69 = vector.broadcast %cst_44 : f32 to vector<32x16xf32>
    %70 = arith.select %66, %68, %69 : vector<32x16xf32>
    %71 = arith.truncf %70 : vector<32x16xf32> to vector<32x16xbf16>
    %c32 = arith.constant 32 : index
    %c1_45 = arith.constant 1 : index
    %72 = vector.load %arg10[%c32, %c1_45] : memref<384x18xbf16, #tpu.memory_space<vmem>>, vector<32x16xbf16>
    tpu.vector_store %arg10[%c32, %c1_45], %71 {strides = array<i32>} : memref<384x18xbf16, #tpu.memory_space<vmem>>, vector<32x16xbf16>,
    %c2_i32_46 = arith.constant 2 : i32
    %73 = arith.subi %0, %c2_i32_46 : i32
    %c2_i32_47 = arith.constant 2 : i32
    %74 = arith.addi %73, %c2_i32_47 : i32
    %c8_i32_48 = arith.constant 8 : i32
    %75 = arith.addi %6, %c8_i32_48 : i32
    %c0_49 = arith.constant 0 : index
    %76 = arith.index_cast %75 : i32 to index
    %c0_50 = arith.constant 0 : index
    %77 = vector.load %arg2[%c0_49, %76, %c0_50] : memref<1x88x18xf32, #tpu.memory_space<vmem>>, vector<1x12x18xf32>
    %78 = vector.shape_cast %77 : vector<1x12x18xf32> to vector<12x18xf32>
    %79 = arith.truncf %78 : vector<12x18xf32> to vector<12x18xbf16>
    %c0_51 = arith.constant 0 : index
    %c0_52 = arith.constant 0 : index
    %c0_53 = arith.constant 0 : index
    %80 = vector.load %arg3[%c0_51, %c0_52, %c0_53] : memref<3x32x12xbf16, #tpu.memory_space<vmem>>, vector<1x32x12xbf16>
    %81 = vector.shape_cast %80 : vector<1x32x12xbf16> to vector<32x12xbf16>
    %82 = vector.extract_strided_slice %79 {offsets = [0, 0], sizes = [12, 16], strides = [1, 1]} : vector<12x18xbf16> to vector<12x16xbf16>
    %cst_54 = arith.constant dense<0.000000e+00> : vector<32x16xf32>
    %83 = tpu.matmul %81, %82, %cst_54 {dimension_numbers = #tpu.dot_dimension_numbers<[1], [0], [0], [1], [0, 0, 1, 1], [], []>} : vector<32x12xbf16>, vector<12x16xbf16>, vector<32x16xf32> -> vector<32x16xf32>
    %c1_55 = arith.constant 1 : index
    %c0_56 = arith.constant 0 : index
    %c0_57 = arith.constant 0 : index
    %84 = vector.load %arg3[%c1_55, %c0_56, %c0_57] : memref<3x32x12xbf16, #tpu.memory_space<vmem>>, vector<1x32x12xbf16>
    %85 = vector.shape_cast %84 : vector<1x32x12xbf16> to vector<32x12xbf16>
    %86 = vector.extract_strided_slice %79 {offsets = [0, 1], sizes = [12, 16], strides = [1, 1]} : vector<12x18xbf16> to vector<12x16xbf16>
    %cst_58 = arith.constant dense<0.000000e+00> : vector<32x16xf32>
    %87 = tpu.matmul %85, %86, %cst_58 {dimension_numbers = #tpu.dot_dimension_numbers<[1], [0], [0], [1], [0, 0, 1, 1], [], []>} : vector<32x12xbf16>, vector<12x16xbf16>, vector<32x16xf32> -> vector<32x16xf32>
    %88 = arith.addf %83, %87 : vector<32x16xf32>
    %c2_59 = arith.constant 2 : index
    %c0_60 = arith.constant 0 : index
    %c0_61 = arith.constant 0 : index
    %89 = vector.load %arg3[%c2_59, %c0_60, %c0_61] : memref<3x32x12xbf16, #tpu.memory_space<vmem>>, vector<1x32x12xbf16>
    %90 = vector.shape_cast %89 : vector<1x32x12xbf16> to vector<32x12xbf16>
    %91 = vector.extract_strided_slice %79 {offsets = [0, 2], sizes = [12, 16], strides = [1, 1]} : vector<12x18xbf16> to vector<12x16xbf16>
    %cst_62 = arith.constant dense<0.000000e+00> : vector<32x16xf32>
    %92 = tpu.matmul %90, %91, %cst_62 {dimension_numbers = #tpu.dot_dimension_numbers<[1], [0], [0], [1], [0, 0, 1, 1], [], []>} : vector<32x12xbf16>, vector<12x16xbf16>, vector<32x16xf32> -> vector<32x16xf32>
    %93 = arith.addf %88, %92 : vector<32x16xf32>
    %c0_63 = arith.constant 0 : index
    %c0_64 = arith.constant 0 : index
    %94 = vector.load %arg6[%c0_63, %c0_64] : memref<32x1xf32, #tpu.memory_space<vmem>>, vector<32x1xf32>
    %95 = vector.broadcast %94 : vector<32x1xf32> to vector<32x16xf32>
    %96 = arith.addf %93, %95 : vector<32x16xf32>
    %c0_i32_65 = arith.constant 0 : i32
    %97 = arith.cmpi sge, %74, %c0_i32_65 : i32
    %c16_i32_66 = arith.constant 16 : i32
    %98 = arith.cmpi slt, %74, %c16_i32_66 : i32
    %99 = arith.andi %97, %98 : i1
    %cst_67 = arith.constant 0.000000e+00 : f32
    %100 = vector.broadcast %cst_67 : f32 to vector<32x16xf32>
    %101 = arith.maximumf %96, %100 : vector<32x16xf32>
    %cst_68 = arith.constant 0.000000e+00 : f32
    %102 = vector.broadcast %cst_68 : f32 to vector<32x16xf32>
    %103 = arith.select %99, %101, %102 : vector<32x16xf32>
    %104 = arith.truncf %103 : vector<32x16xf32> to vector<32x16xbf16>
    %c64 = arith.constant 64 : index
    %c1_69 = arith.constant 1 : index
    %105 = vector.load %arg10[%c64, %c1_69] : memref<384x18xbf16, #tpu.memory_space<vmem>>, vector<32x16xbf16>
    tpu.vector_store %arg10[%c64, %c1_69], %104 {strides = array<i32>} : memref<384x18xbf16, #tpu.memory_space<vmem>>, vector<32x16xbf16>,
    %c2_i32_70 = arith.constant 2 : i32
    %106 = arith.subi %0, %c2_i32_70 : i32
    %c3_i32 = arith.constant 3 : i32
    %107 = arith.addi %106, %c3_i32 : i32
    %c12_i32 = arith.constant 12 : i32
    %108 = arith.addi %6, %c12_i32 : i32
    %c0_71 = arith.constant 0 : index
    %109 = arith.index_cast %108 : i32 to index
    %c0_72 = arith.constant 0 : index
    %110 = vector.load %arg2[%c0_71, %109, %c0_72] : memref<1x88x18xf32, #tpu.memory_space<vmem>>, vector<1x12x18xf32>
    %111 = vector.shape_cast %110 : vector<1x12x18xf32> to vector<12x18xf32>
    %112 = arith.truncf %111 : vector<12x18xf32> to vector<12x18xbf16>
    %c0_73 = arith.constant 0 : index
    %c0_74 = arith.constant 0 : index
    %c0_75 = arith.constant 0 : index
    %113 = vector.load %arg3[%c0_73, %c0_74, %c0_75] : memref<3x32x12xbf16, #tpu.memory_space<vmem>>, vector<1x32x12xbf16>
    %114 = vector.shape_cast %113 : vector<1x32x12xbf16> to vector<32x12xbf16>
    %115 = vector.extract_strided_slice %112 {offsets = [0, 0], sizes = [12, 16], strides = [1, 1]} : vector<12x18xbf16> to vector<12x16xbf16>
    %cst_76 = arith.constant dense<0.000000e+00> : vector<32x16xf32>
    %116 = tpu.matmul %114, %115, %cst_76 {dimension_numbers = #tpu.dot_dimension_numbers<[1], [0], [0], [1], [0, 0, 1, 1], [], []>} : vector<32x12xbf16>, vector<12x16xbf16>, vector<32x16xf32> -> vector<32x16xf32>
    %c1_77 = arith.constant 1 : index
    %c0_78 = arith.constant 0 : index
    %c0_79 = arith.constant 0 : index
    %117 = vector.load %arg3[%c1_77, %c0_78, %c0_79] : memref<3x32x12xbf16, #tpu.memory_space<vmem>>, vector<1x32x12xbf16>
    %118 = vector.shape_cast %117 : vector<1x32x12xbf16> to vector<32x12xbf16>
    %119 = vector.extract_strided_slice %112 {offsets = [0, 1], sizes = [12, 16], strides = [1, 1]} : vector<12x18xbf16> to vector<12x16xbf16>
    %cst_80 = arith.constant dense<0.000000e+00> : vector<32x16xf32>
    %120 = tpu.matmul %118, %119, %cst_80 {dimension_numbers = #tpu.dot_dimension_numbers<[1], [0], [0], [1], [0, 0, 1, 1], [], []>} : vector<32x12xbf16>, vector<12x16xbf16>, vector<32x16xf32> -> vector<32x16xf32>
    %121 = arith.addf %116, %120 : vector<32x16xf32>
    %c2_81 = arith.constant 2 : index
    %c0_82 = arith.constant 0 : index
    %c0_83 = arith.constant 0 : index
    %122 = vector.load %arg3[%c2_81, %c0_82, %c0_83] : memref<3x32x12xbf16, #tpu.memory_space<vmem>>, vector<1x32x12xbf16>
    %123 = vector.shape_cast %122 : vector<1x32x12xbf16> to vector<32x12xbf16>
    %124 = vector.extract_strided_slice %112 {offsets = [0, 2], sizes = [12, 16], strides = [1, 1]} : vector<12x18xbf16> to vector<12x16xbf16>
    %cst_84 = arith.constant dense<0.000000e+00> : vector<32x16xf32>
    %125 = tpu.matmul %123, %124, %cst_84 {dimension_numbers = #tpu.dot_dimension_numbers<[1], [0], [0], [1], [0, 0, 1, 1], [], []>} : vector<32x12xbf16>, vector<12x16xbf16>, vector<32x16xf32> -> vector<32x16xf32>
    %126 = arith.addf %121, %125 : vector<32x16xf32>
    %c0_85 = arith.constant 0 : index
    %c0_86 = arith.constant 0 : index
    %127 = vector.load %arg6[%c0_85, %c0_86] : memref<32x1xf32, #tpu.memory_space<vmem>>, vector<32x1xf32>
    %128 = vector.broadcast %127 : vector<32x1xf32> to vector<32x16xf32>
    %129 = arith.addf %126, %128 : vector<32x16xf32>
    %c0_i32_87 = arith.constant 0 : i32
    %130 = arith.cmpi sge, %107, %c0_i32_87 : i32
    %c16_i32_88 = arith.constant 16 : i32
    %131 = arith.cmpi slt, %107, %c16_i32_88 : i32
    %132 = arith.andi %130, %131 : i1
    %cst_89 = arith.constant 0.000000e+00 : f32
    %133 = vector.broadcast %cst_89 : f32 to vector<32x16xf32>
    %134 = arith.maximumf %129, %133 : vector<32x16xf32>
    %cst_90 = arith.constant 0.000000e+00 : f32
    %135 = vector.broadcast %cst_90 : f32 to vector<32x16xf32>
    %136 = arith.select %132, %134, %135 : vector<32x16xf32>
    %137 = arith.truncf %136 : vector<32x16xf32> to vector<32x16xbf16>
    %c96 = arith.constant 96 : index
    %c1_91 = arith.constant 1 : index
    %138 = vector.load %arg10[%c96, %c1_91] : memref<384x18xbf16, #tpu.memory_space<vmem>>, vector<32x16xbf16>
    tpu.vector_store %arg10[%c96, %c1_91], %137 {strides = array<i32>} : memref<384x18xbf16, #tpu.memory_space<vmem>>, vector<32x16xbf16>,
    %c2_i32_92 = arith.constant 2 : i32
    %139 = arith.subi %0, %c2_i32_92 : i32
    %c4_i32_93 = arith.constant 4 : i32
    %140 = arith.addi %139, %c4_i32_93 : i32
    %c16_i32_94 = arith.constant 16 : i32
    %141 = arith.addi %6, %c16_i32_94 : i32
    %c0_95 = arith.constant 0 : index
    %142 = arith.index_cast %141 : i32 to index
    %c0_96 = arith.constant 0 : index
    %143 = vector.load %arg2[%c0_95, %142, %c0_96] : memref<1x88x18xf32, #tpu.memory_space<vmem>>, vector<1x12x18xf32>
    %144 = vector.shape_cast %143 : vector<1x12x18xf32> to vector<12x18xf32>
    %145 = arith.truncf %144 : vector<12x18xf32> to vector<12x18xbf16>
    %c0_97 = arith.constant 0 : index
    %c0_98 = arith.constant 0 : index
    %c0_99 = arith.constant 0 : index
    %146 = vector.load %arg3[%c0_97, %c0_98, %c0_99] : memref<3x32x12xbf16, #tpu.memory_space<vmem>>, vector<1x32x12xbf16>
    %147 = vector.shape_cast %146 : vector<1x32x12xbf16> to vector<32x12xbf16>
    %148 = vector.extract_strided_slice %145 {offsets = [0, 0], sizes = [12, 16], strides = [1, 1]} : vector<12x18xbf16> to vector<12x16xbf16>
    %cst_100 = arith.constant dense<0.000000e+00> : vector<32x16xf32>
    %149 = tpu.matmul %147, %148, %cst_100 {dimension_numbers = #tpu.dot_dimension_numbers<[1], [0], [0], [1], [0, 0, 1, 1], [], []>} : vector<32x12xbf16>, vector<12x16xbf16>, vector<32x16xf32> -> vector<32x16xf32>
    %c1_101 = arith.constant 1 : index
    %c0_102 = arith.constant 0 : index
    %c0_103 = arith.constant 0 : index
    %150 = vector.load %arg3[%c1_101, %c0_102, %c0_103] : memref<3x32x12xbf16, #tpu.memory_space<vmem>>, vector<1x32x12xbf16>
    %151 = vector.shape_cast %150 : vector<1x32x12xbf16> to vector<32x12xbf16>
    %152 = vector.extract_strided_slice %145 {offsets = [0, 1], sizes = [12, 16], strides = [1, 1]} : vector<12x18xbf16> to vector<12x16xbf16>
    %cst_104 = arith.constant dense<0.000000e+00> : vector<32x16xf32>
    %153 = tpu.matmul %151, %152, %cst_104 {dimension_numbers = #tpu.dot_dimension_numbers<[1], [0], [0], [1], [0, 0, 1, 1], [], []>} : vector<32x12xbf16>, vector<12x16xbf16>, vector<32x16xf32> -> vector<32x16xf32>
    %154 = arith.addf %149, %153 : vector<32x16xf32>
    %c2_105 = arith.constant 2 : index
    %c0_106 = arith.constant 0 : index
    %c0_107 = arith.constant 0 : index
    %155 = vector.load %arg3[%c2_105, %c0_106, %c0_107] : memref<3x32x12xbf16, #tpu.memory_space<vmem>>, vector<1x32x12xbf16>
    %156 = vector.shape_cast %155 : vector<1x32x12xbf16> to vector<32x12xbf16>
    %157 = vector.extract_strided_slice %145 {offsets = [0, 2], sizes = [12, 16], strides = [1, 1]} : vector<12x18xbf16> to vector<12x16xbf16>
    %cst_108 = arith.constant dense<0.000000e+00> : vector<32x16xf32>
    %158 = tpu.matmul %156, %157, %cst_108 {dimension_numbers = #tpu.dot_dimension_numbers<[1], [0], [0], [1], [0, 0, 1, 1], [], []>} : vector<32x12xbf16>, vector<12x16xbf16>, vector<32x16xf32> -> vector<32x16xf32>
    %159 = arith.addf %154, %158 : vector<32x16xf32>
    %c0_109 = arith.constant 0 : index
    %c0_110 = arith.constant 0 : index
    %160 = vector.load %arg6[%c0_109, %c0_110] : memref<32x1xf32, #tpu.memory_space<vmem>>, vector<32x1xf32>
    %161 = vector.broadcast %160 : vector<32x1xf32> to vector<32x16xf32>
    %162 = arith.addf %159, %161 : vector<32x16xf32>
    %c0_i32_111 = arith.constant 0 : i32
    %163 = arith.cmpi sge, %140, %c0_i32_111 : i32
    %c16_i32_112 = arith.constant 16 : i32
    %164 = arith.cmpi slt, %140, %c16_i32_112 : i32
    %165 = arith.andi %163, %164 : i1
    %cst_113 = arith.constant 0.000000e+00 : f32
    %166 = vector.broadcast %cst_113 : f32 to vector<32x16xf32>
    %167 = arith.maximumf %162, %166 : vector<32x16xf32>
    %cst_114 = arith.constant 0.000000e+00 : f32
    %168 = vector.broadcast %cst_114 : f32 to vector<32x16xf32>
    %169 = arith.select %165, %167, %168 : vector<32x16xf32>
    %170 = arith.truncf %169 : vector<32x16xf32> to vector<32x16xbf16>
    %c128 = arith.constant 128 : index
    %c1_115 = arith.constant 1 : index
    %171 = vector.load %arg10[%c128, %c1_115] : memref<384x18xbf16, #tpu.memory_space<vmem>>, vector<32x16xbf16>
    tpu.vector_store %arg10[%c128, %c1_115], %170 {strides = array<i32>} : memref<384x18xbf16, #tpu.memory_space<vmem>>, vector<32x16xbf16>,
    %c2_i32_116 = arith.constant 2 : i32
    %172 = arith.subi %0, %c2_i32_116 : i32
    %c5_i32 = arith.constant 5 : i32
    %173 = arith.addi %172, %c5_i32 : i32
    %c20_i32 = arith.constant 20 : i32
    %174 = arith.addi %6, %c20_i32 : i32
    %c0_117 = arith.constant 0 : index
    %175 = arith.index_cast %174 : i32 to index
    %c0_118 = arith.constant 0 : index
    %176 = vector.load %arg2[%c0_117, %175, %c0_118] : memref<1x88x18xf32, #tpu.memory_space<vmem>>, vector<1x12x18xf32>
    %177 = vector.shape_cast %176 : vector<1x12x18xf32> to vector<12x18xf32>
    %178 = arith.truncf %177 : vector<12x18xf32> to vector<12x18xbf16>
    %c0_119 = arith.constant 0 : index
    %c0_120 = arith.constant 0 : index
    %c0_121 = arith.constant 0 : index
    %179 = vector.load %arg3[%c0_119, %c0_120, %c0_121] : memref<3x32x12xbf16, #tpu.memory_space<vmem>>, vector<1x32x12xbf16>
    %180 = vector.shape_cast %179 : vector<1x32x12xbf16> to vector<32x12xbf16>
    %181 = vector.extract_strided_slice %178 {offsets = [0, 0], sizes = [12, 16], strides = [1, 1]} : vector<12x18xbf16> to vector<12x16xbf16>
    %cst_122 = arith.constant dense<0.000000e+00> : vector<32x16xf32>
    %182 = tpu.matmul %180, %181, %cst_122 {dimension_numbers = #tpu.dot_dimension_numbers<[1], [0], [0], [1], [0, 0, 1, 1], [], []>} : vector<32x12xbf16>, vector<12x16xbf16>, vector<32x16xf32> -> vector<32x16xf32>
    %c1_123 = arith.constant 1 : index
    %c0_124 = arith.constant 0 : index
    %c0_125 = arith.constant 0 : index
    %183 = vector.load %arg3[%c1_123, %c0_124, %c0_125] : memref<3x32x12xbf16, #tpu.memory_space<vmem>>, vector<1x32x12xbf16>
    %184 = vector.shape_cast %183 : vector<1x32x12xbf16> to vector<32x12xbf16>
    %185 = vector.extract_strided_slice %178 {offsets = [0, 1], sizes = [12, 16], strides = [1, 1]} : vector<12x18xbf16> to vector<12x16xbf16>
    %cst_126 = arith.constant dense<0.000000e+00> : vector<32x16xf32>
    %186 = tpu.matmul %184, %185, %cst_126 {dimension_numbers = #tpu.dot_dimension_numbers<[1], [0], [0], [1], [0, 0, 1, 1], [], []>} : vector<32x12xbf16>, vector<12x16xbf16>, vector<32x16xf32> -> vector<32x16xf32>
    %187 = arith.addf %182, %186 : vector<32x16xf32>
    %c2_127 = arith.constant 2 : index
    %c0_128 = arith.constant 0 : index
    %c0_129 = arith.constant 0 : index
    %188 = vector.load %arg3[%c2_127, %c0_128, %c0_129] : memref<3x32x12xbf16, #tpu.memory_space<vmem>>, vector<1x32x12xbf16>
    %189 = vector.shape_cast %188 : vector<1x32x12xbf16> to vector<32x12xbf16>
    %190 = vector.extract_strided_slice %178 {offsets = [0, 2], sizes = [12, 16], strides = [1, 1]} : vector<12x18xbf16> to vector<12x16xbf16>
    %cst_130 = arith.constant dense<0.000000e+00> : vector<32x16xf32>
    %191 = tpu.matmul %189, %190, %cst_130 {dimension_numbers = #tpu.dot_dimension_numbers<[1], [0], [0], [1], [0, 0, 1, 1], [], []>} : vector<32x12xbf16>, vector<12x16xbf16>, vector<32x16xf32> -> vector<32x16xf32>
    %192 = arith.addf %187, %191 : vector<32x16xf32>
    %c0_131 = arith.constant 0 : index
    %c0_132 = arith.constant 0 : index
    %193 = vector.load %arg6[%c0_131, %c0_132] : memref<32x1xf32, #tpu.memory_space<vmem>>, vector<32x1xf32>
    %194 = vector.broadcast %193 : vector<32x1xf32> to vector<32x16xf32>
    %195 = arith.addf %192, %194 : vector<32x16xf32>
    %c0_i32_133 = arith.constant 0 : i32
    %196 = arith.cmpi sge, %173, %c0_i32_133 : i32
    %c16_i32_134 = arith.constant 16 : i32
    %197 = arith.cmpi slt, %173, %c16_i32_134 : i32
    %198 = arith.andi %196, %197 : i1
    %cst_135 = arith.constant 0.000000e+00 : f32
    %199 = vector.broadcast %cst_135 : f32 to vector<32x16xf32>
    %200 = arith.maximumf %195, %199 : vector<32x16xf32>
    %cst_136 = arith.constant 0.000000e+00 : f32
    %201 = vector.broadcast %cst_136 : f32 to vector<32x16xf32>
    %202 = arith.select %198, %200, %201 : vector<32x16xf32>
    %203 = arith.truncf %202 : vector<32x16xf32> to vector<32x16xbf16>
    %c160 = arith.constant 160 : index
    %c1_137 = arith.constant 1 : index
    %204 = vector.load %arg10[%c160, %c1_137] : memref<384x18xbf16, #tpu.memory_space<vmem>>, vector<32x16xbf16>
    tpu.vector_store %arg10[%c160, %c1_137], %203 {strides = array<i32>} : memref<384x18xbf16, #tpu.memory_space<vmem>>, vector<32x16xbf16>,
    %c2_i32_138 = arith.constant 2 : i32
    %205 = arith.subi %0, %c2_i32_138 : i32
    %c6_i32 = arith.constant 6 : i32
    %206 = arith.addi %205, %c6_i32 : i32
    %c24_i32 = arith.constant 24 : i32
    %207 = arith.addi %6, %c24_i32 : i32
    %c0_139 = arith.constant 0 : index
    %208 = arith.index_cast %207 : i32 to index
    %c0_140 = arith.constant 0 : index
    %209 = vector.load %arg2[%c0_139, %208, %c0_140] : memref<1x88x18xf32, #tpu.memory_space<vmem>>, vector<1x12x18xf32>
    %210 = vector.shape_cast %209 : vector<1x12x18xf32> to vector<12x18xf32>
    %211 = arith.truncf %210 : vector<12x18xf32> to vector<12x18xbf16>
    %c0_141 = arith.constant 0 : index
    %c0_142 = arith.constant 0 : index
    %c0_143 = arith.constant 0 : index
    %212 = vector.load %arg3[%c0_141, %c0_142, %c0_143] : memref<3x32x12xbf16, #tpu.memory_space<vmem>>, vector<1x32x12xbf16>
    %213 = vector.shape_cast %212 : vector<1x32x12xbf16> to vector<32x12xbf16>
    %214 = vector.extract_strided_slice %211 {offsets = [0, 0], sizes = [12, 16], strides = [1, 1]} : vector<12x18xbf16> to vector<12x16xbf16>
    %cst_144 = arith.constant dense<0.000000e+00> : vector<32x16xf32>
    %215 = tpu.matmul %213, %214, %cst_144 {dimension_numbers = #tpu.dot_dimension_numbers<[1], [0], [0], [1], [0, 0, 1, 1], [], []>} : vector<32x12xbf16>, vector<12x16xbf16>, vector<32x16xf32> -> vector<32x16xf32>
    %c1_145 = arith.constant 1 : index
    %c0_146 = arith.constant 0 : index
    %c0_147 = arith.constant 0 : index
    %216 = vector.load %arg3[%c1_145, %c0_146, %c0_147] : memref<3x32x12xbf16, #tpu.memory_space<vmem>>, vector<1x32x12xbf16>
    %217 = vector.shape_cast %216 : vector<1x32x12xbf16> to vector<32x12xbf16>
    %218 = vector.extract_strided_slice %211 {offsets = [0, 1], sizes = [12, 16], strides = [1, 1]} : vector<12x18xbf16> to vector<12x16xbf16>
    %cst_148 = arith.constant dense<0.000000e+00> : vector<32x16xf32>
    %219 = tpu.matmul %217, %218, %cst_148 {dimension_numbers = #tpu.dot_dimension_numbers<[1], [0], [0], [1], [0, 0, 1, 1], [], []>} : vector<32x12xbf16>, vector<12x16xbf16>, vector<32x16xf32> -> vector<32x16xf32>
    %220 = arith.addf %215, %219 : vector<32x16xf32>
    %c2_149 = arith.constant 2 : index
    %c0_150 = arith.constant 0 : index
    %c0_151 = arith.constant 0 : index
    %221 = vector.load %arg3[%c2_149, %c0_150, %c0_151] : memref<3x32x12xbf16, #tpu.memory_space<vmem>>, vector<1x32x12xbf16>
    %222 = vector.shape_cast %221 : vector<1x32x12xbf16> to vector<32x12xbf16>
    %223 = vector.extract_strided_slice %211 {offsets = [0, 2], sizes = [12, 16], strides = [1, 1]} : vector<12x18xbf16> to vector<12x16xbf16>
    %cst_152 = arith.constant dense<0.000000e+00> : vector<32x16xf32>
    %224 = tpu.matmul %222, %223, %cst_152 {dimension_numbers = #tpu.dot_dimension_numbers<[1], [0], [0], [1], [0, 0, 1, 1], [], []>} : vector<32x12xbf16>, vector<12x16xbf16>, vector<32x16xf32> -> vector<32x16xf32>
    %225 = arith.addf %220, %224 : vector<32x16xf32>
    %c0_153 = arith.constant 0 : index
    %c0_154 = arith.constant 0 : index
    %226 = vector.load %arg6[%c0_153, %c0_154] : memref<32x1xf32, #tpu.memory_space<vmem>>, vector<32x1xf32>
    %227 = vector.broadcast %226 : vector<32x1xf32> to vector<32x16xf32>
    %228 = arith.addf %225, %227 : vector<32x16xf32>
    %c0_i32_155 = arith.constant 0 : i32
    %229 = arith.cmpi sge, %206, %c0_i32_155 : i32
    %c16_i32_156 = arith.constant 16 : i32
    %230 = arith.cmpi slt, %206, %c16_i32_156 : i32
    %231 = arith.andi %229, %230 : i1
    %cst_157 = arith.constant 0.000000e+00 : f32
    %232 = vector.broadcast %cst_157 : f32 to vector<32x16xf32>
    %233 = arith.maximumf %228, %232 : vector<32x16xf32>
    %cst_158 = arith.constant 0.000000e+00 : f32
    %234 = vector.broadcast %cst_158 : f32 to vector<32x16xf32>
    %235 = arith.select %231, %233, %234 : vector<32x16xf32>
    %236 = arith.truncf %235 : vector<32x16xf32> to vector<32x16xbf16>
    %c192 = arith.constant 192 : index
    %c1_159 = arith.constant 1 : index
    %237 = vector.load %arg10[%c192, %c1_159] : memref<384x18xbf16, #tpu.memory_space<vmem>>, vector<32x16xbf16>
    tpu.vector_store %arg10[%c192, %c1_159], %236 {strides = array<i32>} : memref<384x18xbf16, #tpu.memory_space<vmem>>, vector<32x16xbf16>,
    %c2_i32_160 = arith.constant 2 : i32
    %238 = arith.subi %0, %c2_i32_160 : i32
    %c7_i32 = arith.constant 7 : i32
    %239 = arith.addi %238, %c7_i32 : i32
    %c28_i32 = arith.constant 28 : i32
    %240 = arith.addi %6, %c28_i32 : i32
    %c0_161 = arith.constant 0 : index
    %241 = arith.index_cast %240 : i32 to index
    %c0_162 = arith.constant 0 : index
    %242 = vector.load %arg2[%c0_161, %241, %c0_162] : memref<1x88x18xf32, #tpu.memory_space<vmem>>, vector<1x12x18xf32>
    %243 = vector.shape_cast %242 : vector<1x12x18xf32> to vector<12x18xf32>
    %244 = arith.truncf %243 : vector<12x18xf32> to vector<12x18xbf16>
    %c0_163 = arith.constant 0 : index
    %c0_164 = arith.constant 0 : index
    %c0_165 = arith.constant 0 : index
    %245 = vector.load %arg3[%c0_163, %c0_164, %c0_165] : memref<3x32x12xbf16, #tpu.memory_space<vmem>>, vector<1x32x12xbf16>
    %246 = vector.shape_cast %245 : vector<1x32x12xbf16> to vector<32x12xbf16>
    %247 = vector.extract_strided_slice %244 {offsets = [0, 0], sizes = [12, 16], strides = [1, 1]} : vector<12x18xbf16> to vector<12x16xbf16>
    %cst_166 = arith.constant dense<0.000000e+00> : vector<32x16xf32>
    %248 = tpu.matmul %246, %247, %cst_166 {dimension_numbers = #tpu.dot_dimension_numbers<[1], [0], [0], [1], [0, 0, 1, 1], [], []>} : vector<32x12xbf16>, vector<12x16xbf16>, vector<32x16xf32> -> vector<32x16xf32>
    %c1_167 = arith.constant 1 : index
    %c0_168 = arith.constant 0 : index
    %c0_169 = arith.constant 0 : index
    %249 = vector.load %arg3[%c1_167, %c0_168, %c0_169] : memref<3x32x12xbf16, #tpu.memory_space<vmem>>, vector<1x32x12xbf16>
    %250 = vector.shape_cast %249 : vector<1x32x12xbf16> to vector<32x12xbf16>
    %251 = vector.extract_strided_slice %244 {offsets = [0, 1], sizes = [12, 16], strides = [1, 1]} : vector<12x18xbf16> to vector<12x16xbf16>
    %cst_170 = arith.constant dense<0.000000e+00> : vector<32x16xf32>
    %252 = tpu.matmul %250, %251, %cst_170 {dimension_numbers = #tpu.dot_dimension_numbers<[1], [0], [0], [1], [0, 0, 1, 1], [], []>} : vector<32x12xbf16>, vector<12x16xbf16>, vector<32x16xf32> -> vector<32x16xf32>
    %253 = arith.addf %248, %252 : vector<32x16xf32>
    %c2_171 = arith.constant 2 : index
    %c0_172 = arith.constant 0 : index
    %c0_173 = arith.constant 0 : index
    %254 = vector.load %arg3[%c2_171, %c0_172, %c0_173] : memref<3x32x12xbf16, #tpu.memory_space<vmem>>, vector<1x32x12xbf16>
    %255 = vector.shape_cast %254 : vector<1x32x12xbf16> to vector<32x12xbf16>
    %256 = vector.extract_strided_slice %244 {offsets = [0, 2], sizes = [12, 16], strides = [1, 1]} : vector<12x18xbf16> to vector<12x16xbf16>
    %cst_174 = arith.constant dense<0.000000e+00> : vector<32x16xf32>
    %257 = tpu.matmul %255, %256, %cst_174 {dimension_numbers = #tpu.dot_dimension_numbers<[1], [0], [0], [1], [0, 0, 1, 1], [], []>} : vector<32x12xbf16>, vector<12x16xbf16>, vector<32x16xf32> -> vector<32x16xf32>
    %258 = arith.addf %253, %257 : vector<32x16xf32>
    %c0_175 = arith.constant 0 : index
    %c0_176 = arith.constant 0 : index
    %259 = vector.load %arg6[%c0_175, %c0_176] : memref<32x1xf32, #tpu.memory_space<vmem>>, vector<32x1xf32>
    %260 = vector.broadcast %259 : vector<32x1xf32> to vector<32x16xf32>
    %261 = arith.addf %258, %260 : vector<32x16xf32>
    %c0_i32_177 = arith.constant 0 : i32
    %262 = arith.cmpi sge, %239, %c0_i32_177 : i32
    %c16_i32_178 = arith.constant 16 : i32
    %263 = arith.cmpi slt, %239, %c16_i32_178 : i32
    %264 = arith.andi %262, %263 : i1
    %cst_179 = arith.constant 0.000000e+00 : f32
    %265 = vector.broadcast %cst_179 : f32 to vector<32x16xf32>
    %266 = arith.maximumf %261, %265 : vector<32x16xf32>
    %cst_180 = arith.constant 0.000000e+00 : f32
    %267 = vector.broadcast %cst_180 : f32 to vector<32x16xf32>
    %268 = arith.select %264, %266, %267 : vector<32x16xf32>
    %269 = arith.truncf %268 : vector<32x16xf32> to vector<32x16xbf16>
    %c224 = arith.constant 224 : index
    %c1_181 = arith.constant 1 : index
    %270 = vector.load %arg10[%c224, %c1_181] : memref<384x18xbf16, #tpu.memory_space<vmem>>, vector<32x16xbf16>
    tpu.vector_store %arg10[%c224, %c1_181], %269 {strides = array<i32>} : memref<384x18xbf16, #tpu.memory_space<vmem>>, vector<32x16xbf16>,
    %c2_i32_182 = arith.constant 2 : i32
    %271 = arith.subi %0, %c2_i32_182 : i32
    %c8_i32_183 = arith.constant 8 : i32
    %272 = arith.addi %271, %c8_i32_183 : i32
    %c32_i32_184 = arith.constant 32 : i32
    %273 = arith.addi %6, %c32_i32_184 : i32
    %c0_185 = arith.constant 0 : index
    %274 = arith.index_cast %273 : i32 to index
    %c0_186 = arith.constant 0 : index
    %275 = vector.load %arg2[%c0_185, %274, %c0_186] : memref<1x88x18xf32, #tpu.memory_space<vmem>>, vector<1x12x18xf32>
    %276 = vector.shape_cast %275 : vector<1x12x18xf32> to vector<12x18xf32>
    %277 = arith.truncf %276 : vector<12x18xf32> to vector<12x18xbf16>
    %c0_187 = arith.constant 0 : index
    %c0_188 = arith.constant 0 : index
    %c0_189 = arith.constant 0 : index
    %278 = vector.load %arg3[%c0_187, %c0_188, %c0_189] : memref<3x32x12xbf16, #tpu.memory_space<vmem>>, vector<1x32x12xbf16>
    %279 = vector.shape_cast %278 : vector<1x32x12xbf16> to vector<32x12xbf16>
    %280 = vector.extract_strided_slice %277 {offsets = [0, 0], sizes = [12, 16], strides = [1, 1]} : vector<12x18xbf16> to vector<12x16xbf16>
    %cst_190 = arith.constant dense<0.000000e+00> : vector<32x16xf32>
    %281 = tpu.matmul %279, %280, %cst_190 {dimension_numbers = #tpu.dot_dimension_numbers<[1], [0], [0], [1], [0, 0, 1, 1], [], []>} : vector<32x12xbf16>, vector<12x16xbf16>, vector<32x16xf32> -> vector<32x16xf32>
    %c1_191 = arith.constant 1 : index
    %c0_192 = arith.constant 0 : index
    %c0_193 = arith.constant 0 : index
    %282 = vector.load %arg3[%c1_191, %c0_192, %c0_193] : memref<3x32x12xbf16, #tpu.memory_space<vmem>>, vector<1x32x12xbf16>
    %283 = vector.shape_cast %282 : vector<1x32x12xbf16> to vector<32x12xbf16>
    %284 = vector.extract_strided_slice %277 {offsets = [0, 1], sizes = [12, 16], strides = [1, 1]} : vector<12x18xbf16> to vector<12x16xbf16>
    %cst_194 = arith.constant dense<0.000000e+00> : vector<32x16xf32>
    %285 = tpu.matmul %283, %284, %cst_194 {dimension_numbers = #tpu.dot_dimension_numbers<[1], [0], [0], [1], [0, 0, 1, 1], [], []>} : vector<32x12xbf16>, vector<12x16xbf16>, vector<32x16xf32> -> vector<32x16xf32>
    %286 = arith.addf %281, %285 : vector<32x16xf32>
    %c2_195 = arith.constant 2 : index
    %c0_196 = arith.constant 0 : index
    %c0_197 = arith.constant 0 : index
    %287 = vector.load %arg3[%c2_195, %c0_196, %c0_197] : memref<3x32x12xbf16, #tpu.memory_space<vmem>>, vector<1x32x12xbf16>
    %288 = vector.shape_cast %287 : vector<1x32x12xbf16> to vector<32x12xbf16>
    %289 = vector.extract_strided_slice %277 {offsets = [0, 2], sizes = [12, 16], strides = [1, 1]} : vector<12x18xbf16> to vector<12x16xbf16>
    %cst_198 = arith.constant dense<0.000000e+00> : vector<32x16xf32>
    %290 = tpu.matmul %288, %289, %cst_198 {dimension_numbers = #tpu.dot_dimension_numbers<[1], [0], [0], [1], [0, 0, 1, 1], [], []>} : vector<32x12xbf16>, vector<12x16xbf16>, vector<32x16xf32> -> vector<32x16xf32>
    %291 = arith.addf %286, %290 : vector<32x16xf32>
    %c0_199 = arith.constant 0 : index
    %c0_200 = arith.constant 0 : index
    %292 = vector.load %arg6[%c0_199, %c0_200] : memref<32x1xf32, #tpu.memory_space<vmem>>, vector<32x1xf32>
    %293 = vector.broadcast %292 : vector<32x1xf32> to vector<32x16xf32>
    %294 = arith.addf %291, %293 : vector<32x16xf32>
    %c0_i32_201 = arith.constant 0 : i32
    %295 = arith.cmpi sge, %272, %c0_i32_201 : i32
    %c16_i32_202 = arith.constant 16 : i32
    %296 = arith.cmpi slt, %272, %c16_i32_202 : i32
    %297 = arith.andi %295, %296 : i1
    %cst_203 = arith.constant 0.000000e+00 : f32
    %298 = vector.broadcast %cst_203 : f32 to vector<32x16xf32>
    %299 = arith.maximumf %294, %298 : vector<32x16xf32>
    %cst_204 = arith.constant 0.000000e+00 : f32
    %300 = vector.broadcast %cst_204 : f32 to vector<32x16xf32>
    %301 = arith.select %297, %299, %300 : vector<32x16xf32>
    %302 = arith.truncf %301 : vector<32x16xf32> to vector<32x16xbf16>
    %c256 = arith.constant 256 : index
    %c1_205 = arith.constant 1 : index
    %303 = vector.load %arg10[%c256, %c1_205] : memref<384x18xbf16, #tpu.memory_space<vmem>>, vector<32x16xbf16>
    tpu.vector_store %arg10[%c256, %c1_205], %302 {strides = array<i32>} : memref<384x18xbf16, #tpu.memory_space<vmem>>, vector<32x16xbf16>,
    %c2_i32_206 = arith.constant 2 : i32
    %304 = arith.subi %0, %c2_i32_206 : i32
    %c9_i32 = arith.constant 9 : i32
    %305 = arith.addi %304, %c9_i32 : i32
    %c36_i32 = arith.constant 36 : i32
    %306 = arith.addi %6, %c36_i32 : i32
    %c0_207 = arith.constant 0 : index
    %307 = arith.index_cast %306 : i32 to index
    %c0_208 = arith.constant 0 : index
    %308 = vector.load %arg2[%c0_207, %307, %c0_208] : memref<1x88x18xf32, #tpu.memory_space<vmem>>, vector<1x12x18xf32>
    %309 = vector.shape_cast %308 : vector<1x12x18xf32> to vector<12x18xf32>
    %310 = arith.truncf %309 : vector<12x18xf32> to vector<12x18xbf16>
    %c0_209 = arith.constant 0 : index
    %c0_210 = arith.constant 0 : index
    %c0_211 = arith.constant 0 : index
    %311 = vector.load %arg3[%c0_209, %c0_210, %c0_211] : memref<3x32x12xbf16, #tpu.memory_space<vmem>>, vector<1x32x12xbf16>
    %312 = vector.shape_cast %311 : vector<1x32x12xbf16> to vector<32x12xbf16>
    %313 = vector.extract_strided_slice %310 {offsets = [0, 0], sizes = [12, 16], strides = [1, 1]} : vector<12x18xbf16> to vector<12x16xbf16>
    %cst_212 = arith.constant dense<0.000000e+00> : vector<32x16xf32>
    %314 = tpu.matmul %312, %313, %cst_212 {dimension_numbers = #tpu.dot_dimension_numbers<[1], [0], [0], [1], [0, 0, 1, 1], [], []>} : vector<32x12xbf16>, vector<12x16xbf16>, vector<32x16xf32> -> vector<32x16xf32>
    %c1_213 = arith.constant 1 : index
    %c0_214 = arith.constant 0 : index
    %c0_215 = arith.constant 0 : index
    %315 = vector.load %arg3[%c1_213, %c0_214, %c0_215] : memref<3x32x12xbf16, #tpu.memory_space<vmem>>, vector<1x32x12xbf16>
    %316 = vector.shape_cast %315 : vector<1x32x12xbf16> to vector<32x12xbf16>
    %317 = vector.extract_strided_slice %310 {offsets = [0, 1], sizes = [12, 16], strides = [1, 1]} : vector<12x18xbf16> to vector<12x16xbf16>
    %cst_216 = arith.constant dense<0.000000e+00> : vector<32x16xf32>
    %318 = tpu.matmul %316, %317, %cst_216 {dimension_numbers = #tpu.dot_dimension_numbers<[1], [0], [0], [1], [0, 0, 1, 1], [], []>} : vector<32x12xbf16>, vector<12x16xbf16>, vector<32x16xf32> -> vector<32x16xf32>
    %319 = arith.addf %314, %318 : vector<32x16xf32>
    %c2_217 = arith.constant 2 : index
    %c0_218 = arith.constant 0 : index
    %c0_219 = arith.constant 0 : index
    %320 = vector.load %arg3[%c2_217, %c0_218, %c0_219] : memref<3x32x12xbf16, #tpu.memory_space<vmem>>, vector<1x32x12xbf16>
    %321 = vector.shape_cast %320 : vector<1x32x12xbf16> to vector<32x12xbf16>
    %322 = vector.extract_strided_slice %310 {offsets = [0, 2], sizes = [12, 16], strides = [1, 1]} : vector<12x18xbf16> to vector<12x16xbf16>
    %cst_220 = arith.constant dense<0.000000e+00> : vector<32x16xf32>
    %323 = tpu.matmul %321, %322, %cst_220 {dimension_numbers = #tpu.dot_dimension_numbers<[1], [0], [0], [1], [0, 0, 1, 1], [], []>} : vector<32x12xbf16>, vector<12x16xbf16>, vector<32x16xf32> -> vector<32x16xf32>
    %324 = arith.addf %319, %323 : vector<32x16xf32>
    %c0_221 = arith.constant 0 : index
    %c0_222 = arith.constant 0 : index
    %325 = vector.load %arg6[%c0_221, %c0_222] : memref<32x1xf32, #tpu.memory_space<vmem>>, vector<32x1xf32>
    %326 = vector.broadcast %325 : vector<32x1xf32> to vector<32x16xf32>
    %327 = arith.addf %324, %326 : vector<32x16xf32>
    %c0_i32_223 = arith.constant 0 : i32
    %328 = arith.cmpi sge, %305, %c0_i32_223 : i32
    %c16_i32_224 = arith.constant 16 : i32
    %329 = arith.cmpi slt, %305, %c16_i32_224 : i32
    %330 = arith.andi %328, %329 : i1
    %cst_225 = arith.constant 0.000000e+00 : f32
    %331 = vector.broadcast %cst_225 : f32 to vector<32x16xf32>
    %332 = arith.maximumf %327, %331 : vector<32x16xf32>
    %cst_226 = arith.constant 0.000000e+00 : f32
    %333 = vector.broadcast %cst_226 : f32 to vector<32x16xf32>
    %334 = arith.select %330, %332, %333 : vector<32x16xf32>
    %335 = arith.truncf %334 : vector<32x16xf32> to vector<32x16xbf16>
    %c288 = arith.constant 288 : index
    %c1_227 = arith.constant 1 : index
    %336 = vector.load %arg10[%c288, %c1_227] : memref<384x18xbf16, #tpu.memory_space<vmem>>, vector<32x16xbf16>
    tpu.vector_store %arg10[%c288, %c1_227], %335 {strides = array<i32>} : memref<384x18xbf16, #tpu.memory_space<vmem>>, vector<32x16xbf16>,
    %c2_i32_228 = arith.constant 2 : i32
    %337 = arith.subi %0, %c2_i32_228 : i32
    %c10_i32 = arith.constant 10 : i32
    %338 = arith.addi %337, %c10_i32 : i32
    %c40_i32 = arith.constant 40 : i32
    %339 = arith.addi %6, %c40_i32 : i32
    %c0_229 = arith.constant 0 : index
    %340 = arith.index_cast %339 : i32 to index
    %c0_230 = arith.constant 0 : index
    %341 = vector.load %arg2[%c0_229, %340, %c0_230] : memref<1x88x18xf32, #tpu.memory_space<vmem>>, vector<1x12x18xf32>
    %342 = vector.shape_cast %341 : vector<1x12x18xf32> to vector<12x18xf32>
    %343 = arith.truncf %342 : vector<12x18xf32> to vector<12x18xbf16>
    %c0_231 = arith.constant 0 : index
    %c0_232 = arith.constant 0 : index
    %c0_233 = arith.constant 0 : index
    %344 = vector.load %arg3[%c0_231, %c0_232, %c0_233] : memref<3x32x12xbf16, #tpu.memory_space<vmem>>, vector<1x32x12xbf16>
    %345 = vector.shape_cast %344 : vector<1x32x12xbf16> to vector<32x12xbf16>
    %346 = vector.extract_strided_slice %343 {offsets = [0, 0], sizes = [12, 16], strides = [1, 1]} : vector<12x18xbf16> to vector<12x16xbf16>
    %cst_234 = arith.constant dense<0.000000e+00> : vector<32x16xf32>
    %347 = tpu.matmul %345, %346, %cst_234 {dimension_numbers = #tpu.dot_dimension_numbers<[1], [0], [0], [1], [0, 0, 1, 1], [], []>} : vector<32x12xbf16>, vector<12x16xbf16>, vector<32x16xf32> -> vector<32x16xf32>
    %c1_235 = arith.constant 1 : index
    %c0_236 = arith.constant 0 : index
    %c0_237 = arith.constant 0 : index
    %348 = vector.load %arg3[%c1_235, %c0_236, %c0_237] : memref<3x32x12xbf16, #tpu.memory_space<vmem>>, vector<1x32x12xbf16>
    %349 = vector.shape_cast %348 : vector<1x32x12xbf16> to vector<32x12xbf16>
    %350 = vector.extract_strided_slice %343 {offsets = [0, 1], sizes = [12, 16], strides = [1, 1]} : vector<12x18xbf16> to vector<12x16xbf16>
    %cst_238 = arith.constant dense<0.000000e+00> : vector<32x16xf32>
    %351 = tpu.matmul %349, %350, %cst_238 {dimension_numbers = #tpu.dot_dimension_numbers<[1], [0], [0], [1], [0, 0, 1, 1], [], []>} : vector<32x12xbf16>, vector<12x16xbf16>, vector<32x16xf32> -> vector<32x16xf32>
    %352 = arith.addf %347, %351 : vector<32x16xf32>
    %c2_239 = arith.constant 2 : index
    %c0_240 = arith.constant 0 : index
    %c0_241 = arith.constant 0 : index
    %353 = vector.load %arg3[%c2_239, %c0_240, %c0_241] : memref<3x32x12xbf16, #tpu.memory_space<vmem>>, vector<1x32x12xbf16>
    %354 = vector.shape_cast %353 : vector<1x32x12xbf16> to vector<32x12xbf16>
    %355 = vector.extract_strided_slice %343 {offsets = [0, 2], sizes = [12, 16], strides = [1, 1]} : vector<12x18xbf16> to vector<12x16xbf16>
    %cst_242 = arith.constant dense<0.000000e+00> : vector<32x16xf32>
    %356 = tpu.matmul %354, %355, %cst_242 {dimension_numbers = #tpu.dot_dimension_numbers<[1], [0], [0], [1], [0, 0, 1, 1], [], []>} : vector<32x12xbf16>, vector<12x16xbf16>, vector<32x16xf32> -> vector<32x16xf32>
    %357 = arith.addf %352, %356 : vector<32x16xf32>
    %c0_243 = arith.constant 0 : index
    %c0_244 = arith.constant 0 : index
    %358 = vector.load %arg6[%c0_243, %c0_244] : memref<32x1xf32, #tpu.memory_space<vmem>>, vector<32x1xf32>
    %359 = vector.broadcast %358 : vector<32x1xf32> to vector<32x16xf32>
    %360 = arith.addf %357, %359 : vector<32x16xf32>
    %c0_i32_245 = arith.constant 0 : i32
    %361 = arith.cmpi sge, %338, %c0_i32_245 : i32
    %c16_i32_246 = arith.constant 16 : i32
    %362 = arith.cmpi slt, %338, %c16_i32_246 : i32
    %363 = arith.andi %361, %362 : i1
    %cst_247 = arith.constant 0.000000e+00 : f32
    %364 = vector.broadcast %cst_247 : f32 to vector<32x16xf32>
    %365 = arith.maximumf %360, %364 : vector<32x16xf32>
    %cst_248 = arith.constant 0.000000e+00 : f32
    %366 = vector.broadcast %cst_248 : f32 to vector<32x16xf32>
    %367 = arith.select %363, %365, %366 : vector<32x16xf32>
    %368 = arith.truncf %367 : vector<32x16xf32> to vector<32x16xbf16>
    %c320 = arith.constant 320 : index
    %c1_249 = arith.constant 1 : index
    %369 = vector.load %arg10[%c320, %c1_249] : memref<384x18xbf16, #tpu.memory_space<vmem>>, vector<32x16xbf16>
    tpu.vector_store %arg10[%c320, %c1_249], %368 {strides = array<i32>} : memref<384x18xbf16, #tpu.memory_space<vmem>>, vector<32x16xbf16>,
    %c2_i32_250 = arith.constant 2 : i32
    %370 = arith.subi %0, %c2_i32_250 : i32
    %c11_i32 = arith.constant 11 : i32
    %371 = arith.addi %370, %c11_i32 : i32
    %c44_i32 = arith.constant 44 : i32
    %372 = arith.addi %6, %c44_i32 : i32
    %c0_251 = arith.constant 0 : index
    %373 = arith.index_cast %372 : i32 to index
    %c0_252 = arith.constant 0 : index
    %374 = vector.load %arg2[%c0_251, %373, %c0_252] : memref<1x88x18xf32, #tpu.memory_space<vmem>>, vector<1x12x18xf32>
    %375 = vector.shape_cast %374 : vector<1x12x18xf32> to vector<12x18xf32>
    %376 = arith.truncf %375 : vector<12x18xf32> to vector<12x18xbf16>
    %c0_253 = arith.constant 0 : index
    %c0_254 = arith.constant 0 : index
    %c0_255 = arith.constant 0 : index
    %377 = vector.load %arg3[%c0_253, %c0_254, %c0_255] : memref<3x32x12xbf16, #tpu.memory_space<vmem>>, vector<1x32x12xbf16>
    %378 = vector.shape_cast %377 : vector<1x32x12xbf16> to vector<32x12xbf16>
    %379 = vector.extract_strided_slice %376 {offsets = [0, 0], sizes = [12, 16], strides = [1, 1]} : vector<12x18xbf16> to vector<12x16xbf16>
    %cst_256 = arith.constant dense<0.000000e+00> : vector<32x16xf32>
    %380 = tpu.matmul %378, %379, %cst_256 {dimension_numbers = #tpu.dot_dimension_numbers<[1], [0], [0], [1], [0, 0, 1, 1], [], []>} : vector<32x12xbf16>, vector<12x16xbf16>, vector<32x16xf32> -> vector<32x16xf32>
    %c1_257 = arith.constant 1 : index
    %c0_258 = arith.constant 0 : index
    %c0_259 = arith.constant 0 : index
    %381 = vector.load %arg3[%c1_257, %c0_258, %c0_259] : memref<3x32x12xbf16, #tpu.memory_space<vmem>>, vector<1x32x12xbf16>
    %382 = vector.shape_cast %381 : vector<1x32x12xbf16> to vector<32x12xbf16>
    %383 = vector.extract_strided_slice %376 {offsets = [0, 1], sizes = [12, 16], strides = [1, 1]} : vector<12x18xbf16> to vector<12x16xbf16>
    %cst_260 = arith.constant dense<0.000000e+00> : vector<32x16xf32>
    %384 = tpu.matmul %382, %383, %cst_260 {dimension_numbers = #tpu.dot_dimension_numbers<[1], [0], [0], [1], [0, 0, 1, 1], [], []>} : vector<32x12xbf16>, vector<12x16xbf16>, vector<32x16xf32> -> vector<32x16xf32>
    %385 = arith.addf %380, %384 : vector<32x16xf32>
    %c2_261 = arith.constant 2 : index
    %c0_262 = arith.constant 0 : index
    %c0_263 = arith.constant 0 : index
    %386 = vector.load %arg3[%c2_261, %c0_262, %c0_263] : memref<3x32x12xbf16, #tpu.memory_space<vmem>>, vector<1x32x12xbf16>
    %387 = vector.shape_cast %386 : vector<1x32x12xbf16> to vector<32x12xbf16>
    %388 = vector.extract_strided_slice %376 {offsets = [0, 2], sizes = [12, 16], strides = [1, 1]} : vector<12x18xbf16> to vector<12x16xbf16>
    %cst_264 = arith.constant dense<0.000000e+00> : vector<32x16xf32>
    %389 = tpu.matmul %387, %388, %cst_264 {dimension_numbers = #tpu.dot_dimension_numbers<[1], [0], [0], [1], [0, 0, 1, 1], [], []>} : vector<32x12xbf16>, vector<12x16xbf16>, vector<32x16xf32> -> vector<32x16xf32>
    %390 = arith.addf %385, %389 : vector<32x16xf32>
    %c0_265 = arith.constant 0 : index
    %c0_266 = arith.constant 0 : index
    %391 = vector.load %arg6[%c0_265, %c0_266] : memref<32x1xf32, #tpu.memory_space<vmem>>, vector<32x1xf32>
    %392 = vector.broadcast %391 : vector<32x1xf32> to vector<32x16xf32>
    %393 = arith.addf %390, %392 : vector<32x16xf32>
    %c0_i32_267 = arith.constant 0 : i32
    %394 = arith.cmpi sge, %371, %c0_i32_267 : i32
    %c16_i32_268 = arith.constant 16 : i32
    %395 = arith.cmpi slt, %371, %c16_i32_268 : i32
    %396 = arith.andi %394, %395 : i1
    %cst_269 = arith.constant 0.000000e+00 : f32
    %397 = vector.broadcast %cst_269 : f32 to vector<32x16xf32>
    %398 = arith.maximumf %393, %397 : vector<32x16xf32>
    %cst_270 = arith.constant 0.000000e+00 : f32
    %399 = vector.broadcast %cst_270 : f32 to vector<32x16xf32>
    %400 = arith.select %396, %398, %399 : vector<32x16xf32>
    %401 = arith.truncf %400 : vector<32x16xf32> to vector<32x16xbf16>
    %c352 = arith.constant 352 : index
    %c1_271 = arith.constant 1 : index
    %402 = vector.load %arg10[%c352, %c1_271] : memref<384x18xbf16, #tpu.memory_space<vmem>>, vector<32x16xbf16>
    tpu.vector_store %arg10[%c352, %c1_271], %401 {strides = array<i32>} : memref<384x18xbf16, #tpu.memory_space<vmem>>, vector<32x16xbf16>,
    %c1_i32_272 = arith.constant 1 : i32
    %403 = arith.subi %0, %c1_i32_272 : i32
    %c0_i32_273 = arith.constant 0 : i32
    %404 = arith.addi %403, %c0_i32_273 : i32
    %c0_274 = arith.constant 0 : index
    %c0_275 = arith.constant 0 : index
    %405 = vector.load %arg10[%c0_274, %c0_275] : memref<384x18xbf16, #tpu.memory_space<vmem>>, vector<96x18xbf16>
    %c0_276 = arith.constant 0 : index
    %c0_277 = arith.constant 0 : index
    %c0_278 = arith.constant 0 : index
    %406 = vector.load %arg4[%c0_276, %c0_277, %c0_278] : memref<3x32x96xbf16, #tpu.memory_space<vmem>>, vector<1x32x96xbf16>
    %407 = vector.shape_cast %406 : vector<1x32x96xbf16> to vector<32x96xbf16>
    %408 = vector.extract_strided_slice %405 {offsets = [0, 0], sizes = [96, 16], strides = [1, 1]} : vector<96x18xbf16> to vector<96x16xbf16>
    %cst_279 = arith.constant dense<0.000000e+00> : vector<32x16xf32>
    %409 = tpu.matmul %407, %408, %cst_279 {dimension_numbers = #tpu.dot_dimension_numbers<[1], [0], [0], [1], [0, 0, 1, 1], [], []>} : vector<32x96xbf16>, vector<96x16xbf16>, vector<32x16xf32> -> vector<32x16xf32>
    %c1_280 = arith.constant 1 : index
    %c0_281 = arith.constant 0 : index
    %c0_282 = arith.constant 0 : index
    %410 = vector.load %arg4[%c1_280, %c0_281, %c0_282] : memref<3x32x96xbf16, #tpu.memory_space<vmem>>, vector<1x32x96xbf16>
    %411 = vector.shape_cast %410 : vector<1x32x96xbf16> to vector<32x96xbf16>
    %412 = vector.extract_strided_slice %405 {offsets = [0, 1], sizes = [96, 16], strides = [1, 1]} : vector<96x18xbf16> to vector<96x16xbf16>
    %cst_283 = arith.constant dense<0.000000e+00> : vector<32x16xf32>
    %413 = tpu.matmul %411, %412, %cst_283 {dimension_numbers = #tpu.dot_dimension_numbers<[1], [0], [0], [1], [0, 0, 1, 1], [], []>} : vector<32x96xbf16>, vector<96x16xbf16>, vector<32x16xf32> -> vector<32x16xf32>
    %414 = arith.addf %409, %413 : vector<32x16xf32>
    %c2_284 = arith.constant 2 : index
    %c0_285 = arith.constant 0 : index
    %c0_286 = arith.constant 0 : index
    %415 = vector.load %arg4[%c2_284, %c0_285, %c0_286] : memref<3x32x96xbf16, #tpu.memory_space<vmem>>, vector<1x32x96xbf16>
    %416 = vector.shape_cast %415 : vector<1x32x96xbf16> to vector<32x96xbf16>
    %417 = vector.extract_strided_slice %405 {offsets = [0, 2], sizes = [96, 16], strides = [1, 1]} : vector<96x18xbf16> to vector<96x16xbf16>
    %cst_287 = arith.constant dense<0.000000e+00> : vector<32x16xf32>
    %418 = tpu.matmul %416, %417, %cst_287 {dimension_numbers = #tpu.dot_dimension_numbers<[1], [0], [0], [1], [0, 0, 1, 1], [], []>} : vector<32x96xbf16>, vector<96x16xbf16>, vector<32x16xf32> -> vector<32x16xf32>
    %419 = arith.addf %414, %418 : vector<32x16xf32>
    %c0_288 = arith.constant 0 : index
    %c0_289 = arith.constant 0 : index
    %420 = vector.load %arg7[%c0_288, %c0_289] : memref<32x1xf32, #tpu.memory_space<vmem>>, vector<32x1xf32>
    %421 = vector.broadcast %420 : vector<32x1xf32> to vector<32x16xf32>
    %422 = arith.addf %419, %421 : vector<32x16xf32>
    %c0_i32_290 = arith.constant 0 : i32
    %423 = arith.cmpi sge, %404, %c0_i32_290 : i32
    %c16_i32_291 = arith.constant 16 : i32
    %424 = arith.cmpi slt, %404, %c16_i32_291 : i32
    %425 = arith.andi %423, %424 : i1
    %cst_292 = arith.constant 0.000000e+00 : f32
    %426 = vector.broadcast %cst_292 : f32 to vector<32x16xf32>
    %427 = arith.maximumf %422, %426 : vector<32x16xf32>
    %cst_293 = arith.constant 0.000000e+00 : f32
    %428 = vector.broadcast %cst_293 : f32 to vector<32x16xf32>
    %429 = arith.select %425, %427, %428 : vector<32x16xf32>
    %430 = arith.truncf %429 : vector<32x16xf32> to vector<32x16xbf16>
    %c0_294 = arith.constant 0 : index
    %c1_295 = arith.constant 1 : index
    %431 = vector.load %arg11[%c0_294, %c1_295] : memref<320x18xbf16, #tpu.memory_space<vmem>>, vector<32x16xbf16>
    tpu.vector_store %arg11[%c0_294, %c1_295], %430 {strides = array<i32>} : memref<320x18xbf16, #tpu.memory_space<vmem>>, vector<32x16xbf16>,
    %c1_i32_296 = arith.constant 1 : i32
    %432 = arith.subi %0, %c1_i32_296 : i32
    %c1_i32_297 = arith.constant 1 : i32
    %433 = arith.addi %432, %c1_i32_297 : i32
    %c32_298 = arith.constant 32 : index
    %c0_299 = arith.constant 0 : index
    %434 = vector.load %arg10[%c32_298, %c0_299] : memref<384x18xbf16, #tpu.memory_space<vmem>>, vector<96x18xbf16>
    %c0_300 = arith.constant 0 : index
    %c0_301 = arith.constant 0 : index
    %c0_302 = arith.constant 0 : index
    %435 = vector.load %arg4[%c0_300, %c0_301, %c0_302] : memref<3x32x96xbf16, #tpu.memory_space<vmem>>, vector<1x32x96xbf16>
    %436 = vector.shape_cast %435 : vector<1x32x96xbf16> to vector<32x96xbf16>
    %437 = vector.extract_strided_slice %434 {offsets = [0, 0], sizes = [96, 16], strides = [1, 1]} : vector<96x18xbf16> to vector<96x16xbf16>
    %cst_303 = arith.constant dense<0.000000e+00> : vector<32x16xf32>
    %438 = tpu.matmul %436, %437, %cst_303 {dimension_numbers = #tpu.dot_dimension_numbers<[1], [0], [0], [1], [0, 0, 1, 1], [], []>} : vector<32x96xbf16>, vector<96x16xbf16>, vector<32x16xf32> -> vector<32x16xf32>
    %c1_304 = arith.constant 1 : index
    %c0_305 = arith.constant 0 : index
    %c0_306 = arith.constant 0 : index
    %439 = vector.load %arg4[%c1_304, %c0_305, %c0_306] : memref<3x32x96xbf16, #tpu.memory_space<vmem>>, vector<1x32x96xbf16>
    %440 = vector.shape_cast %439 : vector<1x32x96xbf16> to vector<32x96xbf16>
    %441 = vector.extract_strided_slice %434 {offsets = [0, 1], sizes = [96, 16], strides = [1, 1]} : vector<96x18xbf16> to vector<96x16xbf16>
    %cst_307 = arith.constant dense<0.000000e+00> : vector<32x16xf32>
    %442 = tpu.matmul %440, %441, %cst_307 {dimension_numbers = #tpu.dot_dimension_numbers<[1], [0], [0], [1], [0, 0, 1, 1], [], []>} : vector<32x96xbf16>, vector<96x16xbf16>, vector<32x16xf32> -> vector<32x16xf32>
    %443 = arith.addf %438, %442 : vector<32x16xf32>
    %c2_308 = arith.constant 2 : index
    %c0_309 = arith.constant 0 : index
    %c0_310 = arith.constant 0 : index
    %444 = vector.load %arg4[%c2_308, %c0_309, %c0_310] : memref<3x32x96xbf16, #tpu.memory_space<vmem>>, vector<1x32x96xbf16>
    %445 = vector.shape_cast %444 : vector<1x32x96xbf16> to vector<32x96xbf16>
    %446 = vector.extract_strided_slice %434 {offsets = [0, 2], sizes = [96, 16], strides = [1, 1]} : vector<96x18xbf16> to vector<96x16xbf16>
    %cst_311 = arith.constant dense<0.000000e+00> : vector<32x16xf32>
    %447 = tpu.matmul %445, %446, %cst_311 {dimension_numbers = #tpu.dot_dimension_numbers<[1], [0], [0], [1], [0, 0, 1, 1], [], []>} : vector<32x96xbf16>, vector<96x16xbf16>, vector<32x16xf32> -> vector<32x16xf32>
    %448 = arith.addf %443, %447 : vector<32x16xf32>
    %c0_312 = arith.constant 0 : index
    %c0_313 = arith.constant 0 : index
    %449 = vector.load %arg7[%c0_312, %c0_313] : memref<32x1xf32, #tpu.memory_space<vmem>>, vector<32x1xf32>
    %450 = vector.broadcast %449 : vector<32x1xf32> to vector<32x16xf32>
    %451 = arith.addf %448, %450 : vector<32x16xf32>
    %c0_i32_314 = arith.constant 0 : i32
    %452 = arith.cmpi sge, %433, %c0_i32_314 : i32
    %c16_i32_315 = arith.constant 16 : i32
    %453 = arith.cmpi slt, %433, %c16_i32_315 : i32
    %454 = arith.andi %452, %453 : i1
    %cst_316 = arith.constant 0.000000e+00 : f32
    %455 = vector.broadcast %cst_316 : f32 to vector<32x16xf32>
    %456 = arith.maximumf %451, %455 : vector<32x16xf32>
    %cst_317 = arith.constant 0.000000e+00 : f32
    %457 = vector.broadcast %cst_317 : f32 to vector<32x16xf32>
    %458 = arith.select %454, %456, %457 : vector<32x16xf32>
    %459 = arith.truncf %458 : vector<32x16xf32> to vector<32x16xbf16>
    %c32_318 = arith.constant 32 : index
    %c1_319 = arith.constant 1 : index
    %460 = vector.load %arg11[%c32_318, %c1_319] : memref<320x18xbf16, #tpu.memory_space<vmem>>, vector<32x16xbf16>
    tpu.vector_store %arg11[%c32_318, %c1_319], %459 {strides = array<i32>} : memref<320x18xbf16, #tpu.memory_space<vmem>>, vector<32x16xbf16>,
    %c1_i32_320 = arith.constant 1 : i32
    %461 = arith.subi %0, %c1_i32_320 : i32
    %c2_i32_321 = arith.constant 2 : i32
    %462 = arith.addi %461, %c2_i32_321 : i32
    %c64_322 = arith.constant 64 : index
    %c0_323 = arith.constant 0 : index
    %463 = vector.load %arg10[%c64_322, %c0_323] : memref<384x18xbf16, #tpu.memory_space<vmem>>, vector<96x18xbf16>
    %c0_324 = arith.constant 0 : index
    %c0_325 = arith.constant 0 : index
    %c0_326 = arith.constant 0 : index
    %464 = vector.load %arg4[%c0_324, %c0_325, %c0_326] : memref<3x32x96xbf16, #tpu.memory_space<vmem>>, vector<1x32x96xbf16>
    %465 = vector.shape_cast %464 : vector<1x32x96xbf16> to vector<32x96xbf16>
    %466 = vector.extract_strided_slice %463 {offsets = [0, 0], sizes = [96, 16], strides = [1, 1]} : vector<96x18xbf16> to vector<96x16xbf16>
    %cst_327 = arith.constant dense<0.000000e+00> : vector<32x16xf32>
    %467 = tpu.matmul %465, %466, %cst_327 {dimension_numbers = #tpu.dot_dimension_numbers<[1], [0], [0], [1], [0, 0, 1, 1], [], []>} : vector<32x96xbf16>, vector<96x16xbf16>, vector<32x16xf32> -> vector<32x16xf32>
    %c1_328 = arith.constant 1 : index
    %c0_329 = arith.constant 0 : index
    %c0_330 = arith.constant 0 : index
    %468 = vector.load %arg4[%c1_328, %c0_329, %c0_330] : memref<3x32x96xbf16, #tpu.memory_space<vmem>>, vector<1x32x96xbf16>
    %469 = vector.shape_cast %468 : vector<1x32x96xbf16> to vector<32x96xbf16>
    %470 = vector.extract_strided_slice %463 {offsets = [0, 1], sizes = [96, 16], strides = [1, 1]} : vector<96x18xbf16> to vector<96x16xbf16>
    %cst_331 = arith.constant dense<0.000000e+00> : vector<32x16xf32>
    %471 = tpu.matmul %469, %470, %cst_331 {dimension_numbers = #tpu.dot_dimension_numbers<[1], [0], [0], [1], [0, 0, 1, 1], [], []>} : vector<32x96xbf16>, vector<96x16xbf16>, vector<32x16xf32> -> vector<32x16xf32>
    %472 = arith.addf %467, %471 : vector<32x16xf32>
    %c2_332 = arith.constant 2 : index
    %c0_333 = arith.constant 0 : index
    %c0_334 = arith.constant 0 : index
    %473 = vector.load %arg4[%c2_332, %c0_333, %c0_334] : memref<3x32x96xbf16, #tpu.memory_space<vmem>>, vector<1x32x96xbf16>
    %474 = vector.shape_cast %473 : vector<1x32x96xbf16> to vector<32x96xbf16>
    %475 = vector.extract_strided_slice %463 {offsets = [0, 2], sizes = [96, 16], strides = [1, 1]} : vector<96x18xbf16> to vector<96x16xbf16>
    %cst_335 = arith.constant dense<0.000000e+00> : vector<32x16xf32>
    %476 = tpu.matmul %474, %475, %cst_335 {dimension_numbers = #tpu.dot_dimension_numbers<[1], [0], [0], [1], [0, 0, 1, 1], [], []>} : vector<32x96xbf16>, vector<96x16xbf16>, vector<32x16xf32> -> vector<32x16xf32>
    %477 = arith.addf %472, %476 : vector<32x16xf32>
    %c0_336 = arith.constant 0 : index
    %c0_337 = arith.constant 0 : index
    %478 = vector.load %arg7[%c0_336, %c0_337] : memref<32x1xf32, #tpu.memory_space<vmem>>, vector<32x1xf32>
    %479 = vector.broadcast %478 : vector<32x1xf32> to vector<32x16xf32>
    %480 = arith.addf %477, %479 : vector<32x16xf32>
    %c0_i32_338 = arith.constant 0 : i32
    %481 = arith.cmpi sge, %462, %c0_i32_338 : i32
    %c16_i32_339 = arith.constant 16 : i32
    %482 = arith.cmpi slt, %462, %c16_i32_339 : i32
    %483 = arith.andi %481, %482 : i1
    %cst_340 = arith.constant 0.000000e+00 : f32
    %484 = vector.broadcast %cst_340 : f32 to vector<32x16xf32>
    %485 = arith.maximumf %480, %484 : vector<32x16xf32>
    %cst_341 = arith.constant 0.000000e+00 : f32
    %486 = vector.broadcast %cst_341 : f32 to vector<32x16xf32>
    %487 = arith.select %483, %485, %486 : vector<32x16xf32>
    %488 = arith.truncf %487 : vector<32x16xf32> to vector<32x16xbf16>
    %c64_342 = arith.constant 64 : index
    %c1_343 = arith.constant 1 : index
    %489 = vector.load %arg11[%c64_342, %c1_343] : memref<320x18xbf16, #tpu.memory_space<vmem>>, vector<32x16xbf16>
    tpu.vector_store %arg11[%c64_342, %c1_343], %488 {strides = array<i32>} : memref<320x18xbf16, #tpu.memory_space<vmem>>, vector<32x16xbf16>,
    %c1_i32_344 = arith.constant 1 : i32
    %490 = arith.subi %0, %c1_i32_344 : i32
    %c3_i32_345 = arith.constant 3 : i32
    %491 = arith.addi %490, %c3_i32_345 : i32
    %c96_346 = arith.constant 96 : index
    %c0_347 = arith.constant 0 : index
    %492 = vector.load %arg10[%c96_346, %c0_347] : memref<384x18xbf16, #tpu.memory_space<vmem>>, vector<96x18xbf16>
    %c0_348 = arith.constant 0 : index
    %c0_349 = arith.constant 0 : index
    %c0_350 = arith.constant 0 : index
    %493 = vector.load %arg4[%c0_348, %c0_349, %c0_350] : memref<3x32x96xbf16, #tpu.memory_space<vmem>>, vector<1x32x96xbf16>
    %494 = vector.shape_cast %493 : vector<1x32x96xbf16> to vector<32x96xbf16>
    %495 = vector.extract_strided_slice %492 {offsets = [0, 0], sizes = [96, 16], strides = [1, 1]} : vector<96x18xbf16> to vector<96x16xbf16>
    %cst_351 = arith.constant dense<0.000000e+00> : vector<32x16xf32>
    %496 = tpu.matmul %494, %495, %cst_351 {dimension_numbers = #tpu.dot_dimension_numbers<[1], [0], [0], [1], [0, 0, 1, 1], [], []>} : vector<32x96xbf16>, vector<96x16xbf16>, vector<32x16xf32> -> vector<32x16xf32>
    %c1_352 = arith.constant 1 : index
    %c0_353 = arith.constant 0 : index
    %c0_354 = arith.constant 0 : index
    %497 = vector.load %arg4[%c1_352, %c0_353, %c0_354] : memref<3x32x96xbf16, #tpu.memory_space<vmem>>, vector<1x32x96xbf16>
    %498 = vector.shape_cast %497 : vector<1x32x96xbf16> to vector<32x96xbf16>
    %499 = vector.extract_strided_slice %492 {offsets = [0, 1], sizes = [96, 16], strides = [1, 1]} : vector<96x18xbf16> to vector<96x16xbf16>
    %cst_355 = arith.constant dense<0.000000e+00> : vector<32x16xf32>
    %500 = tpu.matmul %498, %499, %cst_355 {dimension_numbers = #tpu.dot_dimension_numbers<[1], [0], [0], [1], [0, 0, 1, 1], [], []>} : vector<32x96xbf16>, vector<96x16xbf16>, vector<32x16xf32> -> vector<32x16xf32>
    %501 = arith.addf %496, %500 : vector<32x16xf32>
    %c2_356 = arith.constant 2 : index
    %c0_357 = arith.constant 0 : index
    %c0_358 = arith.constant 0 : index
    %502 = vector.load %arg4[%c2_356, %c0_357, %c0_358] : memref<3x32x96xbf16, #tpu.memory_space<vmem>>, vector<1x32x96xbf16>
    %503 = vector.shape_cast %502 : vector<1x32x96xbf16> to vector<32x96xbf16>
    %504 = vector.extract_strided_slice %492 {offsets = [0, 2], sizes = [96, 16], strides = [1, 1]} : vector<96x18xbf16> to vector<96x16xbf16>
    %cst_359 = arith.constant dense<0.000000e+00> : vector<32x16xf32>
    %505 = tpu.matmul %503, %504, %cst_359 {dimension_numbers = #tpu.dot_dimension_numbers<[1], [0], [0], [1], [0, 0, 1, 1], [], []>} : vector<32x96xbf16>, vector<96x16xbf16>, vector<32x16xf32> -> vector<32x16xf32>
    %506 = arith.addf %501, %505 : vector<32x16xf32>
    %c0_360 = arith.constant 0 : index
    %c0_361 = arith.constant 0 : index
    %507 = vector.load %arg7[%c0_360, %c0_361] : memref<32x1xf32, #tpu.memory_space<vmem>>, vector<32x1xf32>
    %508 = vector.broadcast %507 : vector<32x1xf32> to vector<32x16xf32>
    %509 = arith.addf %506, %508 : vector<32x16xf32>
    %c0_i32_362 = arith.constant 0 : i32
    %510 = arith.cmpi sge, %491, %c0_i32_362 : i32
    %c16_i32_363 = arith.constant 16 : i32
    %511 = arith.cmpi slt, %491, %c16_i32_363 : i32
    %512 = arith.andi %510, %511 : i1
    %cst_364 = arith.constant 0.000000e+00 : f32
    %513 = vector.broadcast %cst_364 : f32 to vector<32x16xf32>
    %514 = arith.maximumf %509, %513 : vector<32x16xf32>
    %cst_365 = arith.constant 0.000000e+00 : f32
    %515 = vector.broadcast %cst_365 : f32 to vector<32x16xf32>
    %516 = arith.select %512, %514, %515 : vector<32x16xf32>
    %517 = arith.truncf %516 : vector<32x16xf32> to vector<32x16xbf16>
    %c96_366 = arith.constant 96 : index
    %c1_367 = arith.constant 1 : index
    %518 = vector.load %arg11[%c96_366, %c1_367] : memref<320x18xbf16, #tpu.memory_space<vmem>>, vector<32x16xbf16>
    tpu.vector_store %arg11[%c96_366, %c1_367], %517 {strides = array<i32>} : memref<320x18xbf16, #tpu.memory_space<vmem>>, vector<32x16xbf16>,
    %c1_i32_368 = arith.constant 1 : i32
    %519 = arith.subi %0, %c1_i32_368 : i32
    %c4_i32_369 = arith.constant 4 : i32
    %520 = arith.addi %519, %c4_i32_369 : i32
    %c128_370 = arith.constant 128 : index
    %c0_371 = arith.constant 0 : index
    %521 = vector.load %arg10[%c128_370, %c0_371] : memref<384x18xbf16, #tpu.memory_space<vmem>>, vector<96x18xbf16>
    %c0_372 = arith.constant 0 : index
    %c0_373 = arith.constant 0 : index
    %c0_374 = arith.constant 0 : index
    %522 = vector.load %arg4[%c0_372, %c0_373, %c0_374] : memref<3x32x96xbf16, #tpu.memory_space<vmem>>, vector<1x32x96xbf16>
    %523 = vector.shape_cast %522 : vector<1x32x96xbf16> to vector<32x96xbf16>
    %524 = vector.extract_strided_slice %521 {offsets = [0, 0], sizes = [96, 16], strides = [1, 1]} : vector<96x18xbf16> to vector<96x16xbf16>
    %cst_375 = arith.constant dense<0.000000e+00> : vector<32x16xf32>
    %525 = tpu.matmul %523, %524, %cst_375 {dimension_numbers = #tpu.dot_dimension_numbers<[1], [0], [0], [1], [0, 0, 1, 1], [], []>} : vector<32x96xbf16>, vector<96x16xbf16>, vector<32x16xf32> -> vector<32x16xf32>
    %c1_376 = arith.constant 1 : index
    %c0_377 = arith.constant 0 : index
    %c0_378 = arith.constant 0 : index
    %526 = vector.load %arg4[%c1_376, %c0_377, %c0_378] : memref<3x32x96xbf16, #tpu.memory_space<vmem>>, vector<1x32x96xbf16>
    %527 = vector.shape_cast %526 : vector<1x32x96xbf16> to vector<32x96xbf16>
    %528 = vector.extract_strided_slice %521 {offsets = [0, 1], sizes = [96, 16], strides = [1, 1]} : vector<96x18xbf16> to vector<96x16xbf16>
    %cst_379 = arith.constant dense<0.000000e+00> : vector<32x16xf32>
    %529 = tpu.matmul %527, %528, %cst_379 {dimension_numbers = #tpu.dot_dimension_numbers<[1], [0], [0], [1], [0, 0, 1, 1], [], []>} : vector<32x96xbf16>, vector<96x16xbf16>, vector<32x16xf32> -> vector<32x16xf32>
    %530 = arith.addf %525, %529 : vector<32x16xf32>
    %c2_380 = arith.constant 2 : index
    %c0_381 = arith.constant 0 : index
    %c0_382 = arith.constant 0 : index
    %531 = vector.load %arg4[%c2_380, %c0_381, %c0_382] : memref<3x32x96xbf16, #tpu.memory_space<vmem>>, vector<1x32x96xbf16>
    %532 = vector.shape_cast %531 : vector<1x32x96xbf16> to vector<32x96xbf16>
    %533 = vector.extract_strided_slice %521 {offsets = [0, 2], sizes = [96, 16], strides = [1, 1]} : vector<96x18xbf16> to vector<96x16xbf16>
    %cst_383 = arith.constant dense<0.000000e+00> : vector<32x16xf32>
    %534 = tpu.matmul %532, %533, %cst_383 {dimension_numbers = #tpu.dot_dimension_numbers<[1], [0], [0], [1], [0, 0, 1, 1], [], []>} : vector<32x96xbf16>, vector<96x16xbf16>, vector<32x16xf32> -> vector<32x16xf32>
    %535 = arith.addf %530, %534 : vector<32x16xf32>
    %c0_384 = arith.constant 0 : index
    %c0_385 = arith.constant 0 : index
    %536 = vector.load %arg7[%c0_384, %c0_385] : memref<32x1xf32, #tpu.memory_space<vmem>>, vector<32x1xf32>
    %537 = vector.broadcast %536 : vector<32x1xf32> to vector<32x16xf32>
    %538 = arith.addf %535, %537 : vector<32x16xf32>
    %c0_i32_386 = arith.constant 0 : i32
    %539 = arith.cmpi sge, %520, %c0_i32_386 : i32
    %c16_i32_387 = arith.constant 16 : i32
    %540 = arith.cmpi slt, %520, %c16_i32_387 : i32
    %541 = arith.andi %539, %540 : i1
    %cst_388 = arith.constant 0.000000e+00 : f32
    %542 = vector.broadcast %cst_388 : f32 to vector<32x16xf32>
    %543 = arith.maximumf %538, %542 : vector<32x16xf32>
    %cst_389 = arith.constant 0.000000e+00 : f32
    %544 = vector.broadcast %cst_389 : f32 to vector<32x16xf32>
    %545 = arith.select %541, %543, %544 : vector<32x16xf32>
    %546 = arith.truncf %545 : vector<32x16xf32> to vector<32x16xbf16>
    %c128_390 = arith.constant 128 : index
    %c1_391 = arith.constant 1 : index
    %547 = vector.load %arg11[%c128_390, %c1_391] : memref<320x18xbf16, #tpu.memory_space<vmem>>, vector<32x16xbf16>
    tpu.vector_store %arg11[%c128_390, %c1_391], %546 {strides = array<i32>} : memref<320x18xbf16, #tpu.memory_space<vmem>>, vector<32x16xbf16>,
    %c1_i32_392 = arith.constant 1 : i32
    %548 = arith.subi %0, %c1_i32_392 : i32
    %c5_i32_393 = arith.constant 5 : i32
    %549 = arith.addi %548, %c5_i32_393 : i32
    %c160_394 = arith.constant 160 : index
    %c0_395 = arith.constant 0 : index
    %550 = vector.load %arg10[%c160_394, %c0_395] : memref<384x18xbf16, #tpu.memory_space<vmem>>, vector<96x18xbf16>
    %c0_396 = arith.constant 0 : index
    %c0_397 = arith.constant 0 : index
    %c0_398 = arith.constant 0 : index
    %551 = vector.load %arg4[%c0_396, %c0_397, %c0_398] : memref<3x32x96xbf16, #tpu.memory_space<vmem>>, vector<1x32x96xbf16>
    %552 = vector.shape_cast %551 : vector<1x32x96xbf16> to vector<32x96xbf16>
    %553 = vector.extract_strided_slice %550 {offsets = [0, 0], sizes = [96, 16], strides = [1, 1]} : vector<96x18xbf16> to vector<96x16xbf16>
    %cst_399 = arith.constant dense<0.000000e+00> : vector<32x16xf32>
    %554 = tpu.matmul %552, %553, %cst_399 {dimension_numbers = #tpu.dot_dimension_numbers<[1], [0], [0], [1], [0, 0, 1, 1], [], []>} : vector<32x96xbf16>, vector<96x16xbf16>, vector<32x16xf32> -> vector<32x16xf32>
    %c1_400 = arith.constant 1 : index
    %c0_401 = arith.constant 0 : index
    %c0_402 = arith.constant 0 : index
    %555 = vector.load %arg4[%c1_400, %c0_401, %c0_402] : memref<3x32x96xbf16, #tpu.memory_space<vmem>>, vector<1x32x96xbf16>
    %556 = vector.shape_cast %555 : vector<1x32x96xbf16> to vector<32x96xbf16>
    %557 = vector.extract_strided_slice %550 {offsets = [0, 1], sizes = [96, 16], strides = [1, 1]} : vector<96x18xbf16> to vector<96x16xbf16>
    %cst_403 = arith.constant dense<0.000000e+00> : vector<32x16xf32>
    %558 = tpu.matmul %556, %557, %cst_403 {dimension_numbers = #tpu.dot_dimension_numbers<[1], [0], [0], [1], [0, 0, 1, 1], [], []>} : vector<32x96xbf16>, vector<96x16xbf16>, vector<32x16xf32> -> vector<32x16xf32>
    %559 = arith.addf %554, %558 : vector<32x16xf32>
    %c2_404 = arith.constant 2 : index
    %c0_405 = arith.constant 0 : index
    %c0_406 = arith.constant 0 : index
    %560 = vector.load %arg4[%c2_404, %c0_405, %c0_406] : memref<3x32x96xbf16, #tpu.memory_space<vmem>>, vector<1x32x96xbf16>
    %561 = vector.shape_cast %560 : vector<1x32x96xbf16> to vector<32x96xbf16>
    %562 = vector.extract_strided_slice %550 {offsets = [0, 2], sizes = [96, 16], strides = [1, 1]} : vector<96x18xbf16> to vector<96x16xbf16>
    %cst_407 = arith.constant dense<0.000000e+00> : vector<32x16xf32>
    %563 = tpu.matmul %561, %562, %cst_407 {dimension_numbers = #tpu.dot_dimension_numbers<[1], [0], [0], [1], [0, 0, 1, 1], [], []>} : vector<32x96xbf16>, vector<96x16xbf16>, vector<32x16xf32> -> vector<32x16xf32>
    %564 = arith.addf %559, %563 : vector<32x16xf32>
    %c0_408 = arith.constant 0 : index
    %c0_409 = arith.constant 0 : index
    %565 = vector.load %arg7[%c0_408, %c0_409] : memref<32x1xf32, #tpu.memory_space<vmem>>, vector<32x1xf32>
    %566 = vector.broadcast %565 : vector<32x1xf32> to vector<32x16xf32>
    %567 = arith.addf %564, %566 : vector<32x16xf32>
    %c0_i32_410 = arith.constant 0 : i32
    %568 = arith.cmpi sge, %549, %c0_i32_410 : i32
    %c16_i32_411 = arith.constant 16 : i32
    %569 = arith.cmpi slt, %549, %c16_i32_411 : i32
    %570 = arith.andi %568, %569 : i1
    %cst_412 = arith.constant 0.000000e+00 : f32
    %571 = vector.broadcast %cst_412 : f32 to vector<32x16xf32>
    %572 = arith.maximumf %567, %571 : vector<32x16xf32>
    %cst_413 = arith.constant 0.000000e+00 : f32
    %573 = vector.broadcast %cst_413 : f32 to vector<32x16xf32>
    %574 = arith.select %570, %572, %573 : vector<32x16xf32>
    %575 = arith.truncf %574 : vector<32x16xf32> to vector<32x16xbf16>
    %c160_414 = arith.constant 160 : index
    %c1_415 = arith.constant 1 : index
    %576 = vector.load %arg11[%c160_414, %c1_415] : memref<320x18xbf16, #tpu.memory_space<vmem>>, vector<32x16xbf16>
    tpu.vector_store %arg11[%c160_414, %c1_415], %575 {strides = array<i32>} : memref<320x18xbf16, #tpu.memory_space<vmem>>, vector<32x16xbf16>,
    %c1_i32_416 = arith.constant 1 : i32
    %577 = arith.subi %0, %c1_i32_416 : i32
    %c6_i32_417 = arith.constant 6 : i32
    %578 = arith.addi %577, %c6_i32_417 : i32
    %c192_418 = arith.constant 192 : index
    %c0_419 = arith.constant 0 : index
    %579 = vector.load %arg10[%c192_418, %c0_419] : memref<384x18xbf16, #tpu.memory_space<vmem>>, vector<96x18xbf16>
    %c0_420 = arith.constant 0 : index
    %c0_421 = arith.constant 0 : index
    %c0_422 = arith.constant 0 : index
    %580 = vector.load %arg4[%c0_420, %c0_421, %c0_422] : memref<3x32x96xbf16, #tpu.memory_space<vmem>>, vector<1x32x96xbf16>
    %581 = vector.shape_cast %580 : vector<1x32x96xbf16> to vector<32x96xbf16>
    %582 = vector.extract_strided_slice %579 {offsets = [0, 0], sizes = [96, 16], strides = [1, 1]} : vector<96x18xbf16> to vector<96x16xbf16>
    %cst_423 = arith.constant dense<0.000000e+00> : vector<32x16xf32>
    %583 = tpu.matmul %581, %582, %cst_423 {dimension_numbers = #tpu.dot_dimension_numbers<[1], [0], [0], [1], [0, 0, 1, 1], [], []>} : vector<32x96xbf16>, vector<96x16xbf16>, vector<32x16xf32> -> vector<32x16xf32>
    %c1_424 = arith.constant 1 : index
    %c0_425 = arith.constant 0 : index
    %c0_426 = arith.constant 0 : index
    %584 = vector.load %arg4[%c1_424, %c0_425, %c0_426] : memref<3x32x96xbf16, #tpu.memory_space<vmem>>, vector<1x32x96xbf16>
    %585 = vector.shape_cast %584 : vector<1x32x96xbf16> to vector<32x96xbf16>
    %586 = vector.extract_strided_slice %579 {offsets = [0, 1], sizes = [96, 16], strides = [1, 1]} : vector<96x18xbf16> to vector<96x16xbf16>
    %cst_427 = arith.constant dense<0.000000e+00> : vector<32x16xf32>
    %587 = tpu.matmul %585, %586, %cst_427 {dimension_numbers = #tpu.dot_dimension_numbers<[1], [0], [0], [1], [0, 0, 1, 1], [], []>} : vector<32x96xbf16>, vector<96x16xbf16>, vector<32x16xf32> -> vector<32x16xf32>
    %588 = arith.addf %583, %587 : vector<32x16xf32>
    %c2_428 = arith.constant 2 : index
    %c0_429 = arith.constant 0 : index
    %c0_430 = arith.constant 0 : index
    %589 = vector.load %arg4[%c2_428, %c0_429, %c0_430] : memref<3x32x96xbf16, #tpu.memory_space<vmem>>, vector<1x32x96xbf16>
    %590 = vector.shape_cast %589 : vector<1x32x96xbf16> to vector<32x96xbf16>
    %591 = vector.extract_strided_slice %579 {offsets = [0, 2], sizes = [96, 16], strides = [1, 1]} : vector<96x18xbf16> to vector<96x16xbf16>
    %cst_431 = arith.constant dense<0.000000e+00> : vector<32x16xf32>
    %592 = tpu.matmul %590, %591, %cst_431 {dimension_numbers = #tpu.dot_dimension_numbers<[1], [0], [0], [1], [0, 0, 1, 1], [], []>} : vector<32x96xbf16>, vector<96x16xbf16>, vector<32x16xf32> -> vector<32x16xf32>
    %593 = arith.addf %588, %592 : vector<32x16xf32>
    %c0_432 = arith.constant 0 : index
    %c0_433 = arith.constant 0 : index
    %594 = vector.load %arg7[%c0_432, %c0_433] : memref<32x1xf32, #tpu.memory_space<vmem>>, vector<32x1xf32>
    %595 = vector.broadcast %594 : vector<32x1xf32> to vector<32x16xf32>
    %596 = arith.addf %593, %595 : vector<32x16xf32>
    %c0_i32_434 = arith.constant 0 : i32
    %597 = arith.cmpi sge, %578, %c0_i32_434 : i32
    %c16_i32_435 = arith.constant 16 : i32
    %598 = arith.cmpi slt, %578, %c16_i32_435 : i32
    %599 = arith.andi %597, %598 : i1
    %cst_436 = arith.constant 0.000000e+00 : f32
    %600 = vector.broadcast %cst_436 : f32 to vector<32x16xf32>
    %601 = arith.maximumf %596, %600 : vector<32x16xf32>
    %cst_437 = arith.constant 0.000000e+00 : f32
    %602 = vector.broadcast %cst_437 : f32 to vector<32x16xf32>
    %603 = arith.select %599, %601, %602 : vector<32x16xf32>
    %604 = arith.truncf %603 : vector<32x16xf32> to vector<32x16xbf16>
    %c192_438 = arith.constant 192 : index
    %c1_439 = arith.constant 1 : index
    %605 = vector.load %arg11[%c192_438, %c1_439] : memref<320x18xbf16, #tpu.memory_space<vmem>>, vector<32x16xbf16>
    tpu.vector_store %arg11[%c192_438, %c1_439], %604 {strides = array<i32>} : memref<320x18xbf16, #tpu.memory_space<vmem>>, vector<32x16xbf16>,
    %c1_i32_440 = arith.constant 1 : i32
    %606 = arith.subi %0, %c1_i32_440 : i32
    %c7_i32_441 = arith.constant 7 : i32
    %607 = arith.addi %606, %c7_i32_441 : i32
    %c224_442 = arith.constant 224 : index
    %c0_443 = arith.constant 0 : index
    %608 = vector.load %arg10[%c224_442, %c0_443] : memref<384x18xbf16, #tpu.memory_space<vmem>>, vector<96x18xbf16>
    %c0_444 = arith.constant 0 : index
    %c0_445 = arith.constant 0 : index
    %c0_446 = arith.constant 0 : index
    %609 = vector.load %arg4[%c0_444, %c0_445, %c0_446] : memref<3x32x96xbf16, #tpu.memory_space<vmem>>, vector<1x32x96xbf16>
    %610 = vector.shape_cast %609 : vector<1x32x96xbf16> to vector<32x96xbf16>
    %611 = vector.extract_strided_slice %608 {offsets = [0, 0], sizes = [96, 16], strides = [1, 1]} : vector<96x18xbf16> to vector<96x16xbf16>
    %cst_447 = arith.constant dense<0.000000e+00> : vector<32x16xf32>
    %612 = tpu.matmul %610, %611, %cst_447 {dimension_numbers = #tpu.dot_dimension_numbers<[1], [0], [0], [1], [0, 0, 1, 1], [], []>} : vector<32x96xbf16>, vector<96x16xbf16>, vector<32x16xf32> -> vector<32x16xf32>
    %c1_448 = arith.constant 1 : index
    %c0_449 = arith.constant 0 : index
    %c0_450 = arith.constant 0 : index
    %613 = vector.load %arg4[%c1_448, %c0_449, %c0_450] : memref<3x32x96xbf16, #tpu.memory_space<vmem>>, vector<1x32x96xbf16>
    %614 = vector.shape_cast %613 : vector<1x32x96xbf16> to vector<32x96xbf16>
    %615 = vector.extract_strided_slice %608 {offsets = [0, 1], sizes = [96, 16], strides = [1, 1]} : vector<96x18xbf16> to vector<96x16xbf16>
    %cst_451 = arith.constant dense<0.000000e+00> : vector<32x16xf32>
    %616 = tpu.matmul %614, %615, %cst_451 {dimension_numbers = #tpu.dot_dimension_numbers<[1], [0], [0], [1], [0, 0, 1, 1], [], []>} : vector<32x96xbf16>, vector<96x16xbf16>, vector<32x16xf32> -> vector<32x16xf32>
    %617 = arith.addf %612, %616 : vector<32x16xf32>
    %c2_452 = arith.constant 2 : index
    %c0_453 = arith.constant 0 : index
    %c0_454 = arith.constant 0 : index
    %618 = vector.load %arg4[%c2_452, %c0_453, %c0_454] : memref<3x32x96xbf16, #tpu.memory_space<vmem>>, vector<1x32x96xbf16>
    %619 = vector.shape_cast %618 : vector<1x32x96xbf16> to vector<32x96xbf16>
    %620 = vector.extract_strided_slice %608 {offsets = [0, 2], sizes = [96, 16], strides = [1, 1]} : vector<96x18xbf16> to vector<96x16xbf16>
    %cst_455 = arith.constant dense<0.000000e+00> : vector<32x16xf32>
    %621 = tpu.matmul %619, %620, %cst_455 {dimension_numbers = #tpu.dot_dimension_numbers<[1], [0], [0], [1], [0, 0, 1, 1], [], []>} : vector<32x96xbf16>, vector<96x16xbf16>, vector<32x16xf32> -> vector<32x16xf32>
    %622 = arith.addf %617, %621 : vector<32x16xf32>
    %c0_456 = arith.constant 0 : index
    %c0_457 = arith.constant 0 : index
    %623 = vector.load %arg7[%c0_456, %c0_457] : memref<32x1xf32, #tpu.memory_space<vmem>>, vector<32x1xf32>
    %624 = vector.broadcast %623 : vector<32x1xf32> to vector<32x16xf32>
    %625 = arith.addf %622, %624 : vector<32x16xf32>
    %c0_i32_458 = arith.constant 0 : i32
    %626 = arith.cmpi sge, %607, %c0_i32_458 : i32
    %c16_i32_459 = arith.constant 16 : i32
    %627 = arith.cmpi slt, %607, %c16_i32_459 : i32
    %628 = arith.andi %626, %627 : i1
    %cst_460 = arith.constant 0.000000e+00 : f32
    %629 = vector.broadcast %cst_460 : f32 to vector<32x16xf32>
    %630 = arith.maximumf %625, %629 : vector<32x16xf32>
    %cst_461 = arith.constant 0.000000e+00 : f32
    %631 = vector.broadcast %cst_461 : f32 to vector<32x16xf32>
    %632 = arith.select %628, %630, %631 : vector<32x16xf32>
    %633 = arith.truncf %632 : vector<32x16xf32> to vector<32x16xbf16>
    %c224_462 = arith.constant 224 : index
    %c1_463 = arith.constant 1 : index
    %634 = vector.load %arg11[%c224_462, %c1_463] : memref<320x18xbf16, #tpu.memory_space<vmem>>, vector<32x16xbf16>
    tpu.vector_store %arg11[%c224_462, %c1_463], %633 {strides = array<i32>} : memref<320x18xbf16, #tpu.memory_space<vmem>>, vector<32x16xbf16>,
    %c1_i32_464 = arith.constant 1 : i32
    %635 = arith.subi %0, %c1_i32_464 : i32
    %c8_i32_465 = arith.constant 8 : i32
    %636 = arith.addi %635, %c8_i32_465 : i32
    %c256_466 = arith.constant 256 : index
    %c0_467 = arith.constant 0 : index
    %637 = vector.load %arg10[%c256_466, %c0_467] : memref<384x18xbf16, #tpu.memory_space<vmem>>, vector<96x18xbf16>
    %c0_468 = arith.constant 0 : index
    %c0_469 = arith.constant 0 : index
    %c0_470 = arith.constant 0 : index
    %638 = vector.load %arg4[%c0_468, %c0_469, %c0_470] : memref<3x32x96xbf16, #tpu.memory_space<vmem>>, vector<1x32x96xbf16>
    %639 = vector.shape_cast %638 : vector<1x32x96xbf16> to vector<32x96xbf16>
    %640 = vector.extract_strided_slice %637 {offsets = [0, 0], sizes = [96, 16], strides = [1, 1]} : vector<96x18xbf16> to vector<96x16xbf16>
    %cst_471 = arith.constant dense<0.000000e+00> : vector<32x16xf32>
    %641 = tpu.matmul %639, %640, %cst_471 {dimension_numbers = #tpu.dot_dimension_numbers<[1], [0], [0], [1], [0, 0, 1, 1], [], []>} : vector<32x96xbf16>, vector<96x16xbf16>, vector<32x16xf32> -> vector<32x16xf32>
    %c1_472 = arith.constant 1 : index
    %c0_473 = arith.constant 0 : index
    %c0_474 = arith.constant 0 : index
    %642 = vector.load %arg4[%c1_472, %c0_473, %c0_474] : memref<3x32x96xbf16, #tpu.memory_space<vmem>>, vector<1x32x96xbf16>
    %643 = vector.shape_cast %642 : vector<1x32x96xbf16> to vector<32x96xbf16>
    %644 = vector.extract_strided_slice %637 {offsets = [0, 1], sizes = [96, 16], strides = [1, 1]} : vector<96x18xbf16> to vector<96x16xbf16>
    %cst_475 = arith.constant dense<0.000000e+00> : vector<32x16xf32>
    %645 = tpu.matmul %643, %644, %cst_475 {dimension_numbers = #tpu.dot_dimension_numbers<[1], [0], [0], [1], [0, 0, 1, 1], [], []>} : vector<32x96xbf16>, vector<96x16xbf16>, vector<32x16xf32> -> vector<32x16xf32>
    %646 = arith.addf %641, %645 : vector<32x16xf32>
    %c2_476 = arith.constant 2 : index
    %c0_477 = arith.constant 0 : index
    %c0_478 = arith.constant 0 : index
    %647 = vector.load %arg4[%c2_476, %c0_477, %c0_478] : memref<3x32x96xbf16, #tpu.memory_space<vmem>>, vector<1x32x96xbf16>
    %648 = vector.shape_cast %647 : vector<1x32x96xbf16> to vector<32x96xbf16>
    %649 = vector.extract_strided_slice %637 {offsets = [0, 2], sizes = [96, 16], strides = [1, 1]} : vector<96x18xbf16> to vector<96x16xbf16>
    %cst_479 = arith.constant dense<0.000000e+00> : vector<32x16xf32>
    %650 = tpu.matmul %648, %649, %cst_479 {dimension_numbers = #tpu.dot_dimension_numbers<[1], [0], [0], [1], [0, 0, 1, 1], [], []>} : vector<32x96xbf16>, vector<96x16xbf16>, vector<32x16xf32> -> vector<32x16xf32>
    %651 = arith.addf %646, %650 : vector<32x16xf32>
    %c0_480 = arith.constant 0 : index
    %c0_481 = arith.constant 0 : index
    %652 = vector.load %arg7[%c0_480, %c0_481] : memref<32x1xf32, #tpu.memory_space<vmem>>, vector<32x1xf32>
    %653 = vector.broadcast %652 : vector<32x1xf32> to vector<32x16xf32>
    %654 = arith.addf %651, %653 : vector<32x16xf32>
    %c0_i32_482 = arith.constant 0 : i32
    %655 = arith.cmpi sge, %636, %c0_i32_482 : i32
    %c16_i32_483 = arith.constant 16 : i32
    %656 = arith.cmpi slt, %636, %c16_i32_483 : i32
    %657 = arith.andi %655, %656 : i1
    %cst_484 = arith.constant 0.000000e+00 : f32
    %658 = vector.broadcast %cst_484 : f32 to vector<32x16xf32>
    %659 = arith.maximumf %654, %658 : vector<32x16xf32>
    %cst_485 = arith.constant 0.000000e+00 : f32
    %660 = vector.broadcast %cst_485 : f32 to vector<32x16xf32>
    %661 = arith.select %657, %659, %660 : vector<32x16xf32>
    %662 = arith.truncf %661 : vector<32x16xf32> to vector<32x16xbf16>
    %c256_486 = arith.constant 256 : index
    %c1_487 = arith.constant 1 : index
    %663 = vector.load %arg11[%c256_486, %c1_487] : memref<320x18xbf16, #tpu.memory_space<vmem>>, vector<32x16xbf16>
    tpu.vector_store %arg11[%c256_486, %c1_487], %662 {strides = array<i32>} : memref<320x18xbf16, #tpu.memory_space<vmem>>, vector<32x16xbf16>,
    %c1_i32_488 = arith.constant 1 : i32
    %664 = arith.subi %0, %c1_i32_488 : i32
    %c9_i32_489 = arith.constant 9 : i32
    %665 = arith.addi %664, %c9_i32_489 : i32
    %c288_490 = arith.constant 288 : index
    %c0_491 = arith.constant 0 : index
    %666 = vector.load %arg10[%c288_490, %c0_491] : memref<384x18xbf16, #tpu.memory_space<vmem>>, vector<96x18xbf16>
    %c0_492 = arith.constant 0 : index
    %c0_493 = arith.constant 0 : index
    %c0_494 = arith.constant 0 : index
    %667 = vector.load %arg4[%c0_492, %c0_493, %c0_494] : memref<3x32x96xbf16, #tpu.memory_space<vmem>>, vector<1x32x96xbf16>
    %668 = vector.shape_cast %667 : vector<1x32x96xbf16> to vector<32x96xbf16>
    %669 = vector.extract_strided_slice %666 {offsets = [0, 0], sizes = [96, 16], strides = [1, 1]} : vector<96x18xbf16> to vector<96x16xbf16>
    %cst_495 = arith.constant dense<0.000000e+00> : vector<32x16xf32>
    %670 = tpu.matmul %668, %669, %cst_495 {dimension_numbers = #tpu.dot_dimension_numbers<[1], [0], [0], [1], [0, 0, 1, 1], [], []>} : vector<32x96xbf16>, vector<96x16xbf16>, vector<32x16xf32> -> vector<32x16xf32>
    %c1_496 = arith.constant 1 : index
    %c0_497 = arith.constant 0 : index
    %c0_498 = arith.constant 0 : index
    %671 = vector.load %arg4[%c1_496, %c0_497, %c0_498] : memref<3x32x96xbf16, #tpu.memory_space<vmem>>, vector<1x32x96xbf16>
    %672 = vector.shape_cast %671 : vector<1x32x96xbf16> to vector<32x96xbf16>
    %673 = vector.extract_strided_slice %666 {offsets = [0, 1], sizes = [96, 16], strides = [1, 1]} : vector<96x18xbf16> to vector<96x16xbf16>
    %cst_499 = arith.constant dense<0.000000e+00> : vector<32x16xf32>
    %674 = tpu.matmul %672, %673, %cst_499 {dimension_numbers = #tpu.dot_dimension_numbers<[1], [0], [0], [1], [0, 0, 1, 1], [], []>} : vector<32x96xbf16>, vector<96x16xbf16>, vector<32x16xf32> -> vector<32x16xf32>
    %675 = arith.addf %670, %674 : vector<32x16xf32>
    %c2_500 = arith.constant 2 : index
    %c0_501 = arith.constant 0 : index
    %c0_502 = arith.constant 0 : index
    %676 = vector.load %arg4[%c2_500, %c0_501, %c0_502] : memref<3x32x96xbf16, #tpu.memory_space<vmem>>, vector<1x32x96xbf16>
    %677 = vector.shape_cast %676 : vector<1x32x96xbf16> to vector<32x96xbf16>
    %678 = vector.extract_strided_slice %666 {offsets = [0, 2], sizes = [96, 16], strides = [1, 1]} : vector<96x18xbf16> to vector<96x16xbf16>
    %cst_503 = arith.constant dense<0.000000e+00> : vector<32x16xf32>
    %679 = tpu.matmul %677, %678, %cst_503 {dimension_numbers = #tpu.dot_dimension_numbers<[1], [0], [0], [1], [0, 0, 1, 1], [], []>} : vector<32x96xbf16>, vector<96x16xbf16>, vector<32x16xf32> -> vector<32x16xf32>
    %680 = arith.addf %675, %679 : vector<32x16xf32>
    %c0_504 = arith.constant 0 : index
    %c0_505 = arith.constant 0 : index
    %681 = vector.load %arg7[%c0_504, %c0_505] : memref<32x1xf32, #tpu.memory_space<vmem>>, vector<32x1xf32>
    %682 = vector.broadcast %681 : vector<32x1xf32> to vector<32x16xf32>
    %683 = arith.addf %680, %682 : vector<32x16xf32>
    %c0_i32_506 = arith.constant 0 : i32
    %684 = arith.cmpi sge, %665, %c0_i32_506 : i32
    %c16_i32_507 = arith.constant 16 : i32
    %685 = arith.cmpi slt, %665, %c16_i32_507 : i32
    %686 = arith.andi %684, %685 : i1
    %cst_508 = arith.constant 0.000000e+00 : f32
    %687 = vector.broadcast %cst_508 : f32 to vector<32x16xf32>
    %688 = arith.maximumf %683, %687 : vector<32x16xf32>
    %cst_509 = arith.constant 0.000000e+00 : f32
    %689 = vector.broadcast %cst_509 : f32 to vector<32x16xf32>
    %690 = arith.select %686, %688, %689 : vector<32x16xf32>
    %691 = arith.truncf %690 : vector<32x16xf32> to vector<32x16xbf16>
    %c288_510 = arith.constant 288 : index
    %c1_511 = arith.constant 1 : index
    %692 = vector.load %arg11[%c288_510, %c1_511] : memref<320x18xbf16, #tpu.memory_space<vmem>>, vector<32x16xbf16>
    tpu.vector_store %arg11[%c288_510, %c1_511], %691 {strides = array<i32>} : memref<320x18xbf16, #tpu.memory_space<vmem>>, vector<32x16xbf16>,
    %c0_512 = arith.constant 0 : index
    %c0_513 = arith.constant 0 : index
    %693 = vector.load %arg11[%c0_512, %c0_513] : memref<320x18xbf16, #tpu.memory_space<vmem>>, vector<96x18xbf16>
    %c0_514 = arith.constant 0 : index
    %c0_515 = arith.constant 0 : index
    %c0_516 = arith.constant 0 : index
    %694 = vector.load %arg5[%c0_514, %c0_515, %c0_516] : memref<3x8x96xbf16, #tpu.memory_space<vmem>>, vector<1x8x96xbf16>
    %695 = vector.shape_cast %694 : vector<1x8x96xbf16> to vector<8x96xbf16>
    %696 = vector.extract_strided_slice %693 {offsets = [0, 0], sizes = [96, 16], strides = [1, 1]} : vector<96x18xbf16> to vector<96x16xbf16>
    %cst_517 = arith.constant dense<0.000000e+00> : vector<8x16xf32>
    %697 = tpu.matmul %695, %696, %cst_517 {dimension_numbers = #tpu.dot_dimension_numbers<[1], [0], [0], [1], [0, 0, 1, 1], [], []>} : vector<8x96xbf16>, vector<96x16xbf16>, vector<8x16xf32> -> vector<8x16xf32>
    %c1_518 = arith.constant 1 : index
    %c0_519 = arith.constant 0 : index
    %c0_520 = arith.constant 0 : index
    %698 = vector.load %arg5[%c1_518, %c0_519, %c0_520] : memref<3x8x96xbf16, #tpu.memory_space<vmem>>, vector<1x8x96xbf16>
    %699 = vector.shape_cast %698 : vector<1x8x96xbf16> to vector<8x96xbf16>
    %700 = vector.extract_strided_slice %693 {offsets = [0, 1], sizes = [96, 16], strides = [1, 1]} : vector<96x18xbf16> to vector<96x16xbf16>
    %cst_521 = arith.constant dense<0.000000e+00> : vector<8x16xf32>
    %701 = tpu.matmul %699, %700, %cst_521 {dimension_numbers = #tpu.dot_dimension_numbers<[1], [0], [0], [1], [0, 0, 1, 1], [], []>} : vector<8x96xbf16>, vector<96x16xbf16>, vector<8x16xf32> -> vector<8x16xf32>
    %702 = arith.addf %697, %701 : vector<8x16xf32>
    %c2_522 = arith.constant 2 : index
    %c0_523 = arith.constant 0 : index
    %c0_524 = arith.constant 0 : index
    %703 = vector.load %arg5[%c2_522, %c0_523, %c0_524] : memref<3x8x96xbf16, #tpu.memory_space<vmem>>, vector<1x8x96xbf16>
    %704 = vector.shape_cast %703 : vector<1x8x96xbf16> to vector<8x96xbf16>
    %705 = vector.extract_strided_slice %693 {offsets = [0, 2], sizes = [96, 16], strides = [1, 1]} : vector<96x18xbf16> to vector<96x16xbf16>
    %cst_525 = arith.constant dense<0.000000e+00> : vector<8x16xf32>
    %706 = tpu.matmul %704, %705, %cst_525 {dimension_numbers = #tpu.dot_dimension_numbers<[1], [0], [0], [1], [0, 0, 1, 1], [], []>} : vector<8x96xbf16>, vector<96x16xbf16>, vector<8x16xf32> -> vector<8x16xf32>
    %707 = arith.addf %702, %706 : vector<8x16xf32>
    %708 = vector.extract_strided_slice %707 {offsets = [0, 0], sizes = [1, 16], strides = [1, 1]} : vector<8x16xf32> to vector<1x16xf32>
    %c0_526 = arith.constant 0 : index
    %c0_527 = arith.constant 0 : index
    %709 = vector.load %arg8[%c0_526, %c0_527] : memref<1x1xf32, #tpu.memory_space<vmem>>, vector<1x1xf32>
    %710 = vector.broadcast %709 : vector<1x1xf32> to vector<1x16xf32>
    %711 = arith.addf %708, %710 : vector<1x16xf32>
    %712 = arith.negf %711 : vector<1x16xf32>
    %713 = math.exp %712 : vector<1x16xf32>
    %cst_528 = arith.constant 1.000000e+00 : f32
    %714 = vector.broadcast %cst_528 : f32 to vector<1x16xf32>
    %715 = arith.addf %714, %713 : vector<1x16xf32>
    %716 = arith.divf %714, %715 : vector<1x16xf32>
    %cst_529 = arith.constant 1.000000e+01 : f32
    %717 = vector.broadcast %cst_529 : f32 to vector<1x16xf32>
    %718 = arith.mulf %716, %717 : vector<1x16xf32>
    %c0_530 = arith.constant 0 : index
    %c0_531 = arith.constant 0 : index
    %c0_532 = arith.constant 0 : index
    %719 = vector.load %arg9[%c0_530, %c0_531, %c0_532] : memref<1x8x16xf32, #tpu.memory_space<vmem>>, vector<1x1x16xf32>
    %720 = vector.shape_cast %719 : vector<1x1x16xf32> to vector<1x16xf32>
    %721 = vector.shape_cast %718 : vector<1x16xf32> to vector<1x1x16xf32>
    tpu.vector_store %arg9[%c0_530, %c0_531, %c0_532], %721 {strides = array<i32>} : memref<1x8x16xf32, #tpu.memory_space<vmem>>, vector<1x1x16xf32>,
    %c32_533 = arith.constant 32 : index
    %c0_534 = arith.constant 0 : index
    %722 = vector.load %arg11[%c32_533, %c0_534] : memref<320x18xbf16, #tpu.memory_space<vmem>>, vector<96x18xbf16>
    %c0_535 = arith.constant 0 : index
    %c0_536 = arith.constant 0 : index
    %c0_537 = arith.constant 0 : index
    %723 = vector.load %arg5[%c0_535, %c0_536, %c0_537] : memref<3x8x96xbf16, #tpu.memory_space<vmem>>, vector<1x8x96xbf16>
    %724 = vector.shape_cast %723 : vector<1x8x96xbf16> to vector<8x96xbf16>
    %725 = vector.extract_strided_slice %722 {offsets = [0, 0], sizes = [96, 16], strides = [1, 1]} : vector<96x18xbf16> to vector<96x16xbf16>
    %cst_538 = arith.constant dense<0.000000e+00> : vector<8x16xf32>
    %726 = tpu.matmul %724, %725, %cst_538 {dimension_numbers = #tpu.dot_dimension_numbers<[1], [0], [0], [1], [0, 0, 1, 1], [], []>} : vector<8x96xbf16>, vector<96x16xbf16>, vector<8x16xf32> -> vector<8x16xf32>
    %c1_539 = arith.constant 1 : index
    %c0_540 = arith.constant 0 : index
    %c0_541 = arith.constant 0 : index
    %727 = vector.load %arg5[%c1_539, %c0_540, %c0_541] : memref<3x8x96xbf16, #tpu.memory_space<vmem>>, vector<1x8x96xbf16>
    %728 = vector.shape_cast %727 : vector<1x8x96xbf16> to vector<8x96xbf16>
    %729 = vector.extract_strided_slice %722 {offsets = [0, 1], sizes = [96, 16], strides = [1, 1]} : vector<96x18xbf16> to vector<96x16xbf16>
    %cst_542 = arith.constant dense<0.000000e+00> : vector<8x16xf32>
    %730 = tpu.matmul %728, %729, %cst_542 {dimension_numbers = #tpu.dot_dimension_numbers<[1], [0], [0], [1], [0, 0, 1, 1], [], []>} : vector<8x96xbf16>, vector<96x16xbf16>, vector<8x16xf32> -> vector<8x16xf32>
    %731 = arith.addf %726, %730 : vector<8x16xf32>
    %c2_543 = arith.constant 2 : index
    %c0_544 = arith.constant 0 : index
    %c0_545 = arith.constant 0 : index
    %732 = vector.load %arg5[%c2_543, %c0_544, %c0_545] : memref<3x8x96xbf16, #tpu.memory_space<vmem>>, vector<1x8x96xbf16>
    %733 = vector.shape_cast %732 : vector<1x8x96xbf16> to vector<8x96xbf16>
    %734 = vector.extract_strided_slice %722 {offsets = [0, 2], sizes = [96, 16], strides = [1, 1]} : vector<96x18xbf16> to vector<96x16xbf16>
    %cst_546 = arith.constant dense<0.000000e+00> : vector<8x16xf32>
    %735 = tpu.matmul %733, %734, %cst_546 {dimension_numbers = #tpu.dot_dimension_numbers<[1], [0], [0], [1], [0, 0, 1, 1], [], []>} : vector<8x96xbf16>, vector<96x16xbf16>, vector<8x16xf32> -> vector<8x16xf32>
    %736 = arith.addf %731, %735 : vector<8x16xf32>
    %737 = vector.extract_strided_slice %736 {offsets = [0, 0], sizes = [1, 16], strides = [1, 1]} : vector<8x16xf32> to vector<1x16xf32>
    %c0_547 = arith.constant 0 : index
    %c0_548 = arith.constant 0 : index
    %738 = vector.load %arg8[%c0_547, %c0_548] : memref<1x1xf32, #tpu.memory_space<vmem>>, vector<1x1xf32>
    %739 = vector.broadcast %738 : vector<1x1xf32> to vector<1x16xf32>
    %740 = arith.addf %737, %739 : vector<1x16xf32>
    %741 = arith.negf %740 : vector<1x16xf32>
    %742 = math.exp %741 : vector<1x16xf32>
    %cst_549 = arith.constant 1.000000e+00 : f32
    %743 = vector.broadcast %cst_549 : f32 to vector<1x16xf32>
    %744 = arith.addf %743, %742 : vector<1x16xf32>
    %745 = arith.divf %743, %744 : vector<1x16xf32>
    %cst_550 = arith.constant 1.000000e+01 : f32
    %746 = vector.broadcast %cst_550 : f32 to vector<1x16xf32>
    %747 = arith.mulf %745, %746 : vector<1x16xf32>
    %c0_551 = arith.constant 0 : index
    %c1_552 = arith.constant 1 : index
    %c0_553 = arith.constant 0 : index
    %748 = vector.load %arg9[%c0_551, %c1_552, %c0_553] : memref<1x8x16xf32, #tpu.memory_space<vmem>>, vector<1x1x16xf32>
    %749 = vector.shape_cast %748 : vector<1x1x16xf32> to vector<1x16xf32>
    %750 = vector.shape_cast %747 : vector<1x16xf32> to vector<1x1x16xf32>
    tpu.vector_store %arg9[%c0_551, %c1_552, %c0_553], %750 {strides = array<i32>} : memref<1x8x16xf32, #tpu.memory_space<vmem>>, vector<1x1x16xf32>,
    %c64_554 = arith.constant 64 : index
    %c0_555 = arith.constant 0 : index
    %751 = vector.load %arg11[%c64_554, %c0_555] : memref<320x18xbf16, #tpu.memory_space<vmem>>, vector<96x18xbf16>
    %c0_556 = arith.constant 0 : index
    %c0_557 = arith.constant 0 : index
    %c0_558 = arith.constant 0 : index
    %752 = vector.load %arg5[%c0_556, %c0_557, %c0_558] : memref<3x8x96xbf16, #tpu.memory_space<vmem>>, vector<1x8x96xbf16>
    %753 = vector.shape_cast %752 : vector<1x8x96xbf16> to vector<8x96xbf16>
    %754 = vector.extract_strided_slice %751 {offsets = [0, 0], sizes = [96, 16], strides = [1, 1]} : vector<96x18xbf16> to vector<96x16xbf16>
    %cst_559 = arith.constant dense<0.000000e+00> : vector<8x16xf32>
    %755 = tpu.matmul %753, %754, %cst_559 {dimension_numbers = #tpu.dot_dimension_numbers<[1], [0], [0], [1], [0, 0, 1, 1], [], []>} : vector<8x96xbf16>, vector<96x16xbf16>, vector<8x16xf32> -> vector<8x16xf32>
    %c1_560 = arith.constant 1 : index
    %c0_561 = arith.constant 0 : index
    %c0_562 = arith.constant 0 : index
    %756 = vector.load %arg5[%c1_560, %c0_561, %c0_562] : memref<3x8x96xbf16, #tpu.memory_space<vmem>>, vector<1x8x96xbf16>
    %757 = vector.shape_cast %756 : vector<1x8x96xbf16> to vector<8x96xbf16>
    %758 = vector.extract_strided_slice %751 {offsets = [0, 1], sizes = [96, 16], strides = [1, 1]} : vector<96x18xbf16> to vector<96x16xbf16>
    %cst_563 = arith.constant dense<0.000000e+00> : vector<8x16xf32>
    %759 = tpu.matmul %757, %758, %cst_563 {dimension_numbers = #tpu.dot_dimension_numbers<[1], [0], [0], [1], [0, 0, 1, 1], [], []>} : vector<8x96xbf16>, vector<96x16xbf16>, vector<8x16xf32> -> vector<8x16xf32>
    %760 = arith.addf %755, %759 : vector<8x16xf32>
    %c2_564 = arith.constant 2 : index
    %c0_565 = arith.constant 0 : index
    %c0_566 = arith.constant 0 : index
    %761 = vector.load %arg5[%c2_564, %c0_565, %c0_566] : memref<3x8x96xbf16, #tpu.memory_space<vmem>>, vector<1x8x96xbf16>
    %762 = vector.shape_cast %761 : vector<1x8x96xbf16> to vector<8x96xbf16>
    %763 = vector.extract_strided_slice %751 {offsets = [0, 2], sizes = [96, 16], strides = [1, 1]} : vector<96x18xbf16> to vector<96x16xbf16>
    %cst_567 = arith.constant dense<0.000000e+00> : vector<8x16xf32>
    %764 = tpu.matmul %762, %763, %cst_567 {dimension_numbers = #tpu.dot_dimension_numbers<[1], [0], [0], [1], [0, 0, 1, 1], [], []>} : vector<8x96xbf16>, vector<96x16xbf16>, vector<8x16xf32> -> vector<8x16xf32>
    %765 = arith.addf %760, %764 : vector<8x16xf32>
    %766 = vector.extract_strided_slice %765 {offsets = [0, 0], sizes = [1, 16], strides = [1, 1]} : vector<8x16xf32> to vector<1x16xf32>
    %c0_568 = arith.constant 0 : index
    %c0_569 = arith.constant 0 : index
    %767 = vector.load %arg8[%c0_568, %c0_569] : memref<1x1xf32, #tpu.memory_space<vmem>>, vector<1x1xf32>
    %768 = vector.broadcast %767 : vector<1x1xf32> to vector<1x16xf32>
    %769 = arith.addf %766, %768 : vector<1x16xf32>
    %770 = arith.negf %769 : vector<1x16xf32>
    %771 = math.exp %770 : vector<1x16xf32>
    %cst_570 = arith.constant 1.000000e+00 : f32
    %772 = vector.broadcast %cst_570 : f32 to vector<1x16xf32>
    %773 = arith.addf %772, %771 : vector<1x16xf32>
    %774 = arith.divf %772, %773 : vector<1x16xf32>
    %cst_571 = arith.constant 1.000000e+01 : f32
    %775 = vector.broadcast %cst_571 : f32 to vector<1x16xf32>
    %776 = arith.mulf %774, %775 : vector<1x16xf32>
    %c0_572 = arith.constant 0 : index
    %c2_573 = arith.constant 2 : index
    %c0_574 = arith.constant 0 : index
    %777 = vector.load %arg9[%c0_572, %c2_573, %c0_574] : memref<1x8x16xf32, #tpu.memory_space<vmem>>, vector<1x1x16xf32>
    %778 = vector.shape_cast %777 : vector<1x1x16xf32> to vector<1x16xf32>
    %779 = vector.shape_cast %776 : vector<1x16xf32> to vector<1x1x16xf32>
    tpu.vector_store %arg9[%c0_572, %c2_573, %c0_574], %779 {strides = array<i32>} : memref<1x8x16xf32, #tpu.memory_space<vmem>>, vector<1x1x16xf32>,
    %c96_575 = arith.constant 96 : index
    %c0_576 = arith.constant 0 : index
    %780 = vector.load %arg11[%c96_575, %c0_576] : memref<320x18xbf16, #tpu.memory_space<vmem>>, vector<96x18xbf16>
    %c0_577 = arith.constant 0 : index
    %c0_578 = arith.constant 0 : index
    %c0_579 = arith.constant 0 : index
    %781 = vector.load %arg5[%c0_577, %c0_578, %c0_579] : memref<3x8x96xbf16, #tpu.memory_space<vmem>>, vector<1x8x96xbf16>
    %782 = vector.shape_cast %781 : vector<1x8x96xbf16> to vector<8x96xbf16>
    %783 = vector.extract_strided_slice %780 {offsets = [0, 0], sizes = [96, 16], strides = [1, 1]} : vector<96x18xbf16> to vector<96x16xbf16>
    %cst_580 = arith.constant dense<0.000000e+00> : vector<8x16xf32>
    %784 = tpu.matmul %782, %783, %cst_580 {dimension_numbers = #tpu.dot_dimension_numbers<[1], [0], [0], [1], [0, 0, 1, 1], [], []>} : vector<8x96xbf16>, vector<96x16xbf16>, vector<8x16xf32> -> vector<8x16xf32>
    %c1_581 = arith.constant 1 : index
    %c0_582 = arith.constant 0 : index
    %c0_583 = arith.constant 0 : index
    %785 = vector.load %arg5[%c1_581, %c0_582, %c0_583] : memref<3x8x96xbf16, #tpu.memory_space<vmem>>, vector<1x8x96xbf16>
    %786 = vector.shape_cast %785 : vector<1x8x96xbf16> to vector<8x96xbf16>
    %787 = vector.extract_strided_slice %780 {offsets = [0, 1], sizes = [96, 16], strides = [1, 1]} : vector<96x18xbf16> to vector<96x16xbf16>
    %cst_584 = arith.constant dense<0.000000e+00> : vector<8x16xf32>
    %788 = tpu.matmul %786, %787, %cst_584 {dimension_numbers = #tpu.dot_dimension_numbers<[1], [0], [0], [1], [0, 0, 1, 1], [], []>} : vector<8x96xbf16>, vector<96x16xbf16>, vector<8x16xf32> -> vector<8x16xf32>
    %789 = arith.addf %784, %788 : vector<8x16xf32>
    %c2_585 = arith.constant 2 : index
    %c0_586 = arith.constant 0 : index
    %c0_587 = arith.constant 0 : index
    %790 = vector.load %arg5[%c2_585, %c0_586, %c0_587] : memref<3x8x96xbf16, #tpu.memory_space<vmem>>, vector<1x8x96xbf16>
    %791 = vector.shape_cast %790 : vector<1x8x96xbf16> to vector<8x96xbf16>
    %792 = vector.extract_strided_slice %780 {offsets = [0, 2], sizes = [96, 16], strides = [1, 1]} : vector<96x18xbf16> to vector<96x16xbf16>
    %cst_588 = arith.constant dense<0.000000e+00> : vector<8x16xf32>
    %793 = tpu.matmul %791, %792, %cst_588 {dimension_numbers = #tpu.dot_dimension_numbers<[1], [0], [0], [1], [0, 0, 1, 1], [], []>} : vector<8x96xbf16>, vector<96x16xbf16>, vector<8x16xf32> -> vector<8x16xf32>
    %794 = arith.addf %789, %793 : vector<8x16xf32>
    %795 = vector.extract_strided_slice %794 {offsets = [0, 0], sizes = [1, 16], strides = [1, 1]} : vector<8x16xf32> to vector<1x16xf32>
    %c0_589 = arith.constant 0 : index
    %c0_590 = arith.constant 0 : index
    %796 = vector.load %arg8[%c0_589, %c0_590] : memref<1x1xf32, #tpu.memory_space<vmem>>, vector<1x1xf32>
    %797 = vector.broadcast %796 : vector<1x1xf32> to vector<1x16xf32>
    %798 = arith.addf %795, %797 : vector<1x16xf32>
    %799 = arith.negf %798 : vector<1x16xf32>
    %800 = math.exp %799 : vector<1x16xf32>
    %cst_591 = arith.constant 1.000000e+00 : f32
    %801 = vector.broadcast %cst_591 : f32 to vector<1x16xf32>
    %802 = arith.addf %801, %800 : vector<1x16xf32>
    %803 = arith.divf %801, %802 : vector<1x16xf32>
    %cst_592 = arith.constant 1.000000e+01 : f32
    %804 = vector.broadcast %cst_592 : f32 to vector<1x16xf32>
    %805 = arith.mulf %803, %804 : vector<1x16xf32>
    %c0_593 = arith.constant 0 : index
    %c3 = arith.constant 3 : index
    %c0_594 = arith.constant 0 : index
    %806 = vector.load %arg9[%c0_593, %c3, %c0_594] : memref<1x8x16xf32, #tpu.memory_space<vmem>>, vector<1x1x16xf32>
    %807 = vector.shape_cast %806 : vector<1x1x16xf32> to vector<1x16xf32>
    %808 = vector.shape_cast %805 : vector<1x16xf32> to vector<1x1x16xf32>
    tpu.vector_store %arg9[%c0_593, %c3, %c0_594], %808 {strides = array<i32>} : memref<1x8x16xf32, #tpu.memory_space<vmem>>, vector<1x1x16xf32>,
    %c128_595 = arith.constant 128 : index
    %c0_596 = arith.constant 0 : index
    %809 = vector.load %arg11[%c128_595, %c0_596] : memref<320x18xbf16, #tpu.memory_space<vmem>>, vector<96x18xbf16>
    %c0_597 = arith.constant 0 : index
    %c0_598 = arith.constant 0 : index
    %c0_599 = arith.constant 0 : index
    %810 = vector.load %arg5[%c0_597, %c0_598, %c0_599] : memref<3x8x96xbf16, #tpu.memory_space<vmem>>, vector<1x8x96xbf16>
    %811 = vector.shape_cast %810 : vector<1x8x96xbf16> to vector<8x96xbf16>
    %812 = vector.extract_strided_slice %809 {offsets = [0, 0], sizes = [96, 16], strides = [1, 1]} : vector<96x18xbf16> to vector<96x16xbf16>
    %cst_600 = arith.constant dense<0.000000e+00> : vector<8x16xf32>
    %813 = tpu.matmul %811, %812, %cst_600 {dimension_numbers = #tpu.dot_dimension_numbers<[1], [0], [0], [1], [0, 0, 1, 1], [], []>} : vector<8x96xbf16>, vector<96x16xbf16>, vector<8x16xf32> -> vector<8x16xf32>
    %c1_601 = arith.constant 1 : index
    %c0_602 = arith.constant 0 : index
    %c0_603 = arith.constant 0 : index
    %814 = vector.load %arg5[%c1_601, %c0_602, %c0_603] : memref<3x8x96xbf16, #tpu.memory_space<vmem>>, vector<1x8x96xbf16>
    %815 = vector.shape_cast %814 : vector<1x8x96xbf16> to vector<8x96xbf16>
    %816 = vector.extract_strided_slice %809 {offsets = [0, 1], sizes = [96, 16], strides = [1, 1]} : vector<96x18xbf16> to vector<96x16xbf16>
    %cst_604 = arith.constant dense<0.000000e+00> : vector<8x16xf32>
    %817 = tpu.matmul %815, %816, %cst_604 {dimension_numbers = #tpu.dot_dimension_numbers<[1], [0], [0], [1], [0, 0, 1, 1], [], []>} : vector<8x96xbf16>, vector<96x16xbf16>, vector<8x16xf32> -> vector<8x16xf32>
    %818 = arith.addf %813, %817 : vector<8x16xf32>
    %c2_605 = arith.constant 2 : index
    %c0_606 = arith.constant 0 : index
    %c0_607 = arith.constant 0 : index
    %819 = vector.load %arg5[%c2_605, %c0_606, %c0_607] : memref<3x8x96xbf16, #tpu.memory_space<vmem>>, vector<1x8x96xbf16>
    %820 = vector.shape_cast %819 : vector<1x8x96xbf16> to vector<8x96xbf16>
    %821 = vector.extract_strided_slice %809 {offsets = [0, 2], sizes = [96, 16], strides = [1, 1]} : vector<96x18xbf16> to vector<96x16xbf16>
    %cst_608 = arith.constant dense<0.000000e+00> : vector<8x16xf32>
    %822 = tpu.matmul %820, %821, %cst_608 {dimension_numbers = #tpu.dot_dimension_numbers<[1], [0], [0], [1], [0, 0, 1, 1], [], []>} : vector<8x96xbf16>, vector<96x16xbf16>, vector<8x16xf32> -> vector<8x16xf32>
    %823 = arith.addf %818, %822 : vector<8x16xf32>
    %824 = vector.extract_strided_slice %823 {offsets = [0, 0], sizes = [1, 16], strides = [1, 1]} : vector<8x16xf32> to vector<1x16xf32>
    %c0_609 = arith.constant 0 : index
    %c0_610 = arith.constant 0 : index
    %825 = vector.load %arg8[%c0_609, %c0_610] : memref<1x1xf32, #tpu.memory_space<vmem>>, vector<1x1xf32>
    %826 = vector.broadcast %825 : vector<1x1xf32> to vector<1x16xf32>
    %827 = arith.addf %824, %826 : vector<1x16xf32>
    %828 = arith.negf %827 : vector<1x16xf32>
    %829 = math.exp %828 : vector<1x16xf32>
    %cst_611 = arith.constant 1.000000e+00 : f32
    %830 = vector.broadcast %cst_611 : f32 to vector<1x16xf32>
    %831 = arith.addf %830, %829 : vector<1x16xf32>
    %832 = arith.divf %830, %831 : vector<1x16xf32>
    %cst_612 = arith.constant 1.000000e+01 : f32
    %833 = vector.broadcast %cst_612 : f32 to vector<1x16xf32>
    %834 = arith.mulf %832, %833 : vector<1x16xf32>
    %c0_613 = arith.constant 0 : index
    %c4 = arith.constant 4 : index
    %c0_614 = arith.constant 0 : index
    %835 = vector.load %arg9[%c0_613, %c4, %c0_614] : memref<1x8x16xf32, #tpu.memory_space<vmem>>, vector<1x1x16xf32>
    %836 = vector.shape_cast %835 : vector<1x1x16xf32> to vector<1x16xf32>
    %837 = vector.shape_cast %834 : vector<1x16xf32> to vector<1x1x16xf32>
    tpu.vector_store %arg9[%c0_613, %c4, %c0_614], %837 {strides = array<i32>} : memref<1x8x16xf32, #tpu.memory_space<vmem>>, vector<1x1x16xf32>,
    %c160_615 = arith.constant 160 : index
    %c0_616 = arith.constant 0 : index
    %838 = vector.load %arg11[%c160_615, %c0_616] : memref<320x18xbf16, #tpu.memory_space<vmem>>, vector<96x18xbf16>
    %c0_617 = arith.constant 0 : index
    %c0_618 = arith.constant 0 : index
    %c0_619 = arith.constant 0 : index
    %839 = vector.load %arg5[%c0_617, %c0_618, %c0_619] : memref<3x8x96xbf16, #tpu.memory_space<vmem>>, vector<1x8x96xbf16>
    %840 = vector.shape_cast %839 : vector<1x8x96xbf16> to vector<8x96xbf16>
    %841 = vector.extract_strided_slice %838 {offsets = [0, 0], sizes = [96, 16], strides = [1, 1]} : vector<96x18xbf16> to vector<96x16xbf16>
    %cst_620 = arith.constant dense<0.000000e+00> : vector<8x16xf32>
    %842 = tpu.matmul %840, %841, %cst_620 {dimension_numbers = #tpu.dot_dimension_numbers<[1], [0], [0], [1], [0, 0, 1, 1], [], []>} : vector<8x96xbf16>, vector<96x16xbf16>, vector<8x16xf32> -> vector<8x16xf32>
    %c1_621 = arith.constant 1 : index
    %c0_622 = arith.constant 0 : index
    %c0_623 = arith.constant 0 : index
    %843 = vector.load %arg5[%c1_621, %c0_622, %c0_623] : memref<3x8x96xbf16, #tpu.memory_space<vmem>>, vector<1x8x96xbf16>
    %844 = vector.shape_cast %843 : vector<1x8x96xbf16> to vector<8x96xbf16>
    %845 = vector.extract_strided_slice %838 {offsets = [0, 1], sizes = [96, 16], strides = [1, 1]} : vector<96x18xbf16> to vector<96x16xbf16>
    %cst_624 = arith.constant dense<0.000000e+00> : vector<8x16xf32>
    %846 = tpu.matmul %844, %845, %cst_624 {dimension_numbers = #tpu.dot_dimension_numbers<[1], [0], [0], [1], [0, 0, 1, 1], [], []>} : vector<8x96xbf16>, vector<96x16xbf16>, vector<8x16xf32> -> vector<8x16xf32>
    %847 = arith.addf %842, %846 : vector<8x16xf32>
    %c2_625 = arith.constant 2 : index
    %c0_626 = arith.constant 0 : index
    %c0_627 = arith.constant 0 : index
    %848 = vector.load %arg5[%c2_625, %c0_626, %c0_627] : memref<3x8x96xbf16, #tpu.memory_space<vmem>>, vector<1x8x96xbf16>
    %849 = vector.shape_cast %848 : vector<1x8x96xbf16> to vector<8x96xbf16>
    %850 = vector.extract_strided_slice %838 {offsets = [0, 2], sizes = [96, 16], strides = [1, 1]} : vector<96x18xbf16> to vector<96x16xbf16>
    %cst_628 = arith.constant dense<0.000000e+00> : vector<8x16xf32>
    %851 = tpu.matmul %849, %850, %cst_628 {dimension_numbers = #tpu.dot_dimension_numbers<[1], [0], [0], [1], [0, 0, 1, 1], [], []>} : vector<8x96xbf16>, vector<96x16xbf16>, vector<8x16xf32> -> vector<8x16xf32>
    %852 = arith.addf %847, %851 : vector<8x16xf32>
    %853 = vector.extract_strided_slice %852 {offsets = [0, 0], sizes = [1, 16], strides = [1, 1]} : vector<8x16xf32> to vector<1x16xf32>
    %c0_629 = arith.constant 0 : index
    %c0_630 = arith.constant 0 : index
    %854 = vector.load %arg8[%c0_629, %c0_630] : memref<1x1xf32, #tpu.memory_space<vmem>>, vector<1x1xf32>
    %855 = vector.broadcast %854 : vector<1x1xf32> to vector<1x16xf32>
    %856 = arith.addf %853, %855 : vector<1x16xf32>
    %857 = arith.negf %856 : vector<1x16xf32>
    %858 = math.exp %857 : vector<1x16xf32>
    %cst_631 = arith.constant 1.000000e+00 : f32
    %859 = vector.broadcast %cst_631 : f32 to vector<1x16xf32>
    %860 = arith.addf %859, %858 : vector<1x16xf32>
    %861 = arith.divf %859, %860 : vector<1x16xf32>
    %cst_632 = arith.constant 1.000000e+01 : f32
    %862 = vector.broadcast %cst_632 : f32 to vector<1x16xf32>
    %863 = arith.mulf %861, %862 : vector<1x16xf32>
    %c0_633 = arith.constant 0 : index
    %c5 = arith.constant 5 : index
    %c0_634 = arith.constant 0 : index
    %864 = vector.load %arg9[%c0_633, %c5, %c0_634] : memref<1x8x16xf32, #tpu.memory_space<vmem>>, vector<1x1x16xf32>
    %865 = vector.shape_cast %864 : vector<1x1x16xf32> to vector<1x16xf32>
    %866 = vector.shape_cast %863 : vector<1x16xf32> to vector<1x1x16xf32>
    tpu.vector_store %arg9[%c0_633, %c5, %c0_634], %866 {strides = array<i32>} : memref<1x8x16xf32, #tpu.memory_space<vmem>>, vector<1x1x16xf32>,
    %c192_635 = arith.constant 192 : index
    %c0_636 = arith.constant 0 : index
    %867 = vector.load %arg11[%c192_635, %c0_636] : memref<320x18xbf16, #tpu.memory_space<vmem>>, vector<96x18xbf16>
    %c0_637 = arith.constant 0 : index
    %c0_638 = arith.constant 0 : index
    %c0_639 = arith.constant 0 : index
    %868 = vector.load %arg5[%c0_637, %c0_638, %c0_639] : memref<3x8x96xbf16, #tpu.memory_space<vmem>>, vector<1x8x96xbf16>
    %869 = vector.shape_cast %868 : vector<1x8x96xbf16> to vector<8x96xbf16>
    %870 = vector.extract_strided_slice %867 {offsets = [0, 0], sizes = [96, 16], strides = [1, 1]} : vector<96x18xbf16> to vector<96x16xbf16>
    %cst_640 = arith.constant dense<0.000000e+00> : vector<8x16xf32>
    %871 = tpu.matmul %869, %870, %cst_640 {dimension_numbers = #tpu.dot_dimension_numbers<[1], [0], [0], [1], [0, 0, 1, 1], [], []>} : vector<8x96xbf16>, vector<96x16xbf16>, vector<8x16xf32> -> vector<8x16xf32>
    %c1_641 = arith.constant 1 : index
    %c0_642 = arith.constant 0 : index
    %c0_643 = arith.constant 0 : index
    %872 = vector.load %arg5[%c1_641, %c0_642, %c0_643] : memref<3x8x96xbf16, #tpu.memory_space<vmem>>, vector<1x8x96xbf16>
    %873 = vector.shape_cast %872 : vector<1x8x96xbf16> to vector<8x96xbf16>
    %874 = vector.extract_strided_slice %867 {offsets = [0, 1], sizes = [96, 16], strides = [1, 1]} : vector<96x18xbf16> to vector<96x16xbf16>
    %cst_644 = arith.constant dense<0.000000e+00> : vector<8x16xf32>
    %875 = tpu.matmul %873, %874, %cst_644 {dimension_numbers = #tpu.dot_dimension_numbers<[1], [0], [0], [1], [0, 0, 1, 1], [], []>} : vector<8x96xbf16>, vector<96x16xbf16>, vector<8x16xf32> -> vector<8x16xf32>
    %876 = arith.addf %871, %875 : vector<8x16xf32>
    %c2_645 = arith.constant 2 : index
    %c0_646 = arith.constant 0 : index
    %c0_647 = arith.constant 0 : index
    %877 = vector.load %arg5[%c2_645, %c0_646, %c0_647] : memref<3x8x96xbf16, #tpu.memory_space<vmem>>, vector<1x8x96xbf16>
    %878 = vector.shape_cast %877 : vector<1x8x96xbf16> to vector<8x96xbf16>
    %879 = vector.extract_strided_slice %867 {offsets = [0, 2], sizes = [96, 16], strides = [1, 1]} : vector<96x18xbf16> to vector<96x16xbf16>
    %cst_648 = arith.constant dense<0.000000e+00> : vector<8x16xf32>
    %880 = tpu.matmul %878, %879, %cst_648 {dimension_numbers = #tpu.dot_dimension_numbers<[1], [0], [0], [1], [0, 0, 1, 1], [], []>} : vector<8x96xbf16>, vector<96x16xbf16>, vector<8x16xf32> -> vector<8x16xf32>
    %881 = arith.addf %876, %880 : vector<8x16xf32>
    %882 = vector.extract_strided_slice %881 {offsets = [0, 0], sizes = [1, 16], strides = [1, 1]} : vector<8x16xf32> to vector<1x16xf32>
    %c0_649 = arith.constant 0 : index
    %c0_650 = arith.constant 0 : index
    %883 = vector.load %arg8[%c0_649, %c0_650] : memref<1x1xf32, #tpu.memory_space<vmem>>, vector<1x1xf32>
    %884 = vector.broadcast %883 : vector<1x1xf32> to vector<1x16xf32>
    %885 = arith.addf %882, %884 : vector<1x16xf32>
    %886 = arith.negf %885 : vector<1x16xf32>
    %887 = math.exp %886 : vector<1x16xf32>
    %cst_651 = arith.constant 1.000000e+00 : f32
    %888 = vector.broadcast %cst_651 : f32 to vector<1x16xf32>
    %889 = arith.addf %888, %887 : vector<1x16xf32>
    %890 = arith.divf %888, %889 : vector<1x16xf32>
    %cst_652 = arith.constant 1.000000e+01 : f32
    %891 = vector.broadcast %cst_652 : f32 to vector<1x16xf32>
    %892 = arith.mulf %890, %891 : vector<1x16xf32>
    %c0_653 = arith.constant 0 : index
    %c6 = arith.constant 6 : index
    %c0_654 = arith.constant 0 : index
    %893 = vector.load %arg9[%c0_653, %c6, %c0_654] : memref<1x8x16xf32, #tpu.memory_space<vmem>>, vector<1x1x16xf32>
    %894 = vector.shape_cast %893 : vector<1x1x16xf32> to vector<1x16xf32>
    %895 = vector.shape_cast %892 : vector<1x16xf32> to vector<1x1x16xf32>
    tpu.vector_store %arg9[%c0_653, %c6, %c0_654], %895 {strides = array<i32>} : memref<1x8x16xf32, #tpu.memory_space<vmem>>, vector<1x1x16xf32>,
    %c224_655 = arith.constant 224 : index
    %c0_656 = arith.constant 0 : index
    %896 = vector.load %arg11[%c224_655, %c0_656] : memref<320x18xbf16, #tpu.memory_space<vmem>>, vector<96x18xbf16>
    %c0_657 = arith.constant 0 : index
    %c0_658 = arith.constant 0 : index
    %c0_659 = arith.constant 0 : index
    %897 = vector.load %arg5[%c0_657, %c0_658, %c0_659] : memref<3x8x96xbf16, #tpu.memory_space<vmem>>, vector<1x8x96xbf16>
    %898 = vector.shape_cast %897 : vector<1x8x96xbf16> to vector<8x96xbf16>
    %899 = vector.extract_strided_slice %896 {offsets = [0, 0], sizes = [96, 16], strides = [1, 1]} : vector<96x18xbf16> to vector<96x16xbf16>
    %cst_660 = arith.constant dense<0.000000e+00> : vector<8x16xf32>
    %900 = tpu.matmul %898, %899, %cst_660 {dimension_numbers = #tpu.dot_dimension_numbers<[1], [0], [0], [1], [0, 0, 1, 1], [], []>} : vector<8x96xbf16>, vector<96x16xbf16>, vector<8x16xf32> -> vector<8x16xf32>
    %c1_661 = arith.constant 1 : index
    %c0_662 = arith.constant 0 : index
    %c0_663 = arith.constant 0 : index
    %901 = vector.load %arg5[%c1_661, %c0_662, %c0_663] : memref<3x8x96xbf16, #tpu.memory_space<vmem>>, vector<1x8x96xbf16>
    %902 = vector.shape_cast %901 : vector<1x8x96xbf16> to vector<8x96xbf16>
    %903 = vector.extract_strided_slice %896 {offsets = [0, 1], sizes = [96, 16], strides = [1, 1]} : vector<96x18xbf16> to vector<96x16xbf16>
    %cst_664 = arith.constant dense<0.000000e+00> : vector<8x16xf32>
    %904 = tpu.matmul %902, %903, %cst_664 {dimension_numbers = #tpu.dot_dimension_numbers<[1], [0], [0], [1], [0, 0, 1, 1], [], []>} : vector<8x96xbf16>, vector<96x16xbf16>, vector<8x16xf32> -> vector<8x16xf32>
    %905 = arith.addf %900, %904 : vector<8x16xf32>
    %c2_665 = arith.constant 2 : index
    %c0_666 = arith.constant 0 : index
    %c0_667 = arith.constant 0 : index
    %906 = vector.load %arg5[%c2_665, %c0_666, %c0_667] : memref<3x8x96xbf16, #tpu.memory_space<vmem>>, vector<1x8x96xbf16>
    %907 = vector.shape_cast %906 : vector<1x8x96xbf16> to vector<8x96xbf16>
    %908 = vector.extract_strided_slice %896 {offsets = [0, 2], sizes = [96, 16], strides = [1, 1]} : vector<96x18xbf16> to vector<96x16xbf16>
    %cst_668 = arith.constant dense<0.000000e+00> : vector<8x16xf32>
    %909 = tpu.matmul %907, %908, %cst_668 {dimension_numbers = #tpu.dot_dimension_numbers<[1], [0], [0], [1], [0, 0, 1, 1], [], []>} : vector<8x96xbf16>, vector<96x16xbf16>, vector<8x16xf32> -> vector<8x16xf32>
    %910 = arith.addf %905, %909 : vector<8x16xf32>
    %911 = vector.extract_strided_slice %910 {offsets = [0, 0], sizes = [1, 16], strides = [1, 1]} : vector<8x16xf32> to vector<1x16xf32>
    %c0_669 = arith.constant 0 : index
    %c0_670 = arith.constant 0 : index
    %912 = vector.load %arg8[%c0_669, %c0_670] : memref<1x1xf32, #tpu.memory_space<vmem>>, vector<1x1xf32>
    %913 = vector.broadcast %912 : vector<1x1xf32> to vector<1x16xf32>
    %914 = arith.addf %911, %913 : vector<1x16xf32>
    %915 = arith.negf %914 : vector<1x16xf32>
    %916 = math.exp %915 : vector<1x16xf32>
    %cst_671 = arith.constant 1.000000e+00 : f32
    %917 = vector.broadcast %cst_671 : f32 to vector<1x16xf32>
    %918 = arith.addf %917, %916 : vector<1x16xf32>
    %919 = arith.divf %917, %918 : vector<1x16xf32>
    %cst_672 = arith.constant 1.000000e+01 : f32
    %920 = vector.broadcast %cst_672 : f32 to vector<1x16xf32>
    %921 = arith.mulf %919, %920 : vector<1x16xf32>
    %c0_673 = arith.constant 0 : index
    %c7 = arith.constant 7 : index
    %c0_674 = arith.constant 0 : index
    %922 = vector.load %arg9[%c0_673, %c7, %c0_674] : memref<1x8x16xf32, #tpu.memory_space<vmem>>, vector<1x1x16xf32>
    %923 = vector.shape_cast %922 : vector<1x1x16xf32> to vector<1x16xf32>
    %924 = vector.shape_cast %921 : vector<1x16xf32> to vector<1x1x16xf32>
    tpu.vector_store %arg9[%c0_673, %c7, %c0_674], %924 {strides = array<i32>} : memref<1x8x16xf32, #tpu.memory_space<vmem>>, vector<1x1x16xf32>,
    return
  }
  func.func @transform_0(%arg0: i32, %arg1: i32) -> (i32, i32, i32) {
    %c0_i32 = arith.constant 0 : i32
    %c0_i32_0 = arith.constant 0 : i32
    %c0_i32_1 = arith.constant 0 : i32
    return %arg0, %c0_i32, %c0_i32_0 : i32, i32, i32
  }
  func.func @transform_1(%arg0: i32, %arg1: i32) -> (i32, i32, i32) {
    %c0_i32 = arith.constant 0 : i32
    %c0_i32_0 = arith.constant 0 : i32
    %c0_i32_1 = arith.constant 0 : i32
    %c0_i32_2 = arith.constant 0 : i32
    return %c0_i32, %c0_i32_0, %c0_i32_1 : i32, i32, i32
  }
  func.func @transform_2(%arg0: i32, %arg1: i32) -> (i32, i32, i32) {
    %c0_i32 = arith.constant 0 : i32
    %c0_i32_0 = arith.constant 0 : i32
    %c0_i32_1 = arith.constant 0 : i32
    %c0_i32_2 = arith.constant 0 : i32
    return %c0_i32, %c0_i32_0, %c0_i32_1 : i32, i32, i32
  }
  func.func @transform_3(%arg0: i32, %arg1: i32) -> (i32, i32, i32) {
    %c0_i32 = arith.constant 0 : i32
    %c0_i32_0 = arith.constant 0 : i32
    %c0_i32_1 = arith.constant 0 : i32
    %c0_i32_2 = arith.constant 0 : i32
    return %c0_i32, %c0_i32_0, %c0_i32_1 : i32, i32, i32
  }
  func.func @transform_4(%arg0: i32, %arg1: i32) -> (i32, i32) {
    %c0_i32 = arith.constant 0 : i32
    %c0_i32_0 = arith.constant 0 : i32
    %c0_i32_1 = arith.constant 0 : i32
    return %c0_i32, %c0_i32_0 : i32, i32
  }
  func.func @transform_5(%arg0: i32, %arg1: i32) -> (i32, i32) {
    %c0_i32 = arith.constant 0 : i32
    %c0_i32_0 = arith.constant 0 : i32
    %c0_i32_1 = arith.constant 0 : i32
    return %c0_i32, %c0_i32_0 : i32, i32
  }
  func.func @transform_6(%arg0: i32, %arg1: i32) -> (i32, i32) {
    %c0_i32 = arith.constant 0 : i32
    %c0_i32_0 = arith.constant 0 : i32
    %c0_i32_1 = arith.constant 0 : i32
    return %c0_i32, %c0_i32_0 : i32, i32
  }
  func.func @transform_7(%arg0: i32, %arg1: i32) -> (i32, i32, i32) {
    %c0_i32 = arith.constant 0 : i32
    %c0_i32_0 = arith.constant 0 : i32
    return %arg0, %arg1, %c0_i32 : i32, i32, i32
  }
}

</mosaic_0001>

<llo_original>
// kernel: coex_height_forward.1
$region0: #{coex_height_forward.1}
  #allocation0 [shape = 'u32[]', space=smem, size = 0x4, offset = 0x4, fixed_abs, tag = 'smem constant byte address 0x4 - core index']
  #allocation1 [shape = 'u32[144,128]{1,0:T(1,128)}', space=vmem, size = 0x12000, scoped, tag = 'internal scratch']
  #allocation2 [shape = 'bf16[384,18]{1,0:T(8,128)(2,1)}', space=vmem, size = 0x18000, scoped, tag = 'scratch operand']
  #allocation3 [shape = 'bf16[320,18]{1,0:T(8,128)(2,1)}', space=vmem, size = 0x14000, scoped, tag = 'scratch operand']
  #allocation4 [shape = 'f32[1,1]{1,0:T(1,128)S(1)}', space=vmem, size = 0x200, scoped, tag = 'scoped memory for coex_height_forward.1']
  %s0 = inlined_call_operand.vmem [shape: f32[2,88,18], index: 0, kind: input, shape index: {}]
  %s1 = inlined_call_operand.vmem [shape: bf16[3,32,12], index: 1, kind: input, shape index: {}]
  %s2 = inlined_call_operand.vmem [shape: bf16[3,32,96], index: 2, kind: input, shape index: {}]
  %s3 = inlined_call_operand.vmem [shape: bf16[3,8,96], index: 3, kind: input, shape index: {}]
  %s4 = inlined_call_operand.vmem [shape: f32[32,1], index: 4, kind: input, shape index: {}]
  %s5 = inlined_call_operand.vmem [shape: f32[32,1], index: 5, kind: input, shape index: {}]
  %s6 = inlined_call_operand.<no memory space> [shape: f32[1,1], index: 6, kind: input, shape index: {}]
  %s7 = inlined_call_operand.hbm [shape: f32[2,16,16], index: 7, kind: output, shape index: {}]
  %s8 = sld [smem:[#allocation0]]
  $region61: #{coex_height_forward.1} parent=0
    _
  %s10 = ssub.s32 1, %s8
  %s11 = scalar_select 0, %s10, %s8
  %v12 = vstv %s6
  %13 = vst [vmem:[#allocation4] sm:$0x1] %v12
  $region1: #{coex_height_forward.1} parent=0
    #allocation5 [shape = 'u8[8192]{0}', space=vmem, size = 0x2000, scoped, tag = 'output window, operand 0']
    #allocation6 [shape = 's32[2]{0}', space=sflag, size = 0x8, scoped, tag = 'scoped memory for coex_height_forward.1']
    %14 = vsyncpa [#allocation6], 0
    %s15 = scalar_lea.sflag [#allocation6], 1
    %16 = vsyncpa %s15, 0
    loop: start=0, step=1, limit=6
    $region2: #{coex_height_forward.1} parent=1 // loop_pre_header
      _
    $region3: #{coex_height_forward.1} parent=1 // loop_header
      %s18 = sphi 0, %s22
      %p19 = scmp.ge.s32.totalorder %s18, 6
      %s25 = sphi 0, %s37
      %s26 = sphi 0, %s33
      %s27 = sphi 0, %s25
      %s28 = sphi 0, %s26
      %s29 = sphi 0, %s27
      %s30 = sphi 0, %s28
      %s40 = sphi 0, %s42
      %s43 = sphi 0, %s40
      %s44 = sphi 0, %s43
      %s60 = sphi 0, %s44
      %s64 = sphi 0, %s64
      %s66 = sphi 0, %s64
      %s67 = sphi 0, %s66
      %s81 = sphi 0, %s67
      %s85 = sphi 0, %s85
      %s87 = sphi 0, %s85
      %s88 = sphi 0, %s87
      %s102 = sphi 0, %s88
      %s106 = sphi 0, %s106
      %s108 = sphi 0, %s106
      %s109 = sphi 0, %s108
      %s123 = sphi 0, %s109
      %s127 = sphi 0, %s127
      %s129 = sphi 0, %s127
      %s130 = sphi 0, %s129
      %s144 = sphi 0, %s130
      %s148 = sphi 0, %s148
      %s150 = sphi 0, %s148
      %s151 = sphi 0, %s150
      %s165 = sphi 0, %s151
      %s169 = sphi 0, %s169
      %s171 = sphi 0, %s169
      %s172 = sphi 0, %s171
      %s186 = sphi 0, %s172
      %s194 = sphi 0, %s196
      %s197 = sphi 0, %s194
      %s198 = sphi 0, %s197
      %s214 = sphi 0, %s198
    $region4: #{coex_height_forward.1} parent=1 // loop_header_branch
      %21 = sbr.rel (%p19) target = $region8
    $region5: #{coex_height_forward.1} parent=1 // loop_body
      %s23 = ssub.s32 %s18, 1
      %s24 = ssub.s32 %s18, 2
      %s31 = sadd.s32 1, %s26
      %p32 = scmp.ge.s32.totalorder %s31, 2
      %s33 = scalar_select %p32, 0, %s31
      %s34 = sadd.s32 1, %s25
      %s35 = scalar_select %p32, %s34, %s25
      %p36 = scmp.ge.s32.totalorder %s35, 2
      %s37 = scalar_select %p36, 0, %s35
      %s38 = ssub.s32 %s25, %s37
      %p39 = scmp.eq.s32.totalorder %s38, 0
      %s41 = sadd.s32 %s40, 1
      %s42 = scalar_select %p39, %s40, %s41
      %p45 = pneg %p39
      %p46 = scmp.eq.s32.totalorder %s18, 3
      %p47 = por %p45, %p46
      %p48 = scmp.ne.s32.totalorder %s40, %s43
      %p49 = scmp.eq.s32.totalorder %s18, 0
      %p50 = por %p48, %p49
      %p51 = scmp.ne.s32.totalorder %s40, %s43
      %p52 = scmp.eq.s32.totalorder %s23, 3
      %p53 = por %p51, %p52
      %p54 = scmp.ne.s32.totalorder %s43, %s44
      %p55 = scmp.eq.s32.totalorder %s23, 0
      %p56 = por %p54, %p55
      %p57 = scmp.ne.s32.totalorder %s43, %s44
      %p58 = scmp.eq.s32.totalorder %s24, 3
      %p59 = por %p57, %p58
      %p61 = scmp.ne.s32.totalorder %s44, %s60
      %p62 = scmp.eq.s32.totalorder %s24, 0
      %p63 = por %p61, %p62
      %s65 = sadd.s32 %s64, 1
      %p68 = scmp.eq.s32.totalorder %s18, 3
      %p69 = scmp.ne.s32.totalorder %s64, %s66
      %p70 = scmp.eq.s32.totalorder %s18, 0
      %p71 = por %p69, %p70
      %p72 = scmp.ne.s32.totalorder %s64, %s66
      %p73 = scmp.eq.s32.totalorder %s23, 3
      %p74 = por %p72, %p73
      %p75 = scmp.ne.s32.totalorder %s66, %s67
      %p76 = scmp.eq.s32.totalorder %s23, 0
      %p77 = por %p75, %p76
      %p78 = scmp.ne.s32.totalorder %s66, %s67
      %p79 = scmp.eq.s32.totalorder %s24, 3
      %p80 = por %p78, %p79
      %p82 = scmp.ne.s32.totalorder %s67, %s81
      %p83 = scmp.eq.s32.totalorder %s24, 0
      %p84 = por %p82, %p83
      %s86 = sadd.s32 %s85, 1
      %p89 = scmp.eq.s32.totalorder %s18, 3
      %p90 = scmp.ne.s32.totalorder %s85, %s87
      %p91 = scmp.eq.s32.totalorder %s18, 0
      %p92 = por %p90, %p91
      %p93 = scmp.ne.s32.totalorder %s85, %s87
      %p94 = scmp.eq.s32.totalorder %s23, 3
      %p95 = por %p93, %p94
      %p96 = scmp.ne.s32.totalorder %s87, %s88
      %p97 = scmp.eq.s32.totalorder %s23, 0
      %p98 = por %p96, %p97
      %p99 = scmp.ne.s32.totalorder %s87, %s88
      %p100 = scmp.eq.s32.totalorder %s24, 3
      %p101 = por %p99, %p100
      %p103 = scmp.ne.s32.totalorder %s88, %s102
      %p104 = scmp.eq.s32.totalorder %s24, 0
      %p105 = por %p103, %p104
      %s107 = sadd.s32 %s106, 1
      %p110 = scmp.eq.s32.totalorder %s18, 3
      %p111 = scmp.ne.s32.totalorder %s106, %s108
      %p112 = scmp.eq.s32.totalorder %s18, 0
      %p113 = por %p111, %p112
      %p114 = scmp.ne.s32.totalorder %s106, %s108
      %p115 = scmp.eq.s32.totalorder %s23, 3
      %p116 = por %p114, %p115
      %p117 = scmp.ne.s32.totalorder %s108, %s109
      %p118 = scmp.eq.s32.totalorder %s23, 0
      %p119 = por %p117, %p118
      %p120 = scmp.ne.s32.totalorder %s108, %s109
      %p121 = scmp.eq.s32.totalorder %s24, 3
      %p122 = por %p120, %p121
      %p124 = scmp.ne.s32.totalorder %s109, %s123
      %p125 = scmp.eq.s32.totalorder %s24, 0
      %p126 = por %p124, %p125
      %s128 = sadd.s32 %s127, 1
      %p131 = scmp.eq.s32.totalorder %s18, 3
      %p132 = scmp.ne.s32.totalorder %s127, %s129
      %p133 = scmp.eq.s32.totalorder %s18, 0
      %p134 = por %p132, %p133
      %p135 = scmp.ne.s32.totalorder %s127, %s129
      %p136 = scmp.eq.s32.totalorder %s23, 3
      %p137 = por %p135, %p136
      %p138 = scmp.ne.s32.totalorder %s129, %s130
      %p139 = scmp.eq.s32.totalorder %s23, 0
      %p140 = por %p138, %p139
      %p141 = scmp.ne.s32.totalorder %s129, %s130
      %p142 = scmp.eq.s32.totalorder %s24, 3
      %p143 = por %p141, %p142
      %p145 = scmp.ne.s32.totalorder %s130, %s144
      %p146 = scmp.eq.s32.totalorder %s24, 0
      %p147 = por %p145, %p146
      %s149 = sadd.s32 %s148, 1
      %p152 = scmp.eq.s32.totalorder %s18, 3
      %p153 = scmp.ne.s32.totalorder %s148, %s150
      %p154 = scmp.eq.s32.totalorder %s18, 0
      %p155 = por %p153, %p154
      %p156 = scmp.ne.s32.totalorder %s148, %s150
      %p157 = scmp.eq.s32.totalorder %s23, 3
      %p158 = por %p156, %p157
      %p159 = scmp.ne.s32.totalorder %s150, %s151
      %p160 = scmp.eq.s32.totalorder %s23, 0
      %p161 = por %p159, %p160
      %p162 = scmp.ne.s32.totalorder %s150, %s151
      %p163 = scmp.eq.s32.totalorder %s24, 3
      %p164 = por %p162, %p163
      %p166 = scmp.ne.s32.totalorder %s151, %s165
      %p167 = scmp.eq.s32.totalorder %s24, 0
      %p168 = por %p166, %p167
      %s170 = sadd.s32 %s169, 1
      %p173 = scmp.eq.s32.totalorder %s18, 3
      %p174 = scmp.ne.s32.totalorder %s169, %s171
      %p175 = scmp.eq.s32.totalorder %s18, 0
      %p176 = por %p174, %p175
      %p177 = scmp.ne.s32.totalorder %s169, %s171
      %p178 = scmp.eq.s32.totalorder %s23, 3
      %p179 = por %p177, %p178
      %p180 = scmp.ne.s32.totalorder %s171, %s172
      %p181 = scmp.eq.s32.totalorder %s23, 0
      %p182 = por %p180, %p181
      %p183 = scmp.ne.s32.totalorder %s171, %s172
      %p184 = scmp.eq.s32.totalorder %s24, 3
      %p185 = por %p183, %p184
      %p187 = scmp.ne.s32.totalorder %s172, %s186
      %p188 = scmp.eq.s32.totalorder %s24, 0
      %p189 = por %p187, %p188
      %s190 = ssub.s32 %s25, %s37
      %s191 = ssub.s32 %s26, %s33
      %s192 = sor.u32 %s190, %s191
      %p193 = scmp.eq.s32.totalorder %s192, 0
      %s195 = sadd.s32 %s194, 1
      %s196 = scalar_select %p193, %s194, %s195
      %p199 = pneg %p193
      %p200 = scmp.eq.s32.totalorder %s18, 3
      %p201 = por %p199, %p200
      %p202 = scmp.ne.s32.totalorder %s194, %s197
      %p203 = scmp.eq.s32.totalorder %s18, 0
      %p204 = por %p202, %p203
      %p205 = scmp.ne.s32.totalorder %s194, %s197
      %p206 = scmp.eq.s32.totalorder %s23, 3
      %p207 = por %p205, %p206
      %p208 = scmp.ne.s32.totalorder %s197, %s198
      %p209 = scmp.eq.s32.totalorder %s23, 0
      %p210 = por %p208, %p209
      %p211 = scmp.ne.s32.totalorder %s197, %s198
      %p212 = scmp.eq.s32.totalorder %s24, 3
      %p213 = por %p211, %p212
      %p215 = scmp.ne.s32.totalorder %s198, %s214
      %p216 = scmp.eq.s32.totalorder %s24, 0
      %p217 = por %p215, %p216
      %p218 = scmp.le.s32.totalorder 1, %s18
      %p219 = scmp.lt.s32.totalorder %s18, 5
      %p220 = pnand %p218, %p219
      %p221 = pneg %p220
      // Predicated region
      $region9: #{coex_height_forward.1} parent=5 // pred_check
        _
      $region10: #{coex_height_forward.1} parent=5 // pred_check_branch
        %223 = sbr.rel (%p220) target = $region12
      $region11: #{coex_height_forward.1} parent=5 // pred_region
        %s224 = ssub.s32 %s18, 1
        // Predicated region
        $region13: #{coex_height_forward.1} parent=11 // pred_check
          %p225 = pneg %p77
        $region14: #{coex_height_forward.1} parent=11 // pred_check_branch
          %227 = sbr.rel (%p225) target = $region16
        $region15: #{coex_height_forward.1} parent=11 // pred_region
          _
        $region16: #{coex_height_forward.1} parent=11 // pred_fallthru
          _
        // Predicated region
        $region17: #{coex_height_forward.1} parent=11 // pred_check
          %p228 = pneg %p98
        $region18: #{coex_height_forward.1} parent=11 // pred_check_branch
          %230 = sbr.rel (%p228) target = $region20
        $region19: #{coex_height_forward.1} parent=11 // pred_region
          _
        $region20: #{coex_height_forward.1} parent=11 // pred_fallthru
          _
        // Predicated region
        $region21: #{coex_height_forward.1} parent=11 // pred_check
          %p231 = pneg %p119
        $region22: #{coex_height_forward.1} parent=11 // pred_check_branch
          %233 = sbr.rel (%p231) target = $region24
        $region23: #{coex_height_forward.1} parent=11 // pred_region
          _
        $region24: #{coex_height_forward.1} parent=11 // pred_fallthru
          _
        // Predicated region
        $region25: #{coex_height_forward.1} parent=11 // pred_check
          %p234 = pneg %p140
        $region26: #{coex_height_forward.1} parent=11 // pred_check_branch
          %236 = sbr.rel (%p234) target = $region28
        $region27: #{coex_height_forward.1} parent=11 // pred_region
          _
        $region28: #{coex_height_forward.1} parent=11 // pred_fallthru
          _
        // Predicated region
        $region29: #{coex_height_forward.1} parent=11 // pred_check
          %p237 = pneg %p161
        $region30: #{coex_height_forward.1} parent=11 // pred_check_branch
          %239 = sbr.rel (%p237) target = $region32
        $region31: #{coex_height_forward.1} parent=11 // pred_region
          _
        $region32: #{coex_height_forward.1} parent=11 // pred_fallthru
          _
        // Predicated region
        $region33: #{coex_height_forward.1} parent=11 // pred_check
          %p240 = pneg %p182
        $region34: #{coex_height_forward.1} parent=11 // pred_check_branch
          %242 = sbr.rel (%p240) target = $region36
        $region35: #{coex_height_forward.1} parent=11 // pred_region
          _
        $region36: #{coex_height_forward.1} parent=11 // pred_fallthru
          _
      $region12: #{coex_height_forward.1} parent=5 // pred_fallthru
        _
      %p243 = scmp.lt.s32.totalorder %s18, 4
      // Predicated region
      $region37: #{coex_height_forward.1} parent=5 // pred_check
        %p244 = pneg %p243
      $region38: #{coex_height_forward.1} parent=5 // pred_check_branch
        %246 = sbr.rel (%p244) target = $region40
      $region39: #{coex_height_forward.1} parent=5 // pred_region
        // Predicated region
        $region41: #{coex_height_forward.1} parent=39 // pred_check
          %p247 = pneg %p50
        $region42: #{coex_height_forward.1} parent=39 // pred_check_branch
          %249 = sbr.rel (%p247) target = $region44
        $region43: #{coex_height_forward.1} parent=39 // pred_region
          %p250 = scmp.lt.s32.totalorder %s25, 1
          %s251 = scalar_select %p250, %s25, 1
          %s252 = smul.addr %s251, 11
          %s253 = smul.addr %s252, 8
          %s254 = scalar_lea.vmem %s0, %s253
        $region44: #{coex_height_forward.1} parent=39 // pred_fallthru
          _
      $region40: #{coex_height_forward.1} parent=5 // pred_fallthru
        _
      %p255 = scmp.le.s32.totalorder 1, %s18
      %p256 = scmp.lt.s32.totalorder %s18, 5
      %p257 = pnand %p255, %p256
      %p258 = pneg %p257
      // Predicated region
      $region45: #{coex_height_forward.1} parent=5 // pred_check
        _
      $region46: #{coex_height_forward.1} parent=5 // pred_check_branch
        %260 = sbr.rel (%p257) target = $region48
      $region47: #{coex_height_forward.1} parent=5 // pred_region
        %s261 = ssub.s32 %s18, 1
        %p262 = scmp.lt.s32.totalorder %s27, 1
        %s263 = scalar_select %p262, %s27, 1
        %s264 = smul.addr %s263, 11
        %s265 = smul.addr %s264, 8
        %s266 = scalar_lea.vmem %s0, %s265
        %p267 = pneg %p56
        %p268 = pneg %p53
        %p269 = pneg %p77
        %p270 = pneg %p74
        %p271 = pneg %p98
        %p272 = pneg %p95
        %p273 = pneg %p119
        %p274 = pneg %p116
        %p275 = pneg %p140
        %p276 = pneg %p137
        %p277 = pneg %p161
        %p278 = pneg %p158
        %p279 = pneg %p182
        %p280 = pneg %p179
        %p281 = pneg %p210
        %p282 = pneg %p207
        %s283 = sand.u32 %s197, 1
        %s284 = scalar_lea.sflag [#allocation6], %s283
        %s285 = sand.u32 %s197, 1
        %s286 = smul.addr %s285, 8
        %s287 = scalar_lea.vmem [#allocation5], %s286
        %p288 = scmp.lt.s32.totalorder %s27, 1
        %s289 = scalar_select %p288, %s27, 1
        %s290 = smul.addr %s289, 11
        %s291 = smul.addr %s290, 8
        %s292 = scalar_lea.vmem %s0, %s291
        %s294 = smul.u32 %s28, 8
        %vm295 = vcmask 142336
        %296 = vst.msk [vmem:[#allocation2] sm:$0xf] %vm295, 0
        %297 = vst.msk [vmem:[#allocation2 + $0x4] sm:$0xf] %vm295, 0
        %298 = vst.msk [vmem:[#allocation2 + $0x8] sm:$0xf] %vm295, 0
        %299 = vst.msk [vmem:[#allocation2 + $0xc] sm:$0xf] %vm295, 0
        %300 = vst.msk [vmem:[#allocation2 + $0x10] sm:$0xf] %vm295, 0
        %301 = vst.msk [vmem:[#allocation2 + $0x14] sm:$0xf] %vm295, 0
        %302 = vst.msk [vmem:[#allocation2 + $0x18] sm:$0xf] %vm295, 0
        %303 = vst.msk [vmem:[#allocation2 + $0x1c] sm:$0xf] %vm295, 0
        %304 = vst.msk [vmem:[#allocation2 + $0x20] sm:$0xf] %vm295, 0
        %305 = vst.msk [vmem:[#allocation2 + $0x24] sm:$0xf] %vm295, 0
        %306 = vst.msk [vmem:[#allocation2 + $0x28] sm:$0xf] %vm295, 0
        %307 = vst.msk [vmem:[#allocation2 + $0x2c] sm:$0xf] %vm295, 0
        %308 = vst.msk [vmem:[#allocation2 + $0x30] sm:$0xf] %vm295, 0
        %309 = vst.msk [vmem:[#allocation2 + $0x34] sm:$0xf] %vm295, 0
        %310 = vst.msk [vmem:[#allocation2 + $0x38] sm:$0xf] %vm295, 0
        %311 = vst.msk [vmem:[#allocation2 + $0x3c] sm:$0xf] %vm295, 0
        %312 = vst.msk [vmem:[#allocation2 + $0x40] sm:$0xf] %vm295, 0
        %313 = vst.msk [vmem:[#allocation2 + $0x44] sm:$0xf] %vm295, 0
        %314 = vst.msk [vmem:[#allocation2 + $0x48] sm:$0xf] %vm295, 0
        %315 = vst.msk [vmem:[#allocation2 + $0x4c] sm:$0xf] %vm295, 0
        %316 = vst.msk [vmem:[#allocation2 + $0x50] sm:$0xf] %vm295, 0
        %317 = vst.msk [vmem:[#allocation2 + $0x54] sm:$0xf] %vm295, 0
        %318 = vst.msk [vmem:[#allocation2 + $0x58] sm:$0xf] %vm295, 0
        %319 = vst.msk [vmem:[#allocation2 + $0x5c] sm:$0xf] %vm295, 0
        %320 = vst.msk [vmem:[#allocation2 + $0x60] sm:$0xf] %vm295, 0
        %321 = vst.msk [vmem:[#allocation2 + $0x64] sm:$0xf] %vm295, 0
        %322 = vst.msk [vmem:[#allocation2 + $0x68] sm:$0xf] %vm295, 0
        %323 = vst.msk [vmem:[#allocation2 + $0x6c] sm:$0xf] %vm295, 0
        %324 = vst.msk [vmem:[#allocation2 + $0x70] sm:$0xf] %vm295, 0
        %325 = vst.msk [vmem:[#allocation2 + $0x74] sm:$0xf] %vm295, 0
        %326 = vst.msk [vmem:[#allocation2 + $0x78] sm:$0xf] %vm295, 0
        %327 = vst.msk [vmem:[#allocation2 + $0x7c] sm:$0xf] %vm295, 0
        %328 = vst.msk [vmem:[#allocation2 + $0x80] sm:$0xf] %vm295, 0
        %329 = vst.msk [vmem:[#allocation2 + $0x84] sm:$0xf] %vm295, 0
        %330 = vst.msk [vmem:[#allocation2 + $0x88] sm:$0xf] %vm295, 0
        %331 = vst.msk [vmem:[#allocation2 + $0x8c] sm:$0xf] %vm295, 0
        %332 = vst.msk [vmem:[#allocation2 + $0x90] sm:$0xf] %vm295, 0
        %333 = vst.msk [vmem:[#allocation2 + $0x94] sm:$0xf] %vm295, 0
        %334 = vst.msk [vmem:[#allocation2 + $0x98] sm:$0xf] %vm295, 0
        %335 = vst.msk [vmem:[#allocation2 + $0x9c] sm:$0xf] %vm295, 0
        %336 = vst.msk [vmem:[#allocation2 + $0xa0] sm:$0xf] %vm295, 0
        %337 = vst.msk [vmem:[#allocation2 + $0xa4] sm:$0xf] %vm295, 0
        %338 = vst.msk [vmem:[#allocation2 + $0xa8] sm:$0xf] %vm295, 0
        %339 = vst.msk [vmem:[#allocation2 + $0xac] sm:$0xf] %vm295, 0
        %340 = vst.msk [vmem:[#allocation2 + $0xb0] sm:$0xf] %vm295, 0
        %341 = vst.msk [vmem:[#allocation2 + $0xb4] sm:$0xf] %vm295, 0
        %342 = vst.msk [vmem:[#allocation2 + $0xb8] sm:$0xf] %vm295, 0
        %343 = vst.msk [vmem:[#allocation2 + $0xbc] sm:$0xf] %vm295, 0
        %344 = vst.msk [vmem:[#allocation3] sm:$0xf] %vm295, 0
        %345 = vst.msk [vmem:[#allocation3 + $0x4] sm:$0xf] %vm295, 0
        %346 = vst.msk [vmem:[#allocation3 + $0x8] sm:$0xf] %vm295, 0
        %347 = vst.msk [vmem:[#allocation3 + $0xc] sm:$0xf] %vm295, 0
        %348 = vst.msk [vmem:[#allocation3 + $0x10] sm:$0xf] %vm295, 0
        %349 = vst.msk [vmem:[#allocation3 + $0x14] sm:$0xf] %vm295, 0
        %350 = vst.msk [vmem:[#allocation3 + $0x18] sm:$0xf] %vm295, 0
        %351 = vst.msk [vmem:[#allocation3 + $0x1c] sm:$0xf] %vm295, 0
        %352 = vst.msk [vmem:[#allocation3 + $0x20] sm:$0xf] %vm295, 0
        %353 = vst.msk [vmem:[#allocation3 + $0x24] sm:$0xf] %vm295, 0
        %354 = vst.msk [vmem:[#allocation3 + $0x28] sm:$0xf] %vm295, 0
        %355 = vst.msk [vmem:[#allocation3 + $0x2c] sm:$0xf] %vm295, 0
        %356 = vst.msk [vmem:[#allocation3 + $0x30] sm:$0xf] %vm295, 0
        %357 = vst.msk [vmem:[#allocation3 + $0x34] sm:$0xf] %vm295, 0
        %358 = vst.msk [vmem:[#allocation3 + $0x38] sm:$0xf] %vm295, 0
        %359 = vst.msk [vmem:[#allocation3 + $0x3c] sm:$0xf] %vm295, 0
        %360 = vst.msk [vmem:[#allocation3 + $0x40] sm:$0xf] %vm295, 0
        %361 = vst.msk [vmem:[#allocation3 + $0x44] sm:$0xf] %vm295, 0
        %362 = vst.msk [vmem:[#allocation3 + $0x48] sm:$0xf] %vm295, 0
        %363 = vst.msk [vmem:[#allocation3 + $0x4c] sm:$0xf] %vm295, 0
        %364 = vst.msk [vmem:[#allocation3 + $0x50] sm:$0xf] %vm295, 0
        %365 = vst.msk [vmem:[#allocation3 + $0x54] sm:$0xf] %vm295, 0
        %366 = vst.msk [vmem:[#allocation3 + $0x58] sm:$0xf] %vm295, 0
        %367 = vst.msk [vmem:[#allocation3 + $0x5c] sm:$0xf] %vm295, 0
        %368 = vst.msk [vmem:[#allocation3 + $0x60] sm:$0xf] %vm295, 0
        %369 = vst.msk [vmem:[#allocation3 + $0x64] sm:$0xf] %vm295, 0
        %370 = vst.msk [vmem:[#allocation3 + $0x68] sm:$0xf] %vm295, 0
        %371 = vst.msk [vmem:[#allocation3 + $0x6c] sm:$0xf] %vm295, 0
        %372 = vst.msk [vmem:[#allocation3 + $0x70] sm:$0xf] %vm295, 0
        %373 = vst.msk [vmem:[#allocation3 + $0x74] sm:$0xf] %vm295, 0
        %374 = vst.msk [vmem:[#allocation3 + $0x78] sm:$0xf] %vm295, 0
        %375 = vst.msk [vmem:[#allocation3 + $0x7c] sm:$0xf] %vm295, 0
        %376 = vst.msk [vmem:[#allocation3 + $0x80] sm:$0xf] %vm295, 0
        %377 = vst.msk [vmem:[#allocation3 + $0x84] sm:$0xf] %vm295, 0
        %378 = vst.msk [vmem:[#allocation3 + $0x88] sm:$0xf] %vm295, 0
        %379 = vst.msk [vmem:[#allocation3 + $0x8c] sm:$0xf] %vm295, 0
        %380 = vst.msk [vmem:[#allocation3 + $0x90] sm:$0xf] %vm295, 0
        %381 = vst.msk [vmem:[#allocation3 + $0x94] sm:$0xf] %vm295, 0
        %382 = vst.msk [vmem:[#allocation3 + $0x98] sm:$0xf] %vm295, 0
        %383 = vst.msk [vmem:[#allocation3 + $0x9c] sm:$0xf] %vm295, 0
        %s384 = smul.u32 %s28, 32
        %s385 = ssub.s32 %s294, 2
        %s386 = scalar_lea.vmem %s292, %s384
        %v387 = vld [vmem:[%s386] sm:$0xff]
        %v388 = vld [vmem:[%s386 + $0x8] sm:$0xf]
        %v389 = vpack.c.bf16 %v388, %v387
        %v390 = vld [vmem:[%s1] sm:$0xf]
        %v391 = vld [vmem:[%s1 + $0x4] sm:$0xf]
        %v392 = vld [vmem:[%s1 + $0x8] sm:$0xf]
        %v393 = vld [vmem:[%s1 + $0xc] sm:$0xf]
        %s394 = scalar_lea.vmem %s1, 16
        %v395 = vld [vmem:[%s394] sm:$0xf]
        %v396 = vld [vmem:[%s394 + $0x4] sm:$0xf]
        %v397 = vld [vmem:[%s394 + $0x8] sm:$0xf]
        %v398 = vld [vmem:[%s394 + $0xc] sm:$0xf]
        %v403 = vunpack.c.l.b16 %v395
        %v404 = vunpack.c.l.b16 %v396
        %v405 = vunpack.c.l.b16 %v397
        %v406 = vunpack.c.l.b16 %v398
        %v407 = vpack.c.b16 %v404, %v403
        %v408 = vpack.c.b16 %v406, %v405
        %410 = vrot.lane.b32.xlu0 %v389, 127
        %v411 = vpop.permute.xlu0 %410
        %vm412 = vcmask 97280
        %v414 = vsel %vm412, %v407, 0
        %v417 = vsel %vm412, %v408, 0
        %vm419 = vcmask 1045504
        %v421 = vsel %vm419, %v411, 0
        %423 = vmatprep.subr.bf16.mxu0 0
        %424 = vmatpush1.bf16.msra.mxu0 0
        %425 = vmatprep.subr.bf16.mxu0 0
        %426 = vmatpush1.bf16.msra.mxu0 0
        %427 = vmatprep.subr.bf16.mxu0 0
        %428 = vmatpush1.bf16.msra.mxu0 0
        %429 = vmatprep.subr.bf16.mxu0 0
        %430 = vmatpush1.bf16.msra.mxu0 0
        %431 = vmatprep.subr.bf16.mxu0 0
        %432 = vmatpush1.bf16.msra.mxu0 0
        %433 = vmatprep.subr.bf16.mxu0 0
        %434 = vmatpush1.bf16.msra.mxu0 0
        %435 = vmatprep.subr.bf16.mxu0 0
        %436 = vmatpush1.bf16.msra.mxu0 0
        %437 = vmatprep.subr.bf16.mxu0 0
        %438 = vmatpush1.bf16.msra.mxu0 %v421
        %439 = vmatprep.subr.bf16.mxu0 0
        %440 = vmatpush2.bf16.msra.mxu0 0
        %441 = vmatprep.subr.bf16.mxu0 0
        %442 = vmatpush2.bf16.msra.mxu0 0
        %443 = vmatprep.subr.bf16.mxu0 0
        %444 = vmatpush2.bf16.msra.mxu0 0
        %445 = vmatprep.subr.bf16.mxu0 0
        %446 = vmatpush2.bf16.msra.mxu0 0
        %447 = vmatprep.subr.bf16.mxu0 0
        %448 = vmatpush2.bf16.msra.mxu0 0
        %449 = vmatprep.subr.bf16.mxu0 0
        %450 = vmatpush2.bf16.msra.mxu0 0
        %451 = vmatprep.subr.bf16.mxu0 0
        %452 = vmatpush2.bf16.msra.mxu0 0
        %453 = vmatprep.subr.bf16.mxu0 0
        %454 = vmatpush2.bf16.msra.mxu0 0
        %455 = vmatprep.mubr.bf16.mxu0 0
        %456 = vmatmul.mubr.bf16.gmra.mxu0 %v414
        %v457 = vpop.f32.mrf.mxu0
        %v458 = vadd.f32 0.0, %v457
        %v459 = vpop.f32.mrf.mxu0
        %v460 = vpop.f32.mrf.mxu0
        %v461 = vadd.f32 0.0, %v460
        %v462 = vpop.f32.mrf.mxu0
        %463 = vmatprep.mubr.bf16.mxu0 0
        %464 = vmatmul.mubr.bf16.gmra.mxu0 %v417
        %v465 = vpop.f32.mrf.mxu0
        %v466 = vadd.f32 0.0, %v465
        %v467 = vpop.f32.mrf.mxu0
        %v468 = vpop.f32.mrf.mxu0
        %v469 = vadd.f32 0.0, %v468
        %v470 = vpop.f32.mrf.mxu0
        %471 = vdwg.mxu0
        %v476 = vunpack.c.l.b16 %v390
        %v477 = vunpack.c.l.b16 %v391
        %v478 = vunpack.c.l.b16 %v392
        %v479 = vunpack.c.l.b16 %v393
        %v480 = vpack.c.b16 %v477, %v476
        %v481 = vpack.c.b16 %v479, %v478
        %v483 = vsel %vm412, %v480, 0
        %v486 = vsel %vm412, %v481, 0
        %v489 = vsel %vm419, %v389, 0
        %491 = vmatprep.subr.bf16.mxu0 0
        %492 = vmatpush1.bf16.msra.mxu0 0
        %493 = vmatprep.subr.bf16.mxu0 0
        %494 = vmatpush1.bf16.msra.mxu0 0
        %495 = vmatprep.subr.bf16.mxu0 0
        %496 = vmatpush1.bf16.msra.mxu0 0
        %497 = vmatprep.subr.bf16.mxu0 0
        %498 = vmatpush1.bf16.msra.mxu0 0
        %499 = vmatprep.subr.bf16.mxu0 0
        %500 = vmatpush1.bf16.msra.mxu0 0
        %501 = vmatprep.subr.bf16.mxu0 0
        %502 = vmatpush1.bf16.msra.mxu0 0
        %503 = vmatprep.subr.bf16.mxu0 0
        %504 = vmatpush1.bf16.msra.mxu0 0
        %505 = vmatprep.subr.bf16.mxu0 0
        %506 = vmatpush1.bf16.msra.mxu0 %v489
        %507 = vmatprep.subr.bf16.mxu0 0
        %508 = vmatpush2.bf16.msra.mxu0 0
        %509 = vmatprep.subr.bf16.mxu0 0
        %510 = vmatpush2.bf16.msra.mxu0 0
        %511 = vmatprep.subr.bf16.mxu0 0
        %512 = vmatpush2.bf16.msra.mxu0 0
        %513 = vmatprep.subr.bf16.mxu0 0
        %514 = vmatpush2.bf16.msra.mxu0 0
        %515 = vmatprep.subr.bf16.mxu0 0
        %516 = vmatpush2.bf16.msra.mxu0 0
        %517 = vmatprep.subr.bf16.mxu0 0
        %518 = vmatpush2.bf16.msra.mxu0 0
        %519 = vmatprep.subr.bf16.mxu0 0
        %520 = vmatpush2.bf16.msra.mxu0 0
        %521 = vmatprep.subr.bf16.mxu0 0
        %522 = vmatpush2.bf16.msra.mxu0 0
        %523 = vmatprep.mubr.bf16.mxu0 0
        %524 = vmatmul.mubr.bf16.gmra.mxu0 %v483
        %v525 = vpop.f32.mrf.mxu0
        %v526 = vadd.f32 %v458, %v525
        %v527 = vpop.f32.mrf.mxu0
        %v528 = vpop.f32.mrf.mxu0
        %v529 = vadd.f32 %v461, %v528
        %v530 = vpop.f32.mrf.mxu0
        %531 = vmatprep.mubr.bf16.mxu0 0
        %532 = vmatmul.mubr.bf16.gmra.mxu0 %v486
        %v533 = vpop.f32.mrf.mxu0
        %v534 = vadd.f32 %v466, %v533
        %v535 = vpop.f32.mrf.mxu0
        %v536 = vpop.f32.mrf.mxu0
        %v537 = vadd.f32 %v469, %v536
        %v538 = vpop.f32.mrf.mxu0
        %539 = vdwg.mxu0
        %s540 = scalar_lea.vmem %s1, 32
        %v541 = vld [vmem:[%s540] sm:$0xf]
        %v542 = vld [vmem:[%s540 + $0x4] sm:$0xf]
        %v543 = vld [vmem:[%s540 + $0x8] sm:$0xf]
        %v544 = vld [vmem:[%s540 + $0xc] sm:$0xf]
        %v549 = vunpack.c.l.b16 %v541
        %v550 = vunpack.c.l.b16 %v542
        %v551 = vunpack.c.l.b16 %v543
        %v552 = vunpack.c.l.b16 %v544
        %v553 = vpack.c.b16 %v550, %v549
        %v554 = vpack.c.b16 %v552, %v551
        %555 = vrot.lane.b32.xlu0 %v389, 126
        %v556 = vpop.permute.xlu0 %555
        %v558 = vsel %vm412, %v553, 0
        %v561 = vsel %vm412, %v554, 0
        %v564 = vsel %vm419, %v556, 0
        %566 = vmatprep.subr.bf16.mxu0 0
        %567 = vmatpush1.bf16.msra.mxu0 0
        %568 = vmatprep.subr.bf16.mxu0 0
        %569 = vmatpush1.bf16.msra.mxu0 0
        %570 = vmatprep.subr.bf16.mxu0 0
        %571 = vmatpush1.bf16.msra.mxu0 0
        %572 = vmatprep.subr.bf16.mxu0 0
        %573 = vmatpush1.bf16.msra.mxu0 0
        %574 = vmatprep.subr.bf16.mxu0 0
        %575 = vmatpush1.bf16.msra.mxu0 0
        %576 = vmatprep.subr.bf16.mxu0 0
        %577 = vmatpush1.bf16.msra.mxu0 0
        %578 = vmatprep.subr.bf16.mxu0 0
        %579 = vmatpush1.bf16.msra.mxu0 0
        %580 = vmatprep.subr.bf16.mxu0 0
        %581 = vmatpush1.bf16.msra.mxu0 %v564
        %582 = vmatprep.subr.bf16.mxu0 0
        %583 = vmatpush2.bf16.msra.mxu0 0
        %584 = vmatprep.subr.bf16.mxu0 0
        %585 = vmatpush2.bf16.msra.mxu0 0
        %586 = vmatprep.subr.bf16.mxu0 0
        %587 = vmatpush2.bf16.msra.mxu0 0
        %588 = vmatprep.subr.bf16.mxu0 0
        %589 = vmatpush2.bf16.msra.mxu0 0
        %590 = vmatprep.subr.bf16.mxu0 0
        %591 = vmatpush2.bf16.msra.mxu0 0
        %592 = vmatprep.subr.bf16.mxu0 0
        %593 = vmatpush2.bf16.msra.mxu0 0
        %594 = vmatprep.subr.bf16.mxu0 0
        %595 = vmatpush2.bf16.msra.mxu0 0
        %596 = vmatprep.subr.bf16.mxu0 0
        %597 = vmatpush2.bf16.msra.mxu0 0
        %598 = vmatprep.mubr.bf16.mxu0 0
        %599 = vmatmul.mubr.bf16.gmra.mxu0 %v558
        %v600 = vpop.f32.mrf.mxu0
        %v601 = vadd.f32 0.0, %v600
        %v602 = vpop.f32.mrf.mxu0
        %v603 = vpop.f32.mrf.mxu0
        %v604 = vadd.f32 0.0, %v603
        %v605 = vpop.f32.mrf.mxu0
        %606 = vmatprep.mubr.bf16.mxu0 0
        %607 = vmatmul.mubr.bf16.gmra.mxu0 %v561
        %v608 = vpop.f32.mrf.mxu0
        %v609 = vadd.f32 0.0, %v608
        %v610 = vpop.f32.mrf.mxu0
        %v611 = vpop.f32.mrf.mxu0
        %v612 = vadd.f32 0.0, %v611
        %v613 = vpop.f32.mrf.mxu0
        %614 = vdwg.mxu0
        %v615 = vadd.f32 %v526, %v601
        %v616 = vadd.f32 %v529, %v604
        %v617 = vadd.f32 %v534, %v609
        %v618 = vadd.f32 %v537, %v612
        %v619 = vld [vmem:[%s4] sm:$0xff]
        %v620 = vld [vmem:[%s4 + $0x8] sm:$0xff]
        %v621 = vld [vmem:[%s4 + $0x10] sm:$0xff]
        %v622 = vld [vmem:[%s4 + $0x18] sm:$0xff]
        %624 = vset.pattern.permute.xlu0 0
        %625 = vperm.xlu0 %624, %v619
        %v626 = vpop.permute.xlu0 %625
        %629 = vset.pattern.permute.xlu0 0
        %630 = vperm.xlu0 %629, %v620
        %v631 = vpop.permute.xlu0 %630
        %634 = vset.pattern.permute.xlu0 0
        %635 = vperm.xlu0 %634, %v621
        %v636 = vpop.permute.xlu0 %635
        %639 = vset.pattern.permute.xlu0 0
        %640 = vperm.xlu0 %639, %v622
        %v641 = vpop.permute.xlu0 %640
        %v643 = vadd.f32 %v615, %v626
        %v644 = vadd.f32 %v616, %v631
        %v645 = vadd.f32 %v617, %v636
        %v646 = vadd.f32 %v618, %v641
        %p647 = scmp.ge.s32.totalorder %s385, 0
        %p648 = scmp.lt.s32.totalorder %s385, 16
        %p649 = pnand %p647, %p648
        %p650 = pneg %p649
        %v651 = vmax.f32 %v643, 0.0
        %v652 = vmax.f32 %v644, 0.0
        %v653 = vmax.f32 %v645, 0.0
        %v654 = vmax.f32 %v646, 0.0
        %s655 = scalar_select %p650, 1, 0
        %v656 = vstv %s655
        %vm657 = vcmp.eq.s32.totalorder %v656, 1
        %v658 = vsel %vm657, %v651, 0.0
        %v659 = vsel %vm657, %v652, 0.0
        %v660 = vsel %vm657, %v653, 0.0
        %v661 = vsel %vm657, %v654, 0.0
        %v662 = vpack.c.bf16 %v659, %v658
        %v663 = vpack.c.bf16 %v661, %v660
        %v666 = vunpack.c.l.b16 %v662
        %v667 = vunpack.c.h.b16 %v662
        %v668 = vunpack.c.l.b16 %v663
        %v669 = vunpack.c.h.b16 %v663
        %v670 = vpack.c.b16 %v666, %v666
        %v671 = vpack.c.b16 %v667, %v667
        %v672 = vpack.c.b16 %v668, %v668
        %v673 = vpack.c.b16 %v669, %v669
        %674 = vrot.lane.b32.xlu0 %v670, 1
        %v675 = vpop.permute.xlu0 %674
        %676 = vrot.lane.b32.xlu0 %v671, 1
        %v677 = vpop.permute.xlu0 %676
        %678 = vrot.lane.b32.xlu0 %v672, 1
        %v679 = vpop.permute.xlu0 %678
        %680 = vrot.lane.b32.xlu0 %v673, 1
        %v681 = vpop.permute.xlu0 %680
        %vm686 = vcmask 134152
        %687 = vst.msk [vmem:[#allocation2] sm:$0xf] %vm686, %v675
        %688 = vst.msk [vmem:[#allocation2 + $0x4] sm:$0xf] %vm686, %v677
        %689 = vst.msk [vmem:[#allocation2 + $0x8] sm:$0xf] %vm686, %v679
        %690 = vst.msk [vmem:[#allocation2 + $0xc] sm:$0xf] %vm686, %v681
        %s691 = sadd.s32 %s294, 4294967295
        %s692 = sadd.s32 %s384, 4
        %s693 = scalar_lea.vmem %s292, %s692
        %v694 = vld [vmem:[%s693] sm:$0xff]
        %v695 = vld [vmem:[%s693 + $0x8] sm:$0xf]
        %v696 = vpack.c.bf16 %v695, %v694
        %v697 = vld [vmem:[%s1] sm:$0xf]
        %v698 = vld [vmem:[%s1 + $0x4] sm:$0xf]
        %v699 = vld [vmem:[%s1 + $0x8] sm:$0xf]
        %v700 = vld [vmem:[%s1 + $0xc] sm:$0xf]
        %v701 = vld [vmem:[%s394] sm:$0xf]
        %v702 = vld [vmem:[%s394 + $0x4] sm:$0xf]
        %v703 = vld [vmem:[%s394 + $0x8] sm:$0xf]
        %v704 = vld [vmem:[%s394 + $0xc] sm:$0xf]
        %v709 = vunpack.c.l.b16 %v701
        %v710 = vunpack.c.l.b16 %v702
        %v711 = vunpack.c.l.b16 %v703
        %v712 = vunpack.c.l.b16 %v704
        %v713 = vpack.c.b16 %v710, %v709
        %v714 = vpack.c.b16 %v712, %v711
        %716 = vrot.lane.b32.xlu0 %v696, 127
        %v717 = vpop.permute.xlu0 %716
        %v719 = vsel %vm412, %v713, 0
        %v722 = vsel %vm412, %v714, 0
        %v725 = vsel %vm419, %v717, 0
        %727 = vmatprep.subr.bf16.mxu0 0
        %728 = vmatpush1.bf16.msra.mxu0 0
        %729 = vmatprep.subr.bf16.mxu0 0
        %730 = vmatpush1.bf16.msra.mxu0 0
        %731 = vmatprep.subr.bf16.mxu0 0
        %732 = vmatpush1.bf16.msra.mxu0 0
        %733 = vmatprep.subr.bf16.mxu0 0
        %734 = vmatpush1.bf16.msra.mxu0 0
        %735 = vmatprep.subr.bf16.mxu0 0
        %736 = vmatpush1.bf16.msra.mxu0 0
        %737 = vmatprep.subr.bf16.mxu0 0
        %738 = vmatpush1.bf16.msra.mxu0 0
        %739 = vmatprep.subr.bf16.mxu0 0
        %740 = vmatpush1.bf16.msra.mxu0 0
        %741 = vmatprep.subr.bf16.mxu0 0
        %742 = vmatpush1.bf16.msra.mxu0 %v725
        %743 = vmatprep.subr.bf16.mxu0 0
        %744 = vmatpush2.bf16.msra.mxu0 0
        %745 = vmatprep.subr.bf16.mxu0 0
        %746 = vmatpush2.bf16.msra.mxu0 0
        %747 = vmatprep.subr.bf16.mxu0 0
        %748 = vmatpush2.bf16.msra.mxu0 0
        %749 = vmatprep.subr.bf16.mxu0 0
        %750 = vmatpush2.bf16.msra.mxu0 0
        %751 = vmatprep.subr.bf16.mxu0 0
        %752 = vmatpush2.bf16.msra.mxu0 0
        %753 = vmatprep.subr.bf16.mxu0 0
        %754 = vmatpush2.bf16.msra.mxu0 0
        %755 = vmatprep.subr.bf16.mxu0 0
        %756 = vmatpush2.bf16.msra.mxu0 0
        %757 = vmatprep.subr.bf16.mxu0 0
        %758 = vmatpush2.bf16.msra.mxu0 0
        %759 = vmatprep.mubr.bf16.mxu0 0
        %760 = vmatmul.mubr.bf16.gmra.mxu0 %v719
        %v761 = vpop.f32.mrf.mxu0
        %v762 = vadd.f32 0.0, %v761
        %v763 = vpop.f32.mrf.mxu0
        %v764 = vpop.f32.mrf.mxu0
        %v765 = vadd.f32 0.0, %v764
        %v766 = vpop.f32.mrf.mxu0
        %767 = vmatprep.mubr.bf16.mxu0 0
        %768 = vmatmul.mubr.bf16.gmra.mxu0 %v722
        %v769 = vpop.f32.mrf.mxu0
        %v770 = vadd.f32 0.0, %v769
        %v771 = vpop.f32.mrf.mxu0
        %v772 = vpop.f32.mrf.mxu0
        %v773 = vadd.f32 0.0, %v772
        %v774 = vpop.f32.mrf.mxu0
        %775 = vdwg.mxu0
        %v780 = vunpack.c.l.b16 %v697
        %v781 = vunpack.c.l.b16 %v698
        %v782 = vunpack.c.l.b16 %v699
        %v783 = vunpack.c.l.b16 %v700
        %v784 = vpack.c.b16 %v781, %v780
        %v785 = vpack.c.b16 %v783, %v782
        %v787 = vsel %vm412, %v784, 0
        %v790 = vsel %vm412, %v785, 0
        %v793 = vsel %vm419, %v696, 0
        %795 = vmatprep.subr.bf16.mxu0 0
        %796 = vmatpush1.bf16.msra.mxu0 0
        %797 = vmatprep.subr.bf16.mxu0 0
        %798 = vmatpush1.bf16.msra.mxu0 0
        %799 = vmatprep.subr.bf16.mxu0 0
        %800 = vmatpush1.bf16.msra.mxu0 0
        %801 = vmatprep.subr.bf16.mxu0 0
        %802 = vmatpush1.bf16.msra.mxu0 0
        %803 = vmatprep.subr.bf16.mxu0 0
        %804 = vmatpush1.bf16.msra.mxu0 0
        %805 = vmatprep.subr.bf16.mxu0 0
        %806 = vmatpush1.bf16.msra.mxu0 0
        %807 = vmatprep.subr.bf16.mxu0 0
        %808 = vmatpush1.bf16.msra.mxu0 0
        %809 = vmatprep.subr.bf16.mxu0 0
        %810 = vmatpush1.bf16.msra.mxu0 %v793
        %811 = vmatprep.subr.bf16.mxu0 0
        %812 = vmatpush2.bf16.msra.mxu0 0
        %813 = vmatprep.subr.bf16.mxu0 0
        %814 = vmatpush2.bf16.msra.mxu0 0
        %815 = vmatprep.subr.bf16.mxu0 0
        %816 = vmatpush2.bf16.msra.mxu0 0
        %817 = vmatprep.subr.bf16.mxu0 0
        %818 = vmatpush2.bf16.msra.mxu0 0
        %819 = vmatprep.subr.bf16.mxu0 0
        %820 = vmatpush2.bf16.msra.mxu0 0
        %821 = vmatprep.subr.bf16.mxu0 0
        %822 = vmatpush2.bf16.msra.mxu0 0
        %823 = vmatprep.subr.bf16.mxu0 0
        %824 = vmatpush2.bf16.msra.mxu0 0
        %825 = vmatprep.subr.bf16.mxu0 0
        %826 = vmatpush2.bf16.msra.mxu0 0
        %827 = vmatprep.mubr.bf16.mxu0 0
        %828 = vmatmul.mubr.bf16.gmra.mxu0 %v787
        %v829 = vpop.f32.mrf.mxu0
        %v830 = vadd.f32 %v762, %v829
        %v831 = vpop.f32.mrf.mxu0
        %v832 = vpop.f32.mrf.mxu0
        %v833 = vadd.f32 %v765, %v832
        %v834 = vpop.f32.mrf.mxu0
        %835 = vmatprep.mubr.bf16.mxu0 0
        %836 = vmatmul.mubr.bf16.gmra.mxu0 %v790
        %v837 = vpop.f32.mrf.mxu0
        %v838 = vadd.f32 %v770, %v837
        %v839 = vpop.f32.mrf.mxu0
        %v840 = vpop.f32.mrf.mxu0
        %v841 = vadd.f32 %v773, %v840
        %v842 = vpop.f32.mrf.mxu0
        %843 = vdwg.mxu0
        %v844 = vld [vmem:[%s540] sm:$0xf]
        %v845 = vld [vmem:[%s540 + $0x4] sm:$0xf]
        %v846 = vld [vmem:[%s540 + $0x8] sm:$0xf]
        %v847 = vld [vmem:[%s540 + $0xc] sm:$0xf]
        %v852 = vunpack.c.l.b16 %v844
        %v853 = vunpack.c.l.b16 %v845
        %v854 = vunpack.c.l.b16 %v846
        %v855 = vunpack.c.l.b16 %v847
        %v856 = vpack.c.b16 %v853, %v852
        %v857 = vpack.c.b16 %v855, %v854
        %858 = vrot.lane.b32.xlu0 %v696, 126
        %v859 = vpop.permute.xlu0 %858
        %v861 = vsel %vm412, %v856, 0
        %v864 = vsel %vm412, %v857, 0
        %v867 = vsel %vm419, %v859, 0
        %869 = vmatprep.subr.bf16.mxu0 0
        %870 = vmatpush1.bf16.msra.mxu0 0
        %871 = vmatprep.subr.bf16.mxu0 0
        %872 = vmatpush1.bf16.msra.mxu0 0
        %873 = vmatprep.subr.bf16.mxu0 0
        %874 = vmatpush1.bf16.msra.mxu0 0
        %875 = vmatprep.subr.bf16.mxu0 0
        %876 = vmatpush1.bf16.msra.mxu0 0
        %877 = vmatprep.subr.bf16.mxu0 0
        %878 = vmatpush1.bf16.msra.mxu0 0
        %879 = vmatprep.subr.bf16.mxu0 0
        %880 = vmatpush1.bf16.msra.mxu0 0
        %881 = vmatprep.subr.bf16.mxu0 0
        %882 = vmatpush1.bf16.msra.mxu0 0
        %883 = vmatprep.subr.bf16.mxu0 0
        %884 = vmatpush1.bf16.msra.mxu0 %v867
        %885 = vmatprep.subr.bf16.mxu0 0
        %886 = vmatpush2.bf16.msra.mxu0 0
        %887 = vmatprep.subr.bf16.mxu0 0
        %888 = vmatpush2.bf16.msra.mxu0 0
        %889 = vmatprep.subr.bf16.mxu0 0
        %890 = vmatpush2.bf16.msra.mxu0 0
        %891 = vmatprep.subr.bf16.mxu0 0
        %892 = vmatpush2.bf16.msra.mxu0 0
        %893 = vmatprep.subr.bf16.mxu0 0
        %894 = vmatpush2.bf16.msra.mxu0 0
        %895 = vmatprep.subr.bf16.mxu0 0
        %896 = vmatpush2.bf16.msra.mxu0 0
        %897 = vmatprep.subr.bf16.mxu0 0
        %898 = vmatpush2.bf16.msra.mxu0 0
        %899 = vmatprep.subr.bf16.mxu0 0
        %900 = vmatpush2.bf16.msra.mxu0 0
        %901 = vmatprep.mubr.bf16.mxu0 0
        %902 = vmatmul.mubr.bf16.gmra.mxu0 %v861
        %v903 = vpop.f32.mrf.mxu0
        %v904 = vadd.f32 0.0, %v903
        %v905 = vpop.f32.mrf.mxu0
        %v906 = vpop.f32.mrf.mxu0
        %v907 = vadd.f32 0.0, %v906
        %v908 = vpop.f32.mrf.mxu0
        %909 = vmatprep.mubr.bf16.mxu0 0
        %910 = vmatmul.mubr.bf16.gmra.mxu0 %v864
        %v911 = vpop.f32.mrf.mxu0
        %v912 = vadd.f32 0.0, %v911
        %v913 = vpop.f32.mrf.mxu0
        %v914 = vpop.f32.mrf.mxu0
        %v915 = vadd.f32 0.0, %v914
        %v916 = vpop.f32.mrf.mxu0
        %917 = vdwg.mxu0
        %v918 = vadd.f32 %v830, %v904
        %v919 = vadd.f32 %v833, %v907
        %v920 = vadd.f32 %v838, %v912
        %v921 = vadd.f32 %v841, %v915
        %v922 = vld [vmem:[%s4] sm:$0xff]
        %v923 = vld [vmem:[%s4 + $0x8] sm:$0xff]
        %v924 = vld [vmem:[%s4 + $0x10] sm:$0xff]
        %v925 = vld [vmem:[%s4 + $0x18] sm:$0xff]
        %927 = vset.pattern.permute.xlu0 0
        %928 = vperm.xlu0 %927, %v922
        %v929 = vpop.permute.xlu0 %928
        %932 = vset.pattern.permute.xlu0 0
        %933 = vperm.xlu0 %932, %v923
        %v934 = vpop.permute.xlu0 %933
        %937 = vset.pattern.permute.xlu0 0
        %938 = vperm.xlu0 %937, %v924
        %v939 = vpop.permute.xlu0 %938
        %942 = vset.pattern.permute.xlu0 0
        %943 = vperm.xlu0 %942, %v925
        %v944 = vpop.permute.xlu0 %943
        %v946 = vadd.f32 %v918, %v929
        %v947 = vadd.f32 %v919, %v934
        %v948 = vadd.f32 %v920, %v939
        %v949 = vadd.f32 %v921, %v944
        %p950 = scmp.ge.s32.totalorder %s691, 0
        %p951 = scmp.lt.s32.totalorder %s691, 16
        %p952 = pnand %p950, %p951
        %p953 = pneg %p952
        %v954 = vmax.f32 %v946, 0.0
        %v955 = vmax.f32 %v947, 0.0
        %v956 = vmax.f32 %v948, 0.0
        %v957 = vmax.f32 %v949, 0.0
        %s958 = scalar_select %p953, 1, 0
        %v959 = vstv %s958
        %vm960 = vcmp.eq.s32.totalorder %v959, 1
        %v961 = vsel %vm960, %v954, 0.0
        %v962 = vsel %vm960, %v955, 0.0
        %v963 = vsel %vm960, %v956, 0.0
        %v964 = vsel %vm960, %v957, 0.0
        %v965 = vpack.c.bf16 %v962, %v961
        %v966 = vpack.c.bf16 %v964, %v963
        %v969 = vunpack.c.l.b16 %v965
        %v970 = vunpack.c.h.b16 %v965
        %v971 = vunpack.c.l.b16 %v966
        %v972 = vunpack.c.h.b16 %v966
        %v973 = vpack.c.b16 %v969, %v969
        %v974 = vpack.c.b16 %v970, %v970
        %v975 = vpack.c.b16 %v971, %v971
        %v976 = vpack.c.b16 %v972, %v972
        %977 = vrot.lane.b32.xlu0 %v973, 1
        %v978 = vpop.permute.xlu0 %977
        %979 = vrot.lane.b32.xlu0 %v974, 1
        %v980 = vpop.permute.xlu0 %979
        %981 = vrot.lane.b32.xlu0 %v975, 1
        %v982 = vpop.permute.xlu0 %981
        %983 = vrot.lane.b32.xlu0 %v976, 1
        %v984 = vpop.permute.xlu0 %983
        %989 = vst.msk [vmem:[#allocation2 + $0x10] sm:$0xf] %vm686, %v978
        %990 = vst.msk [vmem:[#allocation2 + $0x14] sm:$0xf] %vm686, %v980
        %991 = vst.msk [vmem:[#allocation2 + $0x18] sm:$0xf] %vm686, %v982
        %992 = vst.msk [vmem:[#allocation2 + $0x1c] sm:$0xf] %vm686, %v984
        %s993 = sadd.s32 %s384, 8
        %s994 = scalar_lea.vmem %s292, %s993
        %v995 = vld [vmem:[%s994] sm:$0xff]
        %v996 = vld [vmem:[%s994 + $0x8] sm:$0xf]
        %v997 = vpack.c.bf16 %v996, %v995
        %v998 = vld [vmem:[%s1] sm:$0xf]
        %v999 = vld [vmem:[%s1 + $0x4] sm:$0xf]
        %v1000 = vld [vmem:[%s1 + $0x8] sm:$0xf]
        %v1001 = vld [vmem:[%s1 + $0xc] sm:$0xf]
        %v1002 = vld [vmem:[%s394] sm:$0xf]
        %v1003 = vld [vmem:[%s394 + $0x4] sm:$0xf]
        %v1004 = vld [vmem:[%s394 + $0x8] sm:$0xf]
        %v1005 = vld [vmem:[%s394 + $0xc] sm:$0xf]
        %v1010 = vunpack.c.l.b16 %v1002
        %v1011 = vunpack.c.l.b16 %v1003
        %v1012 = vunpack.c.l.b16 %v1004
        %v1013 = vunpack.c.l.b16 %v1005
        %v1014 = vpack.c.b16 %v1011, %v1010
        %v1015 = vpack.c.b16 %v1013, %v1012
        %1017 = vrot.lane.b32.xlu0 %v997, 127
        %v1018 = vpop.permute.xlu0 %1017
        %v1020 = vsel %vm412, %v1014, 0
        %v1023 = vsel %vm412, %v1015, 0
        %v1026 = vsel %vm419, %v1018, 0
        %1028 = vmatprep.subr.bf16.mxu0 0
        %1029 = vmatpush1.bf16.msra.mxu0 0
        %1030 = vmatprep.subr.bf16.mxu0 0
        %1031 = vmatpush1.bf16.msra.mxu0 0
        %1032 = vmatprep.subr.bf16.mxu0 0
        %1033 = vmatpush1.bf16.msra.mxu0 0
        %1034 = vmatprep.subr.bf16.mxu0 0
        %1035 = vmatpush1.bf16.msra.mxu0 0
        %1036 = vmatprep.subr.bf16.mxu0 0
        %1037 = vmatpush1.bf16.msra.mxu0 0
        %1038 = vmatprep.subr.bf16.mxu0 0
        %1039 = vmatpush1.bf16.msra.mxu0 0
        %1040 = vmatprep.subr.bf16.mxu0 0
        %1041 = vmatpush1.bf16.msra.mxu0 0
        %1042 = vmatprep.subr.bf16.mxu0 0
        %1043 = vmatpush1.bf16.msra.mxu0 %v1026
        %1044 = vmatprep.subr.bf16.mxu0 0
        %1045 = vmatpush2.bf16.msra.mxu0 0
        %1046 = vmatprep.subr.bf16.mxu0 0
        %1047 = vmatpush2.bf16.msra.mxu0 0
        %1048 = vmatprep.subr.bf16.mxu0 0
        %1049 = vmatpush2.bf16.msra.mxu0 0
        %1050 = vmatprep.subr.bf16.mxu0 0
        %1051 = vmatpush2.bf16.msra.mxu0 0
        %1052 = vmatprep.subr.bf16.mxu0 0
        %1053 = vmatpush2.bf16.msra.mxu0 0
        %1054 = vmatprep.subr.bf16.mxu0 0
        %1055 = vmatpush2.bf16.msra.mxu0 0
        %1056 = vmatprep.subr.bf16.mxu0 0
        %1057 = vmatpush2.bf16.msra.mxu0 0
        %1058 = vmatprep.subr.bf16.mxu0 0
        %1059 = vmatpush2.bf16.msra.mxu0 0
        %1060 = vmatprep.mubr.bf16.mxu0 0
        %1061 = vmatmul.mubr.bf16.gmra.mxu0 %v1020
        %v1062 = vpop.f32.mrf.mxu0
        %v1063 = vadd.f32 0.0, %v1062
        %v1064 = vpop.f32.mrf.mxu0
        %v1065 = vpop.f32.mrf.mxu0
        %v1066 = vadd.f32 0.0, %v1065
        %v1067 = vpop.f32.mrf.mxu0
        %1068 = vmatprep.mubr.bf16.mxu0 0
        %1069 = vmatmul.mubr.bf16.gmra.mxu0 %v1023
        %v1070 = vpop.f32.mrf.mxu0
        %v1071 = vadd.f32 0.0, %v1070
        %v1072 = vpop.f32.mrf.mxu0
        %v1073 = vpop.f32.mrf.mxu0
        %v1074 = vadd.f32 0.0, %v1073
        %v1075 = vpop.f32.mrf.mxu0
        %1076 = vdwg.mxu0
        %v1081 = vunpack.c.l.b16 %v998
        %v1082 = vunpack.c.l.b16 %v999
        %v1083 = vunpack.c.l.b16 %v1000
        %v1084 = vunpack.c.l.b16 %v1001
        %v1085 = vpack.c.b16 %v1082, %v1081
        %v1086 = vpack.c.b16 %v1084, %v1083
        %v1088 = vsel %vm412, %v1085, 0
        %v1091 = vsel %vm412, %v1086, 0
        %v1094 = vsel %vm419, %v997, 0
        %1096 = vmatprep.subr.bf16.mxu0 0
        %1097 = vmatpush1.bf16.msra.mxu0 0
        %1098 = vmatprep.subr.bf16.mxu0 0
        %1099 = vmatpush1.bf16.msra.mxu0 0
        %1100 = vmatprep.subr.bf16.mxu0 0
        %1101 = vmatpush1.bf16.msra.mxu0 0
        %1102 = vmatprep.subr.bf16.mxu0 0
        %1103 = vmatpush1.bf16.msra.mxu0 0
        %1104 = vmatprep.subr.bf16.mxu0 0
        %1105 = vmatpush1.bf16.msra.mxu0 0
        %1106 = vmatprep.subr.bf16.mxu0 0
        %1107 = vmatpush1.bf16.msra.mxu0 0
        %1108 = vmatprep.subr.bf16.mxu0 0
        %1109 = vmatpush1.bf16.msra.mxu0 0
        %1110 = vmatprep.subr.bf16.mxu0 0
        %1111 = vmatpush1.bf16.msra.mxu0 %v1094
        %1112 = vmatprep.subr.bf16.mxu0 0
        %1113 = vmatpush2.bf16.msra.mxu0 0
        %1114 = vmatprep.subr.bf16.mxu0 0
        %1115 = vmatpush2.bf16.msra.mxu0 0
        %1116 = vmatprep.subr.bf16.mxu0 0
        %1117 = vmatpush2.bf16.msra.mxu0 0
        %1118 = vmatprep.subr.bf16.mxu0 0
        %1119 = vmatpush2.bf16.msra.mxu0 0
        %1120 = vmatprep.subr.bf16.mxu0 0
        %1121 = vmatpush2.bf16.msra.mxu0 0
        %1122 = vmatprep.subr.bf16.mxu0 0
        %1123 = vmatpush2.bf16.msra.mxu0 0
        %1124 = vmatprep.subr.bf16.mxu0 0
        %1125 = vmatpush2.bf16.msra.mxu0 0
        %1126 = vmatprep.subr.bf16.mxu0 0
        %1127 = vmatpush2.bf16.msra.mxu0 0
        %1128 = vmatprep.mubr.bf16.mxu0 0
        %1129 = vmatmul.mubr.bf16.gmra.mxu0 %v1088
        %v1130 = vpop.f32.mrf.mxu0
        %v1131 = vadd.f32 %v1063, %v1130
        %v1132 = vpop.f32.mrf.mxu0
        %v1133 = vpop.f32.mrf.mxu0
        %v1134 = vadd.f32 %v1066, %v1133
        %v1135 = vpop.f32.mrf.mxu0
        %1136 = vmatprep.mubr.bf16.mxu0 0
        %1137 = vmatmul.mubr.bf16.gmra.mxu0 %v1091
        %v1138 = vpop.f32.mrf.mxu0
        %v1139 = vadd.f32 %v1071, %v1138
        %v1140 = vpop.f32.mrf.mxu0
        %v1141 = vpop.f32.mrf.mxu0
        %v1142 = vadd.f32 %v1074, %v1141
        %v1143 = vpop.f32.mrf.mxu0
        %1144 = vdwg.mxu0
        %v1145 = vld [vmem:[%s540] sm:$0xf]
        %v1146 = vld [vmem:[%s540 + $0x4] sm:$0xf]
        %v1147 = vld [vmem:[%s540 + $0x8] sm:$0xf]
        %v1148 = vld [vmem:[%s540 + $0xc] sm:$0xf]
        %v1153 = vunpack.c.l.b16 %v1145
        %v1154 = vunpack.c.l.b16 %v1146
        %v1155 = vunpack.c.l.b16 %v1147
        %v1156 = vunpack.c.l.b16 %v1148
        %v1157 = vpack.c.b16 %v1154, %v1153
        %v1158 = vpack.c.b16 %v1156, %v1155
        %1159 = vrot.lane.b32.xlu0 %v997, 126
        %v1160 = vpop.permute.xlu0 %1159
        %v1162 = vsel %vm412, %v1157, 0
        %v1165 = vsel %vm412, %v1158, 0
        %v1168 = vsel %vm419, %v1160, 0
        %1170 = vmatprep.subr.bf16.mxu0 0
        %1171 = vmatpush1.bf16.msra.mxu0 0
        %1172 = vmatprep.subr.bf16.mxu0 0
        %1173 = vmatpush1.bf16.msra.mxu0 0
        %1174 = vmatprep.subr.bf16.mxu0 0
        %1175 = vmatpush1.bf16.msra.mxu0 0
        %1176 = vmatprep.subr.bf16.mxu0 0
        %1177 = vmatpush1.bf16.msra.mxu0 0
        %1178 = vmatprep.subr.bf16.mxu0 0
        %1179 = vmatpush1.bf16.msra.mxu0 0
        %1180 = vmatprep.subr.bf16.mxu0 0
        %1181 = vmatpush1.bf16.msra.mxu0 0
        %1182 = vmatprep.subr.bf16.mxu0 0
        %1183 = vmatpush1.bf16.msra.mxu0 0
        %1184 = vmatprep.subr.bf16.mxu0 0
        %1185 = vmatpush1.bf16.msra.mxu0 %v1168
        %1186 = vmatprep.subr.bf16.mxu0 0
        %1187 = vmatpush2.bf16.msra.mxu0 0
        %1188 = vmatprep.subr.bf16.mxu0 0
        %1189 = vmatpush2.bf16.msra.mxu0 0
        %1190 = vmatprep.subr.bf16.mxu0 0
        %1191 = vmatpush2.bf16.msra.mxu0 0
        %1192 = vmatprep.subr.bf16.mxu0 0
        %1193 = vmatpush2.bf16.msra.mxu0 0
        %1194 = vmatprep.subr.bf16.mxu0 0
        %1195 = vmatpush2.bf16.msra.mxu0 0
        %1196 = vmatprep.subr.bf16.mxu0 0
        %1197 = vmatpush2.bf16.msra.mxu0 0
        %1198 = vmatprep.subr.bf16.mxu0 0
        %1199 = vmatpush2.bf16.msra.mxu0 0
        %1200 = vmatprep.subr.bf16.mxu0 0
        %1201 = vmatpush2.bf16.msra.mxu0 0
        %1202 = vmatprep.mubr.bf16.mxu0 0
        %1203 = vmatmul.mubr.bf16.gmra.mxu0 %v1162
        %v1204 = vpop.f32.mrf.mxu0
        %v1205 = vadd.f32 0.0, %v1204
        %v1206 = vpop.f32.mrf.mxu0
        %v1207 = vpop.f32.mrf.mxu0
        %v1208 = vadd.f32 0.0, %v1207
        %v1209 = vpop.f32.mrf.mxu0
        %1210 = vmatprep.mubr.bf16.mxu0 0
        %1211 = vmatmul.mubr.bf16.gmra.mxu0 %v1165
        %v1212 = vpop.f32.mrf.mxu0
        %v1213 = vadd.f32 0.0, %v1212
        %v1214 = vpop.f32.mrf.mxu0
        %v1215 = vpop.f32.mrf.mxu0
        %v1216 = vadd.f32 0.0, %v1215
        %v1217 = vpop.f32.mrf.mxu0
        %1218 = vdwg.mxu0
        %v1219 = vadd.f32 %v1131, %v1205
        %v1220 = vadd.f32 %v1134, %v1208
        %v1221 = vadd.f32 %v1139, %v1213
        %v1222 = vadd.f32 %v1142, %v1216
        %v1223 = vld [vmem:[%s4] sm:$0xff]
        %v1224 = vld [vmem:[%s4 + $0x8] sm:$0xff]
        %v1225 = vld [vmem:[%s4 + $0x10] sm:$0xff]
        %v1226 = vld [vmem:[%s4 + $0x18] sm:$0xff]
        %1228 = vset.pattern.permute.xlu0 0
        %1229 = vperm.xlu0 %1228, %v1223
        %v1230 = vpop.permute.xlu0 %1229
        %1233 = vset.pattern.permute.xlu0 0
        %1234 = vperm.xlu0 %1233, %v1224
        %v1235 = vpop.permute.xlu0 %1234
        %1238 = vset.pattern.permute.xlu0 0
        %1239 = vperm.xlu0 %1238, %v1225
        %v1240 = vpop.permute.xlu0 %1239
        %1243 = vset.pattern.permute.xlu0 0
        %1244 = vperm.xlu0 %1243, %v1226
        %v1245 = vpop.permute.xlu0 %1244
        %v1247 = vadd.f32 %v1219, %v1230
        %v1248 = vadd.f32 %v1220, %v1235
        %v1249 = vadd.f32 %v1221, %v1240
        %v1250 = vadd.f32 %v1222, %v1245
        %p1251 = scmp.ge.s32.totalorder %s294, 0
        %p1252 = scmp.lt.s32.totalorder %s294, 16
        %p1253 = pnand %p1251, %p1252
        %p1254 = pneg %p1253
        %v1255 = vmax.f32 %v1247, 0.0
        %v1256 = vmax.f32 %v1248, 0.0
        %v1257 = vmax.f32 %v1249, 0.0
        %v1258 = vmax.f32 %v1250, 0.0
        %s1259 = scalar_select %p1254, 1, 0
        %v1260 = vstv %s1259
        %vm1261 = vcmp.eq.s32.totalorder %v1260, 1
        %v1262 = vsel %vm1261, %v1255, 0.0
        %v1263 = vsel %vm1261, %v1256, 0.0
        %v1264 = vsel %vm1261, %v1257, 0.0
        %v1265 = vsel %vm1261, %v1258, 0.0
        %v1266 = vpack.c.bf16 %v1263, %v1262
        %v1267 = vpack.c.bf16 %v1265, %v1264
        %v1270 = vunpack.c.l.b16 %v1266
        %v1271 = vunpack.c.h.b16 %v1266
        %v1272 = vunpack.c.l.b16 %v1267
        %v1273 = vunpack.c.h.b16 %v1267
        %v1274 = vpack.c.b16 %v1270, %v1270
        %v1275 = vpack.c.b16 %v1271, %v1271
        %v1276 = vpack.c.b16 %v1272, %v1272
        %v1277 = vpack.c.b16 %v1273, %v1273
        %1278 = vrot.lane.b32.xlu0 %v1274, 1
        %v1279 = vpop.permute.xlu0 %1278
        %1280 = vrot.lane.b32.xlu0 %v1275, 1
        %v1281 = vpop.permute.xlu0 %1280
        %1282 = vrot.lane.b32.xlu0 %v1276, 1
        %v1283 = vpop.permute.xlu0 %1282
        %1284 = vrot.lane.b32.xlu0 %v1277, 1
        %v1285 = vpop.permute.xlu0 %1284
        %1290 = vst.msk [vmem:[#allocation2 + $0x20] sm:$0xf] %vm686, %v1279
        %1291 = vst.msk [vmem:[#allocation2 + $0x24] sm:$0xf] %vm686, %v1281
        %1292 = vst.msk [vmem:[#allocation2 + $0x28] sm:$0xf] %vm686, %v1283
        %1293 = vst.msk [vmem:[#allocation2 + $0x2c] sm:$0xf] %vm686, %v1285
        %s1294 = sadd.s32 %s294, 1
        %s1295 = sadd.s32 %s384, 12
        %s1296 = scalar_lea.vmem %s292, %s1295
        %v1297 = vld [vmem:[%s1296] sm:$0xff]
        %v1298 = vld [vmem:[%s1296 + $0x8] sm:$0xf]
        %v1299 = vpack.c.bf16 %v1298, %v1297
        %v1300 = vld [vmem:[%s1] sm:$0xf]
        %v1301 = vld [vmem:[%s1 + $0x4] sm:$0xf]
        %v1302 = vld [vmem:[%s1 + $0x8] sm:$0xf]
        %v1303 = vld [vmem:[%s1 + $0xc] sm:$0xf]
        %v1304 = vld [vmem:[%s394] sm:$0xf]
        %v1305 = vld [vmem:[%s394 + $0x4] sm:$0xf]
        %v1306 = vld [vmem:[%s394 + $0x8] sm:$0xf]
        %v1307 = vld [vmem:[%s394 + $0xc] sm:$0xf]
        %v1312 = vunpack.c.l.b16 %v1304
        %v1313 = vunpack.c.l.b16 %v1305
        %v1314 = vunpack.c.l.b16 %v1306
        %v1315 = vunpack.c.l.b16 %v1307
        %v1316 = vpack.c.b16 %v1313, %v1312
        %v1317 = vpack.c.b16 %v1315, %v1314
        %1319 = vrot.lane.b32.xlu0 %v1299, 127
        %v1320 = vpop.permute.xlu0 %1319
        %v1322 = vsel %vm412, %v1316, 0
        %v1325 = vsel %vm412, %v1317, 0
        %v1328 = vsel %vm419, %v1320, 0
        %1330 = vmatprep.subr.bf16.mxu0 0
        %1331 = vmatpush1.bf16.msra.mxu0 0
        %1332 = vmatprep.subr.bf16.mxu0 0
        %1333 = vmatpush1.bf16.msra.mxu0 0
        %1334 = vmatprep.subr.bf16.mxu0 0
        %1335 = vmatpush1.bf16.msra.mxu0 0
        %1336 = vmatprep.subr.bf16.mxu0 0
        %1337 = vmatpush1.bf16.msra.mxu0 0
        %1338 = vmatprep.subr.bf16.mxu0 0
        %1339 = vmatpush1.bf16.msra.mxu0 0
        %1340 = vmatprep.subr.bf16.mxu0 0
        %1341 = vmatpush1.bf16.msra.mxu0 0
        %1342 = vmatprep.subr.bf16.mxu0 0
        %1343 = vmatpush1.bf16.msra.mxu0 0
        %1344 = vmatprep.subr.bf16.mxu0 0
        %1345 = vmatpush1.bf16.msra.mxu0 %v1328
        %1346 = vmatprep.subr.bf16.mxu0 0
        %1347 = vmatpush2.bf16.msra.mxu0 0
        %1348 = vmatprep.subr.bf16.mxu0 0
        %1349 = vmatpush2.bf16.msra.mxu0 0
        %1350 = vmatprep.subr.bf16.mxu0 0
        %1351 = vmatpush2.bf16.msra.mxu0 0
        %1352 = vmatprep.subr.bf16.mxu0 0
        %1353 = vmatpush2.bf16.msra.mxu0 0
        %1354 = vmatprep.subr.bf16.mxu0 0
        %1355 = vmatpush2.bf16.msra.mxu0 0
        %1356 = vmatprep.subr.bf16.mxu0 0
        %1357 = vmatpush2.bf16.msra.mxu0 0
        %1358 = vmatprep.subr.bf16.mxu0 0
        %1359 = vmatpush2.bf16.msra.mxu0 0
        %1360 = vmatprep.subr.bf16.mxu0 0
        %1361 = vmatpush2.bf16.msra.mxu0 0
        %1362 = vmatprep.mubr.bf16.mxu0 0
        %1363 = vmatmul.mubr.bf16.gmra.mxu0 %v1322
        %v1364 = vpop.f32.mrf.mxu0
        %v1365 = vadd.f32 0.0, %v1364
        %v1366 = vpop.f32.mrf.mxu0
        %v1367 = vpop.f32.mrf.mxu0
        %v1368 = vadd.f32 0.0, %v1367
        %v1369 = vpop.f32.mrf.mxu0
        %1370 = vmatprep.mubr.bf16.mxu0 0
        %1371 = vmatmul.mubr.bf16.gmra.mxu0 %v1325
        %v1372 = vpop.f32.mrf.mxu0
        %v1373 = vadd.f32 0.0, %v1372
        %v1374 = vpop.f32.mrf.mxu0
        %v1375 = vpop.f32.mrf.mxu0
        %v1376 = vadd.f32 0.0, %v1375
        %v1377 = vpop.f32.mrf.mxu0
        %1378 = vdwg.mxu0
        %v1383 = vunpack.c.l.b16 %v1300
        %v1384 = vunpack.c.l.b16 %v1301
        %v1385 = vunpack.c.l.b16 %v1302
        %v1386 = vunpack.c.l.b16 %v1303
        %v1387 = vpack.c.b16 %v1384, %v1383
        %v1388 = vpack.c.b16 %v1386, %v1385
        %v1390 = vsel %vm412, %v1387, 0
        %v1393 = vsel %vm412, %v1388, 0
        %v1396 = vsel %vm419, %v1299, 0
        %1398 = vmatprep.subr.bf16.mxu0 0
        %1399 = vmatpush1.bf16.msra.mxu0 0
        %1400 = vmatprep.subr.bf16.mxu0 0
        %1401 = vmatpush1.bf16.msra.mxu0 0
        %1402 = vmatprep.subr.bf16.mxu0 0
        %1403 = vmatpush1.bf16.msra.mxu0 0
        %1404 = vmatprep.subr.bf16.mxu0 0
        %1405 = vmatpush1.bf16.msra.mxu0 0
        %1406 = vmatprep.subr.bf16.mxu0 0
        %1407 = vmatpush1.bf16.msra.mxu0 0
        %1408 = vmatprep.subr.bf16.mxu0 0
        %1409 = vmatpush1.bf16.msra.mxu0 0
        %1410 = vmatprep.subr.bf16.mxu0 0
        %1411 = vmatpush1.bf16.msra.mxu0 0
        %1412 = vmatprep.subr.bf16.mxu0 0
        %1413 = vmatpush1.bf16.msra.mxu0 %v1396
        %1414 = vmatprep.subr.bf16.mxu0 0
        %1415 = vmatpush2.bf16.msra.mxu0 0
        %1416 = vmatprep.subr.bf16.mxu0 0
        %1417 = vmatpush2.bf16.msra.mxu0 0
        %1418 = vmatprep.subr.bf16.mxu0 0
        %1419 = vmatpush2.bf16.msra.mxu0 0
        %1420 = vmatprep.subr.bf16.mxu0 0
        %1421 = vmatpush2.bf16.msra.mxu0 0
        %1422 = vmatprep.subr.bf16.mxu0 0
        %1423 = vmatpush2.bf16.msra.mxu0 0
        %1424 = vmatprep.subr.bf16.mxu0 0
        %1425 = vmatpush2.bf16.msra.mxu0 0
        %1426 = vmatprep.subr.bf16.mxu0 0
        %1427 = vmatpush2.bf16.msra.mxu0 0
        %1428 = vmatprep.subr.bf16.mxu0 0
        %1429 = vmatpush2.bf16.msra.mxu0 0
        %1430 = vmatprep.mubr.bf16.mxu0 0
        %1431 = vmatmul.mubr.bf16.gmra.mxu0 %v1390
        %v1432 = vpop.f32.mrf.mxu0
        %v1433 = vadd.f32 %v1365, %v1432
        %v1434 = vpop.f32.mrf.mxu0
        %v1435 = vpop.f32.mrf.mxu0
        %v1436 = vadd.f32 %v1368, %v1435
        %v1437 = vpop.f32.mrf.mxu0
        %1438 = vmatprep.mubr.bf16.mxu0 0
        %1439 = vmatmul.mubr.bf16.gmra.mxu0 %v1393
        %v1440 = vpop.f32.mrf.mxu0
        %v1441 = vadd.f32 %v1373, %v1440
        %v1442 = vpop.f32.mrf.mxu0
        %v1443 = vpop.f32.mrf.mxu0
        %v1444 = vadd.f32 %v1376, %v1443
        %v1445 = vpop.f32.mrf.mxu0
        %1446 = vdwg.mxu0
        %v1447 = vld [vmem:[%s540] sm:$0xf]
        %v1448 = vld [vmem:[%s540 + $0x4] sm:$0xf]
        %v1449 = vld [vmem:[%s540 + $0x8] sm:$0xf]
        %v1450 = vld [vmem:[%s540 + $0xc] sm:$0xf]
        %v1455 = vunpack.c.l.b16 %v1447
        %v1456 = vunpack.c.l.b16 %v1448
        %v1457 = vunpack.c.l.b16 %v1449
        %v1458 = vunpack.c.l.b16 %v1450
        %v1459 = vpack.c.b16 %v1456, %v1455
        %v1460 = vpack.c.b16 %v1458, %v1457
        %1461 = vrot.lane.b32.xlu0 %v1299, 126
        %v1462 = vpop.permute.xlu0 %1461
        %v1464 = vsel %vm412, %v1459, 0
        %v1467 = vsel %vm412, %v1460, 0
        %v1470 = vsel %vm419, %v1462, 0
        %1472 = vmatprep.subr.bf16.mxu0 0
        %1473 = vmatpush1.bf16.msra.mxu0 0
        %1474 = vmatprep.subr.bf16.mxu0 0
        %1475 = vmatpush1.bf16.msra.mxu0 0
        %1476 = vmatprep.subr.bf16.mxu0 0
        %1477 = vmatpush1.bf16.msra.mxu0 0
        %1478 = vmatprep.subr.bf16.mxu0 0
        %1479 = vmatpush1.bf16.msra.mxu0 0
        %1480 = vmatprep.subr.bf16.mxu0 0
        %1481 = vmatpush1.bf16.msra.mxu0 0
        %1482 = vmatprep.subr.bf16.mxu0 0
        %1483 = vmatpush1.bf16.msra.mxu0 0
        %1484 = vmatprep.subr.bf16.mxu0 0
        %1485 = vmatpush1.bf16.msra.mxu0 0
        %1486 = vmatprep.subr.bf16.mxu0 0
        %1487 = vmatpush1.bf16.msra.mxu0 %v1470
        %1488 = vmatprep.subr.bf16.mxu0 0
        %1489 = vmatpush2.bf16.msra.mxu0 0
        %1490 = vmatprep.subr.bf16.mxu0 0
        %1491 = vmatpush2.bf16.msra.mxu0 0
        %1492 = vmatprep.subr.bf16.mxu0 0
        %1493 = vmatpush2.bf16.msra.mxu0 0
        %1494 = vmatprep.subr.bf16.mxu0 0
        %1495 = vmatpush2.bf16.msra.mxu0 0
        %1496 = vmatprep.subr.bf16.mxu0 0
        %1497 = vmatpush2.bf16.msra.mxu0 0
        %1498 = vmatprep.subr.bf16.mxu0 0
        %1499 = vmatpush2.bf16.msra.mxu0 0
        %1500 = vmatprep.subr.bf16.mxu0 0
        %1501 = vmatpush2.bf16.msra.mxu0 0
        %1502 = vmatprep.subr.bf16.mxu0 0
        %1503 = vmatpush2.bf16.msra.mxu0 0
        %1504 = vmatprep.mubr.bf16.mxu0 0
        %1505 = vmatmul.mubr.bf16.gmra.mxu0 %v1464
        %v1506 = vpop.f32.mrf.mxu0
        %v1507 = vadd.f32 0.0, %v1506
        %v1508 = vpop.f32.mrf.mxu0
        %v1509 = vpop.f32.mrf.mxu0
        %v1510 = vadd.f32 0.0, %v1509
        %v1511 = vpop.f32.mrf.mxu0
        %1512 = vmatprep.mubr.bf16.mxu0 0
        %1513 = vmatmul.mubr.bf16.gmra.mxu0 %v1467
        %v1514 = vpop.f32.mrf.mxu0
        %v1515 = vadd.f32 0.0, %v1514
        %v1516 = vpop.f32.mrf.mxu0
        %v1517 = vpop.f32.mrf.mxu0
        %v1518 = vadd.f32 0.0, %v1517
        %v1519 = vpop.f32.mrf.mxu0
        %1520 = vdwg.mxu0
        %v1521 = vadd.f32 %v1433, %v1507
        %v1522 = vadd.f32 %v1436, %v1510
        %v1523 = vadd.f32 %v1441, %v1515
        %v1524 = vadd.f32 %v1444, %v1518
        %v1525 = vld [vmem:[%s4] sm:$0xff]
        %v1526 = vld [vmem:[%s4 + $0x8] sm:$0xff]
        %v1527 = vld [vmem:[%s4 + $0x10] sm:$0xff]
        %v1528 = vld [vmem:[%s4 + $0x18] sm:$0xff]
        %1530 = vset.pattern.permute.xlu0 0
        %1531 = vperm.xlu0 %1530, %v1525
        %v1532 = vpop.permute.xlu0 %1531
        %1535 = vset.pattern.permute.xlu0 0
        %1536 = vperm.xlu0 %1535, %v1526
        %v1537 = vpop.permute.xlu0 %1536
        %1540 = vset.pattern.permute.xlu0 0
        %1541 = vperm.xlu0 %1540, %v1527
        %v1542 = vpop.permute.xlu0 %1541
        %1545 = vset.pattern.permute.xlu0 0
        %1546 = vperm.xlu0 %1545, %v1528
        %v1547 = vpop.permute.xlu0 %1546
        %v1549 = vadd.f32 %v1521, %v1532
        %v1550 = vadd.f32 %v1522, %v1537
        %v1551 = vadd.f32 %v1523, %v1542
        %v1552 = vadd.f32 %v1524, %v1547
        %p1553 = scmp.ge.s32.totalorder %s1294, 0
        %p1554 = scmp.lt.s32.totalorder %s1294, 16
        %p1555 = pnand %p1553, %p1554
        %p1556 = pneg %p1555
        %v1557 = vmax.f32 %v1549, 0.0
        %v1558 = vmax.f32 %v1550, 0.0
        %v1559 = vmax.f32 %v1551, 0.0
        %v1560 = vmax.f32 %v1552, 0.0
        %s1561 = scalar_select %p1556, 1, 0
        %v1562 = vstv %s1561
        %vm1563 = vcmp.eq.s32.totalorder %v1562, 1
        %v1564 = vsel %vm1563, %v1557, 0.0
        %v1565 = vsel %vm1563, %v1558, 0.0
        %v1566 = vsel %vm1563, %v1559, 0.0
        %v1567 = vsel %vm1563, %v1560, 0.0
        %v1568 = vpack.c.bf16 %v1565, %v1564
        %v1569 = vpack.c.bf16 %v1567, %v1566
        %v1572 = vunpack.c.l.b16 %v1568
        %v1573 = vunpack.c.h.b16 %v1568
        %v1574 = vunpack.c.l.b16 %v1569
        %v1575 = vunpack.c.h.b16 %v1569
        %v1576 = vpack.c.b16 %v1572, %v1572
        %v1577 = vpack.c.b16 %v1573, %v1573
        %v1578 = vpack.c.b16 %v1574, %v1574
        %v1579 = vpack.c.b16 %v1575, %v1575
        %1580 = vrot.lane.b32.xlu0 %v1576, 1
        %v1581 = vpop.permute.xlu0 %1580
        %1582 = vrot.lane.b32.xlu0 %v1577, 1
        %v1583 = vpop.permute.xlu0 %1582
        %1584 = vrot.lane.b32.xlu0 %v1578, 1
        %v1585 = vpop.permute.xlu0 %1584
        %1586 = vrot.lane.b32.xlu0 %v1579, 1
        %v1587 = vpop.permute.xlu0 %1586
        %1592 = vst.msk [vmem:[#allocation2 + $0x30] sm:$0xf] %vm686, %v1581
        %1593 = vst.msk [vmem:[#allocation2 + $0x34] sm:$0xf] %vm686, %v1583
        %1594 = vst.msk [vmem:[#allocation2 + $0x38] sm:$0xf] %vm686, %v1585
        %1595 = vst.msk [vmem:[#allocation2 + $0x3c] sm:$0xf] %vm686, %v1587
        %s1596 = sadd.s32 %s294, 2
        %s1597 = sadd.s32 %s384, 16
        %s1598 = scalar_lea.vmem %s292, %s1597
        %v1599 = vld [vmem:[%s1598] sm:$0xff]
        %v1600 = vld [vmem:[%s1598 + $0x8] sm:$0xf]
        %v1601 = vpack.c.bf16 %v1600, %v1599
        %v1602 = vld [vmem:[%s1] sm:$0xf]
        %v1603 = vld [vmem:[%s1 + $0x4] sm:$0xf]
        %v1604 = vld [vmem:[%s1 + $0x8] sm:$0xf]
        %v1605 = vld [vmem:[%s1 + $0xc] sm:$0xf]
        %v1606 = vld [vmem:[%s394] sm:$0xf]
        %v1607 = vld [vmem:[%s394 + $0x4] sm:$0xf]
        %v1608 = vld [vmem:[%s394 + $0x8] sm:$0xf]
        %v1609 = vld [vmem:[%s394 + $0xc] sm:$0xf]
        %v1614 = vunpack.c.l.b16 %v1606
        %v1615 = vunpack.c.l.b16 %v1607
        %v1616 = vunpack.c.l.b16 %v1608
        %v1617 = vunpack.c.l.b16 %v1609
        %v1618 = vpack.c.b16 %v1615, %v1614
        %v1619 = vpack.c.b16 %v1617, %v1616
        %1621 = vrot.lane.b32.xlu0 %v1601, 127
        %v1622 = vpop.permute.xlu0 %1621
        %v1624 = vsel %vm412, %v1618, 0
        %v1627 = vsel %vm412, %v1619, 0
        %v1630 = vsel %vm419, %v1622, 0
        %1632 = vmatprep.subr.bf16.mxu0 0
        %1633 = vmatpush1.bf16.msra.mxu0 0
        %1634 = vmatprep.subr.bf16.mxu0 0
        %1635 = vmatpush1.bf16.msra.mxu0 0
        %1636 = vmatprep.subr.bf16.mxu0 0
        %1637 = vmatpush1.bf16.msra.mxu0 0
        %1638 = vmatprep.subr.bf16.mxu0 0
        %1639 = vmatpush1.bf16.msra.mxu0 0
        %1640 = vmatprep.subr.bf16.mxu0 0
        %1641 = vmatpush1.bf16.msra.mxu0 0
        %1642 = vmatprep.subr.bf16.mxu0 0
        %1643 = vmatpush1.bf16.msra.mxu0 0
        %1644 = vmatprep.subr.bf16.mxu0 0
        %1645 = vmatpush1.bf16.msra.mxu0 0
        %1646 = vmatprep.subr.bf16.mxu0 0
        %1647 = vmatpush1.bf16.msra.mxu0 %v1630
        %1648 = vmatprep.subr.bf16.mxu0 0
        %1649 = vmatpush2.bf16.msra.mxu0 0
        %1650 = vmatprep.subr.bf16.mxu0 0
        %1651 = vmatpush2.bf16.msra.mxu0 0
        %1652 = vmatprep.subr.bf16.mxu0 0
        %1653 = vmatpush2.bf16.msra.mxu0 0
        %1654 = vmatprep.subr.bf16.mxu0 0
        %1655 = vmatpush2.bf16.msra.mxu0 0
        %1656 = vmatprep.subr.bf16.mxu0 0
        %1657 = vmatpush2.bf16.msra.mxu0 0
        %1658 = vmatprep.subr.bf16.mxu0 0
        %1659 = vmatpush2.bf16.msra.mxu0 0
        %1660 = vmatprep.subr.bf16.mxu0 0
        %1661 = vmatpush2.bf16.msra.mxu0 0
        %1662 = vmatprep.subr.bf16.mxu0 0
        %1663 = vmatpush2.bf16.msra.mxu0 0
        %1664 = vmatprep.mubr.bf16.mxu0 0
        %1665 = vmatmul.mubr.bf16.gmra.mxu0 %v1624
        %v1666 = vpop.f32.mrf.mxu0
        %v1667 = vadd.f32 0.0, %v1666
        %v1668 = vpop.f32.mrf.mxu0
        %v1669 = vpop.f32.mrf.mxu0
        %v1670 = vadd.f32 0.0, %v1669
        %v1671 = vpop.f32.mrf.mxu0
        %1672 = vmatprep.mubr.bf16.mxu0 0
        %1673 = vmatmul.mubr.bf16.gmra.mxu0 %v1627
        %v1674 = vpop.f32.mrf.mxu0
        %v1675 = vadd.f32 0.0, %v1674
        %v1676 = vpop.f32.mrf.mxu0
        %v1677 = vpop.f32.mrf.mxu0
        %v1678 = vadd.f32 0.0, %v1677
        %v1679 = vpop.f32.mrf.mxu0
        %1680 = vdwg.mxu0
        %v1685 = vunpack.c.l.b16 %v1602
        %v1686 = vunpack.c.l.b16 %v1603
        %v1687 = vunpack.c.l.b16 %v1604
        %v1688 = vunpack.c.l.b16 %v1605
        %v1689 = vpack.c.b16 %v1686, %v1685
        %v1690 = vpack.c.b16 %v1688, %v1687
        %v1692 = vsel %vm412, %v1689, 0
        %v1695 = vsel %vm412, %v1690, 0
        %v1698 = vsel %vm419, %v1601, 0
        %1700 = vmatprep.subr.bf16.mxu0 0
        %1701 = vmatpush1.bf16.msra.mxu0 0
        %1702 = vmatprep.subr.bf16.mxu0 0
        %1703 = vmatpush1.bf16.msra.mxu0 0
        %1704 = vmatprep.subr.bf16.mxu0 0
        %1705 = vmatpush1.bf16.msra.mxu0 0
        %1706 = vmatprep.subr.bf16.mxu0 0
        %1707 = vmatpush1.bf16.msra.mxu0 0
        %1708 = vmatprep.subr.bf16.mxu0 0
        %1709 = vmatpush1.bf16.msra.mxu0 0
        %1710 = vmatprep.subr.bf16.mxu0 0
        %1711 = vmatpush1.bf16.msra.mxu0 0
        %1712 = vmatprep.subr.bf16.mxu0 0
        %1713 = vmatpush1.bf16.msra.mxu0 0
        %1714 = vmatprep.subr.bf16.mxu0 0
        %1715 = vmatpush1.bf16.msra.mxu0 %v1698
        %1716 = vmatprep.subr.bf16.mxu0 0
        %1717 = vmatpush2.bf16.msra.mxu0 0
        %1718 = vmatprep.subr.bf16.mxu0 0
        %1719 = vmatpush2.bf16.msra.mxu0 0
        %1720 = vmatprep.subr.bf16.mxu0 0
        %1721 = vmatpush2.bf16.msra.mxu0 0
        %1722 = vmatprep.subr.bf16.mxu0 0
        %1723 = vmatpush2.bf16.msra.mxu0 0
        %1724 = vmatprep.subr.bf16.mxu0 0
        %1725 = vmatpush2.bf16.msra.mxu0 0
        %1726 = vmatprep.subr.bf16.mxu0 0
        %1727 = vmatpush2.bf16.msra.mxu0 0
        %1728 = vmatprep.subr.bf16.mxu0 0
        %1729 = vmatpush2.bf16.msra.mxu0 0
        %1730 = vmatprep.subr.bf16.mxu0 0
        %1731 = vmatpush2.bf16.msra.mxu0 0
        %1732 = vmatprep.mubr.bf16.mxu0 0
        %1733 = vmatmul.mubr.bf16.gmra.mxu0 %v1692
        %v1734 = vpop.f32.mrf.mxu0
        %v1735 = vadd.f32 %v1667, %v1734
        %v1736 = vpop.f32.mrf.mxu0
        %v1737 = vpop.f32.mrf.mxu0
        %v1738 = vadd.f32 %v1670, %v1737
        %v1739 = vpop.f32.mrf.mxu0
        %1740 = vmatprep.mubr.bf16.mxu0 0
        %1741 = vmatmul.mubr.bf16.gmra.mxu0 %v1695
        %v1742 = vpop.f32.mrf.mxu0
        %v1743 = vadd.f32 %v1675, %v1742
        %v1744 = vpop.f32.mrf.mxu0
        %v1745 = vpop.f32.mrf.mxu0
        %v1746 = vadd.f32 %v1678, %v1745
        %v1747 = vpop.f32.mrf.mxu0
        %1748 = vdwg.mxu0
        %v1749 = vld [vmem:[%s540] sm:$0xf]
        %v1750 = vld [vmem:[%s540 + $0x4] sm:$0xf]
        %v1751 = vld [vmem:[%s540 + $0x8] sm:$0xf]
        %v1752 = vld [vmem:[%s540 + $0xc] sm:$0xf]
        %v1757 = vunpack.c.l.b16 %v1749
        %v1758 = vunpack.c.l.b16 %v1750
        %v1759 = vunpack.c.l.b16 %v1751
        %v1760 = vunpack.c.l.b16 %v1752
        %v1761 = vpack.c.b16 %v1758, %v1757
        %v1762 = vpack.c.b16 %v1760, %v1759
        %1763 = vrot.lane.b32.xlu0 %v1601, 126
        %v1764 = vpop.permute.xlu0 %1763
        %v1766 = vsel %vm412, %v1761, 0
        %v1769 = vsel %vm412, %v1762, 0
        %v1772 = vsel %vm419, %v1764, 0
        %1774 = vmatprep.subr.bf16.mxu0 0
        %1775 = vmatpush1.bf16.msra.mxu0 0
        %1776 = vmatprep.subr.bf16.mxu0 0
        %1777 = vmatpush1.bf16.msra.mxu0 0
        %1778 = vmatprep.subr.bf16.mxu0 0
        %1779 = vmatpush1.bf16.msra.mxu0 0
        %1780 = vmatprep.subr.bf16.mxu0 0
        %1781 = vmatpush1.bf16.msra.mxu0 0
        %1782 = vmatprep.subr.bf16.mxu0 0
        %1783 = vmatpush1.bf16.msra.mxu0 0
        %1784 = vmatprep.subr.bf16.mxu0 0
        %1785 = vmatpush1.bf16.msra.mxu0 0
        %1786 = vmatprep.subr.bf16.mxu0 0
        %1787 = vmatpush1.bf16.msra.mxu0 0
        %1788 = vmatprep.subr.bf16.mxu0 0
        %1789 = vmatpush1.bf16.msra.mxu0 %v1772
        %1790 = vmatprep.subr.bf16.mxu0 0
        %1791 = vmatpush2.bf16.msra.mxu0 0
        %1792 = vmatprep.subr.bf16.mxu0 0
        %1793 = vmatpush2.bf16.msra.mxu0 0
        %1794 = vmatprep.subr.bf16.mxu0 0
        %1795 = vmatpush2.bf16.msra.mxu0 0
        %1796 = vmatprep.subr.bf16.mxu0 0
        %1797 = vmatpush2.bf16.msra.mxu0 0
        %1798 = vmatprep.subr.bf16.mxu0 0
        %1799 = vmatpush2.bf16.msra.mxu0 0
        %1800 = vmatprep.subr.bf16.mxu0 0
        %1801 = vmatpush2.bf16.msra.mxu0 0
        %1802 = vmatprep.subr.bf16.mxu0 0
        %1803 = vmatpush2.bf16.msra.mxu0 0
        %1804 = vmatprep.subr.bf16.mxu0 0
        %1805 = vmatpush2.bf16.msra.mxu0 0
        %1806 = vmatprep.mubr.bf16.mxu0 0
        %1807 = vmatmul.mubr.bf16.gmra.mxu0 %v1766
        %v1808 = vpop.f32.mrf.mxu0
        %v1809 = vadd.f32 0.0, %v1808
        %v1810 = vpop.f32.mrf.mxu0
        %v1811 = vpop.f32.mrf.mxu0
        %v1812 = vadd.f32 0.0, %v1811
        %v1813 = vpop.f32.mrf.mxu0
        %1814 = vmatprep.mubr.bf16.mxu0 0
        %1815 = vmatmul.mubr.bf16.gmra.mxu0 %v1769
        %v1816 = vpop.f32.mrf.mxu0
        %v1817 = vadd.f32 0.0, %v1816
        %v1818 = vpop.f32.mrf.mxu0
        %v1819 = vpop.f32.mrf.mxu0
        %v1820 = vadd.f32 0.0, %v1819
        %v1821 = vpop.f32.mrf.mxu0
        %1822 = vdwg.mxu0
        %v1823 = vadd.f32 %v1735, %v1809
        %v1824 = vadd.f32 %v1738, %v1812
        %v1825 = vadd.f32 %v1743, %v1817
        %v1826 = vadd.f32 %v1746, %v1820
        %v1827 = vld [vmem:[%s4] sm:$0xff]
        %v1828 = vld [vmem:[%s4 + $0x8] sm:$0xff]
        %v1829 = vld [vmem:[%s4 + $0x10] sm:$0xff]
        %v1830 = vld [vmem:[%s4 + $0x18] sm:$0xff]
        %1832 = vset.pattern.permute.xlu0 0
        %1833 = vperm.xlu0 %1832, %v1827
        %v1834 = vpop.permute.xlu0 %1833
        %1837 = vset.pattern.permute.xlu0 0
        %1838 = vperm.xlu0 %1837, %v1828
        %v1839 = vpop.permute.xlu0 %1838
        %1842 = vset.pattern.permute.xlu0 0
        %1843 = vperm.xlu0 %1842, %v1829
        %v1844 = vpop.permute.xlu0 %1843
        %1847 = vset.pattern.permute.xlu0 0
        %1848 = vperm.xlu0 %1847, %v1830
        %v1849 = vpop.permute.xlu0 %1848
        %v1851 = vadd.f32 %v1823, %v1834
        %v1852 = vadd.f32 %v1824, %v1839
        %v1853 = vadd.f32 %v1825, %v1844
        %v1854 = vadd.f32 %v1826, %v1849
        %p1855 = scmp.ge.s32.totalorder %s1596, 0
        %p1856 = scmp.lt.s32.totalorder %s1596, 16
        %p1857 = pnand %p1855, %p1856
        %p1858 = pneg %p1857
        %v1859 = vmax.f32 %v1851, 0.0
        %v1860 = vmax.f32 %v1852, 0.0
        %v1861 = vmax.f32 %v1853, 0.0
        %v1862 = vmax.f32 %v1854, 0.0
        %s1863 = scalar_select %p1858, 1, 0
        %v1864 = vstv %s1863
        %vm1865 = vcmp.eq.s32.totalorder %v1864, 1
        %v1866 = vsel %vm1865, %v1859, 0.0
        %v1867 = vsel %vm1865, %v1860, 0.0
        %v1868 = vsel %vm1865, %v1861, 0.0
        %v1869 = vsel %vm1865, %v1862, 0.0
        %v1870 = vpack.c.bf16 %v1867, %v1866
        %v1871 = vpack.c.bf16 %v1869, %v1868
        %v1874 = vunpack.c.l.b16 %v1870
        %v1875 = vunpack.c.h.b16 %v1870
        %v1876 = vunpack.c.l.b16 %v1871
        %v1877 = vunpack.c.h.b16 %v1871
        %v1878 = vpack.c.b16 %v1874, %v1874
        %v1879 = vpack.c.b16 %v1875, %v1875
        %v1880 = vpack.c.b16 %v1876, %v1876
        %v1881 = vpack.c.b16 %v1877, %v1877
        %1882 = vrot.lane.b32.xlu0 %v1878, 1
        %v1883 = vpop.permute.xlu0 %1882
        %1884 = vrot.lane.b32.xlu0 %v1879, 1
        %v1885 = vpop.permute.xlu0 %1884
        %1886 = vrot.lane.b32.xlu0 %v1880, 1
        %v1887 = vpop.permute.xlu0 %1886
        %1888 = vrot.lane.b32.xlu0 %v1881, 1
        %v1889 = vpop.permute.xlu0 %1888
        %1894 = vst.msk [vmem:[#allocation2 + $0x40] sm:$0xf] %vm686, %v1883
        %1895 = vst.msk [vmem:[#allocation2 + $0x44] sm:$0xf] %vm686, %v1885
        %1896 = vst.msk [vmem:[#allocation2 + $0x48] sm:$0xf] %vm686, %v1887
        %1897 = vst.msk [vmem:[#allocation2 + $0x4c] sm:$0xf] %vm686, %v1889
        %s1898 = sadd.s32 %s294, 3
        %s1899 = sadd.s32 %s384, 20
        %s1900 = scalar_lea.vmem %s292, %s1899
        %v1901 = vld [vmem:[%s1900] sm:$0xff]
        %v1902 = vld [vmem:[%s1900 + $0x8] sm:$0xf]
        %v1903 = vpack.c.bf16 %v1902, %v1901
        %v1904 = vld [vmem:[%s1] sm:$0xf]
        %v1905 = vld [vmem:[%s1 + $0x4] sm:$0xf]
        %v1906 = vld [vmem:[%s1 + $0x8] sm:$0xf]
        %v1907 = vld [vmem:[%s1 + $0xc] sm:$0xf]
        %v1908 = vld [vmem:[%s394] sm:$0xf]
        %v1909 = vld [vmem:[%s394 + $0x4] sm:$0xf]
        %v1910 = vld [vmem:[%s394 + $0x8] sm:$0xf]
        %v1911 = vld [vmem:[%s394 + $0xc] sm:$0xf]
        %v1916 = vunpack.c.l.b16 %v1908
        %v1917 = vunpack.c.l.b16 %v1909
        %v1918 = vunpack.c.l.b16 %v1910
        %v1919 = vunpack.c.l.b16 %v1911
        %v1920 = vpack.c.b16 %v1917, %v1916
        %v1921 = vpack.c.b16 %v1919, %v1918
        %1923 = vrot.lane.b32.xlu0 %v1903, 127
        %v1924 = vpop.permute.xlu0 %1923
        %v1926 = vsel %vm412, %v1920, 0
        %v1929 = vsel %vm412, %v1921, 0
        %v1932 = vsel %vm419, %v1924, 0
        %1934 = vmatprep.subr.bf16.mxu0 0
        %1935 = vmatpush1.bf16.msra.mxu0 0
        %1936 = vmatprep.subr.bf16.mxu0 0
        %1937 = vmatpush1.bf16.msra.mxu0 0
        %1938 = vmatprep.subr.bf16.mxu0 0
        %1939 = vmatpush1.bf16.msra.mxu0 0
        %1940 = vmatprep.subr.bf16.mxu0 0
        %1941 = vmatpush1.bf16.msra.mxu0 0
        %1942 = vmatprep.subr.bf16.mxu0 0
        %1943 = vmatpush1.bf16.msra.mxu0 0
        %1944 = vmatprep.subr.bf16.mxu0 0
        %1945 = vmatpush1.bf16.msra.mxu0 0
        %1946 = vmatprep.subr.bf16.mxu0 0
        %1947 = vmatpush1.bf16.msra.mxu0 0
        %1948 = vmatprep.subr.bf16.mxu0 0
        %1949 = vmatpush1.bf16.msra.mxu0 %v1932
        %1950 = vmatprep.subr.bf16.mxu0 0
        %1951 = vmatpush2.bf16.msra.mxu0 0
        %1952 = vmatprep.subr.bf16.mxu0 0
        %1953 = vmatpush2.bf16.msra.mxu0 0
        %1954 = vmatprep.subr.bf16.mxu0 0
        %1955 = vmatpush2.bf16.msra.mxu0 0
        %1956 = vmatprep.subr.bf16.mxu0 0
        %1957 = vmatpush2.bf16.msra.mxu0 0
        %1958 = vmatprep.subr.bf16.mxu0 0
        %1959 = vmatpush2.bf16.msra.mxu0 0
        %1960 = vmatprep.subr.bf16.mxu0 0
        %1961 = vmatpush2.bf16.msra.mxu0 0
        %1962 = vmatprep.subr.bf16.mxu0 0
        %1963 = vmatpush2.bf16.msra.mxu0 0
        %1964 = vmatprep.subr.bf16.mxu0 0
        %1965 = vmatpush2.bf16.msra.mxu0 0
        %1966 = vmatprep.mubr.bf16.mxu0 0
        %1967 = vmatmul.mubr.bf16.gmra.mxu0 %v1926
        %v1968 = vpop.f32.mrf.mxu0
        %v1969 = vadd.f32 0.0, %v1968
        %v1970 = vpop.f32.mrf.mxu0
        %v1971 = vpop.f32.mrf.mxu0
        %v1972 = vadd.f32 0.0, %v1971
        %v1973 = vpop.f32.mrf.mxu0
        %1974 = vmatprep.mubr.bf16.mxu0 0
        %1975 = vmatmul.mubr.bf16.gmra.mxu0 %v1929
        %v1976 = vpop.f32.mrf.mxu0
        %v1977 = vadd.f32 0.0, %v1976
        %v1978 = vpop.f32.mrf.mxu0
        %v1979 = vpop.f32.mrf.mxu0
        %v1980 = vadd.f32 0.0, %v1979
        %v1981 = vpop.f32.mrf.mxu0
        %1982 = vdwg.mxu0
        %v1987 = vunpack.c.l.b16 %v1904
        %v1988 = vunpack.c.l.b16 %v1905
        %v1989 = vunpack.c.l.b16 %v1906
        %v1990 = vunpack.c.l.b16 %v1907
        %v1991 = vpack.c.b16 %v1988, %v1987
        %v1992 = vpack.c.b16 %v1990, %v1989
        %v1994 = vsel %vm412, %v1991, 0
        %v1997 = vsel %vm412, %v1992, 0
        %v2000 = vsel %vm419, %v1903, 0
        %2002 = vmatprep.subr.bf16.mxu0 0
        %2003 = vmatpush1.bf16.msra.mxu0 0
        %2004 = vmatprep.subr.bf16.mxu0 0
        %2005 = vmatpush1.bf16.msra.mxu0 0
        %2006 = vmatprep.subr.bf16.mxu0 0
        %2007 = vmatpush1.bf16.msra.mxu0 0
        %2008 = vmatprep.subr.bf16.mxu0 0
        %2009 = vmatpush1.bf16.msra.mxu0 0
        %2010 = vmatprep.subr.bf16.mxu0 0
        %2011 = vmatpush1.bf16.msra.mxu0 0
        %2012 = vmatprep.subr.bf16.mxu0 0
        %2013 = vmatpush1.bf16.msra.mxu0 0
        %2014 = vmatprep.subr.bf16.mxu0 0
        %2015 = vmatpush1.bf16.msra.mxu0 0
        %2016 = vmatprep.subr.bf16.mxu0 0
        %2017 = vmatpush1.bf16.msra.mxu0 %v2000
        %2018 = vmatprep.subr.bf16.mxu0 0
        %2019 = vmatpush2.bf16.msra.mxu0 0
        %2020 = vmatprep.subr.bf16.mxu0 0
        %2021 = vmatpush2.bf16.msra.mxu0 0
        %2022 = vmatprep.subr.bf16.mxu0 0
        %2023 = vmatpush2.bf16.msra.mxu0 0
        %2024 = vmatprep.subr.bf16.mxu0 0
        %2025 = vmatpush2.bf16.msra.mxu0 0
        %2026 = vmatprep.subr.bf16.mxu0 0
        %2027 = vmatpush2.bf16.msra.mxu0 0
        %2028 = vmatprep.subr.bf16.mxu0 0
        %2029 = vmatpush2.bf16.msra.mxu0 0
        %2030 = vmatprep.subr.bf16.mxu0 0
        %2031 = vmatpush2.bf16.msra.mxu0 0
        %2032 = vmatprep.subr.bf16.mxu0 0
        %2033 = vmatpush2.bf16.msra.mxu0 0
        %2034 = vmatprep.mubr.bf16.mxu0 0
        %2035 = vmatmul.mubr.bf16.gmra.mxu0 %v1994
        %v2036 = vpop.f32.mrf.mxu0
        %v2037 = vadd.f32 %v1969, %v2036
        %v2038 = vpop.f32.mrf.mxu0
        %v2039 = vpop.f32.mrf.mxu0
        %v2040 = vadd.f32 %v1972, %v2039
        %v2041 = vpop.f32.mrf.mxu0
        %2042 = vmatprep.mubr.bf16.mxu0 0
        %2043 = vmatmul.mubr.bf16.gmra.mxu0 %v1997
        %v2044 = vpop.f32.mrf.mxu0
        %v2045 = vadd.f32 %v1977, %v2044
        %v2046 = vpop.f32.mrf.mxu0
        %v2047 = vpop.f32.mrf.mxu0
        %v2048 = vadd.f32 %v1980, %v2047
        %v2049 = vpop.f32.mrf.mxu0
        %2050 = vdwg.mxu0
        %v2051 = vld [vmem:[%s540] sm:$0xf]
        %v2052 = vld [vmem:[%s540 + $0x4] sm:$0xf]
        %v2053 = vld [vmem:[%s540 + $0x8] sm:$0xf]
        %v2054 = vld [vmem:[%s540 + $0xc] sm:$0xf]
        %v2059 = vunpack.c.l.b16 %v2051
        %v2060 = vunpack.c.l.b16 %v2052
        %v2061 = vunpack.c.l.b16 %v2053
        %v2062 = vunpack.c.l.b16 %v2054
        %v2063 = vpack.c.b16 %v2060, %v2059
        %v2064 = vpack.c.b16 %v2062, %v2061
        %2065 = vrot.lane.b32.xlu0 %v1903, 126
        %v2066 = vpop.permute.xlu0 %2065
        %v2068 = vsel %vm412, %v2063, 0
        %v2071 = vsel %vm412, %v2064, 0
        %v2074 = vsel %vm419, %v2066, 0
        %2076 = vmatprep.subr.bf16.mxu0 0
        %2077 = vmatpush1.bf16.msra.mxu0 0
        %2078 = vmatprep.subr.bf16.mxu0 0
        %2079 = vmatpush1.bf16.msra.mxu0 0
        %2080 = vmatprep.subr.bf16.mxu0 0
        %2081 = vmatpush1.bf16.msra.mxu0 0
        %2082 = vmatprep.subr.bf16.mxu0 0
        %2083 = vmatpush1.bf16.msra.mxu0 0
        %2084 = vmatprep.subr.bf16.mxu0 0
        %2085 = vmatpush1.bf16.msra.mxu0 0
        %2086 = vmatprep.subr.bf16.mxu0 0
        %2087 = vmatpush1.bf16.msra.mxu0 0
        %2088 = vmatprep.subr.bf16.mxu0 0
        %2089 = vmatpush1.bf16.msra.mxu0 0
        %2090 = vmatprep.subr.bf16.mxu0 0
        %2091 = vmatpush1.bf16.msra.mxu0 %v2074
        %2092 = vmatprep.subr.bf16.mxu0 0
        %2093 = vmatpush2.bf16.msra.mxu0 0
        %2094 = vmatprep.subr.bf16.mxu0 0
        %2095 = vmatpush2.bf16.msra.mxu0 0
        %2096 = vmatprep.subr.bf16.mxu0 0
        %2097 = vmatpush2.bf16.msra.mxu0 0
        %2098 = vmatprep.subr.bf16.mxu0 0
        %2099 = vmatpush2.bf16.msra.mxu0 0
        %2100 = vmatprep.subr.bf16.mxu0 0
        %2101 = vmatpush2.bf16.msra.mxu0 0
        %2102 = vmatprep.subr.bf16.mxu0 0
        %2103 = vmatpush2.bf16.msra.mxu0 0
        %2104 = vmatprep.subr.bf16.mxu0 0
        %2105 = vmatpush2.bf16.msra.mxu0 0
        %2106 = vmatprep.subr.bf16.mxu0 0
        %2107 = vmatpush2.bf16.msra.mxu0 0
        %2108 = vmatprep.mubr.bf16.mxu0 0
        %2109 = vmatmul.mubr.bf16.gmra.mxu0 %v2068
        %v2110 = vpop.f32.mrf.mxu0
        %v2111 = vadd.f32 0.0, %v2110
        %v2112 = vpop.f32.mrf.mxu0
        %v2113 = vpop.f32.mrf.mxu0
        %v2114 = vadd.f32 0.0, %v2113
        %v2115 = vpop.f32.mrf.mxu0
        %2116 = vmatprep.mubr.bf16.mxu0 0
        %2117 = vmatmul.mubr.bf16.gmra.mxu0 %v2071
        %v2118 = vpop.f32.mrf.mxu0
        %v2119 = vadd.f32 0.0, %v2118
        %v2120 = vpop.f32.mrf.mxu0
        %v2121 = vpop.f32.mrf.mxu0
        %v2122 = vadd.f32 0.0, %v2121
        %v2123 = vpop.f32.mrf.mxu0
        %2124 = vdwg.mxu0
        %v2125 = vadd.f32 %v2037, %v2111
        %v2126 = vadd.f32 %v2040, %v2114
        %v2127 = vadd.f32 %v2045, %v2119
        %v2128 = vadd.f32 %v2048, %v2122
        %v2129 = vld [vmem:[%s4] sm:$0xff]
        %v2130 = vld [vmem:[%s4 + $0x8] sm:$0xff]
        %v2131 = vld [vmem:[%s4 + $0x10] sm:$0xff]
        %v2132 = vld [vmem:[%s4 + $0x18] sm:$0xff]
        %2134 = vset.pattern.permute.xlu0 0
        %2135 = vperm.xlu0 %2134, %v2129
        %v2136 = vpop.permute.xlu0 %2135
        %2139 = vset.pattern.permute.xlu0 0
        %2140 = vperm.xlu0 %2139, %v2130
        %v2141 = vpop.permute.xlu0 %2140
        %2144 = vset.pattern.permute.xlu0 0
        %2145 = vperm.xlu0 %2144, %v2131
        %v2146 = vpop.permute.xlu0 %2145
        %2149 = vset.pattern.permute.xlu0 0
        %2150 = vperm.xlu0 %2149, %v2132
        %v2151 = vpop.permute.xlu0 %2150
        %v2153 = vadd.f32 %v2125, %v2136
        %v2154 = vadd.f32 %v2126, %v2141
        %v2155 = vadd.f32 %v2127, %v2146
        %v2156 = vadd.f32 %v2128, %v2151
        %p2157 = scmp.ge.s32.totalorder %s1898, 0
        %p2158 = scmp.lt.s32.totalorder %s1898, 16
        %p2159 = pnand %p2157, %p2158
        %p2160 = pneg %p2159
        %v2161 = vmax.f32 %v2153, 0.0
        %v2162 = vmax.f32 %v2154, 0.0
        %v2163 = vmax.f32 %v2155, 0.0
        %v2164 = vmax.f32 %v2156, 0.0
        %s2165 = scalar_select %p2160, 1, 0
        %v2166 = vstv %s2165
        %vm2167 = vcmp.eq.s32.totalorder %v2166, 1
        %v2168 = vsel %vm2167, %v2161, 0.0
        %v2169 = vsel %vm2167, %v2162, 0.0
        %v2170 = vsel %vm2167, %v2163, 0.0
        %v2171 = vsel %vm2167, %v2164, 0.0
        %v2172 = vpack.c.bf16 %v2169, %v2168
        %v2173 = vpack.c.bf16 %v2171, %v2170
        %v2176 = vunpack.c.l.b16 %v2172
        %v2177 = vunpack.c.h.b16 %v2172
        %v2178 = vunpack.c.l.b16 %v2173
        %v2179 = vunpack.c.h.b16 %v2173
        %v2180 = vpack.c.b16 %v2176, %v2176
        %v2181 = vpack.c.b16 %v2177, %v2177
        %v2182 = vpack.c.b16 %v2178, %v2178
        %v2183 = vpack.c.b16 %v2179, %v2179
        %2184 = vrot.lane.b32.xlu0 %v2180, 1
        %v2185 = vpop.permute.xlu0 %2184
        %2186 = vrot.lane.b32.xlu0 %v2181, 1
        %v2187 = vpop.permute.xlu0 %2186
        %2188 = vrot.lane.b32.xlu0 %v2182, 1
        %v2189 = vpop.permute.xlu0 %2188
        %2190 = vrot.lane.b32.xlu0 %v2183, 1
        %v2191 = vpop.permute.xlu0 %2190
        %2196 = vst.msk [vmem:[#allocation2 + $0x50] sm:$0xf] %vm686, %v2185
        %2197 = vst.msk [vmem:[#allocation2 + $0x54] sm:$0xf] %vm686, %v2187
        %2198 = vst.msk [vmem:[#allocation2 + $0x58] sm:$0xf] %vm686, %v2189
        %2199 = vst.msk [vmem:[#allocation2 + $0x5c] sm:$0xf] %vm686, %v2191
        %s2200 = sadd.s32 %s294, 4
        %s2201 = sadd.s32 %s384, 24
        %s2202 = scalar_lea.vmem %s292, %s2201
        %v2203 = vld [vmem:[%s2202] sm:$0xff]
        %v2204 = vld [vmem:[%s2202 + $0x8] sm:$0xf]
        %v2205 = vpack.c.bf16 %v2204, %v2203
        %v2206 = vld [vmem:[%s1] sm:$0xf]
        %v2207 = vld [vmem:[%s1 + $0x4] sm:$0xf]
        %v2208 = vld [vmem:[%s1 + $0x8] sm:$0xf]
        %v2209 = vld [vmem:[%s1 + $0xc] sm:$0xf]
        %v2210 = vld [vmem:[%s394] sm:$0xf]
        %v2211 = vld [vmem:[%s394 + $0x4] sm:$0xf]
        %v2212 = vld [vmem:[%s394 + $0x8] sm:$0xf]
        %v2213 = vld [vmem:[%s394 + $0xc] sm:$0xf]
        %v2218 = vunpack.c.l.b16 %v2210
        %v2219 = vunpack.c.l.b16 %v2211
        %v2220 = vunpack.c.l.b16 %v2212
        %v2221 = vunpack.c.l.b16 %v2213
        %v2222 = vpack.c.b16 %v2219, %v2218
        %v2223 = vpack.c.b16 %v2221, %v2220
        %2225 = vrot.lane.b32.xlu0 %v2205, 127
        %v2226 = vpop.permute.xlu0 %2225
        %v2228 = vsel %vm412, %v2222, 0
        %v2231 = vsel %vm412, %v2223, 0
        %v2234 = vsel %vm419, %v2226, 0
        %2236 = vmatprep.subr.bf16.mxu0 0
        %2237 = vmatpush1.bf16.msra.mxu0 0
        %2238 = vmatprep.subr.bf16.mxu0 0
        %2239 = vmatpush1.bf16.msra.mxu0 0
        %2240 = vmatprep.subr.bf16.mxu0 0
        %2241 = vmatpush1.bf16.msra.mxu0 0
        %2242 = vmatprep.subr.bf16.mxu0 0
        %2243 = vmatpush1.bf16.msra.mxu0 0
        %2244 = vmatprep.subr.bf16.mxu0 0
        %2245 = vmatpush1.bf16.msra.mxu0 0
        %2246 = vmatprep.subr.bf16.mxu0 0
        %2247 = vmatpush1.bf16.msra.mxu0 0
        %2248 = vmatprep.subr.bf16.mxu0 0
        %2249 = vmatpush1.bf16.msra.mxu0 0
        %2250 = vmatprep.subr.bf16.mxu0 0
        %2251 = vmatpush1.bf16.msra.mxu0 %v2234
        %2252 = vmatprep.subr.bf16.mxu0 0
        %2253 = vmatpush2.bf16.msra.mxu0 0
        %2254 = vmatprep.subr.bf16.mxu0 0
        %2255 = vmatpush2.bf16.msra.mxu0 0
        %2256 = vmatprep.subr.bf16.mxu0 0
        %2257 = vmatpush2.bf16.msra.mxu0 0
        %2258 = vmatprep.subr.bf16.mxu0 0
        %2259 = vmatpush2.bf16.msra.mxu0 0
        %2260 = vmatprep.subr.bf16.mxu0 0
        %2261 = vmatpush2.bf16.msra.mxu0 0
        %2262 = vmatprep.subr.bf16.mxu0 0
        %2263 = vmatpush2.bf16.msra.mxu0 0
        %2264 = vmatprep.subr.bf16.mxu0 0
        %2265 = vmatpush2.bf16.msra.mxu0 0
        %2266 = vmatprep.subr.bf16.mxu0 0
        %2267 = vmatpush2.bf16.msra.mxu0 0
        %2268 = vmatprep.mubr.bf16.mxu0 0
        %2269 = vmatmul.mubr.bf16.gmra.mxu0 %v2228
        %v2270 = vpop.f32.mrf.mxu0
        %v2271 = vadd.f32 0.0, %v2270
        %v2272 = vpop.f32.mrf.mxu0
        %v2273 = vpop.f32.mrf.mxu0
        %v2274 = vadd.f32 0.0, %v2273
        %v2275 = vpop.f32.mrf.mxu0
        %2276 = vmatprep.mubr.bf16.mxu0 0
        %2277 = vmatmul.mubr.bf16.gmra.mxu0 %v2231
        %v2278 = vpop.f32.mrf.mxu0
        %v2279 = vadd.f32 0.0, %v2278
        %v2280 = vpop.f32.mrf.mxu0
        %v2281 = vpop.f32.mrf.mxu0
        %v2282 = vadd.f32 0.0, %v2281
        %v2283 = vpop.f32.mrf.mxu0
        %2284 = vdwg.mxu0
        %v2289 = vunpack.c.l.b16 %v2206
        %v2290 = vunpack.c.l.b16 %v2207
        %v2291 = vunpack.c.l.b16 %v2208
        %v2292 = vunpack.c.l.b16 %v2209
        %v2293 = vpack.c.b16 %v2290, %v2289
        %v2294 = vpack.c.b16 %v2292, %v2291
        %v2296 = vsel %vm412, %v2293, 0
        %v2299 = vsel %vm412, %v2294, 0
        %v2302 = vsel %vm419, %v2205, 0
        %2304 = vmatprep.subr.bf16.mxu0 0
        %2305 = vmatpush1.bf16.msra.mxu0 0
        %2306 = vmatprep.subr.bf16.mxu0 0
        %2307 = vmatpush1.bf16.msra.mxu0 0
        %2308 = vmatprep.subr.bf16.mxu0 0
        %2309 = vmatpush1.bf16.msra.mxu0 0
        %2310 = vmatprep.subr.bf16.mxu0 0
        %2311 = vmatpush1.bf16.msra.mxu0 0
        %2312 = vmatprep.subr.bf16.mxu0 0
        %2313 = vmatpush1.bf16.msra.mxu0 0
        %2314 = vmatprep.subr.bf16.mxu0 0
        %2315 = vmatpush1.bf16.msra.mxu0 0
        %2316 = vmatprep.subr.bf16.mxu0 0
        %2317 = vmatpush1.bf16.msra.mxu0 0
        %2318 = vmatprep.subr.bf16.mxu0 0
        %2319 = vmatpush1.bf16.msra.mxu0 %v2302
        %2320 = vmatprep.subr.bf16.mxu0 0
        %2321 = vmatpush2.bf16.msra.mxu0 0
        %2322 = vmatprep.subr.bf16.mxu0 0
        %2323 = vmatpush2.bf16.msra.mxu0 0
        %2324 = vmatprep.subr.bf16.mxu0 0
        %2325 = vmatpush2.bf16.msra.mxu0 0
        %2326 = vmatprep.subr.bf16.mxu0 0
        %2327 = vmatpush2.bf16.msra.mxu0 0
        %2328 = vmatprep.subr.bf16.mxu0 0
        %2329 = vmatpush2.bf16.msra.mxu0 0
        %2330 = vmatprep.subr.bf16.mxu0 0
        %2331 = vmatpush2.bf16.msra.mxu0 0
        %2332 = vmatprep.subr.bf16.mxu0 0
        %2333 = vmatpush2.bf16.msra.mxu0 0
        %2334 = vmatprep.subr.bf16.mxu0 0
        %2335 = vmatpush2.bf16.msra.mxu0 0
        %2336 = vmatprep.mubr.bf16.mxu0 0
        %2337 = vmatmul.mubr.bf16.gmra.mxu0 %v2296
        %v2338 = vpop.f32.mrf.mxu0
        %v2339 = vadd.f32 %v2271, %v2338
        %v2340 = vpop.f32.mrf.mxu0
        %v2341 = vpop.f32.mrf.mxu0
        %v2342 = vadd.f32 %v2274, %v2341
        %v2343 = vpop.f32.mrf.mxu0
        %2344 = vmatprep.mubr.bf16.mxu0 0
        %2345 = vmatmul.mubr.bf16.gmra.mxu0 %v2299
        %v2346 = vpop.f32.mrf.mxu0
        %v2347 = vadd.f32 %v2279, %v2346
        %v2348 = vpop.f32.mrf.mxu0
        %v2349 = vpop.f32.mrf.mxu0
        %v2350 = vadd.f32 %v2282, %v2349
        %v2351 = vpop.f32.mrf.mxu0
        %2352 = vdwg.mxu0
        %v2353 = vld [vmem:[%s540] sm:$0xf]
        %v2354 = vld [vmem:[%s540 + $0x4] sm:$0xf]
        %v2355 = vld [vmem:[%s540 + $0x8] sm:$0xf]
        %v2356 = vld [vmem:[%s540 + $0xc] sm:$0xf]
        %v2361 = vunpack.c.l.b16 %v2353
        %v2362 = vunpack.c.l.b16 %v2354
        %v2363 = vunpack.c.l.b16 %v2355
        %v2364 = vunpack.c.l.b16 %v2356
        %v2365 = vpack.c.b16 %v2362, %v2361
        %v2366 = vpack.c.b16 %v2364, %v2363
        %2367 = vrot.lane.b32.xlu0 %v2205, 126
        %v2368 = vpop.permute.xlu0 %2367
        %v2370 = vsel %vm412, %v2365, 0
        %v2373 = vsel %vm412, %v2366, 0
        %v2376 = vsel %vm419, %v2368, 0
        %2378 = vmatprep.subr.bf16.mxu0 0
        %2379 = vmatpush1.bf16.msra.mxu0 0
        %2380 = vmatprep.subr.bf16.mxu0 0
        %2381 = vmatpush1.bf16.msra.mxu0 0
        %2382 = vmatprep.subr.bf16.mxu0 0
        %2383 = vmatpush1.bf16.msra.mxu0 0
        %2384 = vmatprep.subr.bf16.mxu0 0
        %2385 = vmatpush1.bf16.msra.mxu0 0
        %2386 = vmatprep.subr.bf16.mxu0 0
        %2387 = vmatpush1.bf16.msra.mxu0 0
        %2388 = vmatprep.subr.bf16.mxu0 0
        %2389 = vmatpush1.bf16.msra.mxu0 0
        %2390 = vmatprep.subr.bf16.mxu0 0
        %2391 = vmatpush1.bf16.msra.mxu0 0
        %2392 = vmatprep.subr.bf16.mxu0 0
        %2393 = vmatpush1.bf16.msra.mxu0 %v2376
        %2394 = vmatprep.subr.bf16.mxu0 0
        %2395 = vmatpush2.bf16.msra.mxu0 0
        %2396 = vmatprep.subr.bf16.mxu0 0
        %2397 = vmatpush2.bf16.msra.mxu0 0
        %2398 = vmatprep.subr.bf16.mxu0 0
        %2399 = vmatpush2.bf16.msra.mxu0 0
        %2400 = vmatprep.subr.bf16.mxu0 0
        %2401 = vmatpush2.bf16.msra.mxu0 0
        %2402 = vmatprep.subr.bf16.mxu0 0
        %2403 = vmatpush2.bf16.msra.mxu0 0
        %2404 = vmatprep.subr.bf16.mxu0 0
        %2405 = vmatpush2.bf16.msra.mxu0 0
        %2406 = vmatprep.subr.bf16.mxu0 0
        %2407 = vmatpush2.bf16.msra.mxu0 0
        %2408 = vmatprep.subr.bf16.mxu0 0
        %2409 = vmatpush2.bf16.msra.mxu0 0
        %2410 = vmatprep.mubr.bf16.mxu0 0
        %2411 = vmatmul.mubr.bf16.gmra.mxu0 %v2370
        %v2412 = vpop.f32.mrf.mxu0
        %v2413 = vadd.f32 0.0, %v2412
        %v2414 = vpop.f32.mrf.mxu0
        %v2415 = vpop.f32.mrf.mxu0
        %v2416 = vadd.f32 0.0, %v2415
        %v2417 = vpop.f32.mrf.mxu0
        %2418 = vmatprep.mubr.bf16.mxu0 0
        %2419 = vmatmul.mubr.bf16.gmra.mxu0 %v2373
        %v2420 = vpop.f32.mrf.mxu0
        %v2421 = vadd.f32 0.0, %v2420
        %v2422 = vpop.f32.mrf.mxu0
        %v2423 = vpop.f32.mrf.mxu0
        %v2424 = vadd.f32 0.0, %v2423
        %v2425 = vpop.f32.mrf.mxu0
        %2426 = vdwg.mxu0
        %v2427 = vadd.f32 %v2339, %v2413
        %v2428 = vadd.f32 %v2342, %v2416
        %v2429 = vadd.f32 %v2347, %v2421
        %v2430 = vadd.f32 %v2350, %v2424
        %v2431 = vld [vmem:[%s4] sm:$0xff]
        %v2432 = vld [vmem:[%s4 + $0x8] sm:$0xff]
        %v2433 = vld [vmem:[%s4 + $0x10] sm:$0xff]
        %v2434 = vld [vmem:[%s4 + $0x18] sm:$0xff]
        %2436 = vset.pattern.permute.xlu0 0
        %2437 = vperm.xlu0 %2436, %v2431
        %v2438 = vpop.permute.xlu0 %2437
        %2441 = vset.pattern.permute.xlu0 0
        %2442 = vperm.xlu0 %2441, %v2432
        %v2443 = vpop.permute.xlu0 %2442
        %2446 = vset.pattern.permute.xlu0 0
        %2447 = vperm.xlu0 %2446, %v2433
        %v2448 = vpop.permute.xlu0 %2447
        %2451 = vset.pattern.permute.xlu0 0
        %2452 = vperm.xlu0 %2451, %v2434
        %v2453 = vpop.permute.xlu0 %2452
        %v2455 = vadd.f32 %v2427, %v2438
        %v2456 = vadd.f32 %v2428, %v2443
        %v2457 = vadd.f32 %v2429, %v2448
        %v2458 = vadd.f32 %v2430, %v2453
        %p2459 = scmp.ge.s32.totalorder %s2200, 0
        %p2460 = scmp.lt.s32.totalorder %s2200, 16
        %p2461 = pnand %p2459, %p2460
        %p2462 = pneg %p2461
        %v2463 = vmax.f32 %v2455, 0.0
        %v2464 = vmax.f32 %v2456, 0.0
        %v2465 = vmax.f32 %v2457, 0.0
        %v2466 = vmax.f32 %v2458, 0.0
        %s2467 = scalar_select %p2462, 1, 0
        %v2468 = vstv %s2467
        %vm2469 = vcmp.eq.s32.totalorder %v2468, 1
        %v2470 = vsel %vm2469, %v2463, 0.0
        %v2471 = vsel %vm2469, %v2464, 0.0
        %v2472 = vsel %vm2469, %v2465, 0.0
        %v2473 = vsel %vm2469, %v2466, 0.0
        %v2474 = vpack.c.bf16 %v2471, %v2470
        %v2475 = vpack.c.bf16 %v2473, %v2472
        %v2478 = vunpack.c.l.b16 %v2474
        %v2479 = vunpack.c.h.b16 %v2474
        %v2480 = vunpack.c.l.b16 %v2475
        %v2481 = vunpack.c.h.b16 %v2475
        %v2482 = vpack.c.b16 %v2478, %v2478
        %v2483 = vpack.c.b16 %v2479, %v2479
        %v2484 = vpack.c.b16 %v2480, %v2480
        %v2485 = vpack.c.b16 %v2481, %v2481
        %2486 = vrot.lane.b32.xlu0 %v2482, 1
        %v2487 = vpop.permute.xlu0 %2486
        %2488 = vrot.lane.b32.xlu0 %v2483, 1
        %v2489 = vpop.permute.xlu0 %2488
        %2490 = vrot.lane.b32.xlu0 %v2484, 1
        %v2491 = vpop.permute.xlu0 %2490
        %2492 = vrot.lane.b32.xlu0 %v2485, 1
        %v2493 = vpop.permute.xlu0 %2492
        %2498 = vst.msk [vmem:[#allocation2 + $0x60] sm:$0xf] %vm686, %v2487
        %2499 = vst.msk [vmem:[#allocation2 + $0x64] sm:$0xf] %vm686, %v2489
        %2500 = vst.msk [vmem:[#allocation2 + $0x68] sm:$0xf] %vm686, %v2491
        %2501 = vst.msk [vmem:[#allocation2 + $0x6c] sm:$0xf] %vm686, %v2493
        %s2502 = sadd.s32 %s294, 5
        %s2503 = sadd.s32 %s384, 28
        %s2504 = scalar_lea.vmem %s292, %s2503
        %v2505 = vld [vmem:[%s2504] sm:$0xff]
        %v2506 = vld [vmem:[%s2504 + $0x8] sm:$0xf]
        %v2507 = vpack.c.bf16 %v2506, %v2505
        %v2508 = vld [vmem:[%s1] sm:$0xf]
        %v2509 = vld [vmem:[%s1 + $0x4] sm:$0xf]
        %v2510 = vld [vmem:[%s1 + $0x8] sm:$0xf]
        %v2511 = vld [vmem:[%s1 + $0xc] sm:$0xf]
        %v2512 = vld [vmem:[%s394] sm:$0xf]
        %v2513 = vld [vmem:[%s394 + $0x4] sm:$0xf]
        %v2514 = vld [vmem:[%s394 + $0x8] sm:$0xf]
        %v2515 = vld [vmem:[%s394 + $0xc] sm:$0xf]
        %v2520 = vunpack.c.l.b16 %v2512
        %v2521 = vunpack.c.l.b16 %v2513
        %v2522 = vunpack.c.l.b16 %v2514
        %v2523 = vunpack.c.l.b16 %v2515
        %v2524 = vpack.c.b16 %v2521, %v2520
        %v2525 = vpack.c.b16 %v2523, %v2522
        %2527 = vrot.lane.b32.xlu0 %v2507, 127
        %v2528 = vpop.permute.xlu0 %2527
        %v2530 = vsel %vm412, %v2524, 0
        %v2533 = vsel %vm412, %v2525, 0
        %v2536 = vsel %vm419, %v2528, 0
        %2538 = vmatprep.subr.bf16.mxu0 0
        %2539 = vmatpush1.bf16.msra.mxu0 0
        %2540 = vmatprep.subr.bf16.mxu0 0
        %2541 = vmatpush1.bf16.msra.mxu0 0
        %2542 = vmatprep.subr.bf16.mxu0 0
        %2543 = vmatpush1.bf16.msra.mxu0 0
        %2544 = vmatprep.subr.bf16.mxu0 0
        %2545 = vmatpush1.bf16.msra.mxu0 0
        %2546 = vmatprep.subr.bf16.mxu0 0
        %2547 = vmatpush1.bf16.msra.mxu0 0
        %2548 = vmatprep.subr.bf16.mxu0 0
        %2549 = vmatpush1.bf16.msra.mxu0 0
        %2550 = vmatprep.subr.bf16.mxu0 0
        %2551 = vmatpush1.bf16.msra.mxu0 0
        %2552 = vmatprep.subr.bf16.mxu0 0
        %2553 = vmatpush1.bf16.msra.mxu0 %v2536
        %2554 = vmatprep.subr.bf16.mxu0 0
        %2555 = vmatpush2.bf16.msra.mxu0 0
        %2556 = vmatprep.subr.bf16.mxu0 0
        %2557 = vmatpush2.bf16.msra.mxu0 0
        %2558 = vmatprep.subr.bf16.mxu0 0
        %2559 = vmatpush2.bf16.msra.mxu0 0
        %2560 = vmatprep.subr.bf16.mxu0 0
        %2561 = vmatpush2.bf16.msra.mxu0 0
        %2562 = vmatprep.subr.bf16.mxu0 0
        %2563 = vmatpush2.bf16.msra.mxu0 0
        %2564 = vmatprep.subr.bf16.mxu0 0
        %2565 = vmatpush2.bf16.msra.mxu0 0
        %2566 = vmatprep.subr.bf16.mxu0 0
        %2567 = vmatpush2.bf16.msra.mxu0 0
        %2568 = vmatprep.subr.bf16.mxu0 0
        %2569 = vmatpush2.bf16.msra.mxu0 0
        %2570 = vmatprep.mubr.bf16.mxu0 0
        %2571 = vmatmul.mubr.bf16.gmra.mxu0 %v2530
        %v2572 = vpop.f32.mrf.mxu0
        %v2573 = vadd.f32 0.0, %v2572
        %v2574 = vpop.f32.mrf.mxu0
        %v2575 = vpop.f32.mrf.mxu0
        %v2576 = vadd.f32 0.0, %v2575
        %v2577 = vpop.f32.mrf.mxu0
        %2578 = vmatprep.mubr.bf16.mxu0 0
        %2579 = vmatmul.mubr.bf16.gmra.mxu0 %v2533
        %v2580 = vpop.f32.mrf.mxu0
        %v2581 = vadd.f32 0.0, %v2580
        %v2582 = vpop.f32.mrf.mxu0
        %v2583 = vpop.f32.mrf.mxu0
        %v2584 = vadd.f32 0.0, %v2583
        %v2585 = vpop.f32.mrf.mxu0
        %2586 = vdwg.mxu0
        %v2591 = vunpack.c.l.b16 %v2508
        %v2592 = vunpack.c.l.b16 %v2509
        %v2593 = vunpack.c.l.b16 %v2510
        %v2594 = vunpack.c.l.b16 %v2511
        %v2595 = vpack.c.b16 %v2592, %v2591
        %v2596 = vpack.c.b16 %v2594, %v2593
        %v2598 = vsel %vm412, %v2595, 0
        %v2601 = vsel %vm412, %v2596, 0
        %v2604 = vsel %vm419, %v2507, 0
        %2606 = vmatprep.subr.bf16.mxu0 0
        %2607 = vmatpush1.bf16.msra.mxu0 0
        %2608 = vmatprep.subr.bf16.mxu0 0
        %2609 = vmatpush1.bf16.msra.mxu0 0
        %2610 = vmatprep.subr.bf16.mxu0 0
        %2611 = vmatpush1.bf16.msra.mxu0 0
        %2612 = vmatprep.subr.bf16.mxu0 0
        %2613 = vmatpush1.bf16.msra.mxu0 0
        %2614 = vmatprep.subr.bf16.mxu0 0
        %2615 = vmatpush1.bf16.msra.mxu0 0
        %2616 = vmatprep.subr.bf16.mxu0 0
        %2617 = vmatpush1.bf16.msra.mxu0 0
        %2618 = vmatprep.subr.bf16.mxu0 0
        %2619 = vmatpush1.bf16.msra.mxu0 0
        %2620 = vmatprep.subr.bf16.mxu0 0
        %2621 = vmatpush1.bf16.msra.mxu0 %v2604
        %2622 = vmatprep.subr.bf16.mxu0 0
        %2623 = vmatpush2.bf16.msra.mxu0 0
        %2624 = vmatprep.subr.bf16.mxu0 0
        %2625 = vmatpush2.bf16.msra.mxu0 0
        %2626 = vmatprep.subr.bf16.mxu0 0
        %2627 = vmatpush2.bf16.msra.mxu0 0
        %2628 = vmatprep.subr.bf16.mxu0 0
        %2629 = vmatpush2.bf16.msra.mxu0 0
        %2630 = vmatprep.subr.bf16.mxu0 0
        %2631 = vmatpush2.bf16.msra.mxu0 0
        %2632 = vmatprep.subr.bf16.mxu0 0
        %2633 = vmatpush2.bf16.msra.mxu0 0
        %2634 = vmatprep.subr.bf16.mxu0 0
        %2635 = vmatpush2.bf16.msra.mxu0 0
        %2636 = vmatprep.subr.bf16.mxu0 0
        %2637 = vmatpush2.bf16.msra.mxu0 0
        %2638 = vmatprep.mubr.bf16.mxu0 0
        %2639 = vmatmul.mubr.bf16.gmra.mxu0 %v2598
        %v2640 = vpop.f32.mrf.mxu0
        %v2641 = vadd.f32 %v2573, %v2640
        %v2642 = vpop.f32.mrf.mxu0
        %v2643 = vpop.f32.mrf.mxu0
        %v2644 = vadd.f32 %v2576, %v2643
        %v2645 = vpop.f32.mrf.mxu0
        %2646 = vmatprep.mubr.bf16.mxu0 0
        %2647 = vmatmul.mubr.bf16.gmra.mxu0 %v2601
        %v2648 = vpop.f32.mrf.mxu0
        %v2649 = vadd.f32 %v2581, %v2648
        %v2650 = vpop.f32.mrf.mxu0
        %v2651 = vpop.f32.mrf.mxu0
        %v2652 = vadd.f32 %v2584, %v2651
        %v2653 = vpop.f32.mrf.mxu0
        %2654 = vdwg.mxu0
        %v2655 = vld [vmem:[%s540] sm:$0xf]
        %v2656 = vld [vmem:[%s540 + $0x4] sm:$0xf]
        %v2657 = vld [vmem:[%s540 + $0x8] sm:$0xf]
        %v2658 = vld [vmem:[%s540 + $0xc] sm:$0xf]
        %v2663 = vunpack.c.l.b16 %v2655
        %v2664 = vunpack.c.l.b16 %v2656
        %v2665 = vunpack.c.l.b16 %v2657
        %v2666 = vunpack.c.l.b16 %v2658
        %v2667 = vpack.c.b16 %v2664, %v2663
        %v2668 = vpack.c.b16 %v2666, %v2665
        %2669 = vrot.lane.b32.xlu0 %v2507, 126
        %v2670 = vpop.permute.xlu0 %2669
        %v2672 = vsel %vm412, %v2667, 0
        %v2675 = vsel %vm412, %v2668, 0
        %v2678 = vsel %vm419, %v2670, 0
        %2680 = vmatprep.subr.bf16.mxu0 0
        %2681 = vmatpush1.bf16.msra.mxu0 0
        %2682 = vmatprep.subr.bf16.mxu0 0
        %2683 = vmatpush1.bf16.msra.mxu0 0
        %2684 = vmatprep.subr.bf16.mxu0 0
        %2685 = vmatpush1.bf16.msra.mxu0 0
        %2686 = vmatprep.subr.bf16.mxu0 0
        %2687 = vmatpush1.bf16.msra.mxu0 0
        %2688 = vmatprep.subr.bf16.mxu0 0
        %2689 = vmatpush1.bf16.msra.mxu0 0
        %2690 = vmatprep.subr.bf16.mxu0 0
        %2691 = vmatpush1.bf16.msra.mxu0 0
        %2692 = vmatprep.subr.bf16.mxu0 0
        %2693 = vmatpush1.bf16.msra.mxu0 0
        %2694 = vmatprep.subr.bf16.mxu0 0
        %2695 = vmatpush1.bf16.msra.mxu0 %v2678
        %2696 = vmatprep.subr.bf16.mxu0 0
        %2697 = vmatpush2.bf16.msra.mxu0 0
        %2698 = vmatprep.subr.bf16.mxu0 0
        %2699 = vmatpush2.bf16.msra.mxu0 0
        %2700 = vmatprep.subr.bf16.mxu0 0
        %2701 = vmatpush2.bf16.msra.mxu0 0
        %2702 = vmatprep.subr.bf16.mxu0 0
        %2703 = vmatpush2.bf16.msra.mxu0 0
        %2704 = vmatprep.subr.bf16.mxu0 0
        %2705 = vmatpush2.bf16.msra.mxu0 0
        %2706 = vmatprep.subr.bf16.mxu0 0
        %2707 = vmatpush2.bf16.msra.mxu0 0
        %2708 = vmatprep.subr.bf16.mxu0 0
        %2709 = vmatpush2.bf16.msra.mxu0 0
        %2710 = vmatprep.subr.bf16.mxu0 0
        %2711 = vmatpush2.bf16.msra.mxu0 0
        %2712 = vmatprep.mubr.bf16.mxu0 0
        %2713 = vmatmul.mubr.bf16.gmra.mxu0 %v2672
        %v2714 = vpop.f32.mrf.mxu0
        %v2715 = vadd.f32 0.0, %v2714
        %v2716 = vpop.f32.mrf.mxu0
        %v2717 = vpop.f32.mrf.mxu0
        %v2718 = vadd.f32 0.0, %v2717
        %v2719 = vpop.f32.mrf.mxu0
        %2720 = vmatprep.mubr.bf16.mxu0 0
        %2721 = vmatmul.mubr.bf16.gmra.mxu0 %v2675
        %v2722 = vpop.f32.mrf.mxu0
        %v2723 = vadd.f32 0.0, %v2722
        %v2724 = vpop.f32.mrf.mxu0
        %v2725 = vpop.f32.mrf.mxu0
        %v2726 = vadd.f32 0.0, %v2725
        %v2727 = vpop.f32.mrf.mxu0
        %2728 = vdwg.mxu0
        %v2729 = vadd.f32 %v2641, %v2715
        %v2730 = vadd.f32 %v2644, %v2718
        %v2731 = vadd.f32 %v2649, %v2723
        %v2732 = vadd.f32 %v2652, %v2726
        %v2733 = vld [vmem:[%s4] sm:$0xff]
        %v2734 = vld [vmem:[%s4 + $0x8] sm:$0xff]
        %v2735 = vld [vmem:[%s4 + $0x10] sm:$0xff]
        %v2736 = vld [vmem:[%s4 + $0x18] sm:$0xff]
        %2738 = vset.pattern.permute.xlu0 0
        %2739 = vperm.xlu0 %2738, %v2733
        %v2740 = vpop.permute.xlu0 %2739
        %2743 = vset.pattern.permute.xlu0 0
        %2744 = vperm.xlu0 %2743, %v2734
        %v2745 = vpop.permute.xlu0 %2744
        %2748 = vset.pattern.permute.xlu0 0
        %2749 = vperm.xlu0 %2748, %v2735
        %v2750 = vpop.permute.xlu0 %2749
        %2753 = vset.pattern.permute.xlu0 0
        %2754 = vperm.xlu0 %2753, %v2736
        %v2755 = vpop.permute.xlu0 %2754
        %v2757 = vadd.f32 %v2729, %v2740
        %v2758 = vadd.f32 %v2730, %v2745
        %v2759 = vadd.f32 %v2731, %v2750
        %v2760 = vadd.f32 %v2732, %v2755
        %p2761 = scmp.ge.s32.totalorder %s2502, 0
        %p2762 = scmp.lt.s32.totalorder %s2502, 16
        %p2763 = pnand %p2761, %p2762
        %p2764 = pneg %p2763
        %v2765 = vmax.f32 %v2757, 0.0
        %v2766 = vmax.f32 %v2758, 0.0
        %v2767 = vmax.f32 %v2759, 0.0
        %v2768 = vmax.f32 %v2760, 0.0
        %s2769 = scalar_select %p2764, 1, 0
        %v2770 = vstv %s2769
        %vm2771 = vcmp.eq.s32.totalorder %v2770, 1
        %v2772 = vsel %vm2771, %v2765, 0.0
        %v2773 = vsel %vm2771, %v2766, 0.0
        %v2774 = vsel %vm2771, %v2767, 0.0
        %v2775 = vsel %vm2771, %v2768, 0.0
        %v2776 = vpack.c.bf16 %v2773, %v2772
        %v2777 = vpack.c.bf16 %v2775, %v2774
        %v2780 = vunpack.c.l.b16 %v2776
        %v2781 = vunpack.c.h.b16 %v2776
        %v2782 = vunpack.c.l.b16 %v2777
        %v2783 = vunpack.c.h.b16 %v2777
        %v2784 = vpack.c.b16 %v2780, %v2780
        %v2785 = vpack.c.b16 %v2781, %v2781
        %v2786 = vpack.c.b16 %v2782, %v2782
        %v2787 = vpack.c.b16 %v2783, %v2783
        %2788 = vrot.lane.b32.xlu0 %v2784, 1
        %v2789 = vpop.permute.xlu0 %2788
        %2790 = vrot.lane.b32.xlu0 %v2785, 1
        %v2791 = vpop.permute.xlu0 %2790
        %2792 = vrot.lane.b32.xlu0 %v2786, 1
        %v2793 = vpop.permute.xlu0 %2792
        %2794 = vrot.lane.b32.xlu0 %v2787, 1
        %v2795 = vpop.permute.xlu0 %2794
        %2800 = vst.msk [vmem:[#allocation2 + $0x70] sm:$0xf] %vm686, %v2789
        %2801 = vst.msk [vmem:[#allocation2 + $0x74] sm:$0xf] %vm686, %v2791
        %2802 = vst.msk [vmem:[#allocation2 + $0x78] sm:$0xf] %vm686, %v2793
        %2803 = vst.msk [vmem:[#allocation2 + $0x7c] sm:$0xf] %vm686, %v2795
        %s2804 = sadd.s32 %s294, 6
        %s2805 = sadd.s32 %s384, 32
        %s2806 = scalar_lea.vmem %s292, %s2805
        %v2807 = vld [vmem:[%s2806] sm:$0xff]
        %v2808 = vld [vmem:[%s2806 + $0x8] sm:$0xf]
        %v2809 = vpack.c.bf16 %v2808, %v2807
        %v2810 = vld [vmem:[%s1] sm:$0xf]
        %v2811 = vld [vmem:[%s1 + $0x4] sm:$0xf]
        %v2812 = vld [vmem:[%s1 + $0x8] sm:$0xf]
        %v2813 = vld [vmem:[%s1 + $0xc] sm:$0xf]
        %v2814 = vld [vmem:[%s394] sm:$0xf]
        %v2815 = vld [vmem:[%s394 + $0x4] sm:$0xf]
        %v2816 = vld [vmem:[%s394 + $0x8] sm:$0xf]
        %v2817 = vld [vmem:[%s394 + $0xc] sm:$0xf]
        %v2822 = vunpack.c.l.b16 %v2814
        %v2823 = vunpack.c.l.b16 %v2815
        %v2824 = vunpack.c.l.b16 %v2816
        %v2825 = vunpack.c.l.b16 %v2817
        %v2826 = vpack.c.b16 %v2823, %v2822
        %v2827 = vpack.c.b16 %v2825, %v2824
        %2829 = vrot.lane.b32.xlu0 %v2809, 127
        %v2830 = vpop.permute.xlu0 %2829
        %v2832 = vsel %vm412, %v2826, 0
        %v2835 = vsel %vm412, %v2827, 0
        %v2838 = vsel %vm419, %v2830, 0
        %2840 = vmatprep.subr.bf16.mxu0 0
        %2841 = vmatpush1.bf16.msra.mxu0 0
        %2842 = vmatprep.subr.bf16.mxu0 0
        %2843 = vmatpush1.bf16.msra.mxu0 0
        %2844 = vmatprep.subr.bf16.mxu0 0
        %2845 = vmatpush1.bf16.msra.mxu0 0
        %2846 = vmatprep.subr.bf16.mxu0 0
        %2847 = vmatpush1.bf16.msra.mxu0 0
        %2848 = vmatprep.subr.bf16.mxu0 0
        %2849 = vmatpush1.bf16.msra.mxu0 0
        %2850 = vmatprep.subr.bf16.mxu0 0
        %2851 = vmatpush1.bf16.msra.mxu0 0
        %2852 = vmatprep.subr.bf16.mxu0 0
        %2853 = vmatpush1.bf16.msra.mxu0 0
        %2854 = vmatprep.subr.bf16.mxu0 0
        %2855 = vmatpush1.bf16.msra.mxu0 %v2838
        %2856 = vmatprep.subr.bf16.mxu0 0
        %2857 = vmatpush2.bf16.msra.mxu0 0
        %2858 = vmatprep.subr.bf16.mxu0 0
        %2859 = vmatpush2.bf16.msra.mxu0 0
        %2860 = vmatprep.subr.bf16.mxu0 0
        %2861 = vmatpush2.bf16.msra.mxu0 0
        %2862 = vmatprep.subr.bf16.mxu0 0
        %2863 = vmatpush2.bf16.msra.mxu0 0
        %2864 = vmatprep.subr.bf16.mxu0 0
        %2865 = vmatpush2.bf16.msra.mxu0 0
        %2866 = vmatprep.subr.bf16.mxu0 0
        %2867 = vmatpush2.bf16.msra.mxu0 0
        %2868 = vmatprep.subr.bf16.mxu0 0
        %2869 = vmatpush2.bf16.msra.mxu0 0
        %2870 = vmatprep.subr.bf16.mxu0 0
        %2871 = vmatpush2.bf16.msra.mxu0 0
        %2872 = vmatprep.mubr.bf16.mxu0 0
        %2873 = vmatmul.mubr.bf16.gmra.mxu0 %v2832
        %v2874 = vpop.f32.mrf.mxu0
        %v2875 = vadd.f32 0.0, %v2874
        %v2876 = vpop.f32.mrf.mxu0
        %v2877 = vpop.f32.mrf.mxu0
        %v2878 = vadd.f32 0.0, %v2877
        %v2879 = vpop.f32.mrf.mxu0
        %2880 = vmatprep.mubr.bf16.mxu0 0
        %2881 = vmatmul.mubr.bf16.gmra.mxu0 %v2835
        %v2882 = vpop.f32.mrf.mxu0
        %v2883 = vadd.f32 0.0, %v2882
        %v2884 = vpop.f32.mrf.mxu0
        %v2885 = vpop.f32.mrf.mxu0
        %v2886 = vadd.f32 0.0, %v2885
        %v2887 = vpop.f32.mrf.mxu0
        %2888 = vdwg.mxu0
        %v2893 = vunpack.c.l.b16 %v2810
        %v2894 = vunpack.c.l.b16 %v2811
        %v2895 = vunpack.c.l.b16 %v2812
        %v2896 = vunpack.c.l.b16 %v2813
        %v2897 = vpack.c.b16 %v2894, %v2893
        %v2898 = vpack.c.b16 %v2896, %v2895
        %v2900 = vsel %vm412, %v2897, 0
        %v2903 = vsel %vm412, %v2898, 0
        %v2906 = vsel %vm419, %v2809, 0
        %2908 = vmatprep.subr.bf16.mxu0 0
        %2909 = vmatpush1.bf16.msra.mxu0 0
        %2910 = vmatprep.subr.bf16.mxu0 0
        %2911 = vmatpush1.bf16.msra.mxu0 0
        %2912 = vmatprep.subr.bf16.mxu0 0
        %2913 = vmatpush1.bf16.msra.mxu0 0
        %2914 = vmatprep.subr.bf16.mxu0 0
        %2915 = vmatpush1.bf16.msra.mxu0 0
        %2916 = vmatprep.subr.bf16.mxu0 0
        %2917 = vmatpush1.bf16.msra.mxu0 0
        %2918 = vmatprep.subr.bf16.mxu0 0
        %2919 = vmatpush1.bf16.msra.mxu0 0
        %2920 = vmatprep.subr.bf16.mxu0 0
        %2921 = vmatpush1.bf16.msra.mxu0 0
        %2922 = vmatprep.subr.bf16.mxu0 0
        %2923 = vmatpush1.bf16.msra.mxu0 %v2906
        %2924 = vmatprep.subr.bf16.mxu0 0
        %2925 = vmatpush2.bf16.msra.mxu0 0
        %2926 = vmatprep.subr.bf16.mxu0 0
        %2927 = vmatpush2.bf16.msra.mxu0 0
        %2928 = vmatprep.subr.bf16.mxu0 0
        %2929 = vmatpush2.bf16.msra.mxu0 0
        %2930 = vmatprep.subr.bf16.mxu0 0
        %2931 = vmatpush2.bf16.msra.mxu0 0
        %2932 = vmatprep.subr.bf16.mxu0 0
        %2933 = vmatpush2.bf16.msra.mxu0 0
        %2934 = vmatprep.subr.bf16.mxu0 0
        %2935 = vmatpush2.bf16.msra.mxu0 0
        %2936 = vmatprep.subr.bf16.mxu0 0
        %2937 = vmatpush2.bf16.msra.mxu0 0
        %2938 = vmatprep.subr.bf16.mxu0 0
        %2939 = vmatpush2.bf16.msra.mxu0 0
        %2940 = vmatprep.mubr.bf16.mxu0 0
        %2941 = vmatmul.mubr.bf16.gmra.mxu0 %v2900
        %v2942 = vpop.f32.mrf.mxu0
        %v2943 = vadd.f32 %v2875, %v2942
        %v2944 = vpop.f32.mrf.mxu0
        %v2945 = vpop.f32.mrf.mxu0
        %v2946 = vadd.f32 %v2878, %v2945
        %v2947 = vpop.f32.mrf.mxu0
        %2948 = vmatprep.mubr.bf16.mxu0 0
        %2949 = vmatmul.mubr.bf16.gmra.mxu0 %v2903
        %v2950 = vpop.f32.mrf.mxu0
        %v2951 = vadd.f32 %v2883, %v2950
        %v2952 = vpop.f32.mrf.mxu0
        %v2953 = vpop.f32.mrf.mxu0
        %v2954 = vadd.f32 %v2886, %v2953
        %v2955 = vpop.f32.mrf.mxu0
        %2956 = vdwg.mxu0
        %v2957 = vld [vmem:[%s540] sm:$0xf]
        %v2958 = vld [vmem:[%s540 + $0x4] sm:$0xf]
        %v2959 = vld [vmem:[%s540 + $0x8] sm:$0xf]
        %v2960 = vld [vmem:[%s540 + $0xc] sm:$0xf]
        %v2965 = vunpack.c.l.b16 %v2957
        %v2966 = vunpack.c.l.b16 %v2958
        %v2967 = vunpack.c.l.b16 %v2959
        %v2968 = vunpack.c.l.b16 %v2960
        %v2969 = vpack.c.b16 %v2966, %v2965
        %v2970 = vpack.c.b16 %v2968, %v2967
        %2971 = vrot.lane.b32.xlu0 %v2809, 126
        %v2972 = vpop.permute.xlu0 %2971
        %v2974 = vsel %vm412, %v2969, 0
        %v2977 = vsel %vm412, %v2970, 0
        %v2980 = vsel %vm419, %v2972, 0
        %2982 = vmatprep.subr.bf16.mxu0 0
        %2983 = vmatpush1.bf16.msra.mxu0 0
        %2984 = vmatprep.subr.bf16.mxu0 0
        %2985 = vmatpush1.bf16.msra.mxu0 0
        %2986 = vmatprep.subr.bf16.mxu0 0
        %2987 = vmatpush1.bf16.msra.mxu0 0
        %2988 = vmatprep.subr.bf16.mxu0 0
        %2989 = vmatpush1.bf16.msra.mxu0 0
        %2990 = vmatprep.subr.bf16.mxu0 0
        %2991 = vmatpush1.bf16.msra.mxu0 0
        %2992 = vmatprep.subr.bf16.mxu0 0
        %2993 = vmatpush1.bf16.msra.mxu0 0
        %2994 = vmatprep.subr.bf16.mxu0 0
        %2995 = vmatpush1.bf16.msra.mxu0 0
        %2996 = vmatprep.subr.bf16.mxu0 0
        %2997 = vmatpush1.bf16.msra.mxu0 %v2980
        %2998 = vmatprep.subr.bf16.mxu0 0
        %2999 = vmatpush2.bf16.msra.mxu0 0
        %3000 = vmatprep.subr.bf16.mxu0 0
        %3001 = vmatpush2.bf16.msra.mxu0 0
        %3002 = vmatprep.subr.bf16.mxu0 0
        %3003 = vmatpush2.bf16.msra.mxu0 0
        %3004 = vmatprep.subr.bf16.mxu0 0
        %3005 = vmatpush2.bf16.msra.mxu0 0
        %3006 = vmatprep.subr.bf16.mxu0 0
        %3007 = vmatpush2.bf16.msra.mxu0 0
        %3008 = vmatprep.subr.bf16.mxu0 0
        %3009 = vmatpush2.bf16.msra.mxu0 0
        %3010 = vmatprep.subr.bf16.mxu0 0
        %3011 = vmatpush2.bf16.msra.mxu0 0
        %3012 = vmatprep.subr.bf16.mxu0 0
        %3013 = vmatpush2.bf16.msra.mxu0 0
        %3014 = vmatprep.mubr.bf16.mxu0 0
        %3015 = vmatmul.mubr.bf16.gmra.mxu0 %v2974
        %v3016 = vpop.f32.mrf.mxu0
        %v3017 = vadd.f32 0.0, %v3016
        %v3018 = vpop.f32.mrf.mxu0
        %v3019 = vpop.f32.mrf.mxu0
        %v3020 = vadd.f32 0.0, %v3019
        %v3021 = vpop.f32.mrf.mxu0
        %3022 = vmatprep.mubr.bf16.mxu0 0
        %3023 = vmatmul.mubr.bf16.gmra.mxu0 %v2977
        %v3024 = vpop.f32.mrf.mxu0
        %v3025 = vadd.f32 0.0, %v3024
        %v3026 = vpop.f32.mrf.mxu0
        %v3027 = vpop.f32.mrf.mxu0
        %v3028 = vadd.f32 0.0, %v3027
        %v3029 = vpop.f32.mrf.mxu0
        %3030 = vdwg.mxu0
        %v3031 = vadd.f32 %v2943, %v3017
        %v3032 = vadd.f32 %v2946, %v3020
        %v3033 = vadd.f32 %v2951, %v3025
        %v3034 = vadd.f32 %v2954, %v3028
        %v3035 = vld [vmem:[%s4] sm:$0xff]
        %v3036 = vld [vmem:[%s4 + $0x8] sm:$0xff]
        %v3037 = vld [vmem:[%s4 + $0x10] sm:$0xff]
        %v3038 = vld [vmem:[%s4 + $0x18] sm:$0xff]
        %3040 = vset.pattern.permute.xlu0 0
        %3041 = vperm.xlu0 %3040, %v3035
        %v3042 = vpop.permute.xlu0 %3041
        %3045 = vset.pattern.permute.xlu0 0
        %3046 = vperm.xlu0 %3045, %v3036
        %v3047 = vpop.permute.xlu0 %3046
        %3050 = vset.pattern.permute.xlu0 0
        %3051 = vperm.xlu0 %3050, %v3037
        %v3052 = vpop.permute.xlu0 %3051
        %3055 = vset.pattern.permute.xlu0 0
        %3056 = vperm.xlu0 %3055, %v3038
        %v3057 = vpop.permute.xlu0 %3056
        %v3059 = vadd.f32 %v3031, %v3042
        %v3060 = vadd.f32 %v3032, %v3047
        %v3061 = vadd.f32 %v3033, %v3052
        %v3062 = vadd.f32 %v3034, %v3057
        %p3063 = scmp.ge.s32.totalorder %s2804, 0
        %p3064 = scmp.lt.s32.totalorder %s2804, 16
        %p3065 = pnand %p3063, %p3064
        %p3066 = pneg %p3065
        %v3067 = vmax.f32 %v3059, 0.0
        %v3068 = vmax.f32 %v3060, 0.0
        %v3069 = vmax.f32 %v3061, 0.0
        %v3070 = vmax.f32 %v3062, 0.0
        %s3071 = scalar_select %p3066, 1, 0
        %v3072 = vstv %s3071
        %vm3073 = vcmp.eq.s32.totalorder %v3072, 1
        %v3074 = vsel %vm3073, %v3067, 0.0
        %v3075 = vsel %vm3073, %v3068, 0.0
        %v3076 = vsel %vm3073, %v3069, 0.0
        %v3077 = vsel %vm3073, %v3070, 0.0
        %v3078 = vpack.c.bf16 %v3075, %v3074
        %v3079 = vpack.c.bf16 %v3077, %v3076
        %v3082 = vunpack.c.l.b16 %v3078
        %v3083 = vunpack.c.h.b16 %v3078
        %v3084 = vunpack.c.l.b16 %v3079
        %v3085 = vunpack.c.h.b16 %v3079
        %v3086 = vpack.c.b16 %v3082, %v3082
        %v3087 = vpack.c.b16 %v3083, %v3083
        %v3088 = vpack.c.b16 %v3084, %v3084
        %v3089 = vpack.c.b16 %v3085, %v3085
        %3090 = vrot.lane.b32.xlu0 %v3086, 1
        %v3091 = vpop.permute.xlu0 %3090
        %3092 = vrot.lane.b32.xlu0 %v3087, 1
        %v3093 = vpop.permute.xlu0 %3092
        %3094 = vrot.lane.b32.xlu0 %v3088, 1
        %v3095 = vpop.permute.xlu0 %3094
        %3096 = vrot.lane.b32.xlu0 %v3089, 1
        %v3097 = vpop.permute.xlu0 %3096
        %3102 = vst.msk [vmem:[#allocation2 + $0x80] sm:$0xf] %vm686, %v3091
        %3103 = vst.msk [vmem:[#allocation2 + $0x84] sm:$0xf] %vm686, %v3093
        %3104 = vst.msk [vmem:[#allocation2 + $0x88] sm:$0xf] %vm686, %v3095
        %3105 = vst.msk [vmem:[#allocation2 + $0x8c] sm:$0xf] %vm686, %v3097
        %s3106 = sadd.s32 %s294, 7
        %s3107 = sadd.s32 %s384, 36
        %s3108 = scalar_lea.vmem %s292, %s3107
        %v3109 = vld [vmem:[%s3108] sm:$0xff]
        %v3110 = vld [vmem:[%s3108 + $0x8] sm:$0xf]
        %v3111 = vpack.c.bf16 %v3110, %v3109
        %v3112 = vld [vmem:[%s1] sm:$0xf]
        %v3113 = vld [vmem:[%s1 + $0x4] sm:$0xf]
        %v3114 = vld [vmem:[%s1 + $0x8] sm:$0xf]
        %v3115 = vld [vmem:[%s1 + $0xc] sm:$0xf]
        %v3116 = vld [vmem:[%s394] sm:$0xf]
        %v3117 = vld [vmem:[%s394 + $0x4] sm:$0xf]
        %v3118 = vld [vmem:[%s394 + $0x8] sm:$0xf]
        %v3119 = vld [vmem:[%s394 + $0xc] sm:$0xf]
        %v3124 = vunpack.c.l.b16 %v3116
        %v3125 = vunpack.c.l.b16 %v3117
        %v3126 = vunpack.c.l.b16 %v3118
        %v3127 = vunpack.c.l.b16 %v3119
        %v3128 = vpack.c.b16 %v3125, %v3124
        %v3129 = vpack.c.b16 %v3127, %v3126
        %3131 = vrot.lane.b32.xlu0 %v3111, 127
        %v3132 = vpop.permute.xlu0 %3131
        %v3134 = vsel %vm412, %v3128, 0
        %v3137 = vsel %vm412, %v3129, 0
        %v3140 = vsel %vm419, %v3132, 0
        %3142 = vmatprep.subr.bf16.mxu0 0
        %3143 = vmatpush1.bf16.msra.mxu0 0
        %3144 = vmatprep.subr.bf16.mxu0 0
        %3145 = vmatpush1.bf16.msra.mxu0 0
        %3146 = vmatprep.subr.bf16.mxu0 0
        %3147 = vmatpush1.bf16.msra.mxu0 0
        %3148 = vmatprep.subr.bf16.mxu0 0
        %3149 = vmatpush1.bf16.msra.mxu0 0
        %3150 = vmatprep.subr.bf16.mxu0 0
        %3151 = vmatpush1.bf16.msra.mxu0 0
        %3152 = vmatprep.subr.bf16.mxu0 0
        %3153 = vmatpush1.bf16.msra.mxu0 0
        %3154 = vmatprep.subr.bf16.mxu0 0
        %3155 = vmatpush1.bf16.msra.mxu0 0
        %3156 = vmatprep.subr.bf16.mxu0 0
        %3157 = vmatpush1.bf16.msra.mxu0 %v3140
        %3158 = vmatprep.subr.bf16.mxu0 0
        %3159 = vmatpush2.bf16.msra.mxu0 0
        %3160 = vmatprep.subr.bf16.mxu0 0
        %3161 = vmatpush2.bf16.msra.mxu0 0
        %3162 = vmatprep.subr.bf16.mxu0 0
        %3163 = vmatpush2.bf16.msra.mxu0 0
        %3164 = vmatprep.subr.bf16.mxu0 0
        %3165 = vmatpush2.bf16.msra.mxu0 0
        %3166 = vmatprep.subr.bf16.mxu0 0
        %3167 = vmatpush2.bf16.msra.mxu0 0
        %3168 = vmatprep.subr.bf16.mxu0 0
        %3169 = vmatpush2.bf16.msra.mxu0 0
        %3170 = vmatprep.subr.bf16.mxu0 0
        %3171 = vmatpush2.bf16.msra.mxu0 0
        %3172 = vmatprep.subr.bf16.mxu0 0
        %3173 = vmatpush2.bf16.msra.mxu0 0
        %3174 = vmatprep.mubr.bf16.mxu0 0
        %3175 = vmatmul.mubr.bf16.gmra.mxu0 %v3134
        %v3176 = vpop.f32.mrf.mxu0
        %v3177 = vadd.f32 0.0, %v3176
        %v3178 = vpop.f32.mrf.mxu0
        %v3179 = vpop.f32.mrf.mxu0
        %v3180 = vadd.f32 0.0, %v3179
        %v3181 = vpop.f32.mrf.mxu0
        %3182 = vmatprep.mubr.bf16.mxu0 0
        %3183 = vmatmul.mubr.bf16.gmra.mxu0 %v3137
        %v3184 = vpop.f32.mrf.mxu0
        %v3185 = vadd.f32 0.0, %v3184
        %v3186 = vpop.f32.mrf.mxu0
        %v3187 = vpop.f32.mrf.mxu0
        %v3188 = vadd.f32 0.0, %v3187
        %v3189 = vpop.f32.mrf.mxu0
        %3190 = vdwg.mxu0
        %v3195 = vunpack.c.l.b16 %v3112
        %v3196 = vunpack.c.l.b16 %v3113
        %v3197 = vunpack.c.l.b16 %v3114
        %v3198 = vunpack.c.l.b16 %v3115
        %v3199 = vpack.c.b16 %v3196, %v3195
        %v3200 = vpack.c.b16 %v3198, %v3197
        %v3202 = vsel %vm412, %v3199, 0
        %v3205 = vsel %vm412, %v3200, 0
        %v3208 = vsel %vm419, %v3111, 0
        %3210 = vmatprep.subr.bf16.mxu0 0
        %3211 = vmatpush1.bf16.msra.mxu0 0
        %3212 = vmatprep.subr.bf16.mxu0 0
        %3213 = vmatpush1.bf16.msra.mxu0 0
        %3214 = vmatprep.subr.bf16.mxu0 0
        %3215 = vmatpush1.bf16.msra.mxu0 0
        %3216 = vmatprep.subr.bf16.mxu0 0
        %3217 = vmatpush1.bf16.msra.mxu0 0
        %3218 = vmatprep.subr.bf16.mxu0 0
        %3219 = vmatpush1.bf16.msra.mxu0 0
        %3220 = vmatprep.subr.bf16.mxu0 0
        %3221 = vmatpush1.bf16.msra.mxu0 0
        %3222 = vmatprep.subr.bf16.mxu0 0
        %3223 = vmatpush1.bf16.msra.mxu0 0
        %3224 = vmatprep.subr.bf16.mxu0 0
        %3225 = vmatpush1.bf16.msra.mxu0 %v3208
        %3226 = vmatprep.subr.bf16.mxu0 0
        %3227 = vmatpush2.bf16.msra.mxu0 0
        %3228 = vmatprep.subr.bf16.mxu0 0
        %3229 = vmatpush2.bf16.msra.mxu0 0
        %3230 = vmatprep.subr.bf16.mxu0 0
        %3231 = vmatpush2.bf16.msra.mxu0 0
        %3232 = vmatprep.subr.bf16.mxu0 0
        %3233 = vmatpush2.bf16.msra.mxu0 0
        %3234 = vmatprep.subr.bf16.mxu0 0
        %3235 = vmatpush2.bf16.msra.mxu0 0
        %3236 = vmatprep.subr.bf16.mxu0 0
        %3237 = vmatpush2.bf16.msra.mxu0 0
        %3238 = vmatprep.subr.bf16.mxu0 0
        %3239 = vmatpush2.bf16.msra.mxu0 0
        %3240 = vmatprep.subr.bf16.mxu0 0
        %3241 = vmatpush2.bf16.msra.mxu0 0
        %3242 = vmatprep.mubr.bf16.mxu0 0
        %3243 = vmatmul.mubr.bf16.gmra.mxu0 %v3202
        %v3244 = vpop.f32.mrf.mxu0
        %v3245 = vadd.f32 %v3177, %v3244
        %v3246 = vpop.f32.mrf.mxu0
        %v3247 = vpop.f32.mrf.mxu0
        %v3248 = vadd.f32 %v3180, %v3247
        %v3249 = vpop.f32.mrf.mxu0
        %3250 = vmatprep.mubr.bf16.mxu0 0
        %3251 = vmatmul.mubr.bf16.gmra.mxu0 %v3205
        %v3252 = vpop.f32.mrf.mxu0
        %v3253 = vadd.f32 %v3185, %v3252
        %v3254 = vpop.f32.mrf.mxu0
        %v3255 = vpop.f32.mrf.mxu0
        %v3256 = vadd.f32 %v3188, %v3255
        %v3257 = vpop.f32.mrf.mxu0
        %3258 = vdwg.mxu0
        %v3259 = vld [vmem:[%s540] sm:$0xf]
        %v3260 = vld [vmem:[%s540 + $0x4] sm:$0xf]
        %v3261 = vld [vmem:[%s540 + $0x8] sm:$0xf]
        %v3262 = vld [vmem:[%s540 + $0xc] sm:$0xf]
        %v3267 = vunpack.c.l.b16 %v3259
        %v3268 = vunpack.c.l.b16 %v3260
        %v3269 = vunpack.c.l.b16 %v3261
        %v3270 = vunpack.c.l.b16 %v3262
        %v3271 = vpack.c.b16 %v3268, %v3267
        %v3272 = vpack.c.b16 %v3270, %v3269
        %3273 = vrot.lane.b32.xlu0 %v3111, 126
        %v3274 = vpop.permute.xlu0 %3273
        %v3276 = vsel %vm412, %v3271, 0
        %v3279 = vsel %vm412, %v3272, 0
        %v3282 = vsel %vm419, %v3274, 0
        %3284 = vmatprep.subr.bf16.mxu0 0
        %3285 = vmatpush1.bf16.msra.mxu0 0
        %3286 = vmatprep.subr.bf16.mxu0 0
        %3287 = vmatpush1.bf16.msra.mxu0 0
        %3288 = vmatprep.subr.bf16.mxu0 0
        %3289 = vmatpush1.bf16.msra.mxu0 0
        %3290 = vmatprep.subr.bf16.mxu0 0
        %3291 = vmatpush1.bf16.msra.mxu0 0
        %3292 = vmatprep.subr.bf16.mxu0 0
        %3293 = vmatpush1.bf16.msra.mxu0 0
        %3294 = vmatprep.subr.bf16.mxu0 0
        %3295 = vmatpush1.bf16.msra.mxu0 0
        %3296 = vmatprep.subr.bf16.mxu0 0
        %3297 = vmatpush1.bf16.msra.mxu0 0
        %3298 = vmatprep.subr.bf16.mxu0 0
        %3299 = vmatpush1.bf16.msra.mxu0 %v3282
        %3300 = vmatprep.subr.bf16.mxu0 0
        %3301 = vmatpush2.bf16.msra.mxu0 0
        %3302 = vmatprep.subr.bf16.mxu0 0
        %3303 = vmatpush2.bf16.msra.mxu0 0
        %3304 = vmatprep.subr.bf16.mxu0 0
        %3305 = vmatpush2.bf16.msra.mxu0 0
        %3306 = vmatprep.subr.bf16.mxu0 0
        %3307 = vmatpush2.bf16.msra.mxu0 0
        %3308 = vmatprep.subr.bf16.mxu0 0
        %3309 = vmatpush2.bf16.msra.mxu0 0
        %3310 = vmatprep.subr.bf16.mxu0 0
        %3311 = vmatpush2.bf16.msra.mxu0 0
        %3312 = vmatprep.subr.bf16.mxu0 0
        %3313 = vmatpush2.bf16.msra.mxu0 0
        %3314 = vmatprep.subr.bf16.mxu0 0
        %3315 = vmatpush2.bf16.msra.mxu0 0
        %3316 = vmatprep.mubr.bf16.mxu0 0
        %3317 = vmatmul.mubr.bf16.gmra.mxu0 %v3276
        %v3318 = vpop.f32.mrf.mxu0
        %v3319 = vadd.f32 0.0, %v3318
        %v3320 = vpop.f32.mrf.mxu0
        %v3321 = vpop.f32.mrf.mxu0
        %v3322 = vadd.f32 0.0, %v3321
        %v3323 = vpop.f32.mrf.mxu0
        %3324 = vmatprep.mubr.bf16.mxu0 0
        %3325 = vmatmul.mubr.bf16.gmra.mxu0 %v3279
        %v3326 = vpop.f32.mrf.mxu0
        %v3327 = vadd.f32 0.0, %v3326
        %v3328 = vpop.f32.mrf.mxu0
        %v3329 = vpop.f32.mrf.mxu0
        %v3330 = vadd.f32 0.0, %v3329
        %v3331 = vpop.f32.mrf.mxu0
        %3332 = vdwg.mxu0
        %v3333 = vadd.f32 %v3245, %v3319
        %v3334 = vadd.f32 %v3248, %v3322
        %v3335 = vadd.f32 %v3253, %v3327
        %v3336 = vadd.f32 %v3256, %v3330
        %v3337 = vld [vmem:[%s4] sm:$0xff]
        %v3338 = vld [vmem:[%s4 + $0x8] sm:$0xff]
        %v3339 = vld [vmem:[%s4 + $0x10] sm:$0xff]
        %v3340 = vld [vmem:[%s4 + $0x18] sm:$0xff]
        %3342 = vset.pattern.permute.xlu0 0
        %3343 = vperm.xlu0 %3342, %v3337
        %v3344 = vpop.permute.xlu0 %3343
        %3347 = vset.pattern.permute.xlu0 0
        %3348 = vperm.xlu0 %3347, %v3338
        %v3349 = vpop.permute.xlu0 %3348
        %3352 = vset.pattern.permute.xlu0 0
        %3353 = vperm.xlu0 %3352, %v3339
        %v3354 = vpop.permute.xlu0 %3353
        %3357 = vset.pattern.permute.xlu0 0
        %3358 = vperm.xlu0 %3357, %v3340
        %v3359 = vpop.permute.xlu0 %3358
        %v3361 = vadd.f32 %v3333, %v3344
        %v3362 = vadd.f32 %v3334, %v3349
        %v3363 = vadd.f32 %v3335, %v3354
        %v3364 = vadd.f32 %v3336, %v3359
        %p3365 = scmp.ge.s32.totalorder %s3106, 0
        %p3366 = scmp.lt.s32.totalorder %s3106, 16
        %p3367 = pnand %p3365, %p3366
        %p3368 = pneg %p3367
        %v3369 = vmax.f32 %v3361, 0.0
        %v3370 = vmax.f32 %v3362, 0.0
        %v3371 = vmax.f32 %v3363, 0.0
        %v3372 = vmax.f32 %v3364, 0.0
        %s3373 = scalar_select %p3368, 1, 0
        %v3374 = vstv %s3373
        %vm3375 = vcmp.eq.s32.totalorder %v3374, 1
        %v3376 = vsel %vm3375, %v3369, 0.0
        %v3377 = vsel %vm3375, %v3370, 0.0
        %v3378 = vsel %vm3375, %v3371, 0.0
        %v3379 = vsel %vm3375, %v3372, 0.0
        %v3380 = vpack.c.bf16 %v3377, %v3376
        %v3381 = vpack.c.bf16 %v3379, %v3378
        %v3384 = vunpack.c.l.b16 %v3380
        %v3385 = vunpack.c.h.b16 %v3380
        %v3386 = vunpack.c.l.b16 %v3381
        %v3387 = vunpack.c.h.b16 %v3381
        %v3388 = vpack.c.b16 %v3384, %v3384
        %v3389 = vpack.c.b16 %v3385, %v3385
        %v3390 = vpack.c.b16 %v3386, %v3386
        %v3391 = vpack.c.b16 %v3387, %v3387
        %3392 = vrot.lane.b32.xlu0 %v3388, 1
        %v3393 = vpop.permute.xlu0 %3392
        %3394 = vrot.lane.b32.xlu0 %v3389, 1
        %v3395 = vpop.permute.xlu0 %3394
        %3396 = vrot.lane.b32.xlu0 %v3390, 1
        %v3397 = vpop.permute.xlu0 %3396
        %3398 = vrot.lane.b32.xlu0 %v3391, 1
        %v3399 = vpop.permute.xlu0 %3398
        %3404 = vst.msk [vmem:[#allocation2 + $0x90] sm:$0xf] %vm686, %v3393
        %3405 = vst.msk [vmem:[#allocation2 + $0x94] sm:$0xf] %vm686, %v3395
        %3406 = vst.msk [vmem:[#allocation2 + $0x98] sm:$0xf] %vm686, %v3397
        %3407 = vst.msk [vmem:[#allocation2 + $0x9c] sm:$0xf] %vm686, %v3399
        %s3408 = sadd.s32 %s294, 8
        %s3409 = sadd.s32 %s384, 40
        %s3410 = scalar_lea.vmem %s292, %s3409
        %v3411 = vld [vmem:[%s3410] sm:$0xff]
        %v3412 = vld [vmem:[%s3410 + $0x8] sm:$0xf]
        %v3413 = vpack.c.bf16 %v3412, %v3411
        %v3414 = vld [vmem:[%s1] sm:$0xf]
        %v3415 = vld [vmem:[%s1 + $0x4] sm:$0xf]
        %v3416 = vld [vmem:[%s1 + $0x8] sm:$0xf]
        %v3417 = vld [vmem:[%s1 + $0xc] sm:$0xf]
        %v3418 = vld [vmem:[%s394] sm:$0xf]
        %v3419 = vld [vmem:[%s394 + $0x4] sm:$0xf]
        %v3420 = vld [vmem:[%s394 + $0x8] sm:$0xf]
        %v3421 = vld [vmem:[%s394 + $0xc] sm:$0xf]
        %v3426 = vunpack.c.l.b16 %v3418
        %v3427 = vunpack.c.l.b16 %v3419
        %v3428 = vunpack.c.l.b16 %v3420
        %v3429 = vunpack.c.l.b16 %v3421
        %v3430 = vpack.c.b16 %v3427, %v3426
        %v3431 = vpack.c.b16 %v3429, %v3428
        %3433 = vrot.lane.b32.xlu0 %v3413, 127
        %v3434 = vpop.permute.xlu0 %3433
        %v3436 = vsel %vm412, %v3430, 0
        %v3439 = vsel %vm412, %v3431, 0
        %v3442 = vsel %vm419, %v3434, 0
        %3444 = vmatprep.subr.bf16.mxu0 0
        %3445 = vmatpush1.bf16.msra.mxu0 0
        %3446 = vmatprep.subr.bf16.mxu0 0
        %3447 = vmatpush1.bf16.msra.mxu0 0
        %3448 = vmatprep.subr.bf16.mxu0 0
        %3449 = vmatpush1.bf16.msra.mxu0 0
        %3450 = vmatprep.subr.bf16.mxu0 0
        %3451 = vmatpush1.bf16.msra.mxu0 0
        %3452 = vmatprep.subr.bf16.mxu0 0
        %3453 = vmatpush1.bf16.msra.mxu0 0
        %3454 = vmatprep.subr.bf16.mxu0 0
        %3455 = vmatpush1.bf16.msra.mxu0 0
        %3456 = vmatprep.subr.bf16.mxu0 0
        %3457 = vmatpush1.bf16.msra.mxu0 0
        %3458 = vmatprep.subr.bf16.mxu0 0
        %3459 = vmatpush1.bf16.msra.mxu0 %v3442
        %3460 = vmatprep.subr.bf16.mxu0 0
        %3461 = vmatpush2.bf16.msra.mxu0 0
        %3462 = vmatprep.subr.bf16.mxu0 0
        %3463 = vmatpush2.bf16.msra.mxu0 0
        %3464 = vmatprep.subr.bf16.mxu0 0
        %3465 = vmatpush2.bf16.msra.mxu0 0
        %3466 = vmatprep.subr.bf16.mxu0 0
        %3467 = vmatpush2.bf16.msra.mxu0 0
        %3468 = vmatprep.subr.bf16.mxu0 0
        %3469 = vmatpush2.bf16.msra.mxu0 0
        %3470 = vmatprep.subr.bf16.mxu0 0
        %3471 = vmatpush2.bf16.msra.mxu0 0
        %3472 = vmatprep.subr.bf16.mxu0 0
        %3473 = vmatpush2.bf16.msra.mxu0 0
        %3474 = vmatprep.subr.bf16.mxu0 0
        %3475 = vmatpush2.bf16.msra.mxu0 0
        %3476 = vmatprep.mubr.bf16.mxu0 0
        %3477 = vmatmul.mubr.bf16.gmra.mxu0 %v3436
        %v3478 = vpop.f32.mrf.mxu0
        %v3479 = vadd.f32 0.0, %v3478
        %v3480 = vpop.f32.mrf.mxu0
        %v3481 = vpop.f32.mrf.mxu0
        %v3482 = vadd.f32 0.0, %v3481
        %v3483 = vpop.f32.mrf.mxu0
        %3484 = vmatprep.mubr.bf16.mxu0 0
        %3485 = vmatmul.mubr.bf16.gmra.mxu0 %v3439
        %v3486 = vpop.f32.mrf.mxu0
        %v3487 = vadd.f32 0.0, %v3486
        %v3488 = vpop.f32.mrf.mxu0
        %v3489 = vpop.f32.mrf.mxu0
        %v3490 = vadd.f32 0.0, %v3489
        %v3491 = vpop.f32.mrf.mxu0
        %3492 = vdwg.mxu0
        %v3497 = vunpack.c.l.b16 %v3414
        %v3498 = vunpack.c.l.b16 %v3415
        %v3499 = vunpack.c.l.b16 %v3416
        %v3500 = vunpack.c.l.b16 %v3417
        %v3501 = vpack.c.b16 %v3498, %v3497
        %v3502 = vpack.c.b16 %v3500, %v3499
        %v3504 = vsel %vm412, %v3501, 0
        %v3507 = vsel %vm412, %v3502, 0
        %v3510 = vsel %vm419, %v3413, 0
        %3512 = vmatprep.subr.bf16.mxu0 0
        %3513 = vmatpush1.bf16.msra.mxu0 0
        %3514 = vmatprep.subr.bf16.mxu0 0
        %3515 = vmatpush1.bf16.msra.mxu0 0
        %3516 = vmatprep.subr.bf16.mxu0 0
        %3517 = vmatpush1.bf16.msra.mxu0 0
        %3518 = vmatprep.subr.bf16.mxu0 0
        %3519 = vmatpush1.bf16.msra.mxu0 0
        %3520 = vmatprep.subr.bf16.mxu0 0
        %3521 = vmatpush1.bf16.msra.mxu0 0
        %3522 = vmatprep.subr.bf16.mxu0 0
        %3523 = vmatpush1.bf16.msra.mxu0 0
        %3524 = vmatprep.subr.bf16.mxu0 0
        %3525 = vmatpush1.bf16.msra.mxu0 0
        %3526 = vmatprep.subr.bf16.mxu0 0
        %3527 = vmatpush1.bf16.msra.mxu0 %v3510
        %3528 = vmatprep.subr.bf16.mxu0 0
        %3529 = vmatpush2.bf16.msra.mxu0 0
        %3530 = vmatprep.subr.bf16.mxu0 0
        %3531 = vmatpush2.bf16.msra.mxu0 0
        %3532 = vmatprep.subr.bf16.mxu0 0
        %3533 = vmatpush2.bf16.msra.mxu0 0
        %3534 = vmatprep.subr.bf16.mxu0 0
        %3535 = vmatpush2.bf16.msra.mxu0 0
        %3536 = vmatprep.subr.bf16.mxu0 0
        %3537 = vmatpush2.bf16.msra.mxu0 0
        %3538 = vmatprep.subr.bf16.mxu0 0
        %3539 = vmatpush2.bf16.msra.mxu0 0
        %3540 = vmatprep.subr.bf16.mxu0 0
        %3541 = vmatpush2.bf16.msra.mxu0 0
        %3542 = vmatprep.subr.bf16.mxu0 0
        %3543 = vmatpush2.bf16.msra.mxu0 0
        %3544 = vmatprep.mubr.bf16.mxu0 0
        %3545 = vmatmul.mubr.bf16.gmra.mxu0 %v3504
        %v3546 = vpop.f32.mrf.mxu0
        %v3547 = vadd.f32 %v3479, %v3546
        %v3548 = vpop.f32.mrf.mxu0
        %v3549 = vpop.f32.mrf.mxu0
        %v3550 = vadd.f32 %v3482, %v3549
        %v3551 = vpop.f32.mrf.mxu0
        %3552 = vmatprep.mubr.bf16.mxu0 0
        %3553 = vmatmul.mubr.bf16.gmra.mxu0 %v3507
        %v3554 = vpop.f32.mrf.mxu0
        %v3555 = vadd.f32 %v3487, %v3554
        %v3556 = vpop.f32.mrf.mxu0
        %v3557 = vpop.f32.mrf.mxu0
        %v3558 = vadd.f32 %v3490, %v3557
        %v3559 = vpop.f32.mrf.mxu0
        %3560 = vdwg.mxu0
        %v3561 = vld [vmem:[%s540] sm:$0xf]
        %v3562 = vld [vmem:[%s540 + $0x4] sm:$0xf]
        %v3563 = vld [vmem:[%s540 + $0x8] sm:$0xf]
        %v3564 = vld [vmem:[%s540 + $0xc] sm:$0xf]
        %v3569 = vunpack.c.l.b16 %v3561
        %v3570 = vunpack.c.l.b16 %v3562
        %v3571 = vunpack.c.l.b16 %v3563
        %v3572 = vunpack.c.l.b16 %v3564
        %v3573 = vpack.c.b16 %v3570, %v3569
        %v3574 = vpack.c.b16 %v3572, %v3571
        %3575 = vrot.lane.b32.xlu0 %v3413, 126
        %v3576 = vpop.permute.xlu0 %3575
        %v3578 = vsel %vm412, %v3573, 0
        %v3581 = vsel %vm412, %v3574, 0
        %v3584 = vsel %vm419, %v3576, 0
        %3586 = vmatprep.subr.bf16.mxu0 0
        %3587 = vmatpush1.bf16.msra.mxu0 0
        %3588 = vmatprep.subr.bf16.mxu0 0
        %3589 = vmatpush1.bf16.msra.mxu0 0
        %3590 = vmatprep.subr.bf16.mxu0 0
        %3591 = vmatpush1.bf16.msra.mxu0 0
        %3592 = vmatprep.subr.bf16.mxu0 0
        %3593 = vmatpush1.bf16.msra.mxu0 0
        %3594 = vmatprep.subr.bf16.mxu0 0
        %3595 = vmatpush1.bf16.msra.mxu0 0
        %3596 = vmatprep.subr.bf16.mxu0 0
        %3597 = vmatpush1.bf16.msra.mxu0 0
        %3598 = vmatprep.subr.bf16.mxu0 0
        %3599 = vmatpush1.bf16.msra.mxu0 0
        %3600 = vmatprep.subr.bf16.mxu0 0
        %3601 = vmatpush1.bf16.msra.mxu0 %v3584
        %3602 = vmatprep.subr.bf16.mxu0 0
        %3603 = vmatpush2.bf16.msra.mxu0 0
        %3604 = vmatprep.subr.bf16.mxu0 0
        %3605 = vmatpush2.bf16.msra.mxu0 0
        %3606 = vmatprep.subr.bf16.mxu0 0
        %3607 = vmatpush2.bf16.msra.mxu0 0
        %3608 = vmatprep.subr.bf16.mxu0 0
        %3609 = vmatpush2.bf16.msra.mxu0 0
        %3610 = vmatprep.subr.bf16.mxu0 0
        %3611 = vmatpush2.bf16.msra.mxu0 0
        %3612 = vmatprep.subr.bf16.mxu0 0
        %3613 = vmatpush2.bf16.msra.mxu0 0
        %3614 = vmatprep.subr.bf16.mxu0 0
        %3615 = vmatpush2.bf16.msra.mxu0 0
        %3616 = vmatprep.subr.bf16.mxu0 0
        %3617 = vmatpush2.bf16.msra.mxu0 0
        %3618 = vmatprep.mubr.bf16.mxu0 0
        %3619 = vmatmul.mubr.bf16.gmra.mxu0 %v3578
        %v3620 = vpop.f32.mrf.mxu0
        %v3621 = vadd.f32 0.0, %v3620
        %v3622 = vpop.f32.mrf.mxu0
        %v3623 = vpop.f32.mrf.mxu0
        %v3624 = vadd.f32 0.0, %v3623
        %v3625 = vpop.f32.mrf.mxu0
        %3626 = vmatprep.mubr.bf16.mxu0 0
        %3627 = vmatmul.mubr.bf16.gmra.mxu0 %v3581
        %v3628 = vpop.f32.mrf.mxu0
        %v3629 = vadd.f32 0.0, %v3628
        %v3630 = vpop.f32.mrf.mxu0
        %v3631 = vpop.f32.mrf.mxu0
        %v3632 = vadd.f32 0.0, %v3631
        %v3633 = vpop.f32.mrf.mxu0
        %3634 = vdwg.mxu0
        %v3635 = vadd.f32 %v3547, %v3621
        %v3636 = vadd.f32 %v3550, %v3624
        %v3637 = vadd.f32 %v3555, %v3629
        %v3638 = vadd.f32 %v3558, %v3632
        %v3639 = vld [vmem:[%s4] sm:$0xff]
        %v3640 = vld [vmem:[%s4 + $0x8] sm:$0xff]
        %v3641 = vld [vmem:[%s4 + $0x10] sm:$0xff]
        %v3642 = vld [vmem:[%s4 + $0x18] sm:$0xff]
        %3644 = vset.pattern.permute.xlu0 0
        %3645 = vperm.xlu0 %3644, %v3639
        %v3646 = vpop.permute.xlu0 %3645
        %3649 = vset.pattern.permute.xlu0 0
        %3650 = vperm.xlu0 %3649, %v3640
        %v3651 = vpop.permute.xlu0 %3650
        %3654 = vset.pattern.permute.xlu0 0
        %3655 = vperm.xlu0 %3654, %v3641
        %v3656 = vpop.permute.xlu0 %3655
        %3659 = vset.pattern.permute.xlu0 0
        %3660 = vperm.xlu0 %3659, %v3642
        %v3661 = vpop.permute.xlu0 %3660
        %v3663 = vadd.f32 %v3635, %v3646
        %v3664 = vadd.f32 %v3636, %v3651
        %v3665 = vadd.f32 %v3637, %v3656
        %v3666 = vadd.f32 %v3638, %v3661
        %p3667 = scmp.ge.s32.totalorder %s3408, 0
        %p3668 = scmp.lt.s32.totalorder %s3408, 16
        %p3669 = pnand %p3667, %p3668
        %p3670 = pneg %p3669
        %v3671 = vmax.f32 %v3663, 0.0
        %v3672 = vmax.f32 %v3664, 0.0
        %v3673 = vmax.f32 %v3665, 0.0
        %v3674 = vmax.f32 %v3666, 0.0
        %s3675 = scalar_select %p3670, 1, 0
        %v3676 = vstv %s3675
        %vm3677 = vcmp.eq.s32.totalorder %v3676, 1
        %v3678 = vsel %vm3677, %v3671, 0.0
        %v3679 = vsel %vm3677, %v3672, 0.0
        %v3680 = vsel %vm3677, %v3673, 0.0
        %v3681 = vsel %vm3677, %v3674, 0.0
        %v3682 = vpack.c.bf16 %v3679, %v3678
        %v3683 = vpack.c.bf16 %v3681, %v3680
        %v3686 = vunpack.c.l.b16 %v3682
        %v3687 = vunpack.c.h.b16 %v3682
        %v3688 = vunpack.c.l.b16 %v3683
        %v3689 = vunpack.c.h.b16 %v3683
        %v3690 = vpack.c.b16 %v3686, %v3686
        %v3691 = vpack.c.b16 %v3687, %v3687
        %v3692 = vpack.c.b16 %v3688, %v3688
        %v3693 = vpack.c.b16 %v3689, %v3689
        %3694 = vrot.lane.b32.xlu0 %v3690, 1
        %v3695 = vpop.permute.xlu0 %3694
        %3696 = vrot.lane.b32.xlu0 %v3691, 1
        %v3697 = vpop.permute.xlu0 %3696
        %3698 = vrot.lane.b32.xlu0 %v3692, 1
        %v3699 = vpop.permute.xlu0 %3698
        %3700 = vrot.lane.b32.xlu0 %v3693, 1
        %v3701 = vpop.permute.xlu0 %3700
        %3706 = vst.msk [vmem:[#allocation2 + $0xa0] sm:$0xf] %vm686, %v3695
        %3707 = vst.msk [vmem:[#allocation2 + $0xa4] sm:$0xf] %vm686, %v3697
        %3708 = vst.msk [vmem:[#allocation2 + $0xa8] sm:$0xf] %vm686, %v3699
        %3709 = vst.msk [vmem:[#allocation2 + $0xac] sm:$0xf] %vm686, %v3701
        %s3710 = sadd.s32 %s294, 9
        %s3711 = sadd.s32 %s384, 44
        %s3712 = scalar_lea.vmem %s292, %s3711
        %v3713 = vld [vmem:[%s3712] sm:$0xff]
        %v3714 = vld [vmem:[%s3712 + $0x8] sm:$0xf]
        %v3715 = vpack.c.bf16 %v3714, %v3713
        %v3716 = vld [vmem:[%s1] sm:$0xf]
        %v3717 = vld [vmem:[%s1 + $0x4] sm:$0xf]
        %v3718 = vld [vmem:[%s1 + $0x8] sm:$0xf]
        %v3719 = vld [vmem:[%s1 + $0xc] sm:$0xf]
        %v3720 = vld [vmem:[%s394] sm:$0xf]
        %v3721 = vld [vmem:[%s394 + $0x4] sm:$0xf]
        %v3722 = vld [vmem:[%s394 + $0x8] sm:$0xf]
        %v3723 = vld [vmem:[%s394 + $0xc] sm:$0xf]
        %v3728 = vunpack.c.l.b16 %v3720
        %v3729 = vunpack.c.l.b16 %v3721
        %v3730 = vunpack.c.l.b16 %v3722
        %v3731 = vunpack.c.l.b16 %v3723
        %v3732 = vpack.c.b16 %v3729, %v3728
        %v3733 = vpack.c.b16 %v3731, %v3730
        %3735 = vrot.lane.b32.xlu0 %v3715, 127
        %v3736 = vpop.permute.xlu0 %3735
        %v3738 = vsel %vm412, %v3732, 0
        %v3741 = vsel %vm412, %v3733, 0
        %v3744 = vsel %vm419, %v3736, 0
        %3746 = vmatprep.subr.bf16.mxu0 0
        %3747 = vmatpush1.bf16.msra.mxu0 0
        %3748 = vmatprep.subr.bf16.mxu0 0
        %3749 = vmatpush1.bf16.msra.mxu0 0
        %3750 = vmatprep.subr.bf16.mxu0 0
        %3751 = vmatpush1.bf16.msra.mxu0 0
        %3752 = vmatprep.subr.bf16.mxu0 0
        %3753 = vmatpush1.bf16.msra.mxu0 0
        %3754 = vmatprep.subr.bf16.mxu0 0
        %3755 = vmatpush1.bf16.msra.mxu0 0
        %3756 = vmatprep.subr.bf16.mxu0 0
        %3757 = vmatpush1.bf16.msra.mxu0 0
        %3758 = vmatprep.subr.bf16.mxu0 0
        %3759 = vmatpush1.bf16.msra.mxu0 0
        %3760 = vmatprep.subr.bf16.mxu0 0
        %3761 = vmatpush1.bf16.msra.mxu0 %v3744
        %3762 = vmatprep.subr.bf16.mxu0 0
        %3763 = vmatpush2.bf16.msra.mxu0 0
        %3764 = vmatprep.subr.bf16.mxu0 0
        %3765 = vmatpush2.bf16.msra.mxu0 0
        %3766 = vmatprep.subr.bf16.mxu0 0
        %3767 = vmatpush2.bf16.msra.mxu0 0
        %3768 = vmatprep.subr.bf16.mxu0 0
        %3769 = vmatpush2.bf16.msra.mxu0 0
        %3770 = vmatprep.subr.bf16.mxu0 0
        %3771 = vmatpush2.bf16.msra.mxu0 0
        %3772 = vmatprep.subr.bf16.mxu0 0
        %3773 = vmatpush2.bf16.msra.mxu0 0
        %3774 = vmatprep.subr.bf16.mxu0 0
        %3775 = vmatpush2.bf16.msra.mxu0 0
        %3776 = vmatprep.subr.bf16.mxu0 0
        %3777 = vmatpush2.bf16.msra.mxu0 0
        %3778 = vmatprep.mubr.bf16.mxu0 0
        %3779 = vmatmul.mubr.bf16.gmra.mxu0 %v3738
        %v3780 = vpop.f32.mrf.mxu0
        %v3781 = vadd.f32 0.0, %v3780
        %v3782 = vpop.f32.mrf.mxu0
        %v3783 = vpop.f32.mrf.mxu0
        %v3784 = vadd.f32 0.0, %v3783
        %v3785 = vpop.f32.mrf.mxu0
        %3786 = vmatprep.mubr.bf16.mxu0 0
        %3787 = vmatmul.mubr.bf16.gmra.mxu0 %v3741
        %v3788 = vpop.f32.mrf.mxu0
        %v3789 = vadd.f32 0.0, %v3788
        %v3790 = vpop.f32.mrf.mxu0
        %v3791 = vpop.f32.mrf.mxu0
        %v3792 = vadd.f32 0.0, %v3791
        %v3793 = vpop.f32.mrf.mxu0
        %3794 = vdwg.mxu0
        %v3799 = vunpack.c.l.b16 %v3716
        %v3800 = vunpack.c.l.b16 %v3717
        %v3801 = vunpack.c.l.b16 %v3718
        %v3802 = vunpack.c.l.b16 %v3719
        %v3803 = vpack.c.b16 %v3800, %v3799
        %v3804 = vpack.c.b16 %v3802, %v3801
        %v3806 = vsel %vm412, %v3803, 0
        %v3809 = vsel %vm412, %v3804, 0
        %v3812 = vsel %vm419, %v3715, 0
        %3814 = vmatprep.subr.bf16.mxu0 0
        %3815 = vmatpush1.bf16.msra.mxu0 0
        %3816 = vmatprep.subr.bf16.mxu0 0
        %3817 = vmatpush1.bf16.msra.mxu0 0
        %3818 = vmatprep.subr.bf16.mxu0 0
        %3819 = vmatpush1.bf16.msra.mxu0 0
        %3820 = vmatprep.subr.bf16.mxu0 0
        %3821 = vmatpush1.bf16.msra.mxu0 0
        %3822 = vmatprep.subr.bf16.mxu0 0
        %3823 = vmatpush1.bf16.msra.mxu0 0
        %3824 = vmatprep.subr.bf16.mxu0 0
        %3825 = vmatpush1.bf16.msra.mxu0 0
        %3826 = vmatprep.subr.bf16.mxu0 0
        %3827 = vmatpush1.bf16.msra.mxu0 0
        %3828 = vmatprep.subr.bf16.mxu0 0
        %3829 = vmatpush1.bf16.msra.mxu0 %v3812
        %3830 = vmatprep.subr.bf16.mxu0 0
        %3831 = vmatpush2.bf16.msra.mxu0 0
        %3832 = vmatprep.subr.bf16.mxu0 0
        %3833 = vmatpush2.bf16.msra.mxu0 0
        %3834 = vmatprep.subr.bf16.mxu0 0
        %3835 = vmatpush2.bf16.msra.mxu0 0
        %3836 = vmatprep.subr.bf16.mxu0 0
        %3837 = vmatpush2.bf16.msra.mxu0 0
        %3838 = vmatprep.subr.bf16.mxu0 0
        %3839 = vmatpush2.bf16.msra.mxu0 0
        %3840 = vmatprep.subr.bf16.mxu0 0
        %3841 = vmatpush2.bf16.msra.mxu0 0
        %3842 = vmatprep.subr.bf16.mxu0 0
        %3843 = vmatpush2.bf16.msra.mxu0 0
        %3844 = vmatprep.subr.bf16.mxu0 0
        %3845 = vmatpush2.bf16.msra.mxu0 0
        %3846 = vmatprep.mubr.bf16.mxu0 0
        %3847 = vmatmul.mubr.bf16.gmra.mxu0 %v3806
        %v3848 = vpop.f32.mrf.mxu0
        %v3849 = vadd.f32 %v3781, %v3848
        %v3850 = vpop.f32.mrf.mxu0
        %v3851 = vpop.f32.mrf.mxu0
        %v3852 = vadd.f32 %v3784, %v3851
        %v3853 = vpop.f32.mrf.mxu0
        %3854 = vmatprep.mubr.bf16.mxu0 0
        %3855 = vmatmul.mubr.bf16.gmra.mxu0 %v3809
        %v3856 = vpop.f32.mrf.mxu0
        %v3857 = vadd.f32 %v3789, %v3856
        %v3858 = vpop.f32.mrf.mxu0
        %v3859 = vpop.f32.mrf.mxu0
        %v3860 = vadd.f32 %v3792, %v3859
        %v3861 = vpop.f32.mrf.mxu0
        %3862 = vdwg.mxu0
        %v3863 = vld [vmem:[%s540] sm:$0xf]
        %v3864 = vld [vmem:[%s540 + $0x4] sm:$0xf]
        %v3865 = vld [vmem:[%s540 + $0x8] sm:$0xf]
        %v3866 = vld [vmem:[%s540 + $0xc] sm:$0xf]
        %v3871 = vunpack.c.l.b16 %v3863
        %v3872 = vunpack.c.l.b16 %v3864
        %v3873 = vunpack.c.l.b16 %v3865
        %v3874 = vunpack.c.l.b16 %v3866
        %v3875 = vpack.c.b16 %v3872, %v3871
        %v3876 = vpack.c.b16 %v3874, %v3873
        %3877 = vrot.lane.b32.xlu0 %v3715, 126
        %v3878 = vpop.permute.xlu0 %3877
        %v3880 = vsel %vm412, %v3875, 0
        %v3883 = vsel %vm412, %v3876, 0
        %v3886 = vsel %vm419, %v3878, 0
        %3888 = vmatprep.subr.bf16.mxu0 0
        %3889 = vmatpush1.bf16.msra.mxu0 0
        %3890 = vmatprep.subr.bf16.mxu0 0
        %3891 = vmatpush1.bf16.msra.mxu0 0
        %3892 = vmatprep.subr.bf16.mxu0 0
        %3893 = vmatpush1.bf16.msra.mxu0 0
        %3894 = vmatprep.subr.bf16.mxu0 0
        %3895 = vmatpush1.bf16.msra.mxu0 0
        %3896 = vmatprep.subr.bf16.mxu0 0
        %3897 = vmatpush1.bf16.msra.mxu0 0
        %3898 = vmatprep.subr.bf16.mxu0 0
        %3899 = vmatpush1.bf16.msra.mxu0 0
        %3900 = vmatprep.subr.bf16.mxu0 0
        %3901 = vmatpush1.bf16.msra.mxu0 0
        %3902 = vmatprep.subr.bf16.mxu0 0
        %3903 = vmatpush1.bf16.msra.mxu0 %v3886
        %3904 = vmatprep.subr.bf16.mxu0 0
        %3905 = vmatpush2.bf16.msra.mxu0 0
        %3906 = vmatprep.subr.bf16.mxu0 0
        %3907 = vmatpush2.bf16.msra.mxu0 0
        %3908 = vmatprep.subr.bf16.mxu0 0
        %3909 = vmatpush2.bf16.msra.mxu0 0
        %3910 = vmatprep.subr.bf16.mxu0 0
        %3911 = vmatpush2.bf16.msra.mxu0 0
        %3912 = vmatprep.subr.bf16.mxu0 0
        %3913 = vmatpush2.bf16.msra.mxu0 0
        %3914 = vmatprep.subr.bf16.mxu0 0
        %3915 = vmatpush2.bf16.msra.mxu0 0
        %3916 = vmatprep.subr.bf16.mxu0 0
        %3917 = vmatpush2.bf16.msra.mxu0 0
        %3918 = vmatprep.subr.bf16.mxu0 0
        %3919 = vmatpush2.bf16.msra.mxu0 0
        %3920 = vmatprep.mubr.bf16.mxu0 0
        %3921 = vmatmul.mubr.bf16.gmra.mxu0 %v3880
        %v3922 = vpop.f32.mrf.mxu0
        %v3923 = vadd.f32 0.0, %v3922
        %v3924 = vpop.f32.mrf.mxu0
        %v3925 = vpop.f32.mrf.mxu0
        %v3926 = vadd.f32 0.0, %v3925
        %v3927 = vpop.f32.mrf.mxu0
        %3928 = vmatprep.mubr.bf16.mxu0 0
        %3929 = vmatmul.mubr.bf16.gmra.mxu0 %v3883
        %v3930 = vpop.f32.mrf.mxu0
        %v3931 = vadd.f32 0.0, %v3930
        %v3932 = vpop.f32.mrf.mxu0
        %v3933 = vpop.f32.mrf.mxu0
        %v3934 = vadd.f32 0.0, %v3933
        %v3935 = vpop.f32.mrf.mxu0
        %3936 = vdwg.mxu0
        %v3937 = vadd.f32 %v3849, %v3923
        %v3938 = vadd.f32 %v3852, %v3926
        %v3939 = vadd.f32 %v3857, %v3931
        %v3940 = vadd.f32 %v3860, %v3934
        %v3941 = vld [vmem:[%s4] sm:$0xff]
        %v3942 = vld [vmem:[%s4 + $0x8] sm:$0xff]
        %v3943 = vld [vmem:[%s4 + $0x10] sm:$0xff]
        %v3944 = vld [vmem:[%s4 + $0x18] sm:$0xff]
        %3946 = vset.pattern.permute.xlu0 0
        %3947 = vperm.xlu0 %3946, %v3941
        %v3948 = vpop.permute.xlu0 %3947
        %3951 = vset.pattern.permute.xlu0 0
        %3952 = vperm.xlu0 %3951, %v3942
        %v3953 = vpop.permute.xlu0 %3952
        %3956 = vset.pattern.permute.xlu0 0
        %3957 = vperm.xlu0 %3956, %v3943
        %v3958 = vpop.permute.xlu0 %3957
        %3961 = vset.pattern.permute.xlu0 0
        %3962 = vperm.xlu0 %3961, %v3944
        %v3963 = vpop.permute.xlu0 %3962
        %v3965 = vadd.f32 %v3937, %v3948
        %v3966 = vadd.f32 %v3938, %v3953
        %v3967 = vadd.f32 %v3939, %v3958
        %v3968 = vadd.f32 %v3940, %v3963
        %p3969 = scmp.ge.s32.totalorder %s3710, 0
        %p3970 = scmp.lt.s32.totalorder %s3710, 16
        %p3971 = pnand %p3969, %p3970
        %p3972 = pneg %p3971
        %v3973 = vmax.f32 %v3965, 0.0
        %v3974 = vmax.f32 %v3966, 0.0
        %v3975 = vmax.f32 %v3967, 0.0
        %v3976 = vmax.f32 %v3968, 0.0
        %s3977 = scalar_select %p3972, 1, 0
        %v3978 = vstv %s3977
        %vm3979 = vcmp.eq.s32.totalorder %v3978, 1
        %v3980 = vsel %vm3979, %v3973, 0.0
        %v3981 = vsel %vm3979, %v3974, 0.0
        %v3982 = vsel %vm3979, %v3975, 0.0
        %v3983 = vsel %vm3979, %v3976, 0.0
        %v3984 = vpack.c.bf16 %v3981, %v3980
        %v3985 = vpack.c.bf16 %v3983, %v3982
        %v3988 = vunpack.c.l.b16 %v3984
        %v3989 = vunpack.c.h.b16 %v3984
        %v3990 = vunpack.c.l.b16 %v3985
        %v3991 = vunpack.c.h.b16 %v3985
        %v3992 = vpack.c.b16 %v3988, %v3988
        %v3993 = vpack.c.b16 %v3989, %v3989
        %v3994 = vpack.c.b16 %v3990, %v3990
        %v3995 = vpack.c.b16 %v3991, %v3991
        %3996 = vrot.lane.b32.xlu0 %v3992, 1
        %v3997 = vpop.permute.xlu0 %3996
        %3998 = vrot.lane.b32.xlu0 %v3993, 1
        %v3999 = vpop.permute.xlu0 %3998
        %4000 = vrot.lane.b32.xlu0 %v3994, 1
        %v4001 = vpop.permute.xlu0 %4000
        %4002 = vrot.lane.b32.xlu0 %v3995, 1
        %v4003 = vpop.permute.xlu0 %4002
        %4008 = vst.msk [vmem:[#allocation2 + $0xb0] sm:$0xf] %vm686, %v3997
        %4009 = vst.msk [vmem:[#allocation2 + $0xb4] sm:$0xf] %vm686, %v3999
        %4010 = vst.msk [vmem:[#allocation2 + $0xb8] sm:$0xf] %vm686, %v4001
        %4011 = vst.msk [vmem:[#allocation2 + $0xbc] sm:$0xf] %vm686, %v4003
        %s4012 = ssub.s32 %s294, 1
        %v4013 = vld [vmem:[#allocation2] sm:$0xf]
        %v4014 = vld [vmem:[#allocation2 + $0x4] sm:$0xf]
        %v4015 = vld [vmem:[#allocation2 + $0x8] sm:$0xf]
        %v4016 = vld [vmem:[#allocation2 + $0xc] sm:$0xf]
        %v4017 = vld [vmem:[#allocation2 + $0x10] sm:$0xf]
        %v4018 = vld [vmem:[#allocation2 + $0x14] sm:$0xf]
        %v4019 = vld [vmem:[#allocation2 + $0x18] sm:$0xf]
        %v4020 = vld [vmem:[#allocation2 + $0x1c] sm:$0xf]
        %v4021 = vld [vmem:[#allocation2 + $0x20] sm:$0xf]
        %v4022 = vld [vmem:[#allocation2 + $0x24] sm:$0xf]
        %v4023 = vld [vmem:[#allocation2 + $0x28] sm:$0xf]
        %v4024 = vld [vmem:[#allocation2 + $0x2c] sm:$0xf]
        %v4025 = vld [vmem:[%s2] sm:$0xf]
        %v4026 = vld [vmem:[%s2 + $0x4] sm:$0xf]
        %v4027 = vld [vmem:[%s2 + $0x8] sm:$0xf]
        %v4028 = vld [vmem:[%s2 + $0xc] sm:$0xf]
        %s4029 = scalar_lea.vmem %s2, 16
        %v4030 = vld [vmem:[%s4029] sm:$0xf]
        %v4031 = vld [vmem:[%s4029 + $0x4] sm:$0xf]
        %v4032 = vld [vmem:[%s4029 + $0x8] sm:$0xf]
        %v4033 = vld [vmem:[%s4029 + $0xc] sm:$0xf]
        %v4038 = vunpack.c.l.b16 %v4030
        %v4039 = vunpack.c.l.b16 %v4031
        %v4040 = vunpack.c.l.b16 %v4032
        %v4041 = vunpack.c.l.b16 %v4033
        %v4042 = vpack.c.b16 %v4039, %v4038
        %v4043 = vpack.c.b16 %v4041, %v4040
        %v4056 = vunpack.c.l.b16 %v4013
        %v4057 = vunpack.c.l.b16 %v4014
        %v4058 = vunpack.c.l.b16 %v4015
        %v4059 = vunpack.c.l.b16 %v4016
        %v4060 = vunpack.c.l.b16 %v4017
        %v4061 = vunpack.c.l.b16 %v4018
        %v4062 = vunpack.c.l.b16 %v4019
        %v4063 = vunpack.c.l.b16 %v4020
        %v4064 = vunpack.c.l.b16 %v4021
        %v4065 = vunpack.c.l.b16 %v4022
        %v4066 = vunpack.c.l.b16 %v4023
        %v4067 = vunpack.c.l.b16 %v4024
        %v4068 = vpack.c.b16 %v4057, %v4056
        %v4069 = vpack.c.b16 %v4059, %v4058
        %v4070 = vpack.c.b16 %v4061, %v4060
        %v4071 = vpack.c.b16 %v4063, %v4062
        %v4072 = vpack.c.b16 %v4065, %v4064
        %v4073 = vpack.c.b16 %v4067, %v4066
        %4074 = vrot.lane.b32.xlu0 %v4068, 127
        %v4075 = vpop.permute.xlu0 %4074
        %4076 = vrot.lane.b32.xlu0 %v4069, 127
        %v4077 = vpop.permute.xlu0 %4076
        %4078 = vrot.lane.b32.xlu0 %v4070, 127
        %v4079 = vpop.permute.xlu0 %4078
        %4080 = vrot.lane.b32.xlu0 %v4071, 127
        %v4081 = vpop.permute.xlu0 %4080
        %4082 = vrot.lane.b32.xlu0 %v4072, 127
        %v4083 = vpop.permute.xlu0 %4082
        %4084 = vrot.lane.b32.xlu0 %v4073, 127
        %v4085 = vpop.permute.xlu0 %4084
        %vm4092 = vcmask 785408
        %v4094 = vsel %vm4092, %v4042, 0
        %v4097 = vsel %vm4092, %v4043, 0
        %4099 = vmatprep.subr.bf16.mxu0 0
        %4100 = vmatpush1.bf16.msra.mxu0 0
        %4101 = vmatprep.subr.bf16.mxu0 0
        %4102 = vmatpush1.bf16.msra.mxu0 0
        %4103 = vmatprep.subr.bf16.mxu0 0
        %4104 = vmatpush1.bf16.msra.mxu0 %v4085
        %4105 = vmatprep.subr.bf16.mxu0 0
        %4106 = vmatpush1.bf16.msra.mxu0 %v4083
        %4107 = vmatprep.subr.bf16.mxu0 0
        %4108 = vmatpush1.bf16.msra.mxu0 %v4081
        %4109 = vmatprep.subr.bf16.mxu0 0
        %4110 = vmatpush1.bf16.msra.mxu0 %v4079
        %4111 = vmatprep.subr.bf16.mxu0 0
        %4112 = vmatpush1.bf16.msra.mxu0 %v4077
        %4113 = vmatprep.subr.bf16.mxu0 0
        %4114 = vmatpush1.bf16.msra.mxu0 %v4075
        %4115 = vmatprep.subr.bf16.mxu0 0
        %4116 = vmatpush2.bf16.msra.mxu0 0
        %4117 = vmatprep.subr.bf16.mxu0 0
        %4118 = vmatpush2.bf16.msra.mxu0 0
        %4119 = vmatprep.subr.bf16.mxu0 0
        %4120 = vmatpush2.bf16.msra.mxu0 0
        %4121 = vmatprep.subr.bf16.mxu0 0
        %4122 = vmatpush2.bf16.msra.mxu0 0
        %4123 = vmatprep.subr.bf16.mxu0 0
        %4124 = vmatpush2.bf16.msra.mxu0 0
        %4125 = vmatprep.subr.bf16.mxu0 0
        %4126 = vmatpush2.bf16.msra.mxu0 0
        %4127 = vmatprep.subr.bf16.mxu0 0
        %4128 = vmatpush2.bf16.msra.mxu0 0
        %4129 = vmatprep.subr.bf16.mxu0 0
        %4130 = vmatpush2.bf16.msra.mxu0 0
        %4131 = vmatprep.mubr.bf16.mxu0 0
        %4132 = vmatmul.mubr.bf16.gmra.mxu0 %v4094
        %v4133 = vpop.f32.mrf.mxu0
        %v4134 = vadd.f32 0.0, %v4133
        %v4135 = vpop.f32.mrf.mxu0
        %v4136 = vpop.f32.mrf.mxu0
        %v4137 = vadd.f32 0.0, %v4136
        %v4138 = vpop.f32.mrf.mxu0
        %4139 = vmatprep.mubr.bf16.mxu0 0
        %4140 = vmatmul.mubr.bf16.gmra.mxu0 %v4097
        %v4141 = vpop.f32.mrf.mxu0
        %v4142 = vadd.f32 0.0, %v4141
        %v4143 = vpop.f32.mrf.mxu0
        %v4144 = vpop.f32.mrf.mxu0
        %v4145 = vadd.f32 0.0, %v4144
        %v4146 = vpop.f32.mrf.mxu0
        %4147 = vdwg.mxu0
        %v4152 = vunpack.c.l.b16 %v4025
        %v4153 = vunpack.c.l.b16 %v4026
        %v4154 = vunpack.c.l.b16 %v4027
        %v4155 = vunpack.c.l.b16 %v4028
        %v4156 = vpack.c.b16 %v4153, %v4152
        %v4157 = vpack.c.b16 %v4155, %v4154
        %v4165 = vsel %vm4092, %v4156, 0
        %v4168 = vsel %vm4092, %v4157, 0
        %4170 = vmatprep.subr.bf16.mxu0 0
        %4171 = vmatpush1.bf16.msra.mxu0 0
        %4172 = vmatprep.subr.bf16.mxu0 0
        %4173 = vmatpush1.bf16.msra.mxu0 0
        %4174 = vmatprep.subr.bf16.mxu0 0
        %4175 = vmatpush1.bf16.msra.mxu0 %v4073
        %4176 = vmatprep.subr.bf16.mxu0 0
        %4177 = vmatpush1.bf16.msra.mxu0 %v4072
        %4178 = vmatprep.subr.bf16.mxu0 0
        %4179 = vmatpush1.bf16.msra.mxu0 %v4071
        %4180 = vmatprep.subr.bf16.mxu0 0
        %4181 = vmatpush1.bf16.msra.mxu0 %v4070
        %4182 = vmatprep.subr.bf16.mxu0 0
        %4183 = vmatpush1.bf16.msra.mxu0 %v4069
        %4184 = vmatprep.subr.bf16.mxu0 0
        %4185 = vmatpush1.bf16.msra.mxu0 %v4068
        %4186 = vmatprep.subr.bf16.mxu0 0
        %4187 = vmatpush2.bf16.msra.mxu0 0
        %4188 = vmatprep.subr.bf16.mxu0 0
        %4189 = vmatpush2.bf16.msra.mxu0 0
        %4190 = vmatprep.subr.bf16.mxu0 0
        %4191 = vmatpush2.bf16.msra.mxu0 0
        %4192 = vmatprep.subr.bf16.mxu0 0
        %4193 = vmatpush2.bf16.msra.mxu0 0
        %4194 = vmatprep.subr.bf16.mxu0 0
        %4195 = vmatpush2.bf16.msra.mxu0 0
        %4196 = vmatprep.subr.bf16.mxu0 0
        %4197 = vmatpush2.bf16.msra.mxu0 0
        %4198 = vmatprep.subr.bf16.mxu0 0
        %4199 = vmatpush2.bf16.msra.mxu0 0
        %4200 = vmatprep.subr.bf16.mxu0 0
        %4201 = vmatpush2.bf16.msra.mxu0 0
        %4202 = vmatprep.mubr.bf16.mxu0 0
        %4203 = vmatmul.mubr.bf16.gmra.mxu0 %v4165
        %v4204 = vpop.f32.mrf.mxu0
        %v4205 = vadd.f32 %v4134, %v4204
        %v4206 = vpop.f32.mrf.mxu0
        %v4207 = vpop.f32.mrf.mxu0
        %v4208 = vadd.f32 %v4137, %v4207
        %v4209 = vpop.f32.mrf.mxu0
        %4210 = vmatprep.mubr.bf16.mxu0 0
        %4211 = vmatmul.mubr.bf16.gmra.mxu0 %v4168
        %v4212 = vpop.f32.mrf.mxu0
        %v4213 = vadd.f32 %v4142, %v4212
        %v4214 = vpop.f32.mrf.mxu0
        %v4215 = vpop.f32.mrf.mxu0
        %v4216 = vadd.f32 %v4145, %v4215
        %v4217 = vpop.f32.mrf.mxu0
        %4218 = vdwg.mxu0
        %s4219 = scalar_lea.vmem %s2, 32
        %v4220 = vld [vmem:[%s4219] sm:$0xf]
        %v4221 = vld [vmem:[%s4219 + $0x4] sm:$0xf]
        %v4222 = vld [vmem:[%s4219 + $0x8] sm:$0xf]
        %v4223 = vld [vmem:[%s4219 + $0xc] sm:$0xf]
        %v4228 = vunpack.c.l.b16 %v4220
        %v4229 = vunpack.c.l.b16 %v4221
        %v4230 = vunpack.c.l.b16 %v4222
        %v4231 = vunpack.c.l.b16 %v4223
        %v4232 = vpack.c.b16 %v4229, %v4228
        %v4233 = vpack.c.b16 %v4231, %v4230
        %4234 = vrot.lane.b32.xlu0 %v4068, 126
        %v4235 = vpop.permute.xlu0 %4234
        %4236 = vrot.lane.b32.xlu0 %v4069, 126
        %v4237 = vpop.permute.xlu0 %4236
        %4238 = vrot.lane.b32.xlu0 %v4070, 126
        %v4239 = vpop.permute.xlu0 %4238
        %4240 = vrot.lane.b32.xlu0 %v4071, 126
        %v4241 = vpop.permute.xlu0 %4240
        %4242 = vrot.lane.b32.xlu0 %v4072, 126
        %v4243 = vpop.permute.xlu0 %4242
        %4244 = vrot.lane.b32.xlu0 %v4073, 126
        %v4245 = vpop.permute.xlu0 %4244
        %v4253 = vsel %vm4092, %v4232, 0
        %v4256 = vsel %vm4092, %v4233, 0
        %4258 = vmatprep.subr.bf16.mxu0 0
        %4259 = vmatpush1.bf16.msra.mxu0 0
        %4260 = vmatprep.subr.bf16.mxu0 0
        %4261 = vmatpush1.bf16.msra.mxu0 0
        %4262 = vmatprep.subr.bf16.mxu0 0
        %4263 = vmatpush1.bf16.msra.mxu0 %v4245
        %4264 = vmatprep.subr.bf16.mxu0 0
        %4265 = vmatpush1.bf16.msra.mxu0 %v4243
        %4266 = vmatprep.subr.bf16.mxu0 0
        %4267 = vmatpush1.bf16.msra.mxu0 %v4241
        %4268 = vmatprep.subr.bf16.mxu0 0
        %4269 = vmatpush1.bf16.msra.mxu0 %v4239
        %4270 = vmatprep.subr.bf16.mxu0 0
        %4271 = vmatpush1.bf16.msra.mxu0 %v4237
        %4272 = vmatprep.subr.bf16.mxu0 0
        %4273 = vmatpush1.bf16.msra.mxu0 %v4235
        %4274 = vmatprep.subr.bf16.mxu0 0
        %4275 = vmatpush2.bf16.msra.mxu0 0
        %4276 = vmatprep.subr.bf16.mxu0 0
        %4277 = vmatpush2.bf16.msra.mxu0 0
        %4278 = vmatprep.subr.bf16.mxu0 0
        %4279 = vmatpush2.bf16.msra.mxu0 0
        %4280 = vmatprep.subr.bf16.mxu0 0
        %4281 = vmatpush2.bf16.msra.mxu0 0
        %4282 = vmatprep.subr.bf16.mxu0 0
        %4283 = vmatpush2.bf16.msra.mxu0 0
        %4284 = vmatprep.subr.bf16.mxu0 0
        %4285 = vmatpush2.bf16.msra.mxu0 0
        %4286 = vmatprep.subr.bf16.mxu0 0
        %4287 = vmatpush2.bf16.msra.mxu0 0
        %4288 = vmatprep.subr.bf16.mxu0 0
        %4289 = vmatpush2.bf16.msra.mxu0 0
        %4290 = vmatprep.mubr.bf16.mxu0 0
        %4291 = vmatmul.mubr.bf16.gmra.mxu0 %v4253
        %v4292 = vpop.f32.mrf.mxu0
        %v4293 = vadd.f32 0.0, %v4292
        %v4294 = vpop.f32.mrf.mxu0
        %v4295 = vpop.f32.mrf.mxu0
        %v4296 = vadd.f32 0.0, %v4295
        %v4297 = vpop.f32.mrf.mxu0
        %4298 = vmatprep.mubr.bf16.mxu0 0
        %4299 = vmatmul.mubr.bf16.gmra.mxu0 %v4256
        %v4300 = vpop.f32.mrf.mxu0
        %v4301 = vadd.f32 0.0, %v4300
        %v4302 = vpop.f32.mrf.mxu0
        %v4303 = vpop.f32.mrf.mxu0
        %v4304 = vadd.f32 0.0, %v4303
        %v4305 = vpop.f32.mrf.mxu0
        %4306 = vdwg.mxu0
        %v4307 = vadd.f32 %v4205, %v4293
        %v4308 = vadd.f32 %v4208, %v4296
        %v4309 = vadd.f32 %v4213, %v4301
        %v4310 = vadd.f32 %v4216, %v4304
        %v4311 = vld [vmem:[%s5] sm:$0xff]
        %v4312 = vld [vmem:[%s5 + $0x8] sm:$0xff]
        %v4313 = vld [vmem:[%s5 + $0x10] sm:$0xff]
        %v4314 = vld [vmem:[%s5 + $0x18] sm:$0xff]
        %4316 = vset.pattern.permute.xlu0 0
        %4317 = vperm.xlu0 %4316, %v4311
        %v4318 = vpop.permute.xlu0 %4317
        %4321 = vset.pattern.permute.xlu0 0
        %4322 = vperm.xlu0 %4321, %v4312
        %v4323 = vpop.permute.xlu0 %4322
        %4326 = vset.pattern.permute.xlu0 0
        %4327 = vperm.xlu0 %4326, %v4313
        %v4328 = vpop.permute.xlu0 %4327
        %4331 = vset.pattern.permute.xlu0 0
        %4332 = vperm.xlu0 %4331, %v4314
        %v4333 = vpop.permute.xlu0 %4332
        %v4335 = vadd.f32 %v4307, %v4318
        %v4336 = vadd.f32 %v4308, %v4323
        %v4337 = vadd.f32 %v4309, %v4328
        %v4338 = vadd.f32 %v4310, %v4333
        %p4339 = scmp.ge.s32.totalorder %s4012, 0
        %p4340 = scmp.lt.s32.totalorder %s4012, 16
        %p4341 = pnand %p4339, %p4340
        %p4342 = pneg %p4341
        %v4343 = vmax.f32 %v4335, 0.0
        %v4344 = vmax.f32 %v4336, 0.0
        %v4345 = vmax.f32 %v4337, 0.0
        %v4346 = vmax.f32 %v4338, 0.0
        %s4347 = scalar_select %p4342, 1, 0
        %v4348 = vstv %s4347
        %vm4349 = vcmp.eq.s32.totalorder %v4348, 1
        %v4350 = vsel %vm4349, %v4343, 0.0
        %v4351 = vsel %vm4349, %v4344, 0.0
        %v4352 = vsel %vm4349, %v4345, 0.0
        %v4353 = vsel %vm4349, %v4346, 0.0
        %v4354 = vpack.c.bf16 %v4351, %v4350
        %v4355 = vpack.c.bf16 %v4353, %v4352
        %v4358 = vunpack.c.l.b16 %v4354
        %v4359 = vunpack.c.h.b16 %v4354
        %v4360 = vunpack.c.l.b16 %v4355
        %v4361 = vunpack.c.h.b16 %v4355
        %v4362 = vpack.c.b16 %v4358, %v4358
        %v4363 = vpack.c.b16 %v4359, %v4359
        %v4364 = vpack.c.b16 %v4360, %v4360
        %v4365 = vpack.c.b16 %v4361, %v4361
        %4366 = vrot.lane.b32.xlu0 %v4362, 1
        %v4367 = vpop.permute.xlu0 %4366
        %4368 = vrot.lane.b32.xlu0 %v4363, 1
        %v4369 = vpop.permute.xlu0 %4368
        %4370 = vrot.lane.b32.xlu0 %v4364, 1
        %v4371 = vpop.permute.xlu0 %4370
        %4372 = vrot.lane.b32.xlu0 %v4365, 1
        %v4373 = vpop.permute.xlu0 %4372
        %4378 = vst.msk [vmem:[#allocation3] sm:$0xf] %vm686, %v4367
        %4379 = vst.msk [vmem:[#allocation3 + $0x4] sm:$0xf] %vm686, %v4369
        %4380 = vst.msk [vmem:[#allocation3 + $0x8] sm:$0xf] %vm686, %v4371
        %4381 = vst.msk [vmem:[#allocation3 + $0xc] sm:$0xf] %vm686, %v4373
        %v4382 = vld [vmem:[#allocation2 + $0x10] sm:$0xf]
        %v4383 = vld [vmem:[#allocation2 + $0x14] sm:$0xf]
        %v4384 = vld [vmem:[#allocation2 + $0x18] sm:$0xf]
        %v4385 = vld [vmem:[#allocation2 + $0x1c] sm:$0xf]
        %v4386 = vld [vmem:[#allocation2 + $0x20] sm:$0xf]
        %v4387 = vld [vmem:[#allocation2 + $0x24] sm:$0xf]
        %v4388 = vld [vmem:[#allocation2 + $0x28] sm:$0xf]
        %v4389 = vld [vmem:[#allocation2 + $0x2c] sm:$0xf]
        %v4390 = vld [vmem:[#allocation2 + $0x30] sm:$0xf]
        %v4391 = vld [vmem:[#allocation2 + $0x34] sm:$0xf]
        %v4392 = vld [vmem:[#allocation2 + $0x38] sm:$0xf]
        %v4393 = vld [vmem:[#allocation2 + $0x3c] sm:$0xf]
        %v4394 = vld [vmem:[%s2] sm:$0xf]
        %v4395 = vld [vmem:[%s2 + $0x4] sm:$0xf]
        %v4396 = vld [vmem:[%s2 + $0x8] sm:$0xf]
        %v4397 = vld [vmem:[%s2 + $0xc] sm:$0xf]
        %v4398 = vld [vmem:[%s4029] sm:$0xf]
        %v4399 = vld [vmem:[%s4029 + $0x4] sm:$0xf]
        %v4400 = vld [vmem:[%s4029 + $0x8] sm:$0xf]
        %v4401 = vld [vmem:[%s4029 + $0xc] sm:$0xf]
        %v4406 = vunpack.c.l.b16 %v4398
        %v4407 = vunpack.c.l.b16 %v4399
        %v4408 = vunpack.c.l.b16 %v4400
        %v4409 = vunpack.c.l.b16 %v4401
        %v4410 = vpack.c.b16 %v4407, %v4406
        %v4411 = vpack.c.b16 %v4409, %v4408
        %v4424 = vunpack.c.l.b16 %v4382
        %v4425 = vunpack.c.l.b16 %v4383
        %v4426 = vunpack.c.l.b16 %v4384
        %v4427 = vunpack.c.l.b16 %v4385
        %v4428 = vunpack.c.l.b16 %v4386
        %v4429 = vunpack.c.l.b16 %v4387
        %v4430 = vunpack.c.l.b16 %v4388
        %v4431 = vunpack.c.l.b16 %v4389
        %v4432 = vunpack.c.l.b16 %v4390
        %v4433 = vunpack.c.l.b16 %v4391
        %v4434 = vunpack.c.l.b16 %v4392
        %v4435 = vunpack.c.l.b16 %v4393
        %v4436 = vpack.c.b16 %v4425, %v4424
        %v4437 = vpack.c.b16 %v4427, %v4426
        %v4438 = vpack.c.b16 %v4429, %v4428
        %v4439 = vpack.c.b16 %v4431, %v4430
        %v4440 = vpack.c.b16 %v4433, %v4432
        %v4441 = vpack.c.b16 %v4435, %v4434
        %4442 = vrot.lane.b32.xlu0 %v4436, 127
        %v4443 = vpop.permute.xlu0 %4442
        %4444 = vrot.lane.b32.xlu0 %v4437, 127
        %v4445 = vpop.permute.xlu0 %4444
        %4446 = vrot.lane.b32.xlu0 %v4438, 127
        %v4447 = vpop.permute.xlu0 %4446
        %4448 = vrot.lane.b32.xlu0 %v4439, 127
        %v4449 = vpop.permute.xlu0 %4448
        %4450 = vrot.lane.b32.xlu0 %v4440, 127
        %v4451 = vpop.permute.xlu0 %4450
        %4452 = vrot.lane.b32.xlu0 %v4441, 127
        %v4453 = vpop.permute.xlu0 %4452
        %v4461 = vsel %vm4092, %v4410, 0
        %v4464 = vsel %vm4092, %v4411, 0
        %4466 = vmatprep.subr.bf16.mxu0 0
        %4467 = vmatpush1.bf16.msra.mxu0 0
        %4468 = vmatprep.subr.bf16.mxu0 0
        %4469 = vmatpush1.bf16.msra.mxu0 0
        %4470 = vmatprep.subr.bf16.mxu0 0
        %4471 = vmatpush1.bf16.msra.mxu0 %v4453
        %4472 = vmatprep.subr.bf16.mxu0 0
        %4473 = vmatpush1.bf16.msra.mxu0 %v4451
        %4474 = vmatprep.subr.bf16.mxu0 0
        %4475 = vmatpush1.bf16.msra.mxu0 %v4449
        %4476 = vmatprep.subr.bf16.mxu0 0
        %4477 = vmatpush1.bf16.msra.mxu0 %v4447
        %4478 = vmatprep.subr.bf16.mxu0 0
        %4479 = vmatpush1.bf16.msra.mxu0 %v4445
        %4480 = vmatprep.subr.bf16.mxu0 0
        %4481 = vmatpush1.bf16.msra.mxu0 %v4443
        %4482 = vmatprep.subr.bf16.mxu0 0
        %4483 = vmatpush2.bf16.msra.mxu0 0
        %4484 = vmatprep.subr.bf16.mxu0 0
        %4485 = vmatpush2.bf16.msra.mxu0 0
        %4486 = vmatprep.subr.bf16.mxu0 0
        %4487 = vmatpush2.bf16.msra.mxu0 0
        %4488 = vmatprep.subr.bf16.mxu0 0
        %4489 = vmatpush2.bf16.msra.mxu0 0
        %4490 = vmatprep.subr.bf16.mxu0 0
        %4491 = vmatpush2.bf16.msra.mxu0 0
        %4492 = vmatprep.subr.bf16.mxu0 0
        %4493 = vmatpush2.bf16.msra.mxu0 0
        %4494 = vmatprep.subr.bf16.mxu0 0
        %4495 = vmatpush2.bf16.msra.mxu0 0
        %4496 = vmatprep.subr.bf16.mxu0 0
        %4497 = vmatpush2.bf16.msra.mxu0 0
        %4498 = vmatprep.mubr.bf16.mxu0 0
        %4499 = vmatmul.mubr.bf16.gmra.mxu0 %v4461
        %v4500 = vpop.f32.mrf.mxu0
        %v4501 = vadd.f32 0.0, %v4500
        %v4502 = vpop.f32.mrf.mxu0
        %v4503 = vpop.f32.mrf.mxu0
        %v4504 = vadd.f32 0.0, %v4503
        %v4505 = vpop.f32.mrf.mxu0
        %4506 = vmatprep.mubr.bf16.mxu0 0
        %4507 = vmatmul.mubr.bf16.gmra.mxu0 %v4464
        %v4508 = vpop.f32.mrf.mxu0
        %v4509 = vadd.f32 0.0, %v4508
        %v4510 = vpop.f32.mrf.mxu0
        %v4511 = vpop.f32.mrf.mxu0
        %v4512 = vadd.f32 0.0, %v4511
        %v4513 = vpop.f32.mrf.mxu0
        %4514 = vdwg.mxu0
        %v4519 = vunpack.c.l.b16 %v4394
        %v4520 = vunpack.c.l.b16 %v4395
        %v4521 = vunpack.c.l.b16 %v4396
        %v4522 = vunpack.c.l.b16 %v4397
        %v4523 = vpack.c.b16 %v4520, %v4519
        %v4524 = vpack.c.b16 %v4522, %v4521
        %v4532 = vsel %vm4092, %v4523, 0
        %v4535 = vsel %vm4092, %v4524, 0
        %4537 = vmatprep.subr.bf16.mxu0 0
        %4538 = vmatpush1.bf16.msra.mxu0 0
        %4539 = vmatprep.subr.bf16.mxu0 0
        %4540 = vmatpush1.bf16.msra.mxu0 0
        %4541 = vmatprep.subr.bf16.mxu0 0
        %4542 = vmatpush1.bf16.msra.mxu0 %v4441
        %4543 = vmatprep.subr.bf16.mxu0 0
        %4544 = vmatpush1.bf16.msra.mxu0 %v4440
        %4545 = vmatprep.subr.bf16.mxu0 0
        %4546 = vmatpush1.bf16.msra.mxu0 %v4439
        %4547 = vmatprep.subr.bf16.mxu0 0
        %4548 = vmatpush1.bf16.msra.mxu0 %v4438
        %4549 = vmatprep.subr.bf16.mxu0 0
        %4550 = vmatpush1.bf16.msra.mxu0 %v4437
        %4551 = vmatprep.subr.bf16.mxu0 0
        %4552 = vmatpush1.bf16.msra.mxu0 %v4436
        %4553 = vmatprep.subr.bf16.mxu0 0
        %4554 = vmatpush2.bf16.msra.mxu0 0
        %4555 = vmatprep.subr.bf16.mxu0 0
        %4556 = vmatpush2.bf16.msra.mxu0 0
        %4557 = vmatprep.subr.bf16.mxu0 0
        %4558 = vmatpush2.bf16.msra.mxu0 0
        %4559 = vmatprep.subr.bf16.mxu0 0
        %4560 = vmatpush2.bf16.msra.mxu0 0
        %4561 = vmatprep.subr.bf16.mxu0 0
        %4562 = vmatpush2.bf16.msra.mxu0 0
        %4563 = vmatprep.subr.bf16.mxu0 0
        %4564 = vmatpush2.bf16.msra.mxu0 0
        %4565 = vmatprep.subr.bf16.mxu0 0
        %4566 = vmatpush2.bf16.msra.mxu0 0
        %4567 = vmatprep.subr.bf16.mxu0 0
        %4568 = vmatpush2.bf16.msra.mxu0 0
        %4569 = vmatprep.mubr.bf16.mxu0 0
        %4570 = vmatmul.mubr.bf16.gmra.mxu0 %v4532
        %v4571 = vpop.f32.mrf.mxu0
        %v4572 = vadd.f32 %v4501, %v4571
        %v4573 = vpop.f32.mrf.mxu0
        %v4574 = vpop.f32.mrf.mxu0
        %v4575 = vadd.f32 %v4504, %v4574
        %v4576 = vpop.f32.mrf.mxu0
        %4577 = vmatprep.mubr.bf16.mxu0 0
        %4578 = vmatmul.mubr.bf16.gmra.mxu0 %v4535
        %v4579 = vpop.f32.mrf.mxu0
        %v4580 = vadd.f32 %v4509, %v4579
        %v4581 = vpop.f32.mrf.mxu0
        %v4582 = vpop.f32.mrf.mxu0
        %v4583 = vadd.f32 %v4512, %v4582
        %v4584 = vpop.f32.mrf.mxu0
        %4585 = vdwg.mxu0
        %v4586 = vld [vmem:[%s4219] sm:$0xf]
        %v4587 = vld [vmem:[%s4219 + $0x4] sm:$0xf]
        %v4588 = vld [vmem:[%s4219 + $0x8] sm:$0xf]
        %v4589 = vld [vmem:[%s4219 + $0xc] sm:$0xf]
        %v4594 = vunpack.c.l.b16 %v4586
        %v4595 = vunpack.c.l.b16 %v4587
        %v4596 = vunpack.c.l.b16 %v4588
        %v4597 = vunpack.c.l.b16 %v4589
        %v4598 = vpack.c.b16 %v4595, %v4594
        %v4599 = vpack.c.b16 %v4597, %v4596
        %4600 = vrot.lane.b32.xlu0 %v4436, 126
        %v4601 = vpop.permute.xlu0 %4600
        %4602 = vrot.lane.b32.xlu0 %v4437, 126
        %v4603 = vpop.permute.xlu0 %4602
        %4604 = vrot.lane.b32.xlu0 %v4438, 126
        %v4605 = vpop.permute.xlu0 %4604
        %4606 = vrot.lane.b32.xlu0 %v4439, 126
        %v4607 = vpop.permute.xlu0 %4606
        %4608 = vrot.lane.b32.xlu0 %v4440, 126
        %v4609 = vpop.permute.xlu0 %4608
        %4610 = vrot.lane.b32.xlu0 %v4441, 126
        %v4611 = vpop.permute.xlu0 %4610
        %v4619 = vsel %vm4092, %v4598, 0
        %v4622 = vsel %vm4092, %v4599, 0
        %4624 = vmatprep.subr.bf16.mxu0 0
        %4625 = vmatpush1.bf16.msra.mxu0 0
        %4626 = vmatprep.subr.bf16.mxu0 0
        %4627 = vmatpush1.bf16.msra.mxu0 0
        %4628 = vmatprep.subr.bf16.mxu0 0
        %4629 = vmatpush1.bf16.msra.mxu0 %v4611
        %4630 = vmatprep.subr.bf16.mxu0 0
        %4631 = vmatpush1.bf16.msra.mxu0 %v4609
        %4632 = vmatprep.subr.bf16.mxu0 0
        %4633 = vmatpush1.bf16.msra.mxu0 %v4607
        %4634 = vmatprep.subr.bf16.mxu0 0
        %4635 = vmatpush1.bf16.msra.mxu0 %v4605
        %4636 = vmatprep.subr.bf16.mxu0 0
        %4637 = vmatpush1.bf16.msra.mxu0 %v4603
        %4638 = vmatprep.subr.bf16.mxu0 0
        %4639 = vmatpush1.bf16.msra.mxu0 %v4601
        %4640 = vmatprep.subr.bf16.mxu0 0
        %4641 = vmatpush2.bf16.msra.mxu0 0
        %4642 = vmatprep.subr.bf16.mxu0 0
        %4643 = vmatpush2.bf16.msra.mxu0 0
        %4644 = vmatprep.subr.bf16.mxu0 0
        %4645 = vmatpush2.bf16.msra.mxu0 0
        %4646 = vmatprep.subr.bf16.mxu0 0
        %4647 = vmatpush2.bf16.msra.mxu0 0
        %4648 = vmatprep.subr.bf16.mxu0 0
        %4649 = vmatpush2.bf16.msra.mxu0 0
        %4650 = vmatprep.subr.bf16.mxu0 0
        %4651 = vmatpush2.bf16.msra.mxu0 0
        %4652 = vmatprep.subr.bf16.mxu0 0
        %4653 = vmatpush2.bf16.msra.mxu0 0
        %4654 = vmatprep.subr.bf16.mxu0 0
        %4655 = vmatpush2.bf16.msra.mxu0 0
        %4656 = vmatprep.mubr.bf16.mxu0 0
        %4657 = vmatmul.mubr.bf16.gmra.mxu0 %v4619
        %v4658 = vpop.f32.mrf.mxu0
        %v4659 = vadd.f32 0.0, %v4658
        %v4660 = vpop.f32.mrf.mxu0
        %v4661 = vpop.f32.mrf.mxu0
        %v4662 = vadd.f32 0.0, %v4661
        %v4663 = vpop.f32.mrf.mxu0
        %4664 = vmatprep.mubr.bf16.mxu0 0
        %4665 = vmatmul.mubr.bf16.gmra.mxu0 %v4622
        %v4666 = vpop.f32.mrf.mxu0
        %v4667 = vadd.f32 0.0, %v4666
        %v4668 = vpop.f32.mrf.mxu0
        %v4669 = vpop.f32.mrf.mxu0
        %v4670 = vadd.f32 0.0, %v4669
        %v4671 = vpop.f32.mrf.mxu0
        %4672 = vdwg.mxu0
        %v4673 = vadd.f32 %v4572, %v4659
        %v4674 = vadd.f32 %v4575, %v4662
        %v4675 = vadd.f32 %v4580, %v4667
        %v4676 = vadd.f32 %v4583, %v4670
        %v4677 = vld [vmem:[%s5] sm:$0xff]
        %v4678 = vld [vmem:[%s5 + $0x8] sm:$0xff]
        %v4679 = vld [vmem:[%s5 + $0x10] sm:$0xff]
        %v4680 = vld [vmem:[%s5 + $0x18] sm:$0xff]
        %4682 = vset.pattern.permute.xlu0 0
        %4683 = vperm.xlu0 %4682, %v4677
        %v4684 = vpop.permute.xlu0 %4683
        %4687 = vset.pattern.permute.xlu0 0
        %4688 = vperm.xlu0 %4687, %v4678
        %v4689 = vpop.permute.xlu0 %4688
        %4692 = vset.pattern.permute.xlu0 0
        %4693 = vperm.xlu0 %4692, %v4679
        %v4694 = vpop.permute.xlu0 %4693
        %4697 = vset.pattern.permute.xlu0 0
        %4698 = vperm.xlu0 %4697, %v4680
        %v4699 = vpop.permute.xlu0 %4698
        %v4701 = vadd.f32 %v4673, %v4684
        %v4702 = vadd.f32 %v4674, %v4689
        %v4703 = vadd.f32 %v4675, %v4694
        %v4704 = vadd.f32 %v4676, %v4699
        %v4705 = vmax.f32 %v4701, 0.0
        %v4706 = vmax.f32 %v4702, 0.0
        %v4707 = vmax.f32 %v4703, 0.0
        %v4708 = vmax.f32 %v4704, 0.0
        %v4709 = vsel %vm1261, %v4705, 0.0
        %v4710 = vsel %vm1261, %v4706, 0.0
        %v4711 = vsel %vm1261, %v4707, 0.0
        %v4712 = vsel %vm1261, %v4708, 0.0
        %v4713 = vpack.c.bf16 %v4710, %v4709
        %v4714 = vpack.c.bf16 %v4712, %v4711
        %v4717 = vunpack.c.l.b16 %v4713
        %v4718 = vunpack.c.h.b16 %v4713
        %v4719 = vunpack.c.l.b16 %v4714
        %v4720 = vunpack.c.h.b16 %v4714
        %v4721 = vpack.c.b16 %v4717, %v4717
        %v4722 = vpack.c.b16 %v4718, %v4718
        %v4723 = vpack.c.b16 %v4719, %v4719
        %v4724 = vpack.c.b16 %v4720, %v4720
        %4725 = vrot.lane.b32.xlu0 %v4721, 1
        %v4726 = vpop.permute.xlu0 %4725
        %4727 = vrot.lane.b32.xlu0 %v4722, 1
        %v4728 = vpop.permute.xlu0 %4727
        %4729 = vrot.lane.b32.xlu0 %v4723, 1
        %v4730 = vpop.permute.xlu0 %4729
        %4731 = vrot.lane.b32.xlu0 %v4724, 1
        %v4732 = vpop.permute.xlu0 %4731
        %4737 = vst.msk [vmem:[#allocation3 + $0x10] sm:$0xf] %vm686, %v4726
        %4738 = vst.msk [vmem:[#allocation3 + $0x14] sm:$0xf] %vm686, %v4728
        %4739 = vst.msk [vmem:[#allocation3 + $0x18] sm:$0xf] %vm686, %v4730
        %4740 = vst.msk [vmem:[#allocation3 + $0x1c] sm:$0xf] %vm686, %v4732
        %v4741 = vld [vmem:[#allocation2 + $0x20] sm:$0xf]
        %v4742 = vld [vmem:[#allocation2 + $0x24] sm:$0xf]
        %v4743 = vld [vmem:[#allocation2 + $0x28] sm:$0xf]
        %v4744 = vld [vmem:[#allocation2 + $0x2c] sm:$0xf]
        %v4745 = vld [vmem:[#allocation2 + $0x30] sm:$0xf]
        %v4746 = vld [vmem:[#allocation2 + $0x34] sm:$0xf]
        %v4747 = vld [vmem:[#allocation2 + $0x38] sm:$0xf]
        %v4748 = vld [vmem:[#allocation2 + $0x3c] sm:$0xf]
        %v4749 = vld [vmem:[#allocation2 + $0x40] sm:$0xf]
        %v4750 = vld [vmem:[#allocation2 + $0x44] sm:$0xf]
        %v4751 = vld [vmem:[#allocation2 + $0x48] sm:$0xf]
        %v4752 = vld [vmem:[#allocation2 + $0x4c] sm:$0xf]
        %v4753 = vld [vmem:[%s2] sm:$0xf]
        %v4754 = vld [vmem:[%s2 + $0x4] sm:$0xf]
        %v4755 = vld [vmem:[%s2 + $0x8] sm:$0xf]
        %v4756 = vld [vmem:[%s2 + $0xc] sm:$0xf]
        %v4757 = vld [vmem:[%s4029] sm:$0xf]
        %v4758 = vld [vmem:[%s4029 + $0x4] sm:$0xf]
        %v4759 = vld [vmem:[%s4029 + $0x8] sm:$0xf]
        %v4760 = vld [vmem:[%s4029 + $0xc] sm:$0xf]
        %v4765 = vunpack.c.l.b16 %v4757
        %v4766 = vunpack.c.l.b16 %v4758
        %v4767 = vunpack.c.l.b16 %v4759
        %v4768 = vunpack.c.l.b16 %v4760
        %v4769 = vpack.c.b16 %v4766, %v4765
        %v4770 = vpack.c.b16 %v4768, %v4767
        %v4783 = vunpack.c.l.b16 %v4741
        %v4784 = vunpack.c.l.b16 %v4742
        %v4785 = vunpack.c.l.b16 %v4743
        %v4786 = vunpack.c.l.b16 %v4744
        %v4787 = vunpack.c.l.b16 %v4745
        %v4788 = vunpack.c.l.b16 %v4746
        %v4789 = vunpack.c.l.b16 %v4747
        %v4790 = vunpack.c.l.b16 %v4748
        %v4791 = vunpack.c.l.b16 %v4749
        %v4792 = vunpack.c.l.b16 %v4750
        %v4793 = vunpack.c.l.b16 %v4751
        %v4794 = vunpack.c.l.b16 %v4752
        %v4795 = vpack.c.b16 %v4784, %v4783
        %v4796 = vpack.c.b16 %v4786, %v4785
        %v4797 = vpack.c.b16 %v4788, %v4787
        %v4798 = vpack.c.b16 %v4790, %v4789
        %v4799 = vpack.c.b16 %v4792, %v4791
        %v4800 = vpack.c.b16 %v4794, %v4793
        %4801 = vrot.lane.b32.xlu0 %v4795, 127
        %v4802 = vpop.permute.xlu0 %4801
        %4803 = vrot.lane.b32.xlu0 %v4796, 127
        %v4804 = vpop.permute.xlu0 %4803
        %4805 = vrot.lane.b32.xlu0 %v4797, 127
        %v4806 = vpop.permute.xlu0 %4805
        %4807 = vrot.lane.b32.xlu0 %v4798, 127
        %v4808 = vpop.permute.xlu0 %4807
        %4809 = vrot.lane.b32.xlu0 %v4799, 127
        %v4810 = vpop.permute.xlu0 %4809
        %4811 = vrot.lane.b32.xlu0 %v4800, 127
        %v4812 = vpop.permute.xlu0 %4811
        %v4820 = vsel %vm4092, %v4769, 0
        %v4823 = vsel %vm4092, %v4770, 0
        %4825 = vmatprep.subr.bf16.mxu0 0
        %4826 = vmatpush1.bf16.msra.mxu0 0
        %4827 = vmatprep.subr.bf16.mxu0 0
        %4828 = vmatpush1.bf16.msra.mxu0 0
        %4829 = vmatprep.subr.bf16.mxu0 0
        %4830 = vmatpush1.bf16.msra.mxu0 %v4812
        %4831 = vmatprep.subr.bf16.mxu0 0
        %4832 = vmatpush1.bf16.msra.mxu0 %v4810
        %4833 = vmatprep.subr.bf16.mxu0 0
        %4834 = vmatpush1.bf16.msra.mxu0 %v4808
        %4835 = vmatprep.subr.bf16.mxu0 0
        %4836 = vmatpush1.bf16.msra.mxu0 %v4806
        %4837 = vmatprep.subr.bf16.mxu0 0
        %4838 = vmatpush1.bf16.msra.mxu0 %v4804
        %4839 = vmatprep.subr.bf16.mxu0 0
        %4840 = vmatpush1.bf16.msra.mxu0 %v4802
        %4841 = vmatprep.subr.bf16.mxu0 0
        %4842 = vmatpush2.bf16.msra.mxu0 0
        %4843 = vmatprep.subr.bf16.mxu0 0
        %4844 = vmatpush2.bf16.msra.mxu0 0
        %4845 = vmatprep.subr.bf16.mxu0 0
        %4846 = vmatpush2.bf16.msra.mxu0 0
        %4847 = vmatprep.subr.bf16.mxu0 0
        %4848 = vmatpush2.bf16.msra.mxu0 0
        %4849 = vmatprep.subr.bf16.mxu0 0
        %4850 = vmatpush2.bf16.msra.mxu0 0
        %4851 = vmatprep.subr.bf16.mxu0 0
        %4852 = vmatpush2.bf16.msra.mxu0 0
        %4853 = vmatprep.subr.bf16.mxu0 0
        %4854 = vmatpush2.bf16.msra.mxu0 0
        %4855 = vmatprep.subr.bf16.mxu0 0
        %4856 = vmatpush2.bf16.msra.mxu0 0
        %4857 = vmatprep.mubr.bf16.mxu0 0
        %4858 = vmatmul.mubr.bf16.gmra.mxu0 %v4820
        %v4859 = vpop.f32.mrf.mxu0
        %v4860 = vadd.f32 0.0, %v4859
        %v4861 = vpop.f32.mrf.mxu0
        %v4862 = vpop.f32.mrf.mxu0
        %v4863 = vadd.f32 0.0, %v4862
        %v4864 = vpop.f32.mrf.mxu0
        %4865 = vmatprep.mubr.bf16.mxu0 0
        %4866 = vmatmul.mubr.bf16.gmra.mxu0 %v4823
        %v4867 = vpop.f32.mrf.mxu0
        %v4868 = vadd.f32 0.0, %v4867
        %v4869 = vpop.f32.mrf.mxu0
        %v4870 = vpop.f32.mrf.mxu0
        %v4871 = vadd.f32 0.0, %v4870
        %v4872 = vpop.f32.mrf.mxu0
        %4873 = vdwg.mxu0
        %v4878 = vunpack.c.l.b16 %v4753
        %v4879 = vunpack.c.l.b16 %v4754
        %v4880 = vunpack.c.l.b16 %v4755
        %v4881 = vunpack.c.l.b16 %v4756
        %v4882 = vpack.c.b16 %v4879, %v4878
        %v4883 = vpack.c.b16 %v4881, %v4880
        %v4891 = vsel %vm4092, %v4882, 0
        %v4894 = vsel %vm4092, %v4883, 0
        %4896 = vmatprep.subr.bf16.mxu0 0
        %4897 = vmatpush1.bf16.msra.mxu0 0
        %4898 = vmatprep.subr.bf16.mxu0 0
        %4899 = vmatpush1.bf16.msra.mxu0 0
        %4900 = vmatprep.subr.bf16.mxu0 0
        %4901 = vmatpush1.bf16.msra.mxu0 %v4800
        %4902 = vmatprep.subr.bf16.mxu0 0
        %4903 = vmatpush1.bf16.msra.mxu0 %v4799
        %4904 = vmatprep.subr.bf16.mxu0 0
        %4905 = vmatpush1.bf16.msra.mxu0 %v4798
        %4906 = vmatprep.subr.bf16.mxu0 0
        %4907 = vmatpush1.bf16.msra.mxu0 %v4797
        %4908 = vmatprep.subr.bf16.mxu0 0
        %4909 = vmatpush1.bf16.msra.mxu0 %v4796
        %4910 = vmatprep.subr.bf16.mxu0 0
        %4911 = vmatpush1.bf16.msra.mxu0 %v4795
        %4912 = vmatprep.subr.bf16.mxu0 0
        %4913 = vmatpush2.bf16.msra.mxu0 0
        %4914 = vmatprep.subr.bf16.mxu0 0
        %4915 = vmatpush2.bf16.msra.mxu0 0
        %4916 = vmatprep.subr.bf16.mxu0 0
        %4917 = vmatpush2.bf16.msra.mxu0 0
        %4918 = vmatprep.subr.bf16.mxu0 0
        %4919 = vmatpush2.bf16.msra.mxu0 0
        %4920 = vmatprep.subr.bf16.mxu0 0
        %4921 = vmatpush2.bf16.msra.mxu0 0
        %4922 = vmatprep.subr.bf16.mxu0 0
        %4923 = vmatpush2.bf16.msra.mxu0 0
        %4924 = vmatprep.subr.bf16.mxu0 0
        %4925 = vmatpush2.bf16.msra.mxu0 0
        %4926 = vmatprep.subr.bf16.mxu0 0
        %4927 = vmatpush2.bf16.msra.mxu0 0
        %4928 = vmatprep.mubr.bf16.mxu0 0
        %4929 = vmatmul.mubr.bf16.gmra.mxu0 %v4891
        %v4930 = vpop.f32.mrf.mxu0
        %v4931 = vadd.f32 %v4860, %v4930
        %v4932 = vpop.f32.mrf.mxu0
        %v4933 = vpop.f32.mrf.mxu0
        %v4934 = vadd.f32 %v4863, %v4933
        %v4935 = vpop.f32.mrf.mxu0
        %4936 = vmatprep.mubr.bf16.mxu0 0
        %4937 = vmatmul.mubr.bf16.gmra.mxu0 %v4894
        %v4938 = vpop.f32.mrf.mxu0
        %v4939 = vadd.f32 %v4868, %v4938
        %v4940 = vpop.f32.mrf.mxu0
        %v4941 = vpop.f32.mrf.mxu0
        %v4942 = vadd.f32 %v4871, %v4941
        %v4943 = vpop.f32.mrf.mxu0
        %4944 = vdwg.mxu0
        %v4945 = vld [vmem:[%s4219] sm:$0xf]
        %v4946 = vld [vmem:[%s4219 + $0x4] sm:$0xf]
        %v4947 = vld [vmem:[%s4219 + $0x8] sm:$0xf]
        %v4948 = vld [vmem:[%s4219 + $0xc] sm:$0xf]
        %v4953 = vunpack.c.l.b16 %v4945
        %v4954 = vunpack.c.l.b16 %v4946
        %v4955 = vunpack.c.l.b16 %v4947
        %v4956 = vunpack.c.l.b16 %v4948
        %v4957 = vpack.c.b16 %v4954, %v4953
        %v4958 = vpack.c.b16 %v4956, %v4955
        %4959 = vrot.lane.b32.xlu0 %v4795, 126
        %v4960 = vpop.permute.xlu0 %4959
        %4961 = vrot.lane.b32.xlu0 %v4796, 126
        %v4962 = vpop.permute.xlu0 %4961
        %4963 = vrot.lane.b32.xlu0 %v4797, 126
        %v4964 = vpop.permute.xlu0 %4963
        %4965 = vrot.lane.b32.xlu0 %v4798, 126
        %v4966 = vpop.permute.xlu0 %4965
        %4967 = vrot.lane.b32.xlu0 %v4799, 126
        %v4968 = vpop.permute.xlu0 %4967
        %4969 = vrot.lane.b32.xlu0 %v4800, 126
        %v4970 = vpop.permute.xlu0 %4969
        %v4978 = vsel %vm4092, %v4957, 0
        %v4981 = vsel %vm4092, %v4958, 0
        %4983 = vmatprep.subr.bf16.mxu0 0
        %4984 = vmatpush1.bf16.msra.mxu0 0
        %4985 = vmatprep.subr.bf16.mxu0 0
        %4986 = vmatpush1.bf16.msra.mxu0 0
        %4987 = vmatprep.subr.bf16.mxu0 0
        %4988 = vmatpush1.bf16.msra.mxu0 %v4970
        %4989 = vmatprep.subr.bf16.mxu0 0
        %4990 = vmatpush1.bf16.msra.mxu0 %v4968
        %4991 = vmatprep.subr.bf16.mxu0 0
        %4992 = vmatpush1.bf16.msra.mxu0 %v4966
        %4993 = vmatprep.subr.bf16.mxu0 0
        %4994 = vmatpush1.bf16.msra.mxu0 %v4964
        %4995 = vmatprep.subr.bf16.mxu0 0
        %4996 = vmatpush1.bf16.msra.mxu0 %v4962
        %4997 = vmatprep.subr.bf16.mxu0 0
        %4998 = vmatpush1.bf16.msra.mxu0 %v4960
        %4999 = vmatprep.subr.bf16.mxu0 0
        %5000 = vmatpush2.bf16.msra.mxu0 0
        %5001 = vmatprep.subr.bf16.mxu0 0
        %5002 = vmatpush2.bf16.msra.mxu0 0
        %5003 = vmatprep.subr.bf16.mxu0 0
        %5004 = vmatpush2.bf16.msra.mxu0 0
        %5005 = vmatprep.subr.bf16.mxu0 0
        %5006 = vmatpush2.bf16.msra.mxu0 0
        %5007 = vmatprep.subr.bf16.mxu0 0
        %5008 = vmatpush2.bf16.msra.mxu0 0
        %5009 = vmatprep.subr.bf16.mxu0 0
        %5010 = vmatpush2.bf16.msra.mxu0 0
        %5011 = vmatprep.subr.bf16.mxu0 0
        %5012 = vmatpush2.bf16.msra.mxu0 0
        %5013 = vmatprep.subr.bf16.mxu0 0
        %5014 = vmatpush2.bf16.msra.mxu0 0
        %5015 = vmatprep.mubr.bf16.mxu0 0
        %5016 = vmatmul.mubr.bf16.gmra.mxu0 %v4978
        %v5017 = vpop.f32.mrf.mxu0
        %v5018 = vadd.f32 0.0, %v5017
        %v5019 = vpop.f32.mrf.mxu0
        %v5020 = vpop.f32.mrf.mxu0
        %v5021 = vadd.f32 0.0, %v5020
        %v5022 = vpop.f32.mrf.mxu0
        %5023 = vmatprep.mubr.bf16.mxu0 0
        %5024 = vmatmul.mubr.bf16.gmra.mxu0 %v4981
        %v5025 = vpop.f32.mrf.mxu0
        %v5026 = vadd.f32 0.0, %v5025
        %v5027 = vpop.f32.mrf.mxu0
        %v5028 = vpop.f32.mrf.mxu0
        %v5029 = vadd.f32 0.0, %v5028
        %v5030 = vpop.f32.mrf.mxu0
        %5031 = vdwg.mxu0
        %v5032 = vadd.f32 %v4931, %v5018
        %v5033 = vadd.f32 %v4934, %v5021
        %v5034 = vadd.f32 %v4939, %v5026
        %v5035 = vadd.f32 %v4942, %v5029
        %v5036 = vld [vmem:[%s5] sm:$0xff]
        %v5037 = vld [vmem:[%s5 + $0x8] sm:$0xff]
        %v5038 = vld [vmem:[%s5 + $0x10] sm:$0xff]
        %v5039 = vld [vmem:[%s5 + $0x18] sm:$0xff]
        %5041 = vset.pattern.permute.xlu0 0
        %5042 = vperm.xlu0 %5041, %v5036
        %v5043 = vpop.permute.xlu0 %5042
        %5046 = vset.pattern.permute.xlu0 0
        %5047 = vperm.xlu0 %5046, %v5037
        %v5048 = vpop.permute.xlu0 %5047
        %5051 = vset.pattern.permute.xlu0 0
        %5052 = vperm.xlu0 %5051, %v5038
        %v5053 = vpop.permute.xlu0 %5052
        %5056 = vset.pattern.permute.xlu0 0
        %5057 = vperm.xlu0 %5056, %v5039
        %v5058 = vpop.permute.xlu0 %5057
        %v5060 = vadd.f32 %v5032, %v5043
        %v5061 = vadd.f32 %v5033, %v5048
        %v5062 = vadd.f32 %v5034, %v5053
        %v5063 = vadd.f32 %v5035, %v5058
        %v5064 = vmax.f32 %v5060, 0.0
        %v5065 = vmax.f32 %v5061, 0.0
        %v5066 = vmax.f32 %v5062, 0.0
        %v5067 = vmax.f32 %v5063, 0.0
        %v5068 = vsel %vm1563, %v5064, 0.0
        %v5069 = vsel %vm1563, %v5065, 0.0
        %v5070 = vsel %vm1563, %v5066, 0.0
        %v5071 = vsel %vm1563, %v5067, 0.0
        %v5072 = vpack.c.bf16 %v5069, %v5068
        %v5073 = vpack.c.bf16 %v5071, %v5070
        %v5076 = vunpack.c.l.b16 %v5072
        %v5077 = vunpack.c.h.b16 %v5072
        %v5078 = vunpack.c.l.b16 %v5073
        %v5079 = vunpack.c.h.b16 %v5073
        %v5080 = vpack.c.b16 %v5076, %v5076
        %v5081 = vpack.c.b16 %v5077, %v5077
        %v5082 = vpack.c.b16 %v5078, %v5078
        %v5083 = vpack.c.b16 %v5079, %v5079
        %5084 = vrot.lane.b32.xlu0 %v5080, 1
        %v5085 = vpop.permute.xlu0 %5084
        %5086 = vrot.lane.b32.xlu0 %v5081, 1
        %v5087 = vpop.permute.xlu0 %5086
        %5088 = vrot.lane.b32.xlu0 %v5082, 1
        %v5089 = vpop.permute.xlu0 %5088
        %5090 = vrot.lane.b32.xlu0 %v5083, 1
        %v5091 = vpop.permute.xlu0 %5090
        %5096 = vst.msk [vmem:[#allocation3 + $0x20] sm:$0xf] %vm686, %v5085
        %5097 = vst.msk [vmem:[#allocation3 + $0x24] sm:$0xf] %vm686, %v5087
        %5098 = vst.msk [vmem:[#allocation3 + $0x28] sm:$0xf] %vm686, %v5089
        %5099 = vst.msk [vmem:[#allocation3 + $0x2c] sm:$0xf] %vm686, %v5091
        %v5100 = vld [vmem:[#allocation2 + $0x30] sm:$0xf]
        %v5101 = vld [vmem:[#allocation2 + $0x34] sm:$0xf]
        %v5102 = vld [vmem:[#allocation2 + $0x38] sm:$0xf]
        %v5103 = vld [vmem:[#allocation2 + $0x3c] sm:$0xf]
        %v5104 = vld [vmem:[#allocation2 + $0x40] sm:$0xf]
        %v5105 = vld [vmem:[#allocation2 + $0x44] sm:$0xf]
        %v5106 = vld [vmem:[#allocation2 + $0x48] sm:$0xf]
        %v5107 = vld [vmem:[#allocation2 + $0x4c] sm:$0xf]
        %v5108 = vld [vmem:[#allocation2 + $0x50] sm:$0xf]
        %v5109 = vld [vmem:[#allocation2 + $0x54] sm:$0xf]
        %v5110 = vld [vmem:[#allocation2 + $0x58] sm:$0xf]
        %v5111 = vld [vmem:[#allocation2 + $0x5c] sm:$0xf]
        %v5112 = vld [vmem:[%s2] sm:$0xf]
        %v5113 = vld [vmem:[%s2 + $0x4] sm:$0xf]
        %v5114 = vld [vmem:[%s2 + $0x8] sm:$0xf]
        %v5115 = vld [vmem:[%s2 + $0xc] sm:$0xf]
        %v5116 = vld [vmem:[%s4029] sm:$0xf]
        %v5117 = vld [vmem:[%s4029 + $0x4] sm:$0xf]
        %v5118 = vld [vmem:[%s4029 + $0x8] sm:$0xf]
        %v5119 = vld [vmem:[%s4029 + $0xc] sm:$0xf]
        %v5124 = vunpack.c.l.b16 %v5116
        %v5125 = vunpack.c.l.b16 %v5117
        %v5126 = vunpack.c.l.b16 %v5118
        %v5127 = vunpack.c.l.b16 %v5119
        %v5128 = vpack.c.b16 %v5125, %v5124
        %v5129 = vpack.c.b16 %v5127, %v5126
        %v5142 = vunpack.c.l.b16 %v5100
        %v5143 = vunpack.c.l.b16 %v5101
        %v5144 = vunpack.c.l.b16 %v5102
        %v5145 = vunpack.c.l.b16 %v5103
        %v5146 = vunpack.c.l.b16 %v5104
        %v5147 = vunpack.c.l.b16 %v5105
        %v5148 = vunpack.c.l.b16 %v5106
        %v5149 = vunpack.c.l.b16 %v5107
        %v5150 = vunpack.c.l.b16 %v5108
        %v5151 = vunpack.c.l.b16 %v5109
        %v5152 = vunpack.c.l.b16 %v5110
        %v5153 = vunpack.c.l.b16 %v5111
        %v5154 = vpack.c.b16 %v5143, %v5142
        %v5155 = vpack.c.b16 %v5145, %v5144
        %v5156 = vpack.c.b16 %v5147, %v5146
        %v5157 = vpack.c.b16 %v5149, %v5148
        %v5158 = vpack.c.b16 %v5151, %v5150
        %v5159 = vpack.c.b16 %v5153, %v5152
        %5160 = vrot.lane.b32.xlu0 %v5154, 127
        %v5161 = vpop.permute.xlu0 %5160
        %5162 = vrot.lane.b32.xlu0 %v5155, 127
        %v5163 = vpop.permute.xlu0 %5162
        %5164 = vrot.lane.b32.xlu0 %v5156, 127
        %v5165 = vpop.permute.xlu0 %5164
        %5166 = vrot.lane.b32.xlu0 %v5157, 127
        %v5167 = vpop.permute.xlu0 %5166
        %5168 = vrot.lane.b32.xlu0 %v5158, 127
        %v5169 = vpop.permute.xlu0 %5168
        %5170 = vrot.lane.b32.xlu0 %v5159, 127
        %v5171 = vpop.permute.xlu0 %5170
        %v5179 = vsel %vm4092, %v5128, 0
        %v5182 = vsel %vm4092, %v5129, 0
        %5184 = vmatprep.subr.bf16.mxu0 0
        %5185 = vmatpush1.bf16.msra.mxu0 0
        %5186 = vmatprep.subr.bf16.mxu0 0
        %5187 = vmatpush1.bf16.msra.mxu0 0
        %5188 = vmatprep.subr.bf16.mxu0 0
        %5189 = vmatpush1.bf16.msra.mxu0 %v5171
        %5190 = vmatprep.subr.bf16.mxu0 0
        %5191 = vmatpush1.bf16.msra.mxu0 %v5169
        %5192 = vmatprep.subr.bf16.mxu0 0
        %5193 = vmatpush1.bf16.msra.mxu0 %v5167
        %5194 = vmatprep.subr.bf16.mxu0 0
        %5195 = vmatpush1.bf16.msra.mxu0 %v5165
        %5196 = vmatprep.subr.bf16.mxu0 0
        %5197 = vmatpush1.bf16.msra.mxu0 %v5163
        %5198 = vmatprep.subr.bf16.mxu0 0
        %5199 = vmatpush1.bf16.msra.mxu0 %v5161
        %5200 = vmatprep.subr.bf16.mxu0 0
        %5201 = vmatpush2.bf16.msra.mxu0 0
        %5202 = vmatprep.subr.bf16.mxu0 0
        %5203 = vmatpush2.bf16.msra.mxu0 0
        %5204 = vmatprep.subr.bf16.mxu0 0
        %5205 = vmatpush2.bf16.msra.mxu0 0
        %5206 = vmatprep.subr.bf16.mxu0 0
        %5207 = vmatpush2.bf16.msra.mxu0 0
        %5208 = vmatprep.subr.bf16.mxu0 0
        %5209 = vmatpush2.bf16.msra.mxu0 0
        %5210 = vmatprep.subr.bf16.mxu0 0
        %5211 = vmatpush2.bf16.msra.mxu0 0
        %5212 = vmatprep.subr.bf16.mxu0 0
        %5213 = vmatpush2.bf16.msra.mxu0 0
        %5214 = vmatprep.subr.bf16.mxu0 0
        %5215 = vmatpush2.bf16.msra.mxu0 0
        %5216 = vmatprep.mubr.bf16.mxu0 0
        %5217 = vmatmul.mubr.bf16.gmra.mxu0 %v5179
        %v5218 = vpop.f32.mrf.mxu0
        %v5219 = vadd.f32 0.0, %v5218
        %v5220 = vpop.f32.mrf.mxu0
        %v5221 = vpop.f32.mrf.mxu0
        %v5222 = vadd.f32 0.0, %v5221
        %v5223 = vpop.f32.mrf.mxu0
        %5224 = vmatprep.mubr.bf16.mxu0 0
        %5225 = vmatmul.mubr.bf16.gmra.mxu0 %v5182
        %v5226 = vpop.f32.mrf.mxu0
        %v5227 = vadd.f32 0.0, %v5226
        %v5228 = vpop.f32.mrf.mxu0
        %v5229 = vpop.f32.mrf.mxu0
        %v5230 = vadd.f32 0.0, %v5229
        %v5231 = vpop.f32.mrf.mxu0
        %5232 = vdwg.mxu0
        %v5237 = vunpack.c.l.b16 %v5112
        %v5238 = vunpack.c.l.b16 %v5113
        %v5239 = vunpack.c.l.b16 %v5114
        %v5240 = vunpack.c.l.b16 %v5115
        %v5241 = vpack.c.b16 %v5238, %v5237
        %v5242 = vpack.c.b16 %v5240, %v5239
        %v5250 = vsel %vm4092, %v5241, 0
        %v5253 = vsel %vm4092, %v5242, 0
        %5255 = vmatprep.subr.bf16.mxu0 0
        %5256 = vmatpush1.bf16.msra.mxu0 0
        %5257 = vmatprep.subr.bf16.mxu0 0
        %5258 = vmatpush1.bf16.msra.mxu0 0
        %5259 = vmatprep.subr.bf16.mxu0 0
        %5260 = vmatpush1.bf16.msra.mxu0 %v5159
        %5261 = vmatprep.subr.bf16.mxu0 0
        %5262 = vmatpush1.bf16.msra.mxu0 %v5158
        %5263 = vmatprep.subr.bf16.mxu0 0
        %5264 = vmatpush1.bf16.msra.mxu0 %v5157
        %5265 = vmatprep.subr.bf16.mxu0 0
        %5266 = vmatpush1.bf16.msra.mxu0 %v5156
        %5267 = vmatprep.subr.bf16.mxu0 0
        %5268 = vmatpush1.bf16.msra.mxu0 %v5155
        %5269 = vmatprep.subr.bf16.mxu0 0
        %5270 = vmatpush1.bf16.msra.mxu0 %v5154
        %5271 = vmatprep.subr.bf16.mxu0 0
        %5272 = vmatpush2.bf16.msra.mxu0 0
        %5273 = vmatprep.subr.bf16.mxu0 0
        %5274 = vmatpush2.bf16.msra.mxu0 0
        %5275 = vmatprep.subr.bf16.mxu0 0
        %5276 = vmatpush2.bf16.msra.mxu0 0
        %5277 = vmatprep.subr.bf16.mxu0 0
        %5278 = vmatpush2.bf16.msra.mxu0 0
        %5279 = vmatprep.subr.bf16.mxu0 0
        %5280 = vmatpush2.bf16.msra.mxu0 0
        %5281 = vmatprep.subr.bf16.mxu0 0
        %5282 = vmatpush2.bf16.msra.mxu0 0
        %5283 = vmatprep.subr.bf16.mxu0 0
        %5284 = vmatpush2.bf16.msra.mxu0 0
        %5285 = vmatprep.subr.bf16.mxu0 0
        %5286 = vmatpush2.bf16.msra.mxu0 0
        %5287 = vmatprep.mubr.bf16.mxu0 0
        %5288 = vmatmul.mubr.bf16.gmra.mxu0 %v5250
        %v5289 = vpop.f32.mrf.mxu0
        %v5290 = vadd.f32 %v5219, %v5289
        %v5291 = vpop.f32.mrf.mxu0
        %v5292 = vpop.f32.mrf.mxu0
        %v5293 = vadd.f32 %v5222, %v5292
        %v5294 = vpop.f32.mrf.mxu0
        %5295 = vmatprep.mubr.bf16.mxu0 0
        %5296 = vmatmul.mubr.bf16.gmra.mxu0 %v5253
        %v5297 = vpop.f32.mrf.mxu0
        %v5298 = vadd.f32 %v5227, %v5297
        %v5299 = vpop.f32.mrf.mxu0
        %v5300 = vpop.f32.mrf.mxu0
        %v5301 = vadd.f32 %v5230, %v5300
        %v5302 = vpop.f32.mrf.mxu0
        %5303 = vdwg.mxu0
        %v5304 = vld [vmem:[%s4219] sm:$0xf]
        %v5305 = vld [vmem:[%s4219 + $0x4] sm:$0xf]
        %v5306 = vld [vmem:[%s4219 + $0x8] sm:$0xf]
        %v5307 = vld [vmem:[%s4219 + $0xc] sm:$0xf]
        %v5312 = vunpack.c.l.b16 %v5304
        %v5313 = vunpack.c.l.b16 %v5305
        %v5314 = vunpack.c.l.b16 %v5306
        %v5315 = vunpack.c.l.b16 %v5307
        %v5316 = vpack.c.b16 %v5313, %v5312
        %v5317 = vpack.c.b16 %v5315, %v5314
        %5318 = vrot.lane.b32.xlu0 %v5154, 126
        %v5319 = vpop.permute.xlu0 %5318
        %5320 = vrot.lane.b32.xlu0 %v5155, 126
        %v5321 = vpop.permute.xlu0 %5320
        %5322 = vrot.lane.b32.xlu0 %v5156, 126
        %v5323 = vpop.permute.xlu0 %5322
        %5324 = vrot.lane.b32.xlu0 %v5157, 126
        %v5325 = vpop.permute.xlu0 %5324
        %5326 = vrot.lane.b32.xlu0 %v5158, 126
        %v5327 = vpop.permute.xlu0 %5326
        %5328 = vrot.lane.b32.xlu0 %v5159, 126
        %v5329 = vpop.permute.xlu0 %5328
        %v5337 = vsel %vm4092, %v5316, 0
        %v5340 = vsel %vm4092, %v5317, 0
        %5342 = vmatprep.subr.bf16.mxu0 0
        %5343 = vmatpush1.bf16.msra.mxu0 0
        %5344 = vmatprep.subr.bf16.mxu0 0
        %5345 = vmatpush1.bf16.msra.mxu0 0
        %5346 = vmatprep.subr.bf16.mxu0 0
        %5347 = vmatpush1.bf16.msra.mxu0 %v5329
        %5348 = vmatprep.subr.bf16.mxu0 0
        %5349 = vmatpush1.bf16.msra.mxu0 %v5327
        %5350 = vmatprep.subr.bf16.mxu0 0
        %5351 = vmatpush1.bf16.msra.mxu0 %v5325
        %5352 = vmatprep.subr.bf16.mxu0 0
        %5353 = vmatpush1.bf16.msra.mxu0 %v5323
        %5354 = vmatprep.subr.bf16.mxu0 0
        %5355 = vmatpush1.bf16.msra.mxu0 %v5321
        %5356 = vmatprep.subr.bf16.mxu0 0
        %5357 = vmatpush1.bf16.msra.mxu0 %v5319
        %5358 = vmatprep.subr.bf16.mxu0 0
        %5359 = vmatpush2.bf16.msra.mxu0 0
        %5360 = vmatprep.subr.bf16.mxu0 0
        %5361 = vmatpush2.bf16.msra.mxu0 0
        %5362 = vmatprep.subr.bf16.mxu0 0
        %5363 = vmatpush2.bf16.msra.mxu0 0
        %5364 = vmatprep.subr.bf16.mxu0 0
        %5365 = vmatpush2.bf16.msra.mxu0 0
        %5366 = vmatprep.subr.bf16.mxu0 0
        %5367 = vmatpush2.bf16.msra.mxu0 0
        %5368 = vmatprep.subr.bf16.mxu0 0
        %5369 = vmatpush2.bf16.msra.mxu0 0
        %5370 = vmatprep.subr.bf16.mxu0 0
        %5371 = vmatpush2.bf16.msra.mxu0 0
        %5372 = vmatprep.subr.bf16.mxu0 0
        %5373 = vmatpush2.bf16.msra.mxu0 0
        %5374 = vmatprep.mubr.bf16.mxu0 0
        %5375 = vmatmul.mubr.bf16.gmra.mxu0 %v5337
        %v5376 = vpop.f32.mrf.mxu0
        %v5377 = vadd.f32 0.0, %v5376
        %v5378 = vpop.f32.mrf.mxu0
        %v5379 = vpop.f32.mrf.mxu0
        %v5380 = vadd.f32 0.0, %v5379
        %v5381 = vpop.f32.mrf.mxu0
        %5382 = vmatprep.mubr.bf16.mxu0 0
        %5383 = vmatmul.mubr.bf16.gmra.mxu0 %v5340
        %v5384 = vpop.f32.mrf.mxu0
        %v5385 = vadd.f32 0.0, %v5384
        %v5386 = vpop.f32.mrf.mxu0
        %v5387 = vpop.f32.mrf.mxu0
        %v5388 = vadd.f32 0.0, %v5387
        %v5389 = vpop.f32.mrf.mxu0
        %5390 = vdwg.mxu0
        %v5391 = vadd.f32 %v5290, %v5377
        %v5392 = vadd.f32 %v5293, %v5380
        %v5393 = vadd.f32 %v5298, %v5385
        %v5394 = vadd.f32 %v5301, %v5388
        %v5395 = vld [vmem:[%s5] sm:$0xff]
        %v5396 = vld [vmem:[%s5 + $0x8] sm:$0xff]
        %v5397 = vld [vmem:[%s5 + $0x10] sm:$0xff]
        %v5398 = vld [vmem:[%s5 + $0x18] sm:$0xff]
        %5400 = vset.pattern.permute.xlu0 0
        %5401 = vperm.xlu0 %5400, %v5395
        %v5402 = vpop.permute.xlu0 %5401
        %5405 = vset.pattern.permute.xlu0 0
        %5406 = vperm.xlu0 %5405, %v5396
        %v5407 = vpop.permute.xlu0 %5406
        %5410 = vset.pattern.permute.xlu0 0
        %5411 = vperm.xlu0 %5410, %v5397
        %v5412 = vpop.permute.xlu0 %5411
        %5415 = vset.pattern.permute.xlu0 0
        %5416 = vperm.xlu0 %5415, %v5398
        %v5417 = vpop.permute.xlu0 %5416
        %v5419 = vadd.f32 %v5391, %v5402
        %v5420 = vadd.f32 %v5392, %v5407
        %v5421 = vadd.f32 %v5393, %v5412
        %v5422 = vadd.f32 %v5394, %v5417
        %v5423 = vmax.f32 %v5419, 0.0
        %v5424 = vmax.f32 %v5420, 0.0
        %v5425 = vmax.f32 %v5421, 0.0
        %v5426 = vmax.f32 %v5422, 0.0
        %v5427 = vsel %vm1865, %v5423, 0.0
        %v5428 = vsel %vm1865, %v5424, 0.0
        %v5429 = vsel %vm1865, %v5425, 0.0
        %v5430 = vsel %vm1865, %v5426, 0.0
        %v5431 = vpack.c.bf16 %v5428, %v5427
        %v5432 = vpack.c.bf16 %v5430, %v5429
        %v5435 = vunpack.c.l.b16 %v5431
        %v5436 = vunpack.c.h.b16 %v5431
        %v5437 = vunpack.c.l.b16 %v5432
        %v5438 = vunpack.c.h.b16 %v5432
        %v5439 = vpack.c.b16 %v5435, %v5435
        %v5440 = vpack.c.b16 %v5436, %v5436
        %v5441 = vpack.c.b16 %v5437, %v5437
        %v5442 = vpack.c.b16 %v5438, %v5438
        %5443 = vrot.lane.b32.xlu0 %v5439, 1
        %v5444 = vpop.permute.xlu0 %5443
        %5445 = vrot.lane.b32.xlu0 %v5440, 1
        %v5446 = vpop.permute.xlu0 %5445
        %5447 = vrot.lane.b32.xlu0 %v5441, 1
        %v5448 = vpop.permute.xlu0 %5447
        %5449 = vrot.lane.b32.xlu0 %v5442, 1
        %v5450 = vpop.permute.xlu0 %5449
        %5455 = vst.msk [vmem:[#allocation3 + $0x30] sm:$0xf] %vm686, %v5444
        %5456 = vst.msk [vmem:[#allocation3 + $0x34] sm:$0xf] %vm686, %v5446
        %5457 = vst.msk [vmem:[#allocation3 + $0x38] sm:$0xf] %vm686, %v5448
        %5458 = vst.msk [vmem:[#allocation3 + $0x3c] sm:$0xf] %vm686, %v5450
        %v5459 = vld [vmem:[#allocation2 + $0x40] sm:$0xf]
        %v5460 = vld [vmem:[#allocation2 + $0x44] sm:$0xf]
        %v5461 = vld [vmem:[#allocation2 + $0x48] sm:$0xf]
        %v5462 = vld [vmem:[#allocation2 + $0x4c] sm:$0xf]
        %v5463 = vld [vmem:[#allocation2 + $0x50] sm:$0xf]
        %v5464 = vld [vmem:[#allocation2 + $0x54] sm:$0xf]
        %v5465 = vld [vmem:[#allocation2 + $0x58] sm:$0xf]
        %v5466 = vld [vmem:[#allocation2 + $0x5c] sm:$0xf]
        %v5467 = vld [vmem:[#allocation2 + $0x60] sm:$0xf]
        %v5468 = vld [vmem:[#allocation2 + $0x64] sm:$0xf]
        %v5469 = vld [vmem:[#allocation2 + $0x68] sm:$0xf]
        %v5470 = vld [vmem:[#allocation2 + $0x6c] sm:$0xf]
        %v5471 = vld [vmem:[%s2] sm:$0xf]
        %v5472 = vld [vmem:[%s2 + $0x4] sm:$0xf]
        %v5473 = vld [vmem:[%s2 + $0x8] sm:$0xf]
        %v5474 = vld [vmem:[%s2 + $0xc] sm:$0xf]
        %v5475 = vld [vmem:[%s4029] sm:$0xf]
        %v5476 = vld [vmem:[%s4029 + $0x4] sm:$0xf]
        %v5477 = vld [vmem:[%s4029 + $0x8] sm:$0xf]
        %v5478 = vld [vmem:[%s4029 + $0xc] sm:$0xf]
        %v5483 = vunpack.c.l.b16 %v5475
        %v5484 = vunpack.c.l.b16 %v5476
        %v5485 = vunpack.c.l.b16 %v5477
        %v5486 = vunpack.c.l.b16 %v5478
        %v5487 = vpack.c.b16 %v5484, %v5483
        %v5488 = vpack.c.b16 %v5486, %v5485
        %v5501 = vunpack.c.l.b16 %v5459
        %v5502 = vunpack.c.l.b16 %v5460
        %v5503 = vunpack.c.l.b16 %v5461
        %v5504 = vunpack.c.l.b16 %v5462
        %v5505 = vunpack.c.l.b16 %v5463
        %v5506 = vunpack.c.l.b16 %v5464
        %v5507 = vunpack.c.l.b16 %v5465
        %v5508 = vunpack.c.l.b16 %v5466
        %v5509 = vunpack.c.l.b16 %v5467
        %v5510 = vunpack.c.l.b16 %v5468
        %v5511 = vunpack.c.l.b16 %v5469
        %v5512 = vunpack.c.l.b16 %v5470
        %v5513 = vpack.c.b16 %v5502, %v5501
        %v5514 = vpack.c.b16 %v5504, %v5503
        %v5515 = vpack.c.b16 %v5506, %v5505
        %v5516 = vpack.c.b16 %v5508, %v5507
        %v5517 = vpack.c.b16 %v5510, %v5509
        %v5518 = vpack.c.b16 %v5512, %v5511
        %5519 = vrot.lane.b32.xlu0 %v5513, 127
        %v5520 = vpop.permute.xlu0 %5519
        %5521 = vrot.lane.b32.xlu0 %v5514, 127
        %v5522 = vpop.permute.xlu0 %5521
        %5523 = vrot.lane.b32.xlu0 %v5515, 127
        %v5524 = vpop.permute.xlu0 %5523
        %5525 = vrot.lane.b32.xlu0 %v5516, 127
        %v5526 = vpop.permute.xlu0 %5525
        %5527 = vrot.lane.b32.xlu0 %v5517, 127
        %v5528 = vpop.permute.xlu0 %5527
        %5529 = vrot.lane.b32.xlu0 %v5518, 127
        %v5530 = vpop.permute.xlu0 %5529
        %v5538 = vsel %vm4092, %v5487, 0
        %v5541 = vsel %vm4092, %v5488, 0
        %5543 = vmatprep.subr.bf16.mxu0 0
        %5544 = vmatpush1.bf16.msra.mxu0 0
        %5545 = vmatprep.subr.bf16.mxu0 0
        %5546 = vmatpush1.bf16.msra.mxu0 0
        %5547 = vmatprep.subr.bf16.mxu0 0
        %5548 = vmatpush1.bf16.msra.mxu0 %v5530
        %5549 = vmatprep.subr.bf16.mxu0 0
        %5550 = vmatpush1.bf16.msra.mxu0 %v5528
        %5551 = vmatprep.subr.bf16.mxu0 0
        %5552 = vmatpush1.bf16.msra.mxu0 %v5526
        %5553 = vmatprep.subr.bf16.mxu0 0
        %5554 = vmatpush1.bf16.msra.mxu0 %v5524
        %5555 = vmatprep.subr.bf16.mxu0 0
        %5556 = vmatpush1.bf16.msra.mxu0 %v5522
        %5557 = vmatprep.subr.bf16.mxu0 0
        %5558 = vmatpush1.bf16.msra.mxu0 %v5520
        %5559 = vmatprep.subr.bf16.mxu0 0
        %5560 = vmatpush2.bf16.msra.mxu0 0
        %5561 = vmatprep.subr.bf16.mxu0 0
        %5562 = vmatpush2.bf16.msra.mxu0 0
        %5563 = vmatprep.subr.bf16.mxu0 0
        %5564 = vmatpush2.bf16.msra.mxu0 0
        %5565 = vmatprep.subr.bf16.mxu0 0
        %5566 = vmatpush2.bf16.msra.mxu0 0
        %5567 = vmatprep.subr.bf16.mxu0 0
        %5568 = vmatpush2.bf16.msra.mxu0 0
        %5569 = vmatprep.subr.bf16.mxu0 0
        %5570 = vmatpush2.bf16.msra.mxu0 0
        %5571 = vmatprep.subr.bf16.mxu0 0
        %5572 = vmatpush2.bf16.msra.mxu0 0
        %5573 = vmatprep.subr.bf16.mxu0 0
        %5574 = vmatpush2.bf16.msra.mxu0 0
        %5575 = vmatprep.mubr.bf16.mxu0 0
        %5576 = vmatmul.mubr.bf16.gmra.mxu0 %v5538
        %v5577 = vpop.f32.mrf.mxu0
        %v5578 = vadd.f32 0.0, %v5577
        %v5579 = vpop.f32.mrf.mxu0
        %v5580 = vpop.f32.mrf.mxu0
        %v5581 = vadd.f32 0.0, %v5580
        %v5582 = vpop.f32.mrf.mxu0
        %5583 = vmatprep.mubr.bf16.mxu0 0
        %5584 = vmatmul.mubr.bf16.gmra.mxu0 %v5541
        %v5585 = vpop.f32.mrf.mxu0
        %v5586 = vadd.f32 0.0, %v5585
        %v5587 = vpop.f32.mrf.mxu0
        %v5588 = vpop.f32.mrf.mxu0
        %v5589 = vadd.f32 0.0, %v5588
        %v5590 = vpop.f32.mrf.mxu0
        %5591 = vdwg.mxu0
        %v5596 = vunpack.c.l.b16 %v5471
        %v5597 = vunpack.c.l.b16 %v5472
        %v5598 = vunpack.c.l.b16 %v5473
        %v5599 = vunpack.c.l.b16 %v5474
        %v5600 = vpack.c.b16 %v5597, %v5596
        %v5601 = vpack.c.b16 %v5599, %v5598
        %v5609 = vsel %vm4092, %v5600, 0
        %v5612 = vsel %vm4092, %v5601, 0
        %5614 = vmatprep.subr.bf16.mxu0 0
        %5615 = vmatpush1.bf16.msra.mxu0 0
        %5616 = vmatprep.subr.bf16.mxu0 0
        %5617 = vmatpush1.bf16.msra.mxu0 0
        %5618 = vmatprep.subr.bf16.mxu0 0
        %5619 = vmatpush1.bf16.msra.mxu0 %v5518
        %5620 = vmatprep.subr.bf16.mxu0 0
        %5621 = vmatpush1.bf16.msra.mxu0 %v5517
        %5622 = vmatprep.subr.bf16.mxu0 0
        %5623 = vmatpush1.bf16.msra.mxu0 %v5516
        %5624 = vmatprep.subr.bf16.mxu0 0
        %5625 = vmatpush1.bf16.msra.mxu0 %v5515
        %5626 = vmatprep.subr.bf16.mxu0 0
        %5627 = vmatpush1.bf16.msra.mxu0 %v5514
        %5628 = vmatprep.subr.bf16.mxu0 0
        %5629 = vmatpush1.bf16.msra.mxu0 %v5513
        %5630 = vmatprep.subr.bf16.mxu0 0
        %5631 = vmatpush2.bf16.msra.mxu0 0
        %5632 = vmatprep.subr.bf16.mxu0 0
        %5633 = vmatpush2.bf16.msra.mxu0 0
        %5634 = vmatprep.subr.bf16.mxu0 0
        %5635 = vmatpush2.bf16.msra.mxu0 0
        %5636 = vmatprep.subr.bf16.mxu0 0
        %5637 = vmatpush2.bf16.msra.mxu0 0
        %5638 = vmatprep.subr.bf16.mxu0 0
        %5639 = vmatpush2.bf16.msra.mxu0 0
        %5640 = vmatprep.subr.bf16.mxu0 0
        %5641 = vmatpush2.bf16.msra.mxu0 0
        %5642 = vmatprep.subr.bf16.mxu0 0
        %5643 = vmatpush2.bf16.msra.mxu0 0
        %5644 = vmatprep.subr.bf16.mxu0 0
        %5645 = vmatpush2.bf16.msra.mxu0 0
        %5646 = vmatprep.mubr.bf16.mxu0 0
        %5647 = vmatmul.mubr.bf16.gmra.mxu0 %v5609
        %v5648 = vpop.f32.mrf.mxu0
        %v5649 = vadd.f32 %v5578, %v5648
        %v5650 = vpop.f32.mrf.mxu0
        %v5651 = vpop.f32.mrf.mxu0
        %v5652 = vadd.f32 %v5581, %v5651
        %v5653 = vpop.f32.mrf.mxu0
        %5654 = vmatprep.mubr.bf16.mxu0 0
        %5655 = vmatmul.mubr.bf16.gmra.mxu0 %v5612
        %v5656 = vpop.f32.mrf.mxu0
        %v5657 = vadd.f32 %v5586, %v5656
        %v5658 = vpop.f32.mrf.mxu0
        %v5659 = vpop.f32.mrf.mxu0
        %v5660 = vadd.f32 %v5589, %v5659
        %v5661 = vpop.f32.mrf.mxu0
        %5662 = vdwg.mxu0
        %v5663 = vld [vmem:[%s4219] sm:$0xf]
        %v5664 = vld [vmem:[%s4219 + $0x4] sm:$0xf]
        %v5665 = vld [vmem:[%s4219 + $0x8] sm:$0xf]
        %v5666 = vld [vmem:[%s4219 + $0xc] sm:$0xf]
        %v5671 = vunpack.c.l.b16 %v5663
        %v5672 = vunpack.c.l.b16 %v5664
        %v5673 = vunpack.c.l.b16 %v5665
        %v5674 = vunpack.c.l.b16 %v5666
        %v5675 = vpack.c.b16 %v5672, %v5671
        %v5676 = vpack.c.b16 %v5674, %v5673
        %5677 = vrot.lane.b32.xlu0 %v5513, 126
        %v5678 = vpop.permute.xlu0 %5677
        %5679 = vrot.lane.b32.xlu0 %v5514, 126
        %v5680 = vpop.permute.xlu0 %5679
        %5681 = vrot.lane.b32.xlu0 %v5515, 126
        %v5682 = vpop.permute.xlu0 %5681
        %5683 = vrot.lane.b32.xlu0 %v5516, 126
        %v5684 = vpop.permute.xlu0 %5683
        %5685 = vrot.lane.b32.xlu0 %v5517, 126
        %v5686 = vpop.permute.xlu0 %5685
        %5687 = vrot.lane.b32.xlu0 %v5518, 126
        %v5688 = vpop.permute.xlu0 %5687
        %v5696 = vsel %vm4092, %v5675, 0
        %v5699 = vsel %vm4092, %v5676, 0
        %5701 = vmatprep.subr.bf16.mxu0 0
        %5702 = vmatpush1.bf16.msra.mxu0 0
        %5703 = vmatprep.subr.bf16.mxu0 0
        %5704 = vmatpush1.bf16.msra.mxu0 0
        %5705 = vmatprep.subr.bf16.mxu0 0
        %5706 = vmatpush1.bf16.msra.mxu0 %v5688
        %5707 = vmatprep.subr.bf16.mxu0 0
        %5708 = vmatpush1.bf16.msra.mxu0 %v5686
        %5709 = vmatprep.subr.bf16.mxu0 0
        %5710 = vmatpush1.bf16.msra.mxu0 %v5684
        %5711 = vmatprep.subr.bf16.mxu0 0
        %5712 = vmatpush1.bf16.msra.mxu0 %v5682
        %5713 = vmatprep.subr.bf16.mxu0 0
        %5714 = vmatpush1.bf16.msra.mxu0 %v5680
        %5715 = vmatprep.subr.bf16.mxu0 0
        %5716 = vmatpush1.bf16.msra.mxu0 %v5678
        %5717 = vmatprep.subr.bf16.mxu0 0
        %5718 = vmatpush2.bf16.msra.mxu0 0
        %5719 = vmatprep.subr.bf16.mxu0 0
        %5720 = vmatpush2.bf16.msra.mxu0 0
        %5721 = vmatprep.subr.bf16.mxu0 0
        %5722 = vmatpush2.bf16.msra.mxu0 0
        %5723 = vmatprep.subr.bf16.mxu0 0
        %5724 = vmatpush2.bf16.msra.mxu0 0
        %5725 = vmatprep.subr.bf16.mxu0 0
        %5726 = vmatpush2.bf16.msra.mxu0 0
        %5727 = vmatprep.subr.bf16.mxu0 0
        %5728 = vmatpush2.bf16.msra.mxu0 0
        %5729 = vmatprep.subr.bf16.mxu0 0
        %5730 = vmatpush2.bf16.msra.mxu0 0
        %5731 = vmatprep.subr.bf16.mxu0 0
        %5732 = vmatpush2.bf16.msra.mxu0 0
        %5733 = vmatprep.mubr.bf16.mxu0 0
        %5734 = vmatmul.mubr.bf16.gmra.mxu0 %v5696
        %v5735 = vpop.f32.mrf.mxu0
        %v5736 = vadd.f32 0.0, %v5735
        %v5737 = vpop.f32.mrf.mxu0
        %v5738 = vpop.f32.mrf.mxu0
        %v5739 = vadd.f32 0.0, %v5738
        %v5740 = vpop.f32.mrf.mxu0
        %5741 = vmatprep.mubr.bf16.mxu0 0
        %5742 = vmatmul.mubr.bf16.gmra.mxu0 %v5699
        %v5743 = vpop.f32.mrf.mxu0
        %v5744 = vadd.f32 0.0, %v5743
        %v5745 = vpop.f32.mrf.mxu0
        %v5746 = vpop.f32.mrf.mxu0
        %v5747 = vadd.f32 0.0, %v5746
        %v5748 = vpop.f32.mrf.mxu0
        %5749 = vdwg.mxu0
        %v5750 = vadd.f32 %v5649, %v5736
        %v5751 = vadd.f32 %v5652, %v5739
        %v5752 = vadd.f32 %v5657, %v5744
        %v5753 = vadd.f32 %v5660, %v5747
        %v5754 = vld [vmem:[%s5] sm:$0xff]
        %v5755 = vld [vmem:[%s5 + $0x8] sm:$0xff]
        %v5756 = vld [vmem:[%s5 + $0x10] sm:$0xff]
        %v5757 = vld [vmem:[%s5 + $0x18] sm:$0xff]
        %5759 = vset.pattern.permute.xlu0 0
        %5760 = vperm.xlu0 %5759, %v5754
        %v5761 = vpop.permute.xlu0 %5760
        %5764 = vset.pattern.permute.xlu0 0
        %5765 = vperm.xlu0 %5764, %v5755
        %v5766 = vpop.permute.xlu0 %5765
        %5769 = vset.pattern.permute.xlu0 0
        %5770 = vperm.xlu0 %5769, %v5756
        %v5771 = vpop.permute.xlu0 %5770
        %5774 = vset.pattern.permute.xlu0 0
        %5775 = vperm.xlu0 %5774, %v5757
        %v5776 = vpop.permute.xlu0 %5775
        %v5778 = vadd.f32 %v5750, %v5761
        %v5779 = vadd.f32 %v5751, %v5766
        %v5780 = vadd.f32 %v5752, %v5771
        %v5781 = vadd.f32 %v5753, %v5776
        %v5782 = vmax.f32 %v5778, 0.0
        %v5783 = vmax.f32 %v5779, 0.0
        %v5784 = vmax.f32 %v5780, 0.0
        %v5785 = vmax.f32 %v5781, 0.0
        %v5786 = vsel %vm2167, %v5782, 0.0
        %v5787 = vsel %vm2167, %v5783, 0.0
        %v5788 = vsel %vm2167, %v5784, 0.0
        %v5789 = vsel %vm2167, %v5785, 0.0
        %v5790 = vpack.c.bf16 %v5787, %v5786
        %v5791 = vpack.c.bf16 %v5789, %v5788
        %v5794 = vunpack.c.l.b16 %v5790
        %v5795 = vunpack.c.h.b16 %v5790
        %v5796 = vunpack.c.l.b16 %v5791
        %v5797 = vunpack.c.h.b16 %v5791
        %v5798 = vpack.c.b16 %v5794, %v5794
        %v5799 = vpack.c.b16 %v5795, %v5795
        %v5800 = vpack.c.b16 %v5796, %v5796
        %v5801 = vpack.c.b16 %v5797, %v5797
        %5802 = vrot.lane.b32.xlu0 %v5798, 1
        %v5803 = vpop.permute.xlu0 %5802
        %5804 = vrot.lane.b32.xlu0 %v5799, 1
        %v5805 = vpop.permute.xlu0 %5804
        %5806 = vrot.lane.b32.xlu0 %v5800, 1
        %v5807 = vpop.permute.xlu0 %5806
        %5808 = vrot.lane.b32.xlu0 %v5801, 1
        %v5809 = vpop.permute.xlu0 %5808
        %5814 = vst.msk [vmem:[#allocation3 + $0x40] sm:$0xf] %vm686, %v5803
        %5815 = vst.msk [vmem:[#allocation3 + $0x44] sm:$0xf] %vm686, %v5805
        %5816 = vst.msk [vmem:[#allocation3 + $0x48] sm:$0xf] %vm686, %v5807
        %5817 = vst.msk [vmem:[#allocation3 + $0x4c] sm:$0xf] %vm686, %v5809
        %v5818 = vld [vmem:[#allocation2 + $0x50] sm:$0xf]
        %v5819 = vld [vmem:[#allocation2 + $0x54] sm:$0xf]
        %v5820 = vld [vmem:[#allocation2 + $0x58] sm:$0xf]
        %v5821 = vld [vmem:[#allocation2 + $0x5c] sm:$0xf]
        %v5822 = vld [vmem:[#allocation2 + $0x60] sm:$0xf]
        %v5823 = vld [vmem:[#allocation2 + $0x64] sm:$0xf]
        %v5824 = vld [vmem:[#allocation2 + $0x68] sm:$0xf]
        %v5825 = vld [vmem:[#allocation2 + $0x6c] sm:$0xf]
        %v5826 = vld [vmem:[#allocation2 + $0x70] sm:$0xf]
        %v5827 = vld [vmem:[#allocation2 + $0x74] sm:$0xf]
        %v5828 = vld [vmem:[#allocation2 + $0x78] sm:$0xf]
        %v5829 = vld [vmem:[#allocation2 + $0x7c] sm:$0xf]
        %v5830 = vld [vmem:[%s2] sm:$0xf]
        %v5831 = vld [vmem:[%s2 + $0x4] sm:$0xf]
        %v5832 = vld [vmem:[%s2 + $0x8] sm:$0xf]
        %v5833 = vld [vmem:[%s2 + $0xc] sm:$0xf]
        %v5834 = vld [vmem:[%s4029] sm:$0xf]
        %v5835 = vld [vmem:[%s4029 + $0x4] sm:$0xf]
        %v5836 = vld [vmem:[%s4029 + $0x8] sm:$0xf]
        %v5837 = vld [vmem:[%s4029 + $0xc] sm:$0xf]
        %v5842 = vunpack.c.l.b16 %v5834
        %v5843 = vunpack.c.l.b16 %v5835
        %v5844 = vunpack.c.l.b16 %v5836
        %v5845 = vunpack.c.l.b16 %v5837
        %v5846 = vpack.c.b16 %v5843, %v5842
        %v5847 = vpack.c.b16 %v5845, %v5844
        %v5860 = vunpack.c.l.b16 %v5818
        %v5861 = vunpack.c.l.b16 %v5819
        %v5862 = vunpack.c.l.b16 %v5820
        %v5863 = vunpack.c.l.b16 %v5821
        %v5864 = vunpack.c.l.b16 %v5822
        %v5865 = vunpack.c.l.b16 %v5823
        %v5866 = vunpack.c.l.b16 %v5824
        %v5867 = vunpack.c.l.b16 %v5825
        %v5868 = vunpack.c.l.b16 %v5826
        %v5869 = vunpack.c.l.b16 %v5827
        %v5870 = vunpack.c.l.b16 %v5828
        %v5871 = vunpack.c.l.b16 %v5829
        %v5872 = vpack.c.b16 %v5861, %v5860
        %v5873 = vpack.c.b16 %v5863, %v5862
        %v5874 = vpack.c.b16 %v5865, %v5864
        %v5875 = vpack.c.b16 %v5867, %v5866
        %v5876 = vpack.c.b16 %v5869, %v5868
        %v5877 = vpack.c.b16 %v5871, %v5870
        %5878 = vrot.lane.b32.xlu0 %v5872, 127
        %v5879 = vpop.permute.xlu0 %5878
        %5880 = vrot.lane.b32.xlu0 %v5873, 127
        %v5881 = vpop.permute.xlu0 %5880
        %5882 = vrot.lane.b32.xlu0 %v5874, 127
        %v5883 = vpop.permute.xlu0 %5882
        %5884 = vrot.lane.b32.xlu0 %v5875, 127
        %v5885 = vpop.permute.xlu0 %5884
        %5886 = vrot.lane.b32.xlu0 %v5876, 127
        %v5887 = vpop.permute.xlu0 %5886
        %5888 = vrot.lane.b32.xlu0 %v5877, 127
        %v5889 = vpop.permute.xlu0 %5888
        %v5897 = vsel %vm4092, %v5846, 0
        %v5900 = vsel %vm4092, %v5847, 0
        %5902 = vmatprep.subr.bf16.mxu0 0
        %5903 = vmatpush1.bf16.msra.mxu0 0
        %5904 = vmatprep.subr.bf16.mxu0 0
        %5905 = vmatpush1.bf16.msra.mxu0 0
        %5906 = vmatprep.subr.bf16.mxu0 0
        %5907 = vmatpush1.bf16.msra.mxu0 %v5889
        %5908 = vmatprep.subr.bf16.mxu0 0
        %5909 = vmatpush1.bf16.msra.mxu0 %v5887
        %5910 = vmatprep.subr.bf16.mxu0 0
        %5911 = vmatpush1.bf16.msra.mxu0 %v5885
        %5912 = vmatprep.subr.bf16.mxu0 0
        %5913 = vmatpush1.bf16.msra.mxu0 %v5883
        %5914 = vmatprep.subr.bf16.mxu0 0
        %5915 = vmatpush1.bf16.msra.mxu0 %v5881
        %5916 = vmatprep.subr.bf16.mxu0 0
        %5917 = vmatpush1.bf16.msra.mxu0 %v5879
        %5918 = vmatprep.subr.bf16.mxu0 0
        %5919 = vmatpush2.bf16.msra.mxu0 0
        %5920 = vmatprep.subr.bf16.mxu0 0
        %5921 = vmatpush2.bf16.msra.mxu0 0
        %5922 = vmatprep.subr.bf16.mxu0 0
        %5923 = vmatpush2.bf16.msra.mxu0 0
        %5924 = vmatprep.subr.bf16.mxu0 0
        %5925 = vmatpush2.bf16.msra.mxu0 0
        %5926 = vmatprep.subr.bf16.mxu0 0
        %5927 = vmatpush2.bf16.msra.mxu0 0
        %5928 = vmatprep.subr.bf16.mxu0 0
        %5929 = vmatpush2.bf16.msra.mxu0 0
        %5930 = vmatprep.subr.bf16.mxu0 0
        %5931 = vmatpush2.bf16.msra.mxu0 0
        %5932 = vmatprep.subr.bf16.mxu0 0
        %5933 = vmatpush2.bf16.msra.mxu0 0
        %5934 = vmatprep.mubr.bf16.mxu0 0
        %5935 = vmatmul.mubr.bf16.gmra.mxu0 %v5897
        %v5936 = vpop.f32.mrf.mxu0
        %v5937 = vadd.f32 0.0, %v5936
        %v5938 = vpop.f32.mrf.mxu0
        %v5939 = vpop.f32.mrf.mxu0
        %v5940 = vadd.f32 0.0, %v5939
        %v5941 = vpop.f32.mrf.mxu0
        %5942 = vmatprep.mubr.bf16.mxu0 0
        %5943 = vmatmul.mubr.bf16.gmra.mxu0 %v5900
        %v5944 = vpop.f32.mrf.mxu0
        %v5945 = vadd.f32 0.0, %v5944
        %v5946 = vpop.f32.mrf.mxu0
        %v5947 = vpop.f32.mrf.mxu0
        %v5948 = vadd.f32 0.0, %v5947
        %v5949 = vpop.f32.mrf.mxu0
        %5950 = vdwg.mxu0
        %v5955 = vunpack.c.l.b16 %v5830
        %v5956 = vunpack.c.l.b16 %v5831
        %v5957 = vunpack.c.l.b16 %v5832
        %v5958 = vunpack.c.l.b16 %v5833
        %v5959 = vpack.c.b16 %v5956, %v5955
        %v5960 = vpack.c.b16 %v5958, %v5957
        %v5968 = vsel %vm4092, %v5959, 0
        %v5971 = vsel %vm4092, %v5960, 0
        %5973 = vmatprep.subr.bf16.mxu0 0
        %5974 = vmatpush1.bf16.msra.mxu0 0
        %5975 = vmatprep.subr.bf16.mxu0 0
        %5976 = vmatpush1.bf16.msra.mxu0 0
        %5977 = vmatprep.subr.bf16.mxu0 0
        %5978 = vmatpush1.bf16.msra.mxu0 %v5877
        %5979 = vmatprep.subr.bf16.mxu0 0
        %5980 = vmatpush1.bf16.msra.mxu0 %v5876
        %5981 = vmatprep.subr.bf16.mxu0 0
        %5982 = vmatpush1.bf16.msra.mxu0 %v5875
        %5983 = vmatprep.subr.bf16.mxu0 0
        %5984 = vmatpush1.bf16.msra.mxu0 %v5874
        %5985 = vmatprep.subr.bf16.mxu0 0
        %5986 = vmatpush1.bf16.msra.mxu0 %v5873
        %5987 = vmatprep.subr.bf16.mxu0 0
        %5988 = vmatpush1.bf16.msra.mxu0 %v5872
        %5989 = vmatprep.subr.bf16.mxu0 0
        %5990 = vmatpush2.bf16.msra.mxu0 0
        %5991 = vmatprep.subr.bf16.mxu0 0
        %5992 = vmatpush2.bf16.msra.mxu0 0
        %5993 = vmatprep.subr.bf16.mxu0 0
        %5994 = vmatpush2.bf16.msra.mxu0 0
        %5995 = vmatprep.subr.bf16.mxu0 0
        %5996 = vmatpush2.bf16.msra.mxu0 0
        %5997 = vmatprep.subr.bf16.mxu0 0
        %5998 = vmatpush2.bf16.msra.mxu0 0
        %5999 = vmatprep.subr.bf16.mxu0 0
        %6000 = vmatpush2.bf16.msra.mxu0 0
        %6001 = vmatprep.subr.bf16.mxu0 0
        %6002 = vmatpush2.bf16.msra.mxu0 0
        %6003 = vmatprep.subr.bf16.mxu0 0
        %6004 = vmatpush2.bf16.msra.mxu0 0
        %6005 = vmatprep.mubr.bf16.mxu0 0
        %6006 = vmatmul.mubr.bf16.gmra.mxu0 %v5968
        %v6007 = vpop.f32.mrf.mxu0
        %v6008 = vadd.f32 %v5937, %v6007
        %v6009 = vpop.f32.mrf.mxu0
        %v6010 = vpop.f32.mrf.mxu0
        %v6011 = vadd.f32 %v5940, %v6010
        %v6012 = vpop.f32.mrf.mxu0
        %6013 = vmatprep.mubr.bf16.mxu0 0
        %6014 = vmatmul.mubr.bf16.gmra.mxu0 %v5971
        %v6015 = vpop.f32.mrf.mxu0
        %v6016 = vadd.f32 %v5945, %v6015
        %v6017 = vpop.f32.mrf.mxu0
        %v6018 = vpop.f32.mrf.mxu0
        %v6019 = vadd.f32 %v5948, %v6018
        %v6020 = vpop.f32.mrf.mxu0
        %6021 = vdwg.mxu0
        %v6022 = vld [vmem:[%s4219] sm:$0xf]
        %v6023 = vld [vmem:[%s4219 + $0x4] sm:$0xf]
        %v6024 = vld [vmem:[%s4219 + $0x8] sm:$0xf]
        %v6025 = vld [vmem:[%s4219 + $0xc] sm:$0xf]
        %v6030 = vunpack.c.l.b16 %v6022
        %v6031 = vunpack.c.l.b16 %v6023
        %v6032 = vunpack.c.l.b16 %v6024
        %v6033 = vunpack.c.l.b16 %v6025
        %v6034 = vpack.c.b16 %v6031, %v6030
        %v6035 = vpack.c.b16 %v6033, %v6032
        %6036 = vrot.lane.b32.xlu0 %v5872, 126
        %v6037 = vpop.permute.xlu0 %6036
        %6038 = vrot.lane.b32.xlu0 %v5873, 126
        %v6039 = vpop.permute.xlu0 %6038
        %6040 = vrot.lane.b32.xlu0 %v5874, 126
        %v6041 = vpop.permute.xlu0 %6040
        %6042 = vrot.lane.b32.xlu0 %v5875, 126
        %v6043 = vpop.permute.xlu0 %6042
        %6044 = vrot.lane.b32.xlu0 %v5876, 126
        %v6045 = vpop.permute.xlu0 %6044
        %6046 = vrot.lane.b32.xlu0 %v5877, 126
        %v6047 = vpop.permute.xlu0 %6046
        %v6055 = vsel %vm4092, %v6034, 0
        %v6058 = vsel %vm4092, %v6035, 0
        %6060 = vmatprep.subr.bf16.mxu0 0
        %6061 = vmatpush1.bf16.msra.mxu0 0
        %6062 = vmatprep.subr.bf16.mxu0 0
        %6063 = vmatpush1.bf16.msra.mxu0 0
        %6064 = vmatprep.subr.bf16.mxu0 0
        %6065 = vmatpush1.bf16.msra.mxu0 %v6047
        %6066 = vmatprep.subr.bf16.mxu0 0
        %6067 = vmatpush1.bf16.msra.mxu0 %v6045
        %6068 = vmatprep.subr.bf16.mxu0 0
        %6069 = vmatpush1.bf16.msra.mxu0 %v6043
        %6070 = vmatprep.subr.bf16.mxu0 0
        %6071 = vmatpush1.bf16.msra.mxu0 %v6041
        %6072 = vmatprep.subr.bf16.mxu0 0
        %6073 = vmatpush1.bf16.msra.mxu0 %v6039
        %6074 = vmatprep.subr.bf16.mxu0 0
        %6075 = vmatpush1.bf16.msra.mxu0 %v6037
        %6076 = vmatprep.subr.bf16.mxu0 0
        %6077 = vmatpush2.bf16.msra.mxu0 0
        %6078 = vmatprep.subr.bf16.mxu0 0
        %6079 = vmatpush2.bf16.msra.mxu0 0
        %6080 = vmatprep.subr.bf16.mxu0 0
        %6081 = vmatpush2.bf16.msra.mxu0 0
        %6082 = vmatprep.subr.bf16.mxu0 0
        %6083 = vmatpush2.bf16.msra.mxu0 0
        %6084 = vmatprep.subr.bf16.mxu0 0
        %6085 = vmatpush2.bf16.msra.mxu0 0
        %6086 = vmatprep.subr.bf16.mxu0 0
        %6087 = vmatpush2.bf16.msra.mxu0 0
        %6088 = vmatprep.subr.bf16.mxu0 0
        %6089 = vmatpush2.bf16.msra.mxu0 0
        %6090 = vmatprep.subr.bf16.mxu0 0
        %6091 = vmatpush2.bf16.msra.mxu0 0
        %6092 = vmatprep.mubr.bf16.mxu0 0
        %6093 = vmatmul.mubr.bf16.gmra.mxu0 %v6055
        %v6094 = vpop.f32.mrf.mxu0
        %v6095 = vadd.f32 0.0, %v6094
        %v6096 = vpop.f32.mrf.mxu0
        %v6097 = vpop.f32.mrf.mxu0
        %v6098 = vadd.f32 0.0, %v6097
        %v6099 = vpop.f32.mrf.mxu0
        %6100 = vmatprep.mubr.bf16.mxu0 0
        %6101 = vmatmul.mubr.bf16.gmra.mxu0 %v6058
        %v6102 = vpop.f32.mrf.mxu0
        %v6103 = vadd.f32 0.0, %v6102
        %v6104 = vpop.f32.mrf.mxu0
        %v6105 = vpop.f32.mrf.mxu0
        %v6106 = vadd.f32 0.0, %v6105
        %v6107 = vpop.f32.mrf.mxu0
        %6108 = vdwg.mxu0
        %v6109 = vadd.f32 %v6008, %v6095
        %v6110 = vadd.f32 %v6011, %v6098
        %v6111 = vadd.f32 %v6016, %v6103
        %v6112 = vadd.f32 %v6019, %v6106
        %v6113 = vld [vmem:[%s5] sm:$0xff]
        %v6114 = vld [vmem:[%s5 + $0x8] sm:$0xff]
        %v6115 = vld [vmem:[%s5 + $0x10] sm:$0xff]
        %v6116 = vld [vmem:[%s5 + $0x18] sm:$0xff]
        %6118 = vset.pattern.permute.xlu0 0
        %6119 = vperm.xlu0 %6118, %v6113
        %v6120 = vpop.permute.xlu0 %6119
        %6123 = vset.pattern.permute.xlu0 0
        %6124 = vperm.xlu0 %6123, %v6114
        %v6125 = vpop.permute.xlu0 %6124
        %6128 = vset.pattern.permute.xlu0 0
        %6129 = vperm.xlu0 %6128, %v6115
        %v6130 = vpop.permute.xlu0 %6129
        %6133 = vset.pattern.permute.xlu0 0
        %6134 = vperm.xlu0 %6133, %v6116
        %v6135 = vpop.permute.xlu0 %6134
        %v6137 = vadd.f32 %v6109, %v6120
        %v6138 = vadd.f32 %v6110, %v6125
        %v6139 = vadd.f32 %v6111, %v6130
        %v6140 = vadd.f32 %v6112, %v6135
        %v6141 = vmax.f32 %v6137, 0.0
        %v6142 = vmax.f32 %v6138, 0.0
        %v6143 = vmax.f32 %v6139, 0.0
        %v6144 = vmax.f32 %v6140, 0.0
        %v6145 = vsel %vm2469, %v6141, 0.0
        %v6146 = vsel %vm2469, %v6142, 0.0
        %v6147 = vsel %vm2469, %v6143, 0.0
        %v6148 = vsel %vm2469, %v6144, 0.0
        %v6149 = vpack.c.bf16 %v6146, %v6145
        %v6150 = vpack.c.bf16 %v6148, %v6147
        %v6153 = vunpack.c.l.b16 %v6149
        %v6154 = vunpack.c.h.b16 %v6149
        %v6155 = vunpack.c.l.b16 %v6150
        %v6156 = vunpack.c.h.b16 %v6150
        %v6157 = vpack.c.b16 %v6153, %v6153
        %v6158 = vpack.c.b16 %v6154, %v6154
        %v6159 = vpack.c.b16 %v6155, %v6155
        %v6160 = vpack.c.b16 %v6156, %v6156
        %6161 = vrot.lane.b32.xlu0 %v6157, 1
        %v6162 = vpop.permute.xlu0 %6161
        %6163 = vrot.lane.b32.xlu0 %v6158, 1
        %v6164 = vpop.permute.xlu0 %6163
        %6165 = vrot.lane.b32.xlu0 %v6159, 1
        %v6166 = vpop.permute.xlu0 %6165
        %6167 = vrot.lane.b32.xlu0 %v6160, 1
        %v6168 = vpop.permute.xlu0 %6167
        %6173 = vst.msk [vmem:[#allocation3 + $0x50] sm:$0xf] %vm686, %v6162
        %6174 = vst.msk [vmem:[#allocation3 + $0x54] sm:$0xf] %vm686, %v6164
        %6175 = vst.msk [vmem:[#allocation3 + $0x58] sm:$0xf] %vm686, %v6166
        %6176 = vst.msk [vmem:[#allocation3 + $0x5c] sm:$0xf] %vm686, %v6168
        %v6177 = vld [vmem:[#allocation2 + $0x60] sm:$0xf]
        %v6178 = vld [vmem:[#allocation2 + $0x64] sm:$0xf]
        %v6179 = vld [vmem:[#allocation2 + $0x68] sm:$0xf]
        %v6180 = vld [vmem:[#allocation2 + $0x6c] sm:$0xf]
        %v6181 = vld [vmem:[#allocation2 + $0x70] sm:$0xf]
        %v6182 = vld [vmem:[#allocation2 + $0x74] sm:$0xf]
        %v6183 = vld [vmem:[#allocation2 + $0x78] sm:$0xf]
        %v6184 = vld [vmem:[#allocation2 + $0x7c] sm:$0xf]
        %v6185 = vld [vmem:[#allocation2 + $0x80] sm:$0xf]
        %v6186 = vld [vmem:[#allocation2 + $0x84] sm:$0xf]
        %v6187 = vld [vmem:[#allocation2 + $0x88] sm:$0xf]
        %v6188 = vld [vmem:[#allocation2 + $0x8c] sm:$0xf]
        %v6189 = vld [vmem:[%s2] sm:$0xf]
        %v6190 = vld [vmem:[%s2 + $0x4] sm:$0xf]
        %v6191 = vld [vmem:[%s2 + $0x8] sm:$0xf]
        %v6192 = vld [vmem:[%s2 + $0xc] sm:$0xf]
        %v6193 = vld [vmem:[%s4029] sm:$0xf]
        %v6194 = vld [vmem:[%s4029 + $0x4] sm:$0xf]
        %v6195 = vld [vmem:[%s4029 + $0x8] sm:$0xf]
        %v6196 = vld [vmem:[%s4029 + $0xc] sm:$0xf]
        %v6201 = vunpack.c.l.b16 %v6193
        %v6202 = vunpack.c.l.b16 %v6194
        %v6203 = vunpack.c.l.b16 %v6195
        %v6204 = vunpack.c.l.b16 %v6196
        %v6205 = vpack.c.b16 %v6202, %v6201
        %v6206 = vpack.c.b16 %v6204, %v6203
        %v6219 = vunpack.c.l.b16 %v6177
        %v6220 = vunpack.c.l.b16 %v6178
        %v6221 = vunpack.c.l.b16 %v6179
        %v6222 = vunpack.c.l.b16 %v6180
        %v6223 = vunpack.c.l.b16 %v6181
        %v6224 = vunpack.c.l.b16 %v6182
        %v6225 = vunpack.c.l.b16 %v6183
        %v6226 = vunpack.c.l.b16 %v6184
        %v6227 = vunpack.c.l.b16 %v6185
        %v6228 = vunpack.c.l.b16 %v6186
        %v6229 = vunpack.c.l.b16 %v6187
        %v6230 = vunpack.c.l.b16 %v6188
        %v6231 = vpack.c.b16 %v6220, %v6219
        %v6232 = vpack.c.b16 %v6222, %v6221
        %v6233 = vpack.c.b16 %v6224, %v6223
        %v6234 = vpack.c.b16 %v6226, %v6225
        %v6235 = vpack.c.b16 %v6228, %v6227
        %v6236 = vpack.c.b16 %v6230, %v6229
        %6237 = vrot.lane.b32.xlu0 %v6231, 127
        %v6238 = vpop.permute.xlu0 %6237
        %6239 = vrot.lane.b32.xlu0 %v6232, 127
        %v6240 = vpop.permute.xlu0 %6239
        %6241 = vrot.lane.b32.xlu0 %v6233, 127
        %v6242 = vpop.permute.xlu0 %6241
        %6243 = vrot.lane.b32.xlu0 %v6234, 127
        %v6244 = vpop.permute.xlu0 %6243
        %6245 = vrot.lane.b32.xlu0 %v6235, 127
        %v6246 = vpop.permute.xlu0 %6245
        %6247 = vrot.lane.b32.xlu0 %v6236, 127
        %v6248 = vpop.permute.xlu0 %6247
        %v6256 = vsel %vm4092, %v6205, 0
        %v6259 = vsel %vm4092, %v6206, 0
        %6261 = vmatprep.subr.bf16.mxu0 0
        %6262 = vmatpush1.bf16.msra.mxu0 0
        %6263 = vmatprep.subr.bf16.mxu0 0
        %6264 = vmatpush1.bf16.msra.mxu0 0
        %6265 = vmatprep.subr.bf16.mxu0 0
        %6266 = vmatpush1.bf16.msra.mxu0 %v6248
        %6267 = vmatprep.subr.bf16.mxu0 0
        %6268 = vmatpush1.bf16.msra.mxu0 %v6246
        %6269 = vmatprep.subr.bf16.mxu0 0
        %6270 = vmatpush1.bf16.msra.mxu0 %v6244
        %6271 = vmatprep.subr.bf16.mxu0 0
        %6272 = vmatpush1.bf16.msra.mxu0 %v6242
        %6273 = vmatprep.subr.bf16.mxu0 0
        %6274 = vmatpush1.bf16.msra.mxu0 %v6240
        %6275 = vmatprep.subr.bf16.mxu0 0
        %6276 = vmatpush1.bf16.msra.mxu0 %v6238
        %6277 = vmatprep.subr.bf16.mxu0 0
        %6278 = vmatpush2.bf16.msra.mxu0 0
        %6279 = vmatprep.subr.bf16.mxu0 0
        %6280 = vmatpush2.bf16.msra.mxu0 0
        %6281 = vmatprep.subr.bf16.mxu0 0
        %6282 = vmatpush2.bf16.msra.mxu0 0
        %6283 = vmatprep.subr.bf16.mxu0 0
        %6284 = vmatpush2.bf16.msra.mxu0 0
        %6285 = vmatprep.subr.bf16.mxu0 0
        %6286 = vmatpush2.bf16.msra.mxu0 0
        %6287 = vmatprep.subr.bf16.mxu0 0
        %6288 = vmatpush2.bf16.msra.mxu0 0
        %6289 = vmatprep.subr.bf16.mxu0 0
        %6290 = vmatpush2.bf16.msra.mxu0 0
        %6291 = vmatprep.subr.bf16.mxu0 0
        %6292 = vmatpush2.bf16.msra.mxu0 0
        %6293 = vmatprep.mubr.bf16.mxu0 0
        %6294 = vmatmul.mubr.bf16.gmra.mxu0 %v6256
        %v6295 = vpop.f32.mrf.mxu0
        %v6296 = vadd.f32 0.0, %v6295
        %v6297 = vpop.f32.mrf.mxu0
        %v6298 = vpop.f32.mrf.mxu0
        %v6299 = vadd.f32 0.0, %v6298
        %v6300 = vpop.f32.mrf.mxu0
        %6301 = vmatprep.mubr.bf16.mxu0 0
        %6302 = vmatmul.mubr.bf16.gmra.mxu0 %v6259
        %v6303 = vpop.f32.mrf.mxu0
        %v6304 = vadd.f32 0.0, %v6303
        %v6305 = vpop.f32.mrf.mxu0
        %v6306 = vpop.f32.mrf.mxu0
        %v6307 = vadd.f32 0.0, %v6306
        %v6308 = vpop.f32.mrf.mxu0
        %6309 = vdwg.mxu0
        %v6314 = vunpack.c.l.b16 %v6189
        %v6315 = vunpack.c.l.b16 %v6190
        %v6316 = vunpack.c.l.b16 %v6191
        %v6317 = vunpack.c.l.b16 %v6192
        %v6318 = vpack.c.b16 %v6315, %v6314
        %v6319 = vpack.c.b16 %v6317, %v6316
        %v6327 = vsel %vm4092, %v6318, 0
        %v6330 = vsel %vm4092, %v6319, 0
        %6332 = vmatprep.subr.bf16.mxu0 0
        %6333 = vmatpush1.bf16.msra.mxu0 0
        %6334 = vmatprep.subr.bf16.mxu0 0
        %6335 = vmatpush1.bf16.msra.mxu0 0
        %6336 = vmatprep.subr.bf16.mxu0 0
        %6337 = vmatpush1.bf16.msra.mxu0 %v6236
        %6338 = vmatprep.subr.bf16.mxu0 0
        %6339 = vmatpush1.bf16.msra.mxu0 %v6235
        %6340 = vmatprep.subr.bf16.mxu0 0
        %6341 = vmatpush1.bf16.msra.mxu0 %v6234
        %6342 = vmatprep.subr.bf16.mxu0 0
        %6343 = vmatpush1.bf16.msra.mxu0 %v6233
        %6344 = vmatprep.subr.bf16.mxu0 0
        %6345 = vmatpush1.bf16.msra.mxu0 %v6232
        %6346 = vmatprep.subr.bf16.mxu0 0
        %6347 = vmatpush1.bf16.msra.mxu0 %v6231
        %6348 = vmatprep.subr.bf16.mxu0 0
        %6349 = vmatpush2.bf16.msra.mxu0 0
        %6350 = vmatprep.subr.bf16.mxu0 0
        %6351 = vmatpush2.bf16.msra.mxu0 0
        %6352 = vmatprep.subr.bf16.mxu0 0
        %6353 = vmatpush2.bf16.msra.mxu0 0
        %6354 = vmatprep.subr.bf16.mxu0 0
        %6355 = vmatpush2.bf16.msra.mxu0 0
        %6356 = vmatprep.subr.bf16.mxu0 0
        %6357 = vmatpush2.bf16.msra.mxu0 0
        %6358 = vmatprep.subr.bf16.mxu0 0
        %6359 = vmatpush2.bf16.msra.mxu0 0
        %6360 = vmatprep.subr.bf16.mxu0 0
        %6361 = vmatpush2.bf16.msra.mxu0 0
        %6362 = vmatprep.subr.bf16.mxu0 0
        %6363 = vmatpush2.bf16.msra.mxu0 0
        %6364 = vmatprep.mubr.bf16.mxu0 0
        %6365 = vmatmul.mubr.bf16.gmra.mxu0 %v6327
        %v6366 = vpop.f32.mrf.mxu0
        %v6367 = vadd.f32 %v6296, %v6366
        %v6368 = vpop.f32.mrf.mxu0
        %v6369 = vpop.f32.mrf.mxu0
        %v6370 = vadd.f32 %v6299, %v6369
        %v6371 = vpop.f32.mrf.mxu0
        %6372 = vmatprep.mubr.bf16.mxu0 0
        %6373 = vmatmul.mubr.bf16.gmra.mxu0 %v6330
        %v6374 = vpop.f32.mrf.mxu0
        %v6375 = vadd.f32 %v6304, %v6374
        %v6376 = vpop.f32.mrf.mxu0
        %v6377 = vpop.f32.mrf.mxu0
        %v6378 = vadd.f32 %v6307, %v6377
        %v6379 = vpop.f32.mrf.mxu0
        %6380 = vdwg.mxu0
        %v6381 = vld [vmem:[%s4219] sm:$0xf]
        %v6382 = vld [vmem:[%s4219 + $0x4] sm:$0xf]
        %v6383 = vld [vmem:[%s4219 + $0x8] sm:$0xf]
        %v6384 = vld [vmem:[%s4219 + $0xc] sm:$0xf]
        %v6389 = vunpack.c.l.b16 %v6381
        %v6390 = vunpack.c.l.b16 %v6382
        %v6391 = vunpack.c.l.b16 %v6383
        %v6392 = vunpack.c.l.b16 %v6384
        %v6393 = vpack.c.b16 %v6390, %v6389
        %v6394 = vpack.c.b16 %v6392, %v6391
        %6395 = vrot.lane.b32.xlu0 %v6231, 126
        %v6396 = vpop.permute.xlu0 %6395
        %6397 = vrot.lane.b32.xlu0 %v6232, 126
        %v6398 = vpop.permute.xlu0 %6397
        %6399 = vrot.lane.b32.xlu0 %v6233, 126
        %v6400 = vpop.permute.xlu0 %6399
        %6401 = vrot.lane.b32.xlu0 %v6234, 126
        %v6402 = vpop.permute.xlu0 %6401
        %6403 = vrot.lane.b32.xlu0 %v6235, 126
        %v6404 = vpop.permute.xlu0 %6403
        %6405 = vrot.lane.b32.xlu0 %v6236, 126
        %v6406 = vpop.permute.xlu0 %6405
        %v6414 = vsel %vm4092, %v6393, 0
        %v6417 = vsel %vm4092, %v6394, 0
        %6419 = vmatprep.subr.bf16.mxu0 0
        %6420 = vmatpush1.bf16.msra.mxu0 0
        %6421 = vmatprep.subr.bf16.mxu0 0
        %6422 = vmatpush1.bf16.msra.mxu0 0
        %6423 = vmatprep.subr.bf16.mxu0 0
        %6424 = vmatpush1.bf16.msra.mxu0 %v6406
        %6425 = vmatprep.subr.bf16.mxu0 0
        %6426 = vmatpush1.bf16.msra.mxu0 %v6404
        %6427 = vmatprep.subr.bf16.mxu0 0
        %6428 = vmatpush1.bf16.msra.mxu0 %v6402
        %6429 = vmatprep.subr.bf16.mxu0 0
        %6430 = vmatpush1.bf16.msra.mxu0 %v6400
        %6431 = vmatprep.subr.bf16.mxu0 0
        %6432 = vmatpush1.bf16.msra.mxu0 %v6398
        %6433 = vmatprep.subr.bf16.mxu0 0
        %6434 = vmatpush1.bf16.msra.mxu0 %v6396
        %6435 = vmatprep.subr.bf16.mxu0 0
        %6436 = vmatpush2.bf16.msra.mxu0 0
        %6437 = vmatprep.subr.bf16.mxu0 0
        %6438 = vmatpush2.bf16.msra.mxu0 0
        %6439 = vmatprep.subr.bf16.mxu0 0
        %6440 = vmatpush2.bf16.msra.mxu0 0
        %6441 = vmatprep.subr.bf16.mxu0 0
        %6442 = vmatpush2.bf16.msra.mxu0 0
        %6443 = vmatprep.subr.bf16.mxu0 0
        %6444 = vmatpush2.bf16.msra.mxu0 0
        %6445 = vmatprep.subr.bf16.mxu0 0
        %6446 = vmatpush2.bf16.msra.mxu0 0
        %6447 = vmatprep.subr.bf16.mxu0 0
        %6448 = vmatpush2.bf16.msra.mxu0 0
        %6449 = vmatprep.subr.bf16.mxu0 0
        %6450 = vmatpush2.bf16.msra.mxu0 0
        %6451 = vmatprep.mubr.bf16.mxu0 0
        %6452 = vmatmul.mubr.bf16.gmra.mxu0 %v6414
        %v6453 = vpop.f32.mrf.mxu0
        %v6454 = vadd.f32 0.0, %v6453
        %v6455 = vpop.f32.mrf.mxu0
        %v6456 = vpop.f32.mrf.mxu0
        %v6457 = vadd.f32 0.0, %v6456
        %v6458 = vpop.f32.mrf.mxu0
        %6459 = vmatprep.mubr.bf16.mxu0 0
        %6460 = vmatmul.mubr.bf16.gmra.mxu0 %v6417
        %v6461 = vpop.f32.mrf.mxu0
        %v6462 = vadd.f32 0.0, %v6461
        %v6463 = vpop.f32.mrf.mxu0
        %v6464 = vpop.f32.mrf.mxu0
        %v6465 = vadd.f32 0.0, %v6464
        %v6466 = vpop.f32.mrf.mxu0
        %6467 = vdwg.mxu0
        %v6468 = vadd.f32 %v6367, %v6454
        %v6469 = vadd.f32 %v6370, %v6457
        %v6470 = vadd.f32 %v6375, %v6462
        %v6471 = vadd.f32 %v6378, %v6465
        %v6472 = vld [vmem:[%s5] sm:$0xff]
        %v6473 = vld [vmem:[%s5 + $0x8] sm:$0xff]
        %v6474 = vld [vmem:[%s5 + $0x10] sm:$0xff]
        %v6475 = vld [vmem:[%s5 + $0x18] sm:$0xff]
        %6477 = vset.pattern.permute.xlu0 0
        %6478 = vperm.xlu0 %6477, %v6472
        %v6479 = vpop.permute.xlu0 %6478
        %6482 = vset.pattern.permute.xlu0 0
        %6483 = vperm.xlu0 %6482, %v6473
        %v6484 = vpop.permute.xlu0 %6483
        %6487 = vset.pattern.permute.xlu0 0
        %6488 = vperm.xlu0 %6487, %v6474
        %v6489 = vpop.permute.xlu0 %6488
        %6492 = vset.pattern.permute.xlu0 0
        %6493 = vperm.xlu0 %6492, %v6475
        %v6494 = vpop.permute.xlu0 %6493
        %v6496 = vadd.f32 %v6468, %v6479
        %v6497 = vadd.f32 %v6469, %v6484
        %v6498 = vadd.f32 %v6470, %v6489
        %v6499 = vadd.f32 %v6471, %v6494
        %v6500 = vmax.f32 %v6496, 0.0
        %v6501 = vmax.f32 %v6497, 0.0
        %v6502 = vmax.f32 %v6498, 0.0
        %v6503 = vmax.f32 %v6499, 0.0
        %v6504 = vsel %vm2771, %v6500, 0.0
        %v6505 = vsel %vm2771, %v6501, 0.0
        %v6506 = vsel %vm2771, %v6502, 0.0
        %v6507 = vsel %vm2771, %v6503, 0.0
        %v6508 = vpack.c.bf16 %v6505, %v6504
        %v6509 = vpack.c.bf16 %v6507, %v6506
        %v6512 = vunpack.c.l.b16 %v6508
        %v6513 = vunpack.c.h.b16 %v6508
        %v6514 = vunpack.c.l.b16 %v6509
        %v6515 = vunpack.c.h.b16 %v6509
        %v6516 = vpack.c.b16 %v6512, %v6512
        %v6517 = vpack.c.b16 %v6513, %v6513
        %v6518 = vpack.c.b16 %v6514, %v6514
        %v6519 = vpack.c.b16 %v6515, %v6515
        %6520 = vrot.lane.b32.xlu0 %v6516, 1
        %v6521 = vpop.permute.xlu0 %6520
        %6522 = vrot.lane.b32.xlu0 %v6517, 1
        %v6523 = vpop.permute.xlu0 %6522
        %6524 = vrot.lane.b32.xlu0 %v6518, 1
        %v6525 = vpop.permute.xlu0 %6524
        %6526 = vrot.lane.b32.xlu0 %v6519, 1
        %v6527 = vpop.permute.xlu0 %6526
        %6532 = vst.msk [vmem:[#allocation3 + $0x60] sm:$0xf] %vm686, %v6521
        %6533 = vst.msk [vmem:[#allocation3 + $0x64] sm:$0xf] %vm686, %v6523
        %6534 = vst.msk [vmem:[#allocation3 + $0x68] sm:$0xf] %vm686, %v6525
        %6535 = vst.msk [vmem:[#allocation3 + $0x6c] sm:$0xf] %vm686, %v6527
        %v6536 = vld [vmem:[#allocation2 + $0x70] sm:$0xf]
        %v6537 = vld [vmem:[#allocation2 + $0x74] sm:$0xf]
        %v6538 = vld [vmem:[#allocation2 + $0x78] sm:$0xf]
        %v6539 = vld [vmem:[#allocation2 + $0x7c] sm:$0xf]
        %v6540 = vld [vmem:[#allocation2 + $0x80] sm:$0xf]
        %v6541 = vld [vmem:[#allocation2 + $0x84] sm:$0xf]
        %v6542 = vld [vmem:[#allocation2 + $0x88] sm:$0xf]
        %v6543 = vld [vmem:[#allocation2 + $0x8c] sm:$0xf]
        %v6544 = vld [vmem:[#allocation2 + $0x90] sm:$0xf]
        %v6545 = vld [vmem:[#allocation2 + $0x94] sm:$0xf]
        %v6546 = vld [vmem:[#allocation2 + $0x98] sm:$0xf]
        %v6547 = vld [vmem:[#allocation2 + $0x9c] sm:$0xf]
        %v6548 = vld [vmem:[%s2] sm:$0xf]
        %v6549 = vld [vmem:[%s2 + $0x4] sm:$0xf]
        %v6550 = vld [vmem:[%s2 + $0x8] sm:$0xf]
        %v6551 = vld [vmem:[%s2 + $0xc] sm:$0xf]
        %v6552 = vld [vmem:[%s4029] sm:$0xf]
        %v6553 = vld [vmem:[%s4029 + $0x4] sm:$0xf]
        %v6554 = vld [vmem:[%s4029 + $0x8] sm:$0xf]
        %v6555 = vld [vmem:[%s4029 + $0xc] sm:$0xf]
        %v6560 = vunpack.c.l.b16 %v6552
        %v6561 = vunpack.c.l.b16 %v6553
        %v6562 = vunpack.c.l.b16 %v6554
        %v6563 = vunpack.c.l.b16 %v6555
        %v6564 = vpack.c.b16 %v6561, %v6560
        %v6565 = vpack.c.b16 %v6563, %v6562
        %v6578 = vunpack.c.l.b16 %v6536
        %v6579 = vunpack.c.l.b16 %v6537
        %v6580 = vunpack.c.l.b16 %v6538
        %v6581 = vunpack.c.l.b16 %v6539
        %v6582 = vunpack.c.l.b16 %v6540
        %v6583 = vunpack.c.l.b16 %v6541
        %v6584 = vunpack.c.l.b16 %v6542
        %v6585 = vunpack.c.l.b16 %v6543
        %v6586 = vunpack.c.l.b16 %v6544
        %v6587 = vunpack.c.l.b16 %v6545
        %v6588 = vunpack.c.l.b16 %v6546
        %v6589 = vunpack.c.l.b16 %v6547
        %v6590 = vpack.c.b16 %v6579, %v6578
        %v6591 = vpack.c.b16 %v6581, %v6580
        %v6592 = vpack.c.b16 %v6583, %v6582
        %v6593 = vpack.c.b16 %v6585, %v6584
        %v6594 = vpack.c.b16 %v6587, %v6586
        %v6595 = vpack.c.b16 %v6589, %v6588
        %6596 = vrot.lane.b32.xlu0 %v6590, 127
        %v6597 = vpop.permute.xlu0 %6596
        %6598 = vrot.lane.b32.xlu0 %v6591, 127
        %v6599 = vpop.permute.xlu0 %6598
        %6600 = vrot.lane.b32.xlu0 %v6592, 127
        %v6601 = vpop.permute.xlu0 %6600
        %6602 = vrot.lane.b32.xlu0 %v6593, 127
        %v6603 = vpop.permute.xlu0 %6602
        %6604 = vrot.lane.b32.xlu0 %v6594, 127
        %v6605 = vpop.permute.xlu0 %6604
        %6606 = vrot.lane.b32.xlu0 %v6595, 127
        %v6607 = vpop.permute.xlu0 %6606
        %v6615 = vsel %vm4092, %v6564, 0
        %v6618 = vsel %vm4092, %v6565, 0
        %6620 = vmatprep.subr.bf16.mxu0 0
        %6621 = vmatpush1.bf16.msra.mxu0 0
        %6622 = vmatprep.subr.bf16.mxu0 0
        %6623 = vmatpush1.bf16.msra.mxu0 0
        %6624 = vmatprep.subr.bf16.mxu0 0
        %6625 = vmatpush1.bf16.msra.mxu0 %v6607
        %6626 = vmatprep.subr.bf16.mxu0 0
        %6627 = vmatpush1.bf16.msra.mxu0 %v6605
        %6628 = vmatprep.subr.bf16.mxu0 0
        %6629 = vmatpush1.bf16.msra.mxu0 %v6603
        %6630 = vmatprep.subr.bf16.mxu0 0
        %6631 = vmatpush1.bf16.msra.mxu0 %v6601
        %6632 = vmatprep.subr.bf16.mxu0 0
        %6633 = vmatpush1.bf16.msra.mxu0 %v6599
        %6634 = vmatprep.subr.bf16.mxu0 0
        %6635 = vmatpush1.bf16.msra.mxu0 %v6597
        %6636 = vmatprep.subr.bf16.mxu0 0
        %6637 = vmatpush2.bf16.msra.mxu0 0
        %6638 = vmatprep.subr.bf16.mxu0 0
        %6639 = vmatpush2.bf16.msra.mxu0 0
        %6640 = vmatprep.subr.bf16.mxu0 0
        %6641 = vmatpush2.bf16.msra.mxu0 0
        %6642 = vmatprep.subr.bf16.mxu0 0
        %6643 = vmatpush2.bf16.msra.mxu0 0
        %6644 = vmatprep.subr.bf16.mxu0 0
        %6645 = vmatpush2.bf16.msra.mxu0 0
        %6646 = vmatprep.subr.bf16.mxu0 0
        %6647 = vmatpush2.bf16.msra.mxu0 0
        %6648 = vmatprep.subr.bf16.mxu0 0
        %6649 = vmatpush2.bf16.msra.mxu0 0
        %6650 = vmatprep.subr.bf16.mxu0 0
        %6651 = vmatpush2.bf16.msra.mxu0 0
        %6652 = vmatprep.mubr.bf16.mxu0 0
        %6653 = vmatmul.mubr.bf16.gmra.mxu0 %v6615
        %v6654 = vpop.f32.mrf.mxu0
        %v6655 = vadd.f32 0.0, %v6654
        %v6656 = vpop.f32.mrf.mxu0
        %v6657 = vpop.f32.mrf.mxu0
        %v6658 = vadd.f32 0.0, %v6657
        %v6659 = vpop.f32.mrf.mxu0
        %6660 = vmatprep.mubr.bf16.mxu0 0
        %6661 = vmatmul.mubr.bf16.gmra.mxu0 %v6618
        %v6662 = vpop.f32.mrf.mxu0
        %v6663 = vadd.f32 0.0, %v6662
        %v6664 = vpop.f32.mrf.mxu0
        %v6665 = vpop.f32.mrf.mxu0
        %v6666 = vadd.f32 0.0, %v6665
        %v6667 = vpop.f32.mrf.mxu0
        %6668 = vdwg.mxu0
        %v6673 = vunpack.c.l.b16 %v6548
        %v6674 = vunpack.c.l.b16 %v6549
        %v6675 = vunpack.c.l.b16 %v6550
        %v6676 = vunpack.c.l.b16 %v6551
        %v6677 = vpack.c.b16 %v6674, %v6673
        %v6678 = vpack.c.b16 %v6676, %v6675
        %v6686 = vsel %vm4092, %v6677, 0
        %v6689 = vsel %vm4092, %v6678, 0
        %6691 = vmatprep.subr.bf16.mxu0 0
        %6692 = vmatpush1.bf16.msra.mxu0 0
        %6693 = vmatprep.subr.bf16.mxu0 0
        %6694 = vmatpush1.bf16.msra.mxu0 0
        %6695 = vmatprep.subr.bf16.mxu0 0
        %6696 = vmatpush1.bf16.msra.mxu0 %v6595
        %6697 = vmatprep.subr.bf16.mxu0 0
        %6698 = vmatpush1.bf16.msra.mxu0 %v6594
        %6699 = vmatprep.subr.bf16.mxu0 0
        %6700 = vmatpush1.bf16.msra.mxu0 %v6593
        %6701 = vmatprep.subr.bf16.mxu0 0
        %6702 = vmatpush1.bf16.msra.mxu0 %v6592
        %6703 = vmatprep.subr.bf16.mxu0 0
        %6704 = vmatpush1.bf16.msra.mxu0 %v6591
        %6705 = vmatprep.subr.bf16.mxu0 0
        %6706 = vmatpush1.bf16.msra.mxu0 %v6590
        %6707 = vmatprep.subr.bf16.mxu0 0
        %6708 = vmatpush2.bf16.msra.mxu0 0
        %6709 = vmatprep.subr.bf16.mxu0 0
        %6710 = vmatpush2.bf16.msra.mxu0 0
        %6711 = vmatprep.subr.bf16.mxu0 0
        %6712 = vmatpush2.bf16.msra.mxu0 0
        %6713 = vmatprep.subr.bf16.mxu0 0
        %6714 = vmatpush2.bf16.msra.mxu0 0
        %6715 = vmatprep.subr.bf16.mxu0 0
        %6716 = vmatpush2.bf16.msra.mxu0 0
        %6717 = vmatprep.subr.bf16.mxu0 0
        %6718 = vmatpush2.bf16.msra.mxu0 0
        %6719 = vmatprep.subr.bf16.mxu0 0
        %6720 = vmatpush2.bf16.msra.mxu0 0
        %6721 = vmatprep.subr.bf16.mxu0 0
        %6722 = vmatpush2.bf16.msra.mxu0 0
        %6723 = vmatprep.mubr.bf16.mxu0 0
        %6724 = vmatmul.mubr.bf16.gmra.mxu0 %v6686
        %v6725 = vpop.f32.mrf.mxu0
        %v6726 = vadd.f32 %v6655, %v6725
        %v6727 = vpop.f32.mrf.mxu0
        %v6728 = vpop.f32.mrf.mxu0
        %v6729 = vadd.f32 %v6658, %v6728
        %v6730 = vpop.f32.mrf.mxu0
        %6731 = vmatprep.mubr.bf16.mxu0 0
        %6732 = vmatmul.mubr.bf16.gmra.mxu0 %v6689
        %v6733 = vpop.f32.mrf.mxu0
        %v6734 = vadd.f32 %v6663, %v6733
        %v6735 = vpop.f32.mrf.mxu0
        %v6736 = vpop.f32.mrf.mxu0
        %v6737 = vadd.f32 %v6666, %v6736
        %v6738 = vpop.f32.mrf.mxu0
        %6739 = vdwg.mxu0
        %v6740 = vld [vmem:[%s4219] sm:$0xf]
        %v6741 = vld [vmem:[%s4219 + $0x4] sm:$0xf]
        %v6742 = vld [vmem:[%s4219 + $0x8] sm:$0xf]
        %v6743 = vld [vmem:[%s4219 + $0xc] sm:$0xf]
        %v6748 = vunpack.c.l.b16 %v6740
        %v6749 = vunpack.c.l.b16 %v6741
        %v6750 = vunpack.c.l.b16 %v6742
        %v6751 = vunpack.c.l.b16 %v6743
        %v6752 = vpack.c.b16 %v6749, %v6748
        %v6753 = vpack.c.b16 %v6751, %v6750
        %6754 = vrot.lane.b32.xlu0 %v6590, 126
        %v6755 = vpop.permute.xlu0 %6754
        %6756 = vrot.lane.b32.xlu0 %v6591, 126
        %v6757 = vpop.permute.xlu0 %6756
        %6758 = vrot.lane.b32.xlu0 %v6592, 126
        %v6759 = vpop.permute.xlu0 %6758
        %6760 = vrot.lane.b32.xlu0 %v6593, 126
        %v6761 = vpop.permute.xlu0 %6760
        %6762 = vrot.lane.b32.xlu0 %v6594, 126
        %v6763 = vpop.permute.xlu0 %6762
        %6764 = vrot.lane.b32.xlu0 %v6595, 126
        %v6765 = vpop.permute.xlu0 %6764
        %v6773 = vsel %vm4092, %v6752, 0
        %v6776 = vsel %vm4092, %v6753, 0
        %6778 = vmatprep.subr.bf16.mxu0 0
        %6779 = vmatpush1.bf16.msra.mxu0 0
        %6780 = vmatprep.subr.bf16.mxu0 0
        %6781 = vmatpush1.bf16.msra.mxu0 0
        %6782 = vmatprep.subr.bf16.mxu0 0
        %6783 = vmatpush1.bf16.msra.mxu0 %v6765
        %6784 = vmatprep.subr.bf16.mxu0 0
        %6785 = vmatpush1.bf16.msra.mxu0 %v6763
        %6786 = vmatprep.subr.bf16.mxu0 0
        %6787 = vmatpush1.bf16.msra.mxu0 %v6761
        %6788 = vmatprep.subr.bf16.mxu0 0
        %6789 = vmatpush1.bf16.msra.mxu0 %v6759
        %6790 = vmatprep.subr.bf16.mxu0 0
        %6791 = vmatpush1.bf16.msra.mxu0 %v6757
        %6792 = vmatprep.subr.bf16.mxu0 0
        %6793 = vmatpush1.bf16.msra.mxu0 %v6755
        %6794 = vmatprep.subr.bf16.mxu0 0
        %6795 = vmatpush2.bf16.msra.mxu0 0
        %6796 = vmatprep.subr.bf16.mxu0 0
        %6797 = vmatpush2.bf16.msra.mxu0 0
        %6798 = vmatprep.subr.bf16.mxu0 0
        %6799 = vmatpush2.bf16.msra.mxu0 0
        %6800 = vmatprep.subr.bf16.mxu0 0
        %6801 = vmatpush2.bf16.msra.mxu0 0
        %6802 = vmatprep.subr.bf16.mxu0 0
        %6803 = vmatpush2.bf16.msra.mxu0 0
        %6804 = vmatprep.subr.bf16.mxu0 0
        %6805 = vmatpush2.bf16.msra.mxu0 0
        %6806 = vmatprep.subr.bf16.mxu0 0
        %6807 = vmatpush2.bf16.msra.mxu0 0
        %6808 = vmatprep.subr.bf16.mxu0 0
        %6809 = vmatpush2.bf16.msra.mxu0 0
        %6810 = vmatprep.mubr.bf16.mxu0 0
        %6811 = vmatmul.mubr.bf16.gmra.mxu0 %v6773
        %v6812 = vpop.f32.mrf.mxu0
        %v6813 = vadd.f32 0.0, %v6812
        %v6814 = vpop.f32.mrf.mxu0
        %v6815 = vpop.f32.mrf.mxu0
        %v6816 = vadd.f32 0.0, %v6815
        %v6817 = vpop.f32.mrf.mxu0
        %6818 = vmatprep.mubr.bf16.mxu0 0
        %6819 = vmatmul.mubr.bf16.gmra.mxu0 %v6776
        %v6820 = vpop.f32.mrf.mxu0
        %v6821 = vadd.f32 0.0, %v6820
        %v6822 = vpop.f32.mrf.mxu0
        %v6823 = vpop.f32.mrf.mxu0
        %v6824 = vadd.f32 0.0, %v6823
        %v6825 = vpop.f32.mrf.mxu0
        %6826 = vdwg.mxu0
        %v6827 = vadd.f32 %v6726, %v6813
        %v6828 = vadd.f32 %v6729, %v6816
        %v6829 = vadd.f32 %v6734, %v6821
        %v6830 = vadd.f32 %v6737, %v6824
        %v6831 = vld [vmem:[%s5] sm:$0xff]
        %v6832 = vld [vmem:[%s5 + $0x8] sm:$0xff]
        %v6833 = vld [vmem:[%s5 + $0x10] sm:$0xff]
        %v6834 = vld [vmem:[%s5 + $0x18] sm:$0xff]
        %6836 = vset.pattern.permute.xlu0 0
        %6837 = vperm.xlu0 %6836, %v6831
        %v6838 = vpop.permute.xlu0 %6837
        %6841 = vset.pattern.permute.xlu0 0
        %6842 = vperm.xlu0 %6841, %v6832
        %v6843 = vpop.permute.xlu0 %6842
        %6846 = vset.pattern.permute.xlu0 0
        %6847 = vperm.xlu0 %6846, %v6833
        %v6848 = vpop.permute.xlu0 %6847
        %6851 = vset.pattern.permute.xlu0 0
        %6852 = vperm.xlu0 %6851, %v6834
        %v6853 = vpop.permute.xlu0 %6852
        %v6855 = vadd.f32 %v6827, %v6838
        %v6856 = vadd.f32 %v6828, %v6843
        %v6857 = vadd.f32 %v6829, %v6848
        %v6858 = vadd.f32 %v6830, %v6853
        %v6859 = vmax.f32 %v6855, 0.0
        %v6860 = vmax.f32 %v6856, 0.0
        %v6861 = vmax.f32 %v6857, 0.0
        %v6862 = vmax.f32 %v6858, 0.0
        %v6863 = vsel %vm3073, %v6859, 0.0
        %v6864 = vsel %vm3073, %v6860, 0.0
        %v6865 = vsel %vm3073, %v6861, 0.0
        %v6866 = vsel %vm3073, %v6862, 0.0
        %v6867 = vpack.c.bf16 %v6864, %v6863
        %v6868 = vpack.c.bf16 %v6866, %v6865
        %v6871 = vunpack.c.l.b16 %v6867
        %v6872 = vunpack.c.h.b16 %v6867
        %v6873 = vunpack.c.l.b16 %v6868
        %v6874 = vunpack.c.h.b16 %v6868
        %v6875 = vpack.c.b16 %v6871, %v6871
        %v6876 = vpack.c.b16 %v6872, %v6872
        %v6877 = vpack.c.b16 %v6873, %v6873
        %v6878 = vpack.c.b16 %v6874, %v6874
        %6879 = vrot.lane.b32.xlu0 %v6875, 1
        %v6880 = vpop.permute.xlu0 %6879
        %6881 = vrot.lane.b32.xlu0 %v6876, 1
        %v6882 = vpop.permute.xlu0 %6881
        %6883 = vrot.lane.b32.xlu0 %v6877, 1
        %v6884 = vpop.permute.xlu0 %6883
        %6885 = vrot.lane.b32.xlu0 %v6878, 1
        %v6886 = vpop.permute.xlu0 %6885
        %6891 = vst.msk [vmem:[#allocation3 + $0x70] sm:$0xf] %vm686, %v6880
        %6892 = vst.msk [vmem:[#allocation3 + $0x74] sm:$0xf] %vm686, %v6882
        %6893 = vst.msk [vmem:[#allocation3 + $0x78] sm:$0xf] %vm686, %v6884
        %6894 = vst.msk [vmem:[#allocation3 + $0x7c] sm:$0xf] %vm686, %v6886
        %v6895 = vld [vmem:[#allocation2 + $0x80] sm:$0xf]
        %v6896 = vld [vmem:[#allocation2 + $0x84] sm:$0xf]
        %v6897 = vld [vmem:[#allocation2 + $0x88] sm:$0xf]
        %v6898 = vld [vmem:[#allocation2 + $0x8c] sm:$0xf]
        %v6899 = vld [vmem:[#allocation2 + $0x90] sm:$0xf]
        %v6900 = vld [vmem:[#allocation2 + $0x94] sm:$0xf]
        %v6901 = vld [vmem:[#allocation2 + $0x98] sm:$0xf]
        %v6902 = vld [vmem:[#allocation2 + $0x9c] sm:$0xf]
        %v6903 = vld [vmem:[#allocation2 + $0xa0] sm:$0xf]
        %v6904 = vld [vmem:[#allocation2 + $0xa4] sm:$0xf]
        %v6905 = vld [vmem:[#allocation2 + $0xa8] sm:$0xf]
        %v6906 = vld [vmem:[#allocation2 + $0xac] sm:$0xf]
        %v6907 = vld [vmem:[%s2] sm:$0xf]
        %v6908 = vld [vmem:[%s2 + $0x4] sm:$0xf]
        %v6909 = vld [vmem:[%s2 + $0x8] sm:$0xf]
        %v6910 = vld [vmem:[%s2 + $0xc] sm:$0xf]
        %v6911 = vld [vmem:[%s4029] sm:$0xf]
        %v6912 = vld [vmem:[%s4029 + $0x4] sm:$0xf]
        %v6913 = vld [vmem:[%s4029 + $0x8] sm:$0xf]
        %v6914 = vld [vmem:[%s4029 + $0xc] sm:$0xf]
        %v6919 = vunpack.c.l.b16 %v6911
        %v6920 = vunpack.c.l.b16 %v6912
        %v6921 = vunpack.c.l.b16 %v6913
        %v6922 = vunpack.c.l.b16 %v6914
        %v6923 = vpack.c.b16 %v6920, %v6919
        %v6924 = vpack.c.b16 %v6922, %v6921
        %v6937 = vunpack.c.l.b16 %v6895
        %v6938 = vunpack.c.l.b16 %v6896
        %v6939 = vunpack.c.l.b16 %v6897
        %v6940 = vunpack.c.l.b16 %v6898
        %v6941 = vunpack.c.l.b16 %v6899
        %v6942 = vunpack.c.l.b16 %v6900
        %v6943 = vunpack.c.l.b16 %v6901
        %v6944 = vunpack.c.l.b16 %v6902
        %v6945 = vunpack.c.l.b16 %v6903
        %v6946 = vunpack.c.l.b16 %v6904
        %v6947 = vunpack.c.l.b16 %v6905
        %v6948 = vunpack.c.l.b16 %v6906
        %v6949 = vpack.c.b16 %v6938, %v6937
        %v6950 = vpack.c.b16 %v6940, %v6939
        %v6951 = vpack.c.b16 %v6942, %v6941
        %v6952 = vpack.c.b16 %v6944, %v6943
        %v6953 = vpack.c.b16 %v6946, %v6945
        %v6954 = vpack.c.b16 %v6948, %v6947
        %6955 = vrot.lane.b32.xlu0 %v6949, 127
        %v6956 = vpop.permute.xlu0 %6955
        %6957 = vrot.lane.b32.xlu0 %v6950, 127
        %v6958 = vpop.permute.xlu0 %6957
        %6959 = vrot.lane.b32.xlu0 %v6951, 127
        %v6960 = vpop.permute.xlu0 %6959
        %6961 = vrot.lane.b32.xlu0 %v6952, 127
        %v6962 = vpop.permute.xlu0 %6961
        %6963 = vrot.lane.b32.xlu0 %v6953, 127
        %v6964 = vpop.permute.xlu0 %6963
        %6965 = vrot.lane.b32.xlu0 %v6954, 127
        %v6966 = vpop.permute.xlu0 %6965
        %v6974 = vsel %vm4092, %v6923, 0
        %v6977 = vsel %vm4092, %v6924, 0
        %6979 = vmatprep.subr.bf16.mxu0 0
        %6980 = vmatpush1.bf16.msra.mxu0 0
        %6981 = vmatprep.subr.bf16.mxu0 0
        %6982 = vmatpush1.bf16.msra.mxu0 0
        %6983 = vmatprep.subr.bf16.mxu0 0
        %6984 = vmatpush1.bf16.msra.mxu0 %v6966
        %6985 = vmatprep.subr.bf16.mxu0 0
        %6986 = vmatpush1.bf16.msra.mxu0 %v6964
        %6987 = vmatprep.subr.bf16.mxu0 0
        %6988 = vmatpush1.bf16.msra.mxu0 %v6962
        %6989 = vmatprep.subr.bf16.mxu0 0
        %6990 = vmatpush1.bf16.msra.mxu0 %v6960
        %6991 = vmatprep.subr.bf16.mxu0 0
        %6992 = vmatpush1.bf16.msra.mxu0 %v6958
        %6993 = vmatprep.subr.bf16.mxu0 0
        %6994 = vmatpush1.bf16.msra.mxu0 %v6956
        %6995 = vmatprep.subr.bf16.mxu0 0
        %6996 = vmatpush2.bf16.msra.mxu0 0
        %6997 = vmatprep.subr.bf16.mxu0 0
        %6998 = vmatpush2.bf16.msra.mxu0 0
        %6999 = vmatprep.subr.bf16.mxu0 0
        %7000 = vmatpush2.bf16.msra.mxu0 0
        %7001 = vmatprep.subr.bf16.mxu0 0
        %7002 = vmatpush2.bf16.msra.mxu0 0
        %7003 = vmatprep.subr.bf16.mxu0 0
        %7004 = vmatpush2.bf16.msra.mxu0 0
        %7005 = vmatprep.subr.bf16.mxu0 0
        %7006 = vmatpush2.bf16.msra.mxu0 0
        %7007 = vmatprep.subr.bf16.mxu0 0
        %7008 = vmatpush2.bf16.msra.mxu0 0
        %7009 = vmatprep.subr.bf16.mxu0 0
        %7010 = vmatpush2.bf16.msra.mxu0 0
        %7011 = vmatprep.mubr.bf16.mxu0 0
        %7012 = vmatmul.mubr.bf16.gmra.mxu0 %v6974
        %v7013 = vpop.f32.mrf.mxu0
        %v7014 = vadd.f32 0.0, %v7013
        %v7015 = vpop.f32.mrf.mxu0
        %v7016 = vpop.f32.mrf.mxu0
        %v7017 = vadd.f32 0.0, %v7016
        %v7018 = vpop.f32.mrf.mxu0
        %7019 = vmatprep.mubr.bf16.mxu0 0
        %7020 = vmatmul.mubr.bf16.gmra.mxu0 %v6977
        %v7021 = vpop.f32.mrf.mxu0
        %v7022 = vadd.f32 0.0, %v7021
        %v7023 = vpop.f32.mrf.mxu0
        %v7024 = vpop.f32.mrf.mxu0
        %v7025 = vadd.f32 0.0, %v7024
        %v7026 = vpop.f32.mrf.mxu0
        %7027 = vdwg.mxu0
        %v7032 = vunpack.c.l.b16 %v6907
        %v7033 = vunpack.c.l.b16 %v6908
        %v7034 = vunpack.c.l.b16 %v6909
        %v7035 = vunpack.c.l.b16 %v6910
        %v7036 = vpack.c.b16 %v7033, %v7032
        %v7037 = vpack.c.b16 %v7035, %v7034
        %v7045 = vsel %vm4092, %v7036, 0
        %v7048 = vsel %vm4092, %v7037, 0
        %7050 = vmatprep.subr.bf16.mxu0 0
        %7051 = vmatpush1.bf16.msra.mxu0 0
        %7052 = vmatprep.subr.bf16.mxu0 0
        %7053 = vmatpush1.bf16.msra.mxu0 0
        %7054 = vmatprep.subr.bf16.mxu0 0
        %7055 = vmatpush1.bf16.msra.mxu0 %v6954
        %7056 = vmatprep.subr.bf16.mxu0 0
        %7057 = vmatpush1.bf16.msra.mxu0 %v6953
        %7058 = vmatprep.subr.bf16.mxu0 0
        %7059 = vmatpush1.bf16.msra.mxu0 %v6952
        %7060 = vmatprep.subr.bf16.mxu0 0
        %7061 = vmatpush1.bf16.msra.mxu0 %v6951
        %7062 = vmatprep.subr.bf16.mxu0 0
        %7063 = vmatpush1.bf16.msra.mxu0 %v6950
        %7064 = vmatprep.subr.bf16.mxu0 0
        %7065 = vmatpush1.bf16.msra.mxu0 %v6949
        %7066 = vmatprep.subr.bf16.mxu0 0
        %7067 = vmatpush2.bf16.msra.mxu0 0
        %7068 = vmatprep.subr.bf16.mxu0 0
        %7069 = vmatpush2.bf16.msra.mxu0 0
        %7070 = vmatprep.subr.bf16.mxu0 0
        %7071 = vmatpush2.bf16.msra.mxu0 0
        %7072 = vmatprep.subr.bf16.mxu0 0
        %7073 = vmatpush2.bf16.msra.mxu0 0
        %7074 = vmatprep.subr.bf16.mxu0 0
        %7075 = vmatpush2.bf16.msra.mxu0 0
        %7076 = vmatprep.subr.bf16.mxu0 0
        %7077 = vmatpush2.bf16.msra.mxu0 0
        %7078 = vmatprep.subr.bf16.mxu0 0
        %7079 = vmatpush2.bf16.msra.mxu0 0
        %7080 = vmatprep.subr.bf16.mxu0 0
        %7081 = vmatpush2.bf16.msra.mxu0 0
        %7082 = vmatprep.mubr.bf16.mxu0 0
        %7083 = vmatmul.mubr.bf16.gmra.mxu0 %v7045
        %v7084 = vpop.f32.mrf.mxu0
        %v7085 = vadd.f32 %v7014, %v7084
        %v7086 = vpop.f32.mrf.mxu0
        %v7087 = vpop.f32.mrf.mxu0
        %v7088 = vadd.f32 %v7017, %v7087
        %v7089 = vpop.f32.mrf.mxu0
        %7090 = vmatprep.mubr.bf16.mxu0 0
        %7091 = vmatmul.mubr.bf16.gmra.mxu0 %v7048
        %v7092 = vpop.f32.mrf.mxu0
        %v7093 = vadd.f32 %v7022, %v7092
        %v7094 = vpop.f32.mrf.mxu0
        %v7095 = vpop.f32.mrf.mxu0
        %v7096 = vadd.f32 %v7025, %v7095
        %v7097 = vpop.f32.mrf.mxu0
        %7098 = vdwg.mxu0
        %v7099 = vld [vmem:[%s4219] sm:$0xf]
        %v7100 = vld [vmem:[%s4219 + $0x4] sm:$0xf]
        %v7101 = vld [vmem:[%s4219 + $0x8] sm:$0xf]
        %v7102 = vld [vmem:[%s4219 + $0xc] sm:$0xf]
        %v7107 = vunpack.c.l.b16 %v7099
        %v7108 = vunpack.c.l.b16 %v7100
        %v7109 = vunpack.c.l.b16 %v7101
        %v7110 = vunpack.c.l.b16 %v7102
        %v7111 = vpack.c.b16 %v7108, %v7107
        %v7112 = vpack.c.b16 %v7110, %v7109
        %7113 = vrot.lane.b32.xlu0 %v6949, 126
        %v7114 = vpop.permute.xlu0 %7113
        %7115 = vrot.lane.b32.xlu0 %v6950, 126
        %v7116 = vpop.permute.xlu0 %7115
        %7117 = vrot.lane.b32.xlu0 %v6951, 126
        %v7118 = vpop.permute.xlu0 %7117
        %7119 = vrot.lane.b32.xlu0 %v6952, 126
        %v7120 = vpop.permute.xlu0 %7119
        %7121 = vrot.lane.b32.xlu0 %v6953, 126
        %v7122 = vpop.permute.xlu0 %7121
        %7123 = vrot.lane.b32.xlu0 %v6954, 126
        %v7124 = vpop.permute.xlu0 %7123
        %v7132 = vsel %vm4092, %v7111, 0
        %v7135 = vsel %vm4092, %v7112, 0
        %7137 = vmatprep.subr.bf16.mxu0 0
        %7138 = vmatpush1.bf16.msra.mxu0 0
        %7139 = vmatprep.subr.bf16.mxu0 0
        %7140 = vmatpush1.bf16.msra.mxu0 0
        %7141 = vmatprep.subr.bf16.mxu0 0
        %7142 = vmatpush1.bf16.msra.mxu0 %v7124
        %7143 = vmatprep.subr.bf16.mxu0 0
        %7144 = vmatpush1.bf16.msra.mxu0 %v7122
        %7145 = vmatprep.subr.bf16.mxu0 0
        %7146 = vmatpush1.bf16.msra.mxu0 %v7120
        %7147 = vmatprep.subr.bf16.mxu0 0
        %7148 = vmatpush1.bf16.msra.mxu0 %v7118
        %7149 = vmatprep.subr.bf16.mxu0 0
        %7150 = vmatpush1.bf16.msra.mxu0 %v7116
        %7151 = vmatprep.subr.bf16.mxu0 0
        %7152 = vmatpush1.bf16.msra.mxu0 %v7114
        %7153 = vmatprep.subr.bf16.mxu0 0
        %7154 = vmatpush2.bf16.msra.mxu0 0
        %7155 = vmatprep.subr.bf16.mxu0 0
        %7156 = vmatpush2.bf16.msra.mxu0 0
        %7157 = vmatprep.subr.bf16.mxu0 0
        %7158 = vmatpush2.bf16.msra.mxu0 0
        %7159 = vmatprep.subr.bf16.mxu0 0
        %7160 = vmatpush2.bf16.msra.mxu0 0
        %7161 = vmatprep.subr.bf16.mxu0 0
        %7162 = vmatpush2.bf16.msra.mxu0 0
        %7163 = vmatprep.subr.bf16.mxu0 0
        %7164 = vmatpush2.bf16.msra.mxu0 0
        %7165 = vmatprep.subr.bf16.mxu0 0
        %7166 = vmatpush2.bf16.msra.mxu0 0
        %7167 = vmatprep.subr.bf16.mxu0 0
        %7168 = vmatpush2.bf16.msra.mxu0 0
        %7169 = vmatprep.mubr.bf16.mxu0 0
        %7170 = vmatmul.mubr.bf16.gmra.mxu0 %v7132
        %v7171 = vpop.f32.mrf.mxu0
        %v7172 = vadd.f32 0.0, %v7171
        %v7173 = vpop.f32.mrf.mxu0
        %v7174 = vpop.f32.mrf.mxu0
        %v7175 = vadd.f32 0.0, %v7174
        %v7176 = vpop.f32.mrf.mxu0
        %7177 = vmatprep.mubr.bf16.mxu0 0
        %7178 = vmatmul.mubr.bf16.gmra.mxu0 %v7135
        %v7179 = vpop.f32.mrf.mxu0
        %v7180 = vadd.f32 0.0, %v7179
        %v7181 = vpop.f32.mrf.mxu0
        %v7182 = vpop.f32.mrf.mxu0
        %v7183 = vadd.f32 0.0, %v7182
        %v7184 = vpop.f32.mrf.mxu0
        %7185 = vdwg.mxu0
        %v7186 = vadd.f32 %v7085, %v7172
        %v7187 = vadd.f32 %v7088, %v7175
        %v7188 = vadd.f32 %v7093, %v7180
        %v7189 = vadd.f32 %v7096, %v7183
        %v7190 = vld [vmem:[%s5] sm:$0xff]
        %v7191 = vld [vmem:[%s5 + $0x8] sm:$0xff]
        %v7192 = vld [vmem:[%s5 + $0x10] sm:$0xff]
        %v7193 = vld [vmem:[%s5 + $0x18] sm:$0xff]
        %7195 = vset.pattern.permute.xlu0 0
        %7196 = vperm.xlu0 %7195, %v7190
        %v7197 = vpop.permute.xlu0 %7196
        %7200 = vset.pattern.permute.xlu0 0
        %7201 = vperm.xlu0 %7200, %v7191
        %v7202 = vpop.permute.xlu0 %7201
        %7205 = vset.pattern.permute.xlu0 0
        %7206 = vperm.xlu0 %7205, %v7192
        %v7207 = vpop.permute.xlu0 %7206
        %7210 = vset.pattern.permute.xlu0 0
        %7211 = vperm.xlu0 %7210, %v7193
        %v7212 = vpop.permute.xlu0 %7211
        %v7214 = vadd.f32 %v7186, %v7197
        %v7215 = vadd.f32 %v7187, %v7202
        %v7216 = vadd.f32 %v7188, %v7207
        %v7217 = vadd.f32 %v7189, %v7212
        %v7218 = vmax.f32 %v7214, 0.0
        %v7219 = vmax.f32 %v7215, 0.0
        %v7220 = vmax.f32 %v7216, 0.0
        %v7221 = vmax.f32 %v7217, 0.0
        %v7222 = vsel %vm3375, %v7218, 0.0
        %v7223 = vsel %vm3375, %v7219, 0.0
        %v7224 = vsel %vm3375, %v7220, 0.0
        %v7225 = vsel %vm3375, %v7221, 0.0
        %v7226 = vpack.c.bf16 %v7223, %v7222
        %v7227 = vpack.c.bf16 %v7225, %v7224
        %v7230 = vunpack.c.l.b16 %v7226
        %v7231 = vunpack.c.h.b16 %v7226
        %v7232 = vunpack.c.l.b16 %v7227
        %v7233 = vunpack.c.h.b16 %v7227
        %v7234 = vpack.c.b16 %v7230, %v7230
        %v7235 = vpack.c.b16 %v7231, %v7231
        %v7236 = vpack.c.b16 %v7232, %v7232
        %v7237 = vpack.c.b16 %v7233, %v7233
        %7238 = vrot.lane.b32.xlu0 %v7234, 1
        %v7239 = vpop.permute.xlu0 %7238
        %7240 = vrot.lane.b32.xlu0 %v7235, 1
        %v7241 = vpop.permute.xlu0 %7240
        %7242 = vrot.lane.b32.xlu0 %v7236, 1
        %v7243 = vpop.permute.xlu0 %7242
        %7244 = vrot.lane.b32.xlu0 %v7237, 1
        %v7245 = vpop.permute.xlu0 %7244
        %7250 = vst.msk [vmem:[#allocation3 + $0x80] sm:$0xf] %vm686, %v7239
        %7251 = vst.msk [vmem:[#allocation3 + $0x84] sm:$0xf] %vm686, %v7241
        %7252 = vst.msk [vmem:[#allocation3 + $0x88] sm:$0xf] %vm686, %v7243
        %7253 = vst.msk [vmem:[#allocation3 + $0x8c] sm:$0xf] %vm686, %v7245
        %v7254 = vld [vmem:[#allocation2 + $0x90] sm:$0xf]
        %v7255 = vld [vmem:[#allocation2 + $0x94] sm:$0xf]
        %v7256 = vld [vmem:[#allocation2 + $0x98] sm:$0xf]
        %v7257 = vld [vmem:[#allocation2 + $0x9c] sm:$0xf]
        %v7258 = vld [vmem:[#allocation2 + $0xa0] sm:$0xf]
        %v7259 = vld [vmem:[#allocation2 + $0xa4] sm:$0xf]
        %v7260 = vld [vmem:[#allocation2 + $0xa8] sm:$0xf]
        %v7261 = vld [vmem:[#allocation2 + $0xac] sm:$0xf]
        %v7262 = vld [vmem:[#allocation2 + $0xb0] sm:$0xf]
        %v7263 = vld [vmem:[#allocation2 + $0xb4] sm:$0xf]
        %v7264 = vld [vmem:[#allocation2 + $0xb8] sm:$0xf]
        %v7265 = vld [vmem:[#allocation2 + $0xbc] sm:$0xf]
        %v7266 = vld [vmem:[%s2] sm:$0xf]
        %v7267 = vld [vmem:[%s2 + $0x4] sm:$0xf]
        %v7268 = vld [vmem:[%s2 + $0x8] sm:$0xf]
        %v7269 = vld [vmem:[%s2 + $0xc] sm:$0xf]
        %v7270 = vld [vmem:[%s4029] sm:$0xf]
        %v7271 = vld [vmem:[%s4029 + $0x4] sm:$0xf]
        %v7272 = vld [vmem:[%s4029 + $0x8] sm:$0xf]
        %v7273 = vld [vmem:[%s4029 + $0xc] sm:$0xf]
        %v7278 = vunpack.c.l.b16 %v7270
        %v7279 = vunpack.c.l.b16 %v7271
        %v7280 = vunpack.c.l.b16 %v7272
        %v7281 = vunpack.c.l.b16 %v7273
        %v7282 = vpack.c.b16 %v7279, %v7278
        %v7283 = vpack.c.b16 %v7281, %v7280
        %v7296 = vunpack.c.l.b16 %v7254
        %v7297 = vunpack.c.l.b16 %v7255
        %v7298 = vunpack.c.l.b16 %v7256
        %v7299 = vunpack.c.l.b16 %v7257
        %v7300 = vunpack.c.l.b16 %v7258
        %v7301 = vunpack.c.l.b16 %v7259
        %v7302 = vunpack.c.l.b16 %v7260
        %v7303 = vunpack.c.l.b16 %v7261
        %v7304 = vunpack.c.l.b16 %v7262
        %v7305 = vunpack.c.l.b16 %v7263
        %v7306 = vunpack.c.l.b16 %v7264
        %v7307 = vunpack.c.l.b16 %v7265
        %v7308 = vpack.c.b16 %v7297, %v7296
        %v7309 = vpack.c.b16 %v7299, %v7298
        %v7310 = vpack.c.b16 %v7301, %v7300
        %v7311 = vpack.c.b16 %v7303, %v7302
        %v7312 = vpack.c.b16 %v7305, %v7304
        %v7313 = vpack.c.b16 %v7307, %v7306
        %7314 = vrot.lane.b32.xlu0 %v7308, 127
        %v7315 = vpop.permute.xlu0 %7314
        %7316 = vrot.lane.b32.xlu0 %v7309, 127
        %v7317 = vpop.permute.xlu0 %7316
        %7318 = vrot.lane.b32.xlu0 %v7310, 127
        %v7319 = vpop.permute.xlu0 %7318
        %7320 = vrot.lane.b32.xlu0 %v7311, 127
        %v7321 = vpop.permute.xlu0 %7320
        %7322 = vrot.lane.b32.xlu0 %v7312, 127
        %v7323 = vpop.permute.xlu0 %7322
        %7324 = vrot.lane.b32.xlu0 %v7313, 127
        %v7325 = vpop.permute.xlu0 %7324
        %v7333 = vsel %vm4092, %v7282, 0
        %v7336 = vsel %vm4092, %v7283, 0
        %7338 = vmatprep.subr.bf16.mxu0 0
        %7339 = vmatpush1.bf16.msra.mxu0 0
        %7340 = vmatprep.subr.bf16.mxu0 0
        %7341 = vmatpush1.bf16.msra.mxu0 0
        %7342 = vmatprep.subr.bf16.mxu0 0
        %7343 = vmatpush1.bf16.msra.mxu0 %v7325
        %7344 = vmatprep.subr.bf16.mxu0 0
        %7345 = vmatpush1.bf16.msra.mxu0 %v7323
        %7346 = vmatprep.subr.bf16.mxu0 0
        %7347 = vmatpush1.bf16.msra.mxu0 %v7321
        %7348 = vmatprep.subr.bf16.mxu0 0
        %7349 = vmatpush1.bf16.msra.mxu0 %v7319
        %7350 = vmatprep.subr.bf16.mxu0 0
        %7351 = vmatpush1.bf16.msra.mxu0 %v7317
        %7352 = vmatprep.subr.bf16.mxu0 0
        %7353 = vmatpush1.bf16.msra.mxu0 %v7315
        %7354 = vmatprep.subr.bf16.mxu0 0
        %7355 = vmatpush2.bf16.msra.mxu0 0
        %7356 = vmatprep.subr.bf16.mxu0 0
        %7357 = vmatpush2.bf16.msra.mxu0 0
        %7358 = vmatprep.subr.bf16.mxu0 0
        %7359 = vmatpush2.bf16.msra.mxu0 0
        %7360 = vmatprep.subr.bf16.mxu0 0
        %7361 = vmatpush2.bf16.msra.mxu0 0
        %7362 = vmatprep.subr.bf16.mxu0 0
        %7363 = vmatpush2.bf16.msra.mxu0 0
        %7364 = vmatprep.subr.bf16.mxu0 0
        %7365 = vmatpush2.bf16.msra.mxu0 0
        %7366 = vmatprep.subr.bf16.mxu0 0
        %7367 = vmatpush2.bf16.msra.mxu0 0
        %7368 = vmatprep.subr.bf16.mxu0 0
        %7369 = vmatpush2.bf16.msra.mxu0 0
        %7370 = vmatprep.mubr.bf16.mxu0 0
        %7371 = vmatmul.mubr.bf16.gmra.mxu0 %v7333
        %v7372 = vpop.f32.mrf.mxu0
        %v7373 = vadd.f32 0.0, %v7372
        %v7374 = vpop.f32.mrf.mxu0
        %v7375 = vpop.f32.mrf.mxu0
        %v7376 = vadd.f32 0.0, %v7375
        %v7377 = vpop.f32.mrf.mxu0
        %7378 = vmatprep.mubr.bf16.mxu0 0
        %7379 = vmatmul.mubr.bf16.gmra.mxu0 %v7336
        %v7380 = vpop.f32.mrf.mxu0
        %v7381 = vadd.f32 0.0, %v7380
        %v7382 = vpop.f32.mrf.mxu0
        %v7383 = vpop.f32.mrf.mxu0
        %v7384 = vadd.f32 0.0, %v7383
        %v7385 = vpop.f32.mrf.mxu0
        %7386 = vdwg.mxu0
        %v7391 = vunpack.c.l.b16 %v7266
        %v7392 = vunpack.c.l.b16 %v7267
        %v7393 = vunpack.c.l.b16 %v7268
        %v7394 = vunpack.c.l.b16 %v7269
        %v7395 = vpack.c.b16 %v7392, %v7391
        %v7396 = vpack.c.b16 %v7394, %v7393
        %v7404 = vsel %vm4092, %v7395, 0
        %v7407 = vsel %vm4092, %v7396, 0
        %7409 = vmatprep.subr.bf16.mxu0 0
        %7410 = vmatpush1.bf16.msra.mxu0 0
        %7411 = vmatprep.subr.bf16.mxu0 0
        %7412 = vmatpush1.bf16.msra.mxu0 0
        %7413 = vmatprep.subr.bf16.mxu0 0
        %7414 = vmatpush1.bf16.msra.mxu0 %v7313
        %7415 = vmatprep.subr.bf16.mxu0 0
        %7416 = vmatpush1.bf16.msra.mxu0 %v7312
        %7417 = vmatprep.subr.bf16.mxu0 0
        %7418 = vmatpush1.bf16.msra.mxu0 %v7311
        %7419 = vmatprep.subr.bf16.mxu0 0
        %7420 = vmatpush1.bf16.msra.mxu0 %v7310
        %7421 = vmatprep.subr.bf16.mxu0 0
        %7422 = vmatpush1.bf16.msra.mxu0 %v7309
        %7423 = vmatprep.subr.bf16.mxu0 0
        %7424 = vmatpush1.bf16.msra.mxu0 %v7308
        %7425 = vmatprep.subr.bf16.mxu0 0
        %7426 = vmatpush2.bf16.msra.mxu0 0
        %7427 = vmatprep.subr.bf16.mxu0 0
        %7428 = vmatpush2.bf16.msra.mxu0 0
        %7429 = vmatprep.subr.bf16.mxu0 0
        %7430 = vmatpush2.bf16.msra.mxu0 0
        %7431 = vmatprep.subr.bf16.mxu0 0
        %7432 = vmatpush2.bf16.msra.mxu0 0
        %7433 = vmatprep.subr.bf16.mxu0 0
        %7434 = vmatpush2.bf16.msra.mxu0 0
        %7435 = vmatprep.subr.bf16.mxu0 0
        %7436 = vmatpush2.bf16.msra.mxu0 0
        %7437 = vmatprep.subr.bf16.mxu0 0
        %7438 = vmatpush2.bf16.msra.mxu0 0
        %7439 = vmatprep.subr.bf16.mxu0 0
        %7440 = vmatpush2.bf16.msra.mxu0 0
        %7441 = vmatprep.mubr.bf16.mxu0 0
        %7442 = vmatmul.mubr.bf16.gmra.mxu0 %v7404
        %v7443 = vpop.f32.mrf.mxu0
        %v7444 = vadd.f32 %v7373, %v7443
        %v7445 = vpop.f32.mrf.mxu0
        %v7446 = vpop.f32.mrf.mxu0
        %v7447 = vadd.f32 %v7376, %v7446
        %v7448 = vpop.f32.mrf.mxu0
        %7449 = vmatprep.mubr.bf16.mxu0 0
        %7450 = vmatmul.mubr.bf16.gmra.mxu0 %v7407
        %v7451 = vpop.f32.mrf.mxu0
        %v7452 = vadd.f32 %v7381, %v7451
        %v7453 = vpop.f32.mrf.mxu0
        %v7454 = vpop.f32.mrf.mxu0
        %v7455 = vadd.f32 %v7384, %v7454
        %v7456 = vpop.f32.mrf.mxu0
        %7457 = vdwg.mxu0
        %v7458 = vld [vmem:[%s4219] sm:$0xf]
        %v7459 = vld [vmem:[%s4219 + $0x4] sm:$0xf]
        %v7460 = vld [vmem:[%s4219 + $0x8] sm:$0xf]
        %v7461 = vld [vmem:[%s4219 + $0xc] sm:$0xf]
        %v7466 = vunpack.c.l.b16 %v7458
        %v7467 = vunpack.c.l.b16 %v7459
        %v7468 = vunpack.c.l.b16 %v7460
        %v7469 = vunpack.c.l.b16 %v7461
        %v7470 = vpack.c.b16 %v7467, %v7466
        %v7471 = vpack.c.b16 %v7469, %v7468
        %7472 = vrot.lane.b32.xlu0 %v7308, 126
        %v7473 = vpop.permute.xlu0 %7472
        %7474 = vrot.lane.b32.xlu0 %v7309, 126
        %v7475 = vpop.permute.xlu0 %7474
        %7476 = vrot.lane.b32.xlu0 %v7310, 126
        %v7477 = vpop.permute.xlu0 %7476
        %7478 = vrot.lane.b32.xlu0 %v7311, 126
        %v7479 = vpop.permute.xlu0 %7478
        %7480 = vrot.lane.b32.xlu0 %v7312, 126
        %v7481 = vpop.permute.xlu0 %7480
        %7482 = vrot.lane.b32.xlu0 %v7313, 126
        %v7483 = vpop.permute.xlu0 %7482
        %v7491 = vsel %vm4092, %v7470, 0
        %v7494 = vsel %vm4092, %v7471, 0
        %7496 = vmatprep.subr.bf16.mxu0 0
        %7497 = vmatpush1.bf16.msra.mxu0 0
        %7498 = vmatprep.subr.bf16.mxu0 0
        %7499 = vmatpush1.bf16.msra.mxu0 0
        %7500 = vmatprep.subr.bf16.mxu0 0
        %7501 = vmatpush1.bf16.msra.mxu0 %v7483
        %7502 = vmatprep.subr.bf16.mxu0 0
        %7503 = vmatpush1.bf16.msra.mxu0 %v7481
        %7504 = vmatprep.subr.bf16.mxu0 0
        %7505 = vmatpush1.bf16.msra.mxu0 %v7479
        %7506 = vmatprep.subr.bf16.mxu0 0
        %7507 = vmatpush1.bf16.msra.mxu0 %v7477
        %7508 = vmatprep.subr.bf16.mxu0 0
        %7509 = vmatpush1.bf16.msra.mxu0 %v7475
        %7510 = vmatprep.subr.bf16.mxu0 0
        %7511 = vmatpush1.bf16.msra.mxu0 %v7473
        %7512 = vmatprep.subr.bf16.mxu0 0
        %7513 = vmatpush2.bf16.msra.mxu0 0
        %7514 = vmatprep.subr.bf16.mxu0 0
        %7515 = vmatpush2.bf16.msra.mxu0 0
        %7516 = vmatprep.subr.bf16.mxu0 0
        %7517 = vmatpush2.bf16.msra.mxu0 0
        %7518 = vmatprep.subr.bf16.mxu0 0
        %7519 = vmatpush2.bf16.msra.mxu0 0
        %7520 = vmatprep.subr.bf16.mxu0 0
        %7521 = vmatpush2.bf16.msra.mxu0 0
        %7522 = vmatprep.subr.bf16.mxu0 0
        %7523 = vmatpush2.bf16.msra.mxu0 0
        %7524 = vmatprep.subr.bf16.mxu0 0
        %7525 = vmatpush2.bf16.msra.mxu0 0
        %7526 = vmatprep.subr.bf16.mxu0 0
        %7527 = vmatpush2.bf16.msra.mxu0 0
        %7528 = vmatprep.mubr.bf16.mxu0 0
        %7529 = vmatmul.mubr.bf16.gmra.mxu0 %v7491
        %v7530 = vpop.f32.mrf.mxu0
        %v7531 = vadd.f32 0.0, %v7530
        %v7532 = vpop.f32.mrf.mxu0
        %v7533 = vpop.f32.mrf.mxu0
        %v7534 = vadd.f32 0.0, %v7533
        %v7535 = vpop.f32.mrf.mxu0
        %7536 = vmatprep.mubr.bf16.mxu0 0
        %7537 = vmatmul.mubr.bf16.gmra.mxu0 %v7494
        %v7538 = vpop.f32.mrf.mxu0
        %v7539 = vadd.f32 0.0, %v7538
        %v7540 = vpop.f32.mrf.mxu0
        %v7541 = vpop.f32.mrf.mxu0
        %v7542 = vadd.f32 0.0, %v7541
        %v7543 = vpop.f32.mrf.mxu0
        %7544 = vdwg.mxu0
        %v7545 = vadd.f32 %v7444, %v7531
        %v7546 = vadd.f32 %v7447, %v7534
        %v7547 = vadd.f32 %v7452, %v7539
        %v7548 = vadd.f32 %v7455, %v7542
        %v7549 = vld [vmem:[%s5] sm:$0xff]
        %v7550 = vld [vmem:[%s5 + $0x8] sm:$0xff]
        %v7551 = vld [vmem:[%s5 + $0x10] sm:$0xff]
        %v7552 = vld [vmem:[%s5 + $0x18] sm:$0xff]
        %7554 = vset.pattern.permute.xlu0 0
        %7555 = vperm.xlu0 %7554, %v7549
        %v7556 = vpop.permute.xlu0 %7555
        %7559 = vset.pattern.permute.xlu0 0
        %7560 = vperm.xlu0 %7559, %v7550
        %v7561 = vpop.permute.xlu0 %7560
        %7564 = vset.pattern.permute.xlu0 0
        %7565 = vperm.xlu0 %7564, %v7551
        %v7566 = vpop.permute.xlu0 %7565
        %7569 = vset.pattern.permute.xlu0 0
        %7570 = vperm.xlu0 %7569, %v7552
        %v7571 = vpop.permute.xlu0 %7570
        %v7573 = vadd.f32 %v7545, %v7556
        %v7574 = vadd.f32 %v7546, %v7561
        %v7575 = vadd.f32 %v7547, %v7566
        %v7576 = vadd.f32 %v7548, %v7571
        %v7577 = vmax.f32 %v7573, 0.0
        %v7578 = vmax.f32 %v7574, 0.0
        %v7579 = vmax.f32 %v7575, 0.0
        %v7580 = vmax.f32 %v7576, 0.0
        %v7581 = vsel %vm3677, %v7577, 0.0
        %v7582 = vsel %vm3677, %v7578, 0.0
        %v7583 = vsel %vm3677, %v7579, 0.0
        %v7584 = vsel %vm3677, %v7580, 0.0
        %v7585 = vpack.c.bf16 %v7582, %v7581
        %v7586 = vpack.c.bf16 %v7584, %v7583
        %v7589 = vunpack.c.l.b16 %v7585
        %v7590 = vunpack.c.h.b16 %v7585
        %v7591 = vunpack.c.l.b16 %v7586
        %v7592 = vunpack.c.h.b16 %v7586
        %v7593 = vpack.c.b16 %v7589, %v7589
        %v7594 = vpack.c.b16 %v7590, %v7590
        %v7595 = vpack.c.b16 %v7591, %v7591
        %v7596 = vpack.c.b16 %v7592, %v7592
        %7597 = vrot.lane.b32.xlu0 %v7593, 1
        %v7598 = vpop.permute.xlu0 %7597
        %7599 = vrot.lane.b32.xlu0 %v7594, 1
        %v7600 = vpop.permute.xlu0 %7599
        %7601 = vrot.lane.b32.xlu0 %v7595, 1
        %v7602 = vpop.permute.xlu0 %7601
        %7603 = vrot.lane.b32.xlu0 %v7596, 1
        %v7604 = vpop.permute.xlu0 %7603
        %7609 = vst.msk [vmem:[#allocation3 + $0x90] sm:$0xf] %vm686, %v7598
        %7610 = vst.msk [vmem:[#allocation3 + $0x94] sm:$0xf] %vm686, %v7600
        %7611 = vst.msk [vmem:[#allocation3 + $0x98] sm:$0xf] %vm686, %v7602
        %7612 = vst.msk [vmem:[#allocation3 + $0x9c] sm:$0xf] %vm686, %v7604
        %v7613 = vld [vmem:[#allocation3] sm:$0xf]
        %v7614 = vld [vmem:[#allocation3 + $0x4] sm:$0xf]
        %v7615 = vld [vmem:[#allocation3 + $0x8] sm:$0xf]
        %v7616 = vld [vmem:[#allocation3 + $0xc] sm:$0xf]
        %v7617 = vld [vmem:[#allocation3 + $0x10] sm:$0xf]
        %v7618 = vld [vmem:[#allocation3 + $0x14] sm:$0xf]
        %v7619 = vld [vmem:[#allocation3 + $0x18] sm:$0xf]
        %v7620 = vld [vmem:[#allocation3 + $0x1c] sm:$0xf]
        %v7621 = vld [vmem:[#allocation3 + $0x20] sm:$0xf]
        %v7622 = vld [vmem:[#allocation3 + $0x24] sm:$0xf]
        %v7623 = vld [vmem:[#allocation3 + $0x28] sm:$0xf]
        %v7624 = vld [vmem:[#allocation3 + $0x2c] sm:$0xf]
        %v7625 = vld [vmem:[%s3] sm:$0xf]
        %s7626 = scalar_lea.vmem %s3, 4
        %v7627 = vld [vmem:[%s7626] sm:$0xf]
        %v7640 = vunpack.c.l.b16 %v7613
        %v7641 = vunpack.c.l.b16 %v7614
        %v7642 = vunpack.c.l.b16 %v7615
        %v7643 = vunpack.c.l.b16 %v7616
        %v7644 = vunpack.c.l.b16 %v7617
        %v7645 = vunpack.c.l.b16 %v7618
        %v7646 = vunpack.c.l.b16 %v7619
        %v7647 = vunpack.c.l.b16 %v7620
        %v7648 = vunpack.c.l.b16 %v7621
        %v7649 = vunpack.c.l.b16 %v7622
        %v7650 = vunpack.c.l.b16 %v7623
        %v7651 = vunpack.c.l.b16 %v7624
        %v7652 = vpack.c.b16 %v7641, %v7640
        %v7653 = vpack.c.b16 %v7643, %v7642
        %v7654 = vpack.c.b16 %v7645, %v7644
        %v7655 = vpack.c.b16 %v7647, %v7646
        %v7656 = vpack.c.b16 %v7649, %v7648
        %v7657 = vpack.c.b16 %v7651, %v7650
        %7658 = vrot.lane.b32.xlu0 %v7652, 127
        %v7659 = vpop.permute.xlu0 %7658
        %7660 = vrot.lane.b32.xlu0 %v7653, 127
        %v7661 = vpop.permute.xlu0 %7660
        %7662 = vrot.lane.b32.xlu0 %v7654, 127
        %v7663 = vpop.permute.xlu0 %7662
        %7664 = vrot.lane.b32.xlu0 %v7655, 127
        %v7665 = vpop.permute.xlu0 %7664
        %7666 = vrot.lane.b32.xlu0 %v7656, 127
        %v7667 = vpop.permute.xlu0 %7666
        %7668 = vrot.lane.b32.xlu0 %v7657, 127
        %v7669 = vpop.permute.xlu0 %7668
        %v7677 = vsel %vm4092, %v7627, 0
        %7679 = vmatprep.subr.bf16.mxu0 0
        %7680 = vmatpush1.bf16.msra.mxu0 0
        %7681 = vmatprep.subr.bf16.mxu0 0
        %7682 = vmatpush1.bf16.msra.mxu0 0
        %7683 = vmatprep.subr.bf16.mxu0 0
        %7684 = vmatpush1.bf16.msra.mxu0 %v7669
        %7685 = vmatprep.subr.bf16.mxu0 0
        %7686 = vmatpush1.bf16.msra.mxu0 %v7667
        %7687 = vmatprep.subr.bf16.mxu0 0
        %7688 = vmatpush1.bf16.msra.mxu0 %v7665
        %7689 = vmatprep.subr.bf16.mxu0 0
        %7690 = vmatpush1.bf16.msra.mxu0 %v7663
        %7691 = vmatprep.subr.bf16.mxu0 0
        %7692 = vmatpush1.bf16.msra.mxu0 %v7661
        %7693 = vmatprep.subr.bf16.mxu0 0
        %7694 = vmatpush1.bf16.msra.mxu0 %v7659
        %7695 = vmatprep.subr.bf16.mxu0 0
        %7696 = vmatpush2.bf16.msra.mxu0 0
        %7697 = vmatprep.subr.bf16.mxu0 0
        %7698 = vmatpush2.bf16.msra.mxu0 0
        %7699 = vmatprep.subr.bf16.mxu0 0
        %7700 = vmatpush2.bf16.msra.mxu0 0
        %7701 = vmatprep.subr.bf16.mxu0 0
        %7702 = vmatpush2.bf16.msra.mxu0 0
        %7703 = vmatprep.subr.bf16.mxu0 0
        %7704 = vmatpush2.bf16.msra.mxu0 0
        %7705 = vmatprep.subr.bf16.mxu0 0
        %7706 = vmatpush2.bf16.msra.mxu0 0
        %7707 = vmatprep.subr.bf16.mxu0 0
        %7708 = vmatpush2.bf16.msra.mxu0 0
        %7709 = vmatprep.subr.bf16.mxu0 0
        %7710 = vmatpush2.bf16.msra.mxu0 0
        %7711 = vmatprep.mubr.bf16.mxu0 0
        %7712 = vmatmul.mubr.bf16.gmra.mxu0 %v7677
        %v7713 = vpop.f32.mrf.mxu0
        %v7714 = vadd.f32 0.0, %v7713
        %v7715 = vpop.f32.mrf.mxu0
        %v7716 = vpop.f32.mrf.mxu0
        %v7717 = vpop.f32.mrf.mxu0
        %7718 = vdwg.mxu0
        %v7726 = vsel %vm4092, %v7625, 0
        %7728 = vmatprep.subr.bf16.mxu0 0
        %7729 = vmatpush1.bf16.msra.mxu0 0
        %7730 = vmatprep.subr.bf16.mxu0 0
        %7731 = vmatpush1.bf16.msra.mxu0 0
        %7732 = vmatprep.subr.bf16.mxu0 0
        %7733 = vmatpush1.bf16.msra.mxu0 %v7657
        %7734 = vmatprep.subr.bf16.mxu0 0
        %7735 = vmatpush1.bf16.msra.mxu0 %v7656
        %7736 = vmatprep.subr.bf16.mxu0 0
        %7737 = vmatpush1.bf16.msra.mxu0 %v7655
        %7738 = vmatprep.subr.bf16.mxu0 0
        %7739 = vmatpush1.bf16.msra.mxu0 %v7654
        %7740 = vmatprep.subr.bf16.mxu0 0
        %7741 = vmatpush1.bf16.msra.mxu0 %v7653
        %7742 = vmatprep.subr.bf16.mxu0 0
        %7743 = vmatpush1.bf16.msra.mxu0 %v7652
        %7744 = vmatprep.subr.bf16.mxu0 0
        %7745 = vmatpush2.bf16.msra.mxu0 0
        %7746 = vmatprep.subr.bf16.mxu0 0
        %7747 = vmatpush2.bf16.msra.mxu0 0
        %7748 = vmatprep.subr.bf16.mxu0 0
        %7749 = vmatpush2.bf16.msra.mxu0 0
        %7750 = vmatprep.subr.bf16.mxu0 0
        %7751 = vmatpush2.bf16.msra.mxu0 0
        %7752 = vmatprep.subr.bf16.mxu0 0
        %7753 = vmatpush2.bf16.msra.mxu0 0
        %7754 = vmatprep.subr.bf16.mxu0 0
        %7755 = vmatpush2.bf16.msra.mxu0 0
        %7756 = vmatprep.subr.bf16.mxu0 0
        %7757 = vmatpush2.bf16.msra.mxu0 0
        %7758 = vmatprep.subr.bf16.mxu0 0
        %7759 = vmatpush2.bf16.msra.mxu0 0
        %7760 = vmatprep.mubr.bf16.mxu0 0
        %7761 = vmatmul.mubr.bf16.gmra.mxu0 %v7726
        %v7762 = vpop.f32.mrf.mxu0
        %v7763 = vadd.f32 %v7714, %v7762
        %v7764 = vpop.f32.mrf.mxu0
        %v7765 = vpop.f32.mrf.mxu0
        %v7766 = vpop.f32.mrf.mxu0
        %7767 = vdwg.mxu0
        %s7768 = scalar_lea.vmem %s3, 8
        %v7769 = vld [vmem:[%s7768] sm:$0xf]
        %7770 = vrot.lane.b32.xlu0 %v7652, 126
        %v7771 = vpop.permute.xlu0 %7770
        %7772 = vrot.lane.b32.xlu0 %v7653, 126
        %v7773 = vpop.permute.xlu0 %7772
        %7774 = vrot.lane.b32.xlu0 %v7654, 126
        %v7775 = vpop.permute.xlu0 %7774
        %7776 = vrot.lane.b32.xlu0 %v7655, 126
        %v7777 = vpop.permute.xlu0 %7776
        %7778 = vrot.lane.b32.xlu0 %v7656, 126
        %v7779 = vpop.permute.xlu0 %7778
        %7780 = vrot.lane.b32.xlu0 %v7657, 126
        %v7781 = vpop.permute.xlu0 %7780
        %v7789 = vsel %vm4092, %v7769, 0
        %7791 = vmatprep.subr.bf16.mxu0 0
        %7792 = vmatpush1.bf16.msra.mxu0 0
        %7793 = vmatprep.subr.bf16.mxu0 0
        %7794 = vmatpush1.bf16.msra.mxu0 0
        %7795 = vmatprep.subr.bf16.mxu0 0
        %7796 = vmatpush1.bf16.msra.mxu0 %v7781
        %7797 = vmatprep.subr.bf16.mxu0 0
        %7798 = vmatpush1.bf16.msra.mxu0 %v7779
        %7799 = vmatprep.subr.bf16.mxu0 0
        %7800 = vmatpush1.bf16.msra.mxu0 %v7777
        %7801 = vmatprep.subr.bf16.mxu0 0
        %7802 = vmatpush1.bf16.msra.mxu0 %v7775
        %7803 = vmatprep.subr.bf16.mxu0 0
        %7804 = vmatpush1.bf16.msra.mxu0 %v7773
        %7805 = vmatprep.subr.bf16.mxu0 0
        %7806 = vmatpush1.bf16.msra.mxu0 %v7771
        %7807 = vmatprep.subr.bf16.mxu0 0
        %7808 = vmatpush2.bf16.msra.mxu0 0
        %7809 = vmatprep.subr.bf16.mxu0 0
        %7810 = vmatpush2.bf16.msra.mxu0 0
        %7811 = vmatprep.subr.bf16.mxu0 0
        %7812 = vmatpush2.bf16.msra.mxu0 0
        %7813 = vmatprep.subr.bf16.mxu0 0
        %7814 = vmatpush2.bf16.msra.mxu0 0
        %7815 = vmatprep.subr.bf16.mxu0 0
        %7816 = vmatpush2.bf16.msra.mxu0 0
        %7817 = vmatprep.subr.bf16.mxu0 0
        %7818 = vmatpush2.bf16.msra.mxu0 0
        %7819 = vmatprep.subr.bf16.mxu0 0
        %7820 = vmatpush2.bf16.msra.mxu0 0
        %7821 = vmatprep.subr.bf16.mxu0 0
        %7822 = vmatpush2.bf16.msra.mxu0 0
        %7823 = vmatprep.mubr.bf16.mxu0 0
        %7824 = vmatmul.mubr.bf16.gmra.mxu0 %v7789
        %v7825 = vpop.f32.mrf.mxu0
        %v7826 = vadd.f32 0.0, %v7825
        %v7827 = vpop.f32.mrf.mxu0
        %v7828 = vpop.f32.mrf.mxu0
        %v7829 = vpop.f32.mrf.mxu0
        %7830 = vdwg.mxu0
        %v7831 = vadd.f32 %v7763, %v7826
        %v7832 = vld [vmem:[#allocation4] sm:$0x1]
        %7834 = vset.pattern.permute.xlu0 0
        %7835 = vperm.xlu0 %7834, %v7832
        %v7836 = vpop.permute.xlu0 %7835
        %v7838 = vlaneseq
        %v7839 = vshrl.u32 %v7838, 7
        %v7840 = vsub.s32 0, %v7839
        %v7841 = vrot.slane %v7836, %v7840
        %v7842 = vadd.f32 %v7831, %v7841
        %v7843 = vxor.u32 %v7842, 2147483648
        %v7844 = vmul.f32 %v7843, 1.442695
        %v7845 = vpow.pop %v7844
        %v7846 = vadd.f32 %v7845, 1.0
        %v7847 = vrcp.pop %v7846
        %v7848 = vmul.f32 1.0, %v7847
        %v7849 = vmul.f32 %v7848, 10.0
        %vm7850 = vcmask 122880
        %7851 = vst.msk [vmem:[%s287] sm:$0x1] %vm7850, %v7849
        %v7852 = vld [vmem:[#allocation3 + $0x10] sm:$0xf]
        %v7853 = vld [vmem:[#allocation3 + $0x14] sm:$0xf]
        %v7854 = vld [vmem:[#allocation3 + $0x18] sm:$0xf]
        %v7855 = vld [vmem:[#allocation3 + $0x1c] sm:$0xf]
        %v7856 = vld [vmem:[#allocation3 + $0x20] sm:$0xf]
        %v7857 = vld [vmem:[#allocation3 + $0x24] sm:$0xf]
        %v7858 = vld [vmem:[#allocation3 + $0x28] sm:$0xf]
        %v7859 = vld [vmem:[#allocation3 + $0x2c] sm:$0xf]
        %v7860 = vld [vmem:[#allocation3 + $0x30] sm:$0xf]
        %v7861 = vld [vmem:[#allocation3 + $0x34] sm:$0xf]
        %v7862 = vld [vmem:[#allocation3 + $0x38] sm:$0xf]
        %v7863 = vld [vmem:[#allocation3 + $0x3c] sm:$0xf]
        %v7864 = vld [vmem:[%s3] sm:$0xf]
        %v7865 = vld [vmem:[%s7626] sm:$0xf]
        %v7878 = vunpack.c.l.b16 %v7852
        %v7879 = vunpack.c.l.b16 %v7853
        %v7880 = vunpack.c.l.b16 %v7854
        %v7881 = vunpack.c.l.b16 %v7855
        %v7882 = vunpack.c.l.b16 %v7856
        %v7883 = vunpack.c.l.b16 %v7857
        %v7884 = vunpack.c.l.b16 %v7858
        %v7885 = vunpack.c.l.b16 %v7859
        %v7886 = vunpack.c.l.b16 %v7860
        %v7887 = vunpack.c.l.b16 %v7861
        %v7888 = vunpack.c.l.b16 %v7862
        %v7889 = vunpack.c.l.b16 %v7863
        %v7890 = vpack.c.b16 %v7879, %v7878
        %v7891 = vpack.c.b16 %v7881, %v7880
        %v7892 = vpack.c.b16 %v7883, %v7882
        %v7893 = vpack.c.b16 %v7885, %v7884
        %v7894 = vpack.c.b16 %v7887, %v7886
        %v7895 = vpack.c.b16 %v7889, %v7888
        %7896 = vrot.lane.b32.xlu0 %v7890, 127
        %v7897 = vpop.permute.xlu0 %7896
        %7898 = vrot.lane.b32.xlu0 %v7891, 127
        %v7899 = vpop.permute.xlu0 %7898
        %7900 = vrot.lane.b32.xlu0 %v7892, 127
        %v7901 = vpop.permute.xlu0 %7900
        %7902 = vrot.lane.b32.xlu0 %v7893, 127
        %v7903 = vpop.permute.xlu0 %7902
        %7904 = vrot.lane.b32.xlu0 %v7894, 127
        %v7905 = vpop.permute.xlu0 %7904
        %7906 = vrot.lane.b32.xlu0 %v7895, 127
        %v7907 = vpop.permute.xlu0 %7906
        %v7915 = vsel %vm4092, %v7865, 0
        %7917 = vmatprep.subr.bf16.mxu0 0
        %7918 = vmatpush1.bf16.msra.mxu0 0
        %7919 = vmatprep.subr.bf16.mxu0 0
        %7920 = vmatpush1.bf16.msra.mxu0 0
        %7921 = vmatprep.subr.bf16.mxu0 0
        %7922 = vmatpush1.bf16.msra.mxu0 %v7907
        %7923 = vmatprep.subr.bf16.mxu0 0
        %7924 = vmatpush1.bf16.msra.mxu0 %v7905
        %7925 = vmatprep.subr.bf16.mxu0 0
        %7926 = vmatpush1.bf16.msra.mxu0 %v7903
        %7927 = vmatprep.subr.bf16.mxu0 0
        %7928 = vmatpush1.bf16.msra.mxu0 %v7901
        %7929 = vmatprep.subr.bf16.mxu0 0
        %7930 = vmatpush1.bf16.msra.mxu0 %v7899
        %7931 = vmatprep.subr.bf16.mxu0 0
        %7932 = vmatpush1.bf16.msra.mxu0 %v7897
        %7933 = vmatprep.subr.bf16.mxu0 0
        %7934 = vmatpush2.bf16.msra.mxu0 0
        %7935 = vmatprep.subr.bf16.mxu0 0
        %7936 = vmatpush2.bf16.msra.mxu0 0
        %7937 = vmatprep.subr.bf16.mxu0 0
        %7938 = vmatpush2.bf16.msra.mxu0 0
        %7939 = vmatprep.subr.bf16.mxu0 0
        %7940 = vmatpush2.bf16.msra.mxu0 0
        %7941 = vmatprep.subr.bf16.mxu0 0
        %7942 = vmatpush2.bf16.msra.mxu0 0
        %7943 = vmatprep.subr.bf16.mxu0 0
        %7944 = vmatpush2.bf16.msra.mxu0 0
        %7945 = vmatprep.subr.bf16.mxu0 0
        %7946 = vmatpush2.bf16.msra.mxu0 0
        %7947 = vmatprep.subr.bf16.mxu0 0
        %7948 = vmatpush2.bf16.msra.mxu0 0
        %7949 = vmatprep.mubr.bf16.mxu0 0
        %7950 = vmatmul.mubr.bf16.gmra.mxu0 %v7915
        %v7951 = vpop.f32.mrf.mxu0
        %v7952 = vadd.f32 0.0, %v7951
        %v7953 = vpop.f32.mrf.mxu0
        %v7954 = vpop.f32.mrf.mxu0
        %v7955 = vpop.f32.mrf.mxu0
        %7956 = vdwg.mxu0
        %v7964 = vsel %vm4092, %v7864, 0
        %7966 = vmatprep.subr.bf16.mxu0 0
        %7967 = vmatpush1.bf16.msra.mxu0 0
        %7968 = vmatprep.subr.bf16.mxu0 0
        %7969 = vmatpush1.bf16.msra.mxu0 0
        %7970 = vmatprep.subr.bf16.mxu0 0
        %7971 = vmatpush1.bf16.msra.mxu0 %v7895
        %7972 = vmatprep.subr.bf16.mxu0 0
        %7973 = vmatpush1.bf16.msra.mxu0 %v7894
        %7974 = vmatprep.subr.bf16.mxu0 0
        %7975 = vmatpush1.bf16.msra.mxu0 %v7893
        %7976 = vmatprep.subr.bf16.mxu0 0
        %7977 = vmatpush1.bf16.msra.mxu0 %v7892
        %7978 = vmatprep.subr.bf16.mxu0 0
        %7979 = vmatpush1.bf16.msra.mxu0 %v7891
        %7980 = vmatprep.subr.bf16.mxu0 0
        %7981 = vmatpush1.bf16.msra.mxu0 %v7890
        %7982 = vmatprep.subr.bf16.mxu0 0
        %7983 = vmatpush2.bf16.msra.mxu0 0
        %7984 = vmatprep.subr.bf16.mxu0 0
        %7985 = vmatpush2.bf16.msra.mxu0 0
        %7986 = vmatprep.subr.bf16.mxu0 0
        %7987 = vmatpush2.bf16.msra.mxu0 0
        %7988 = vmatprep.subr.bf16.mxu0 0
        %7989 = vmatpush2.bf16.msra.mxu0 0
        %7990 = vmatprep.subr.bf16.mxu0 0
        %7991 = vmatpush2.bf16.msra.mxu0 0
        %7992 = vmatprep.subr.bf16.mxu0 0
        %7993 = vmatpush2.bf16.msra.mxu0 0
        %7994 = vmatprep.subr.bf16.mxu0 0
        %7995 = vmatpush2.bf16.msra.mxu0 0
        %7996 = vmatprep.subr.bf16.mxu0 0
        %7997 = vmatpush2.bf16.msra.mxu0 0
        %7998 = vmatprep.mubr.bf16.mxu0 0
        %7999 = vmatmul.mubr.bf16.gmra.mxu0 %v7964
        %v8000 = vpop.f32.mrf.mxu0
        %v8001 = vadd.f32 %v7952, %v8000
        %v8002 = vpop.f32.mrf.mxu0
        %v8003 = vpop.f32.mrf.mxu0
        %v8004 = vpop.f32.mrf.mxu0
        %8005 = vdwg.mxu0
        %v8006 = vld [vmem:[%s7768] sm:$0xf]
        %8007 = vrot.lane.b32.xlu0 %v7890, 126
        %v8008 = vpop.permute.xlu0 %8007
        %8009 = vrot.lane.b32.xlu0 %v7891, 126
        %v8010 = vpop.permute.xlu0 %8009
        %8011 = vrot.lane.b32.xlu0 %v7892, 126
        %v8012 = vpop.permute.xlu0 %8011
        %8013 = vrot.lane.b32.xlu0 %v7893, 126
        %v8014 = vpop.permute.xlu0 %8013
        %8015 = vrot.lane.b32.xlu0 %v7894, 126
        %v8016 = vpop.permute.xlu0 %8015
        %8017 = vrot.lane.b32.xlu0 %v7895, 126
        %v8018 = vpop.permute.xlu0 %8017
        %v8026 = vsel %vm4092, %v8006, 0
        %8028 = vmatprep.subr.bf16.mxu0 0
        %8029 = vmatpush1.bf16.msra.mxu0 0
        %8030 = vmatprep.subr.bf16.mxu0 0
        %8031 = vmatpush1.bf16.msra.mxu0 0
        %8032 = vmatprep.subr.bf16.mxu0 0
        %8033 = vmatpush1.bf16.msra.mxu0 %v8018
        %8034 = vmatprep.subr.bf16.mxu0 0
        %8035 = vmatpush1.bf16.msra.mxu0 %v8016
        %8036 = vmatprep.subr.bf16.mxu0 0
        %8037 = vmatpush1.bf16.msra.mxu0 %v8014
        %8038 = vmatprep.subr.bf16.mxu0 0
        %8039 = vmatpush1.bf16.msra.mxu0 %v8012
        %8040 = vmatprep.subr.bf16.mxu0 0
        %8041 = vmatpush1.bf16.msra.mxu0 %v8010
        %8042 = vmatprep.subr.bf16.mxu0 0
        %8043 = vmatpush1.bf16.msra.mxu0 %v8008
        %8044 = vmatprep.subr.bf16.mxu0 0
        %8045 = vmatpush2.bf16.msra.mxu0 0
        %8046 = vmatprep.subr.bf16.mxu0 0
        %8047 = vmatpush2.bf16.msra.mxu0 0
        %8048 = vmatprep.subr.bf16.mxu0 0
        %8049 = vmatpush2.bf16.msra.mxu0 0
        %8050 = vmatprep.subr.bf16.mxu0 0
        %8051 = vmatpush2.bf16.msra.mxu0 0
        %8052 = vmatprep.subr.bf16.mxu0 0
        %8053 = vmatpush2.bf16.msra.mxu0 0
        %8054 = vmatprep.subr.bf16.mxu0 0
        %8055 = vmatpush2.bf16.msra.mxu0 0
        %8056 = vmatprep.subr.bf16.mxu0 0
        %8057 = vmatpush2.bf16.msra.mxu0 0
        %8058 = vmatprep.subr.bf16.mxu0 0
        %8059 = vmatpush2.bf16.msra.mxu0 0
        %8060 = vmatprep.mubr.bf16.mxu0 0
        %8061 = vmatmul.mubr.bf16.gmra.mxu0 %v8026
        %v8062 = vpop.f32.mrf.mxu0
        %v8063 = vadd.f32 0.0, %v8062
        %v8064 = vpop.f32.mrf.mxu0
        %v8065 = vpop.f32.mrf.mxu0
        %v8066 = vpop.f32.mrf.mxu0
        %8067 = vdwg.mxu0
        %v8068 = vadd.f32 %v8001, %v8063
        %v8069 = vld [vmem:[#allocation4] sm:$0x1]
        %8071 = vset.pattern.permute.xlu0 0
        %8072 = vperm.xlu0 %8071, %v8069
        %v8073 = vpop.permute.xlu0 %8072
        %v8075 = vlaneseq
        %v8076 = vshrl.u32 %v8075, 7
        %v8077 = vsub.s32 0, %v8076
        %v8078 = vrot.slane %v8073, %v8077
        %v8079 = vadd.f32 %v8068, %v8078
        %v8080 = vxor.u32 %v8079, 2147483648
        %v8081 = vmul.f32 %v8080, 1.442695
        %v8082 = vpow.pop %v8081
        %v8083 = vadd.f32 %v8082, 1.0
        %v8084 = vrcp.pop %v8083
        %v8085 = vmul.f32 1.0, %v8084
        %v8086 = vmul.f32 %v8085, 10.0
        %8087 = vst.msk [vmem:[%s287 + $0x1] sm:$0x1] %vm7850, %v8086
        %v8088 = vld [vmem:[#allocation3 + $0x20] sm:$0xf]
        %v8089 = vld [vmem:[#allocation3 + $0x24] sm:$0xf]
        %v8090 = vld [vmem:[#allocation3 + $0x28] sm:$0xf]
        %v8091 = vld [vmem:[#allocation3 + $0x2c] sm:$0xf]
        %v8092 = vld [vmem:[#allocation3 + $0x30] sm:$0xf]
        %v8093 = vld [vmem:[#allocation3 + $0x34] sm:$0xf]
        %v8094 = vld [vmem:[#allocation3 + $0x38] sm:$0xf]
        %v8095 = vld [vmem:[#allocation3 + $0x3c] sm:$0xf]
        %v8096 = vld [vmem:[#allocation3 + $0x40] sm:$0xf]
        %v8097 = vld [vmem:[#allocation3 + $0x44] sm:$0xf]
        %v8098 = vld [vmem:[#allocation3 + $0x48] sm:$0xf]
        %v8099 = vld [vmem:[#allocation3 + $0x4c] sm:$0xf]
        %v8100 = vld [vmem:[%s3] sm:$0xf]
        %v8101 = vld [vmem:[%s7626] sm:$0xf]
        %v8114 = vunpack.c.l.b16 %v8088
        %v8115 = vunpack.c.l.b16 %v8089
        %v8116 = vunpack.c.l.b16 %v8090
        %v8117 = vunpack.c.l.b16 %v8091
        %v8118 = vunpack.c.l.b16 %v8092
        %v8119 = vunpack.c.l.b16 %v8093
        %v8120 = vunpack.c.l.b16 %v8094
        %v8121 = vunpack.c.l.b16 %v8095
        %v8122 = vunpack.c.l.b16 %v8096
        %v8123 = vunpack.c.l.b16 %v8097
        %v8124 = vunpack.c.l.b16 %v8098
        %v8125 = vunpack.c.l.b16 %v8099
        %v8126 = vpack.c.b16 %v8115, %v8114
        %v8127 = vpack.c.b16 %v8117, %v8116
        %v8128 = vpack.c.b16 %v8119, %v8118
        %v8129 = vpack.c.b16 %v8121, %v8120
        %v8130 = vpack.c.b16 %v8123, %v8122
        %v8131 = vpack.c.b16 %v8125, %v8124
        %8132 = vrot.lane.b32.xlu0 %v8126, 127
        %v8133 = vpop.permute.xlu0 %8132
        %8134 = vrot.lane.b32.xlu0 %v8127, 127
        %v8135 = vpop.permute.xlu0 %8134
        %8136 = vrot.lane.b32.xlu0 %v8128, 127
        %v8137 = vpop.permute.xlu0 %8136
        %8138 = vrot.lane.b32.xlu0 %v8129, 127
        %v8139 = vpop.permute.xlu0 %8138
        %8140 = vrot.lane.b32.xlu0 %v8130, 127
        %v8141 = vpop.permute.xlu0 %8140
        %8142 = vrot.lane.b32.xlu0 %v8131, 127
        %v8143 = vpop.permute.xlu0 %8142
        %v8151 = vsel %vm4092, %v8101, 0
        %8153 = vmatprep.subr.bf16.mxu0 0
        %8154 = vmatpush1.bf16.msra.mxu0 0
        %8155 = vmatprep.subr.bf16.mxu0 0
        %8156 = vmatpush1.bf16.msra.mxu0 0
        %8157 = vmatprep.subr.bf16.mxu0 0
        %8158 = vmatpush1.bf16.msra.mxu0 %v8143
        %8159 = vmatprep.subr.bf16.mxu0 0
        %8160 = vmatpush1.bf16.msra.mxu0 %v8141
        %8161 = vmatprep.subr.bf16.mxu0 0
        %8162 = vmatpush1.bf16.msra.mxu0 %v8139
        %8163 = vmatprep.subr.bf16.mxu0 0
        %8164 = vmatpush1.bf16.msra.mxu0 %v8137
        %8165 = vmatprep.subr.bf16.mxu0 0
        %8166 = vmatpush1.bf16.msra.mxu0 %v8135
        %8167 = vmatprep.subr.bf16.mxu0 0
        %8168 = vmatpush1.bf16.msra.mxu0 %v8133
        %8169 = vmatprep.subr.bf16.mxu0 0
        %8170 = vmatpush2.bf16.msra.mxu0 0
        %8171 = vmatprep.subr.bf16.mxu0 0
        %8172 = vmatpush2.bf16.msra.mxu0 0
        %8173 = vmatprep.subr.bf16.mxu0 0
        %8174 = vmatpush2.bf16.msra.mxu0 0
        %8175 = vmatprep.subr.bf16.mxu0 0
        %8176 = vmatpush2.bf16.msra.mxu0 0
        %8177 = vmatprep.subr.bf16.mxu0 0
        %8178 = vmatpush2.bf16.msra.mxu0 0
        %8179 = vmatprep.subr.bf16.mxu0 0
        %8180 = vmatpush2.bf16.msra.mxu0 0
        %8181 = vmatprep.subr.bf16.mxu0 0
        %8182 = vmatpush2.bf16.msra.mxu0 0
        %8183 = vmatprep.subr.bf16.mxu0 0
        %8184 = vmatpush2.bf16.msra.mxu0 0
        %8185 = vmatprep.mubr.bf16.mxu0 0
        %8186 = vmatmul.mubr.bf16.gmra.mxu0 %v8151
        %v8187 = vpop.f32.mrf.mxu0
        %v8188 = vadd.f32 0.0, %v8187
        %v8189 = vpop.f32.mrf.mxu0
        %v8190 = vpop.f32.mrf.mxu0
        %v8191 = vpop.f32.mrf.mxu0
        %8192 = vdwg.mxu0
        %v8200 = vsel %vm4092, %v8100, 0
        %8202 = vmatprep.subr.bf16.mxu0 0
        %8203 = vmatpush1.bf16.msra.mxu0 0
        %8204 = vmatprep.subr.bf16.mxu0 0
        %8205 = vmatpush1.bf16.msra.mxu0 0
        %8206 = vmatprep.subr.bf16.mxu0 0
        %8207 = vmatpush1.bf16.msra.mxu0 %v8131
        %8208 = vmatprep.subr.bf16.mxu0 0
        %8209 = vmatpush1.bf16.msra.mxu0 %v8130
        %8210 = vmatprep.subr.bf16.mxu0 0
        %8211 = vmatpush1.bf16.msra.mxu0 %v8129
        %8212 = vmatprep.subr.bf16.mxu0 0
        %8213 = vmatpush1.bf16.msra.mxu0 %v8128
        %8214 = vmatprep.subr.bf16.mxu0 0
        %8215 = vmatpush1.bf16.msra.mxu0 %v8127
        %8216 = vmatprep.subr.bf16.mxu0 0
        %8217 = vmatpush1.bf16.msra.mxu0 %v8126
        %8218 = vmatprep.subr.bf16.mxu0 0
        %8219 = vmatpush2.bf16.msra.mxu0 0
        %8220 = vmatprep.subr.bf16.mxu0 0
        %8221 = vmatpush2.bf16.msra.mxu0 0
        %8222 = vmatprep.subr.bf16.mxu0 0
        %8223 = vmatpush2.bf16.msra.mxu0 0
        %8224 = vmatprep.subr.bf16.mxu0 0
        %8225 = vmatpush2.bf16.msra.mxu0 0
        %8226 = vmatprep.subr.bf16.mxu0 0
        %8227 = vmatpush2.bf16.msra.mxu0 0
        %8228 = vmatprep.subr.bf16.mxu0 0
        %8229 = vmatpush2.bf16.msra.mxu0 0
        %8230 = vmatprep.subr.bf16.mxu0 0
        %8231 = vmatpush2.bf16.msra.mxu0 0
        %8232 = vmatprep.subr.bf16.mxu0 0
        %8233 = vmatpush2.bf16.msra.mxu0 0
        %8234 = vmatprep.mubr.bf16.mxu0 0
        %8235 = vmatmul.mubr.bf16.gmra.mxu0 %v8200
        %v8236 = vpop.f32.mrf.mxu0
        %v8237 = vadd.f32 %v8188, %v8236
        %v8238 = vpop.f32.mrf.mxu0
        %v8239 = vpop.f32.mrf.mxu0
        %v8240 = vpop.f32.mrf.mxu0
        %8241 = vdwg.mxu0
        %v8242 = vld [vmem:[%s7768] sm:$0xf]
        %8243 = vrot.lane.b32.xlu0 %v8126, 126
        %v8244 = vpop.permute.xlu0 %8243
        %8245 = vrot.lane.b32.xlu0 %v8127, 126
        %v8246 = vpop.permute.xlu0 %8245
        %8247 = vrot.lane.b32.xlu0 %v8128, 126
        %v8248 = vpop.permute.xlu0 %8247
        %8249 = vrot.lane.b32.xlu0 %v8129, 126
        %v8250 = vpop.permute.xlu0 %8249
        %8251 = vrot.lane.b32.xlu0 %v8130, 126
        %v8252 = vpop.permute.xlu0 %8251
        %8253 = vrot.lane.b32.xlu0 %v8131, 126
        %v8254 = vpop.permute.xlu0 %8253
        %v8262 = vsel %vm4092, %v8242, 0
        %8264 = vmatprep.subr.bf16.mxu0 0
        %8265 = vmatpush1.bf16.msra.mxu0 0
        %8266 = vmatprep.subr.bf16.mxu0 0
        %8267 = vmatpush1.bf16.msra.mxu0 0
        %8268 = vmatprep.subr.bf16.mxu0 0
        %8269 = vmatpush1.bf16.msra.mxu0 %v8254
        %8270 = vmatprep.subr.bf16.mxu0 0
        %8271 = vmatpush1.bf16.msra.mxu0 %v8252
        %8272 = vmatprep.subr.bf16.mxu0 0
        %8273 = vmatpush1.bf16.msra.mxu0 %v8250
        %8274 = vmatprep.subr.bf16.mxu0 0
        %8275 = vmatpush1.bf16.msra.mxu0 %v8248
        %8276 = vmatprep.subr.bf16.mxu0 0
        %8277 = vmatpush1.bf16.msra.mxu0 %v8246
        %8278 = vmatprep.subr.bf16.mxu0 0
        %8279 = vmatpush1.bf16.msra.mxu0 %v8244
        %8280 = vmatprep.subr.bf16.mxu0 0
        %8281 = vmatpush2.bf16.msra.mxu0 0
        %8282 = vmatprep.subr.bf16.mxu0 0
        %8283 = vmatpush2.bf16.msra.mxu0 0
        %8284 = vmatprep.subr.bf16.mxu0 0
        %8285 = vmatpush2.bf16.msra.mxu0 0
        %8286 = vmatprep.subr.bf16.mxu0 0
        %8287 = vmatpush2.bf16.msra.mxu0 0
        %8288 = vmatprep.subr.bf16.mxu0 0
        %8289 = vmatpush2.bf16.msra.mxu0 0
        %8290 = vmatprep.subr.bf16.mxu0 0
        %8291 = vmatpush2.bf16.msra.mxu0 0
        %8292 = vmatprep.subr.bf16.mxu0 0
        %8293 = vmatpush2.bf16.msra.mxu0 0
        %8294 = vmatprep.subr.bf16.mxu0 0
        %8295 = vmatpush2.bf16.msra.mxu0 0
        %8296 = vmatprep.mubr.bf16.mxu0 0
        %8297 = vmatmul.mubr.bf16.gmra.mxu0 %v8262
        %v8298 = vpop.f32.mrf.mxu0
        %v8299 = vadd.f32 0.0, %v8298
        %v8300 = vpop.f32.mrf.mxu0
        %v8301 = vpop.f32.mrf.mxu0
        %v8302 = vpop.f32.mrf.mxu0
        %8303 = vdwg.mxu0
        %v8304 = vadd.f32 %v8237, %v8299
        %v8305 = vld [vmem:[#allocation4] sm:$0x1]
        %8307 = vset.pattern.permute.xlu0 0
        %8308 = vperm.xlu0 %8307, %v8305
        %v8309 = vpop.permute.xlu0 %8308
        %v8311 = vlaneseq
        %v8312 = vshrl.u32 %v8311, 7
        %v8313 = vsub.s32 0, %v8312
        %v8314 = vrot.slane %v8309, %v8313
        %v8315 = vadd.f32 %v8304, %v8314
        %v8316 = vxor.u32 %v8315, 2147483648
        %v8317 = vmul.f32 %v8316, 1.442695
        %v8318 = vpow.pop %v8317
        %v8319 = vadd.f32 %v8318, 1.0
        %v8320 = vrcp.pop %v8319
        %v8321 = vmul.f32 1.0, %v8320
        %v8322 = vmul.f32 %v8321, 10.0
        %8323 = vst.msk [vmem:[%s287 + $0x2] sm:$0x1] %vm7850, %v8322
        %v8324 = vld [vmem:[#allocation3 + $0x30] sm:$0xf]
        %v8325 = vld [vmem:[#allocation3 + $0x34] sm:$0xf]
        %v8326 = vld [vmem:[#allocation3 + $0x38] sm:$0xf]
        %v8327 = vld [vmem:[#allocation3 + $0x3c] sm:$0xf]
        %v8328 = vld [vmem:[#allocation3 + $0x40] sm:$0xf]
        %v8329 = vld [vmem:[#allocation3 + $0x44] sm:$0xf]
        %v8330 = vld [vmem:[#allocation3 + $0x48] sm:$0xf]
        %v8331 = vld [vmem:[#allocation3 + $0x4c] sm:$0xf]
        %v8332 = vld [vmem:[#allocation3 + $0x50] sm:$0xf]
        %v8333 = vld [vmem:[#allocation3 + $0x54] sm:$0xf]
        %v8334 = vld [vmem:[#allocation3 + $0x58] sm:$0xf]
        %v8335 = vld [vmem:[#allocation3 + $0x5c] sm:$0xf]
        %v8336 = vld [vmem:[%s3] sm:$0xf]
        %v8337 = vld [vmem:[%s7626] sm:$0xf]
        %v8350 = vunpack.c.l.b16 %v8324
        %v8351 = vunpack.c.l.b16 %v8325
        %v8352 = vunpack.c.l.b16 %v8326
        %v8353 = vunpack.c.l.b16 %v8327
        %v8354 = vunpack.c.l.b16 %v8328
        %v8355 = vunpack.c.l.b16 %v8329
        %v8356 = vunpack.c.l.b16 %v8330
        %v8357 = vunpack.c.l.b16 %v8331
        %v8358 = vunpack.c.l.b16 %v8332
        %v8359 = vunpack.c.l.b16 %v8333
        %v8360 = vunpack.c.l.b16 %v8334
        %v8361 = vunpack.c.l.b16 %v8335
        %v8362 = vpack.c.b16 %v8351, %v8350
        %v8363 = vpack.c.b16 %v8353, %v8352
        %v8364 = vpack.c.b16 %v8355, %v8354
        %v8365 = vpack.c.b16 %v8357, %v8356
        %v8366 = vpack.c.b16 %v8359, %v8358
        %v8367 = vpack.c.b16 %v8361, %v8360
        %8368 = vrot.lane.b32.xlu0 %v8362, 127
        %v8369 = vpop.permute.xlu0 %8368
        %8370 = vrot.lane.b32.xlu0 %v8363, 127
        %v8371 = vpop.permute.xlu0 %8370
        %8372 = vrot.lane.b32.xlu0 %v8364, 127
        %v8373 = vpop.permute.xlu0 %8372
        %8374 = vrot.lane.b32.xlu0 %v8365, 127
        %v8375 = vpop.permute.xlu0 %8374
        %8376 = vrot.lane.b32.xlu0 %v8366, 127
        %v8377 = vpop.permute.xlu0 %8376
        %8378 = vrot.lane.b32.xlu0 %v8367, 127
        %v8379 = vpop.permute.xlu0 %8378
        %v8387 = vsel %vm4092, %v8337, 0
        %8389 = vmatprep.subr.bf16.mxu0 0
        %8390 = vmatpush1.bf16.msra.mxu0 0
        %8391 = vmatprep.subr.bf16.mxu0 0
        %8392 = vmatpush1.bf16.msra.mxu0 0
        %8393 = vmatprep.subr.bf16.mxu0 0
        %8394 = vmatpush1.bf16.msra.mxu0 %v8379
        %8395 = vmatprep.subr.bf16.mxu0 0
        %8396 = vmatpush1.bf16.msra.mxu0 %v8377
        %8397 = vmatprep.subr.bf16.mxu0 0
        %8398 = vmatpush1.bf16.msra.mxu0 %v8375
        %8399 = vmatprep.subr.bf16.mxu0 0
        %8400 = vmatpush1.bf16.msra.mxu0 %v8373
        %8401 = vmatprep.subr.bf16.mxu0 0
        %8402 = vmatpush1.bf16.msra.mxu0 %v8371
        %8403 = vmatprep.subr.bf16.mxu0 0
        %8404 = vmatpush1.bf16.msra.mxu0 %v8369
        %8405 = vmatprep.subr.bf16.mxu0 0
        %8406 = vmatpush2.bf16.msra.mxu0 0
        %8407 = vmatprep.subr.bf16.mxu0 0
        %8408 = vmatpush2.bf16.msra.mxu0 0
        %8409 = vmatprep.subr.bf16.mxu0 0
        %8410 = vmatpush2.bf16.msra.mxu0 0
        %8411 = vmatprep.subr.bf16.mxu0 0
        %8412 = vmatpush2.bf16.msra.mxu0 0
        %8413 = vmatprep.subr.bf16.mxu0 0
        %8414 = vmatpush2.bf16.msra.mxu0 0
        %8415 = vmatprep.subr.bf16.mxu0 0
        %8416 = vmatpush2.bf16.msra.mxu0 0
        %8417 = vmatprep.subr.bf16.mxu0 0
        %8418 = vmatpush2.bf16.msra.mxu0 0
        %8419 = vmatprep.subr.bf16.mxu0 0
        %8420 = vmatpush2.bf16.msra.mxu0 0
        %8421 = vmatprep.mubr.bf16.mxu0 0
        %8422 = vmatmul.mubr.bf16.gmra.mxu0 %v8387
        %v8423 = vpop.f32.mrf.mxu0
        %v8424 = vadd.f32 0.0, %v8423
        %v8425 = vpop.f32.mrf.mxu0
        %v8426 = vpop.f32.mrf.mxu0
        %v8427 = vpop.f32.mrf.mxu0
        %8428 = vdwg.mxu0
        %v8436 = vsel %vm4092, %v8336, 0
        %8438 = vmatprep.subr.bf16.mxu0 0
        %8439 = vmatpush1.bf16.msra.mxu0 0
        %8440 = vmatprep.subr.bf16.mxu0 0
        %8441 = vmatpush1.bf16.msra.mxu0 0
        %8442 = vmatprep.subr.bf16.mxu0 0
        %8443 = vmatpush1.bf16.msra.mxu0 %v8367
        %8444 = vmatprep.subr.bf16.mxu0 0
        %8445 = vmatpush1.bf16.msra.mxu0 %v8366
        %8446 = vmatprep.subr.bf16.mxu0 0
        %8447 = vmatpush1.bf16.msra.mxu0 %v8365
        %8448 = vmatprep.subr.bf16.mxu0 0
        %8449 = vmatpush1.bf16.msra.mxu0 %v8364
        %8450 = vmatprep.subr.bf16.mxu0 0
        %8451 = vmatpush1.bf16.msra.mxu0 %v8363
        %8452 = vmatprep.subr.bf16.mxu0 0
        %8453 = vmatpush1.bf16.msra.mxu0 %v8362
        %8454 = vmatprep.subr.bf16.mxu0 0
        %8455 = vmatpush2.bf16.msra.mxu0 0
        %8456 = vmatprep.subr.bf16.mxu0 0
        %8457 = vmatpush2.bf16.msra.mxu0 0
        %8458 = vmatprep.subr.bf16.mxu0 0
        %8459 = vmatpush2.bf16.msra.mxu0 0
        %8460 = vmatprep.subr.bf16.mxu0 0
        %8461 = vmatpush2.bf16.msra.mxu0 0
        %8462 = vmatprep.subr.bf16.mxu0 0
        %8463 = vmatpush2.bf16.msra.mxu0 0
        %8464 = vmatprep.subr.bf16.mxu0 0
        %8465 = vmatpush2.bf16.msra.mxu0 0
        %8466 = vmatprep.subr.bf16.mxu0 0
        %8467 = vmatpush2.bf16.msra.mxu0 0
        %8468 = vmatprep.subr.bf16.mxu0 0
        %8469 = vmatpush2.bf16.msra.mxu0 0
        %8470 = vmatprep.mubr.bf16.mxu0 0
        %8471 = vmatmul.mubr.bf16.gmra.mxu0 %v8436
        %v8472 = vpop.f32.mrf.mxu0
        %v8473 = vadd.f32 %v8424, %v8472
        %v8474 = vpop.f32.mrf.mxu0
        %v8475 = vpop.f32.mrf.mxu0
        %v8476 = vpop.f32.mrf.mxu0
        %8477 = vdwg.mxu0
        %v8478 = vld [vmem:[%s7768] sm:$0xf]
        %8479 = vrot.lane.b32.xlu0 %v8362, 126
        %v8480 = vpop.permute.xlu0 %8479
        %8481 = vrot.lane.b32.xlu0 %v8363, 126
        %v8482 = vpop.permute.xlu0 %8481
        %8483 = vrot.lane.b32.xlu0 %v8364, 126
        %v8484 = vpop.permute.xlu0 %8483
        %8485 = vrot.lane.b32.xlu0 %v8365, 126
        %v8486 = vpop.permute.xlu0 %8485
        %8487 = vrot.lane.b32.xlu0 %v8366, 126
        %v8488 = vpop.permute.xlu0 %8487
        %8489 = vrot.lane.b32.xlu0 %v8367, 126
        %v8490 = vpop.permute.xlu0 %8489
        %v8498 = vsel %vm4092, %v8478, 0
        %8500 = vmatprep.subr.bf16.mxu0 0
        %8501 = vmatpush1.bf16.msra.mxu0 0
        %8502 = vmatprep.subr.bf16.mxu0 0
        %8503 = vmatpush1.bf16.msra.mxu0 0
        %8504 = vmatprep.subr.bf16.mxu0 0
        %8505 = vmatpush1.bf16.msra.mxu0 %v8490
        %8506 = vmatprep.subr.bf16.mxu0 0
        %8507 = vmatpush1.bf16.msra.mxu0 %v8488
        %8508 = vmatprep.subr.bf16.mxu0 0
        %8509 = vmatpush1.bf16.msra.mxu0 %v8486
        %8510 = vmatprep.subr.bf16.mxu0 0
        %8511 = vmatpush1.bf16.msra.mxu0 %v8484
        %8512 = vmatprep.subr.bf16.mxu0 0
        %8513 = vmatpush1.bf16.msra.mxu0 %v8482
        %8514 = vmatprep.subr.bf16.mxu0 0
        %8515 = vmatpush1.bf16.msra.mxu0 %v8480
        %8516 = vmatprep.subr.bf16.mxu0 0
        %8517 = vmatpush2.bf16.msra.mxu0 0
        %8518 = vmatprep.subr.bf16.mxu0 0
        %8519 = vmatpush2.bf16.msra.mxu0 0
        %8520 = vmatprep.subr.bf16.mxu0 0
        %8521 = vmatpush2.bf16.msra.mxu0 0
        %8522 = vmatprep.subr.bf16.mxu0 0
        %8523 = vmatpush2.bf16.msra.mxu0 0
        %8524 = vmatprep.subr.bf16.mxu0 0
        %8525 = vmatpush2.bf16.msra.mxu0 0
        %8526 = vmatprep.subr.bf16.mxu0 0
        %8527 = vmatpush2.bf16.msra.mxu0 0
        %8528 = vmatprep.subr.bf16.mxu0 0
        %8529 = vmatpush2.bf16.msra.mxu0 0
        %8530 = vmatprep.subr.bf16.mxu0 0
        %8531 = vmatpush2.bf16.msra.mxu0 0
        %8532 = vmatprep.mubr.bf16.mxu0 0
        %8533 = vmatmul.mubr.bf16.gmra.mxu0 %v8498
        %v8534 = vpop.f32.mrf.mxu0
        %v8535 = vadd.f32 0.0, %v8534
        %v8536 = vpop.f32.mrf.mxu0
        %v8537 = vpop.f32.mrf.mxu0
        %v8538 = vpop.f32.mrf.mxu0
        %8539 = vdwg.mxu0
        %v8540 = vadd.f32 %v8473, %v8535
        %v8541 = vld [vmem:[#allocation4] sm:$0x1]
        %8543 = vset.pattern.permute.xlu0 0
        %8544 = vperm.xlu0 %8543, %v8541
        %v8545 = vpop.permute.xlu0 %8544
        %v8547 = vlaneseq
        %v8548 = vshrl.u32 %v8547, 7
        %v8549 = vsub.s32 0, %v8548
        %v8550 = vrot.slane %v8545, %v8549
        %v8551 = vadd.f32 %v8540, %v8550
        %v8552 = vxor.u32 %v8551, 2147483648
        %v8553 = vmul.f32 %v8552, 1.442695
        %v8554 = vpow.pop %v8553
        %v8555 = vadd.f32 %v8554, 1.0
        %v8556 = vrcp.pop %v8555
        %v8557 = vmul.f32 1.0, %v8556
        %v8558 = vmul.f32 %v8557, 10.0
        %8559 = vst.msk [vmem:[%s287 + $0x3] sm:$0x1] %vm7850, %v8558
        %v8560 = vld [vmem:[#allocation3 + $0x40] sm:$0xf]
        %v8561 = vld [vmem:[#allocation3 + $0x44] sm:$0xf]
        %v8562 = vld [vmem:[#allocation3 + $0x48] sm:$0xf]
        %v8563 = vld [vmem:[#allocation3 + $0x4c] sm:$0xf]
        %v8564 = vld [vmem:[#allocation3 + $0x50] sm:$0xf]
        %v8565 = vld [vmem:[#allocation3 + $0x54] sm:$0xf]
        %v8566 = vld [vmem:[#allocation3 + $0x58] sm:$0xf]
        %v8567 = vld [vmem:[#allocation3 + $0x5c] sm:$0xf]
        %v8568 = vld [vmem:[#allocation3 + $0x60] sm:$0xf]
        %v8569 = vld [vmem:[#allocation3 + $0x64] sm:$0xf]
        %v8570 = vld [vmem:[#allocation3 + $0x68] sm:$0xf]
        %v8571 = vld [vmem:[#allocation3 + $0x6c] sm:$0xf]
        %v8572 = vld [vmem:[%s3] sm:$0xf]
        %v8573 = vld [vmem:[%s7626] sm:$0xf]
        %v8586 = vunpack.c.l.b16 %v8560
        %v8587 = vunpack.c.l.b16 %v8561
        %v8588 = vunpack.c.l.b16 %v8562
        %v8589 = vunpack.c.l.b16 %v8563
        %v8590 = vunpack.c.l.b16 %v8564
        %v8591 = vunpack.c.l.b16 %v8565
        %v8592 = vunpack.c.l.b16 %v8566
        %v8593 = vunpack.c.l.b16 %v8567
        %v8594 = vunpack.c.l.b16 %v8568
        %v8595 = vunpack.c.l.b16 %v8569
        %v8596 = vunpack.c.l.b16 %v8570
        %v8597 = vunpack.c.l.b16 %v8571
        %v8598 = vpack.c.b16 %v8587, %v8586
        %v8599 = vpack.c.b16 %v8589, %v8588
        %v8600 = vpack.c.b16 %v8591, %v8590
        %v8601 = vpack.c.b16 %v8593, %v8592
        %v8602 = vpack.c.b16 %v8595, %v8594
        %v8603 = vpack.c.b16 %v8597, %v8596
        %8604 = vrot.lane.b32.xlu0 %v8598, 127
        %v8605 = vpop.permute.xlu0 %8604
        %8606 = vrot.lane.b32.xlu0 %v8599, 127
        %v8607 = vpop.permute.xlu0 %8606
        %8608 = vrot.lane.b32.xlu0 %v8600, 127
        %v8609 = vpop.permute.xlu0 %8608
        %8610 = vrot.lane.b32.xlu0 %v8601, 127
        %v8611 = vpop.permute.xlu0 %8610
        %8612 = vrot.lane.b32.xlu0 %v8602, 127
        %v8613 = vpop.permute.xlu0 %8612
        %8614 = vrot.lane.b32.xlu0 %v8603, 127
        %v8615 = vpop.permute.xlu0 %8614
        %v8623 = vsel %vm4092, %v8573, 0
        %8625 = vmatprep.subr.bf16.mxu0 0
        %8626 = vmatpush1.bf16.msra.mxu0 0
        %8627 = vmatprep.subr.bf16.mxu0 0
        %8628 = vmatpush1.bf16.msra.mxu0 0
        %8629 = vmatprep.subr.bf16.mxu0 0
        %8630 = vmatpush1.bf16.msra.mxu0 %v8615
        %8631 = vmatprep.subr.bf16.mxu0 0
        %8632 = vmatpush1.bf16.msra.mxu0 %v8613
        %8633 = vmatprep.subr.bf16.mxu0 0
        %8634 = vmatpush1.bf16.msra.mxu0 %v8611
        %8635 = vmatprep.subr.bf16.mxu0 0
        %8636 = vmatpush1.bf16.msra.mxu0 %v8609
        %8637 = vmatprep.subr.bf16.mxu0 0
        %8638 = vmatpush1.bf16.msra.mxu0 %v8607
        %8639 = vmatprep.subr.bf16.mxu0 0
        %8640 = vmatpush1.bf16.msra.mxu0 %v8605
        %8641 = vmatprep.subr.bf16.mxu0 0
        %8642 = vmatpush2.bf16.msra.mxu0 0
        %8643 = vmatprep.subr.bf16.mxu0 0
        %8644 = vmatpush2.bf16.msra.mxu0 0
        %8645 = vmatprep.subr.bf16.mxu0 0
        %8646 = vmatpush2.bf16.msra.mxu0 0
        %8647 = vmatprep.subr.bf16.mxu0 0
        %8648 = vmatpush2.bf16.msra.mxu0 0
        %8649 = vmatprep.subr.bf16.mxu0 0
        %8650 = vmatpush2.bf16.msra.mxu0 0
        %8651 = vmatprep.subr.bf16.mxu0 0
        %8652 = vmatpush2.bf16.msra.mxu0 0
        %8653 = vmatprep.subr.bf16.mxu0 0
        %8654 = vmatpush2.bf16.msra.mxu0 0
        %8655 = vmatprep.subr.bf16.mxu0 0
        %8656 = vmatpush2.bf16.msra.mxu0 0
        %8657 = vmatprep.mubr.bf16.mxu0 0
        %8658 = vmatmul.mubr.bf16.gmra.mxu0 %v8623
        %v8659 = vpop.f32.mrf.mxu0
        %v8660 = vadd.f32 0.0, %v8659
        %v8661 = vpop.f32.mrf.mxu0
        %v8662 = vpop.f32.mrf.mxu0
        %v8663 = vpop.f32.mrf.mxu0
        %8664 = vdwg.mxu0
        %v8672 = vsel %vm4092, %v8572, 0
        %8674 = vmatprep.subr.bf16.mxu0 0
        %8675 = vmatpush1.bf16.msra.mxu0 0
        %8676 = vmatprep.subr.bf16.mxu0 0
        %8677 = vmatpush1.bf16.msra.mxu0 0
        %8678 = vmatprep.subr.bf16.mxu0 0
        %8679 = vmatpush1.bf16.msra.mxu0 %v8603
        %8680 = vmatprep.subr.bf16.mxu0 0
        %8681 = vmatpush1.bf16.msra.mxu0 %v8602
        %8682 = vmatprep.subr.bf16.mxu0 0
        %8683 = vmatpush1.bf16.msra.mxu0 %v8601
        %8684 = vmatprep.subr.bf16.mxu0 0
        %8685 = vmatpush1.bf16.msra.mxu0 %v8600
        %8686 = vmatprep.subr.bf16.mxu0 0
        %8687 = vmatpush1.bf16.msra.mxu0 %v8599
        %8688 = vmatprep.subr.bf16.mxu0 0
        %8689 = vmatpush1.bf16.msra.mxu0 %v8598
        %8690 = vmatprep.subr.bf16.mxu0 0
        %8691 = vmatpush2.bf16.msra.mxu0 0
        %8692 = vmatprep.subr.bf16.mxu0 0
        %8693 = vmatpush2.bf16.msra.mxu0 0
        %8694 = vmatprep.subr.bf16.mxu0 0
        %8695 = vmatpush2.bf16.msra.mxu0 0
        %8696 = vmatprep.subr.bf16.mxu0 0
        %8697 = vmatpush2.bf16.msra.mxu0 0
        %8698 = vmatprep.subr.bf16.mxu0 0
        %8699 = vmatpush2.bf16.msra.mxu0 0
        %8700 = vmatprep.subr.bf16.mxu0 0
        %8701 = vmatpush2.bf16.msra.mxu0 0
        %8702 = vmatprep.subr.bf16.mxu0 0
        %8703 = vmatpush2.bf16.msra.mxu0 0
        %8704 = vmatprep.subr.bf16.mxu0 0
        %8705 = vmatpush2.bf16.msra.mxu0 0
        %8706 = vmatprep.mubr.bf16.mxu0 0
        %8707 = vmatmul.mubr.bf16.gmra.mxu0 %v8672
        %v8708 = vpop.f32.mrf.mxu0
        %v8709 = vadd.f32 %v8660, %v8708
        %v8710 = vpop.f32.mrf.mxu0
        %v8711 = vpop.f32.mrf.mxu0
        %v8712 = vpop.f32.mrf.mxu0
        %8713 = vdwg.mxu0
        %v8714 = vld [vmem:[%s7768] sm:$0xf]
        %8715 = vrot.lane.b32.xlu0 %v8598, 126
        %v8716 = vpop.permute.xlu0 %8715
        %8717 = vrot.lane.b32.xlu0 %v8599, 126
        %v8718 = vpop.permute.xlu0 %8717
        %8719 = vrot.lane.b32.xlu0 %v8600, 126
        %v8720 = vpop.permute.xlu0 %8719
        %8721 = vrot.lane.b32.xlu0 %v8601, 126
        %v8722 = vpop.permute.xlu0 %8721
        %8723 = vrot.lane.b32.xlu0 %v8602, 126
        %v8724 = vpop.permute.xlu0 %8723
        %8725 = vrot.lane.b32.xlu0 %v8603, 126
        %v8726 = vpop.permute.xlu0 %8725
        %v8734 = vsel %vm4092, %v8714, 0
        %8736 = vmatprep.subr.bf16.mxu0 0
        %8737 = vmatpush1.bf16.msra.mxu0 0
        %8738 = vmatprep.subr.bf16.mxu0 0
        %8739 = vmatpush1.bf16.msra.mxu0 0
        %8740 = vmatprep.subr.bf16.mxu0 0
        %8741 = vmatpush1.bf16.msra.mxu0 %v8726
        %8742 = vmatprep.subr.bf16.mxu0 0
        %8743 = vmatpush1.bf16.msra.mxu0 %v8724
        %8744 = vmatprep.subr.bf16.mxu0 0
        %8745 = vmatpush1.bf16.msra.mxu0 %v8722
        %8746 = vmatprep.subr.bf16.mxu0 0
        %8747 = vmatpush1.bf16.msra.mxu0 %v8720
        %8748 = vmatprep.subr.bf16.mxu0 0
        %8749 = vmatpush1.bf16.msra.mxu0 %v8718
        %8750 = vmatprep.subr.bf16.mxu0 0
        %8751 = vmatpush1.bf16.msra.mxu0 %v8716
        %8752 = vmatprep.subr.bf16.mxu0 0
        %8753 = vmatpush2.bf16.msra.mxu0 0
        %8754 = vmatprep.subr.bf16.mxu0 0
        %8755 = vmatpush2.bf16.msra.mxu0 0
        %8756 = vmatprep.subr.bf16.mxu0 0
        %8757 = vmatpush2.bf16.msra.mxu0 0
        %8758 = vmatprep.subr.bf16.mxu0 0
        %8759 = vmatpush2.bf16.msra.mxu0 0
        %8760 = vmatprep.subr.bf16.mxu0 0
        %8761 = vmatpush2.bf16.msra.mxu0 0
        %8762 = vmatprep.subr.bf16.mxu0 0
        %8763 = vmatpush2.bf16.msra.mxu0 0
        %8764 = vmatprep.subr.bf16.mxu0 0
        %8765 = vmatpush2.bf16.msra.mxu0 0
        %8766 = vmatprep.subr.bf16.mxu0 0
        %8767 = vmatpush2.bf16.msra.mxu0 0
        %8768 = vmatprep.mubr.bf16.mxu0 0
        %8769 = vmatmul.mubr.bf16.gmra.mxu0 %v8734
        %v8770 = vpop.f32.mrf.mxu0
        %v8771 = vadd.f32 0.0, %v8770
        %v8772 = vpop.f32.mrf.mxu0
        %v8773 = vpop.f32.mrf.mxu0
        %v8774 = vpop.f32.mrf.mxu0
        %8775 = vdwg.mxu0
        %v8776 = vadd.f32 %v8709, %v8771
        %v8777 = vld [vmem:[#allocation4] sm:$0x1]
        %8779 = vset.pattern.permute.xlu0 0
        %8780 = vperm.xlu0 %8779, %v8777
        %v8781 = vpop.permute.xlu0 %8780
        %v8783 = vlaneseq
        %v8784 = vshrl.u32 %v8783, 7
        %v8785 = vsub.s32 0, %v8784
        %v8786 = vrot.slane %v8781, %v8785
        %v8787 = vadd.f32 %v8776, %v8786
        %v8788 = vxor.u32 %v8787, 2147483648
        %v8789 = vmul.f32 %v8788, 1.442695
        %v8790 = vpow.pop %v8789
        %v8791 = vadd.f32 %v8790, 1.0
        %v8792 = vrcp.pop %v8791
        %v8793 = vmul.f32 1.0, %v8792
        %v8794 = vmul.f32 %v8793, 10.0
        %8795 = vst.msk [vmem:[%s287 + $0x4] sm:$0x1] %vm7850, %v8794
        %v8796 = vld [vmem:[#allocation3 + $0x50] sm:$0xf]
        %v8797 = vld [vmem:[#allocation3 + $0x54] sm:$0xf]
        %v8798 = vld [vmem:[#allocation3 + $0x58] sm:$0xf]
        %v8799 = vld [vmem:[#allocation3 + $0x5c] sm:$0xf]
        %v8800 = vld [vmem:[#allocation3 + $0x60] sm:$0xf]
        %v8801 = vld [vmem:[#allocation3 + $0x64] sm:$0xf]
        %v8802 = vld [vmem:[#allocation3 + $0x68] sm:$0xf]
        %v8803 = vld [vmem:[#allocation3 + $0x6c] sm:$0xf]
        %v8804 = vld [vmem:[#allocation3 + $0x70] sm:$0xf]
        %v8805 = vld [vmem:[#allocation3 + $0x74] sm:$0xf]
        %v8806 = vld [vmem:[#allocation3 + $0x78] sm:$0xf]
        %v8807 = vld [vmem:[#allocation3 + $0x7c] sm:$0xf]
        %v8808 = vld [vmem:[%s3] sm:$0xf]
        %v8809 = vld [vmem:[%s7626] sm:$0xf]
        %v8822 = vunpack.c.l.b16 %v8796
        %v8823 = vunpack.c.l.b16 %v8797
        %v8824 = vunpack.c.l.b16 %v8798
        %v8825 = vunpack.c.l.b16 %v8799
        %v8826 = vunpack.c.l.b16 %v8800
        %v8827 = vunpack.c.l.b16 %v8801
        %v8828 = vunpack.c.l.b16 %v8802
        %v8829 = vunpack.c.l.b16 %v8803
        %v8830 = vunpack.c.l.b16 %v8804
        %v8831 = vunpack.c.l.b16 %v8805
        %v8832 = vunpack.c.l.b16 %v8806
        %v8833 = vunpack.c.l.b16 %v8807
        %v8834 = vpack.c.b16 %v8823, %v8822
        %v8835 = vpack.c.b16 %v8825, %v8824
        %v8836 = vpack.c.b16 %v8827, %v8826
        %v8837 = vpack.c.b16 %v8829, %v8828
        %v8838 = vpack.c.b16 %v8831, %v8830
        %v8839 = vpack.c.b16 %v8833, %v8832
        %8840 = vrot.lane.b32.xlu0 %v8834, 127
        %v8841 = vpop.permute.xlu0 %8840
        %8842 = vrot.lane.b32.xlu0 %v8835, 127
        %v8843 = vpop.permute.xlu0 %8842
        %8844 = vrot.lane.b32.xlu0 %v8836, 127
        %v8845 = vpop.permute.xlu0 %8844
        %8846 = vrot.lane.b32.xlu0 %v8837, 127
        %v8847 = vpop.permute.xlu0 %8846
        %8848 = vrot.lane.b32.xlu0 %v8838, 127
        %v8849 = vpop.permute.xlu0 %8848
        %8850 = vrot.lane.b32.xlu0 %v8839, 127
        %v8851 = vpop.permute.xlu0 %8850
        %v8859 = vsel %vm4092, %v8809, 0
        %8861 = vmatprep.subr.bf16.mxu0 0
        %8862 = vmatpush1.bf16.msra.mxu0 0
        %8863 = vmatprep.subr.bf16.mxu0 0
        %8864 = vmatpush1.bf16.msra.mxu0 0
        %8865 = vmatprep.subr.bf16.mxu0 0
        %8866 = vmatpush1.bf16.msra.mxu0 %v8851
        %8867 = vmatprep.subr.bf16.mxu0 0
        %8868 = vmatpush1.bf16.msra.mxu0 %v8849
        %8869 = vmatprep.subr.bf16.mxu0 0
        %8870 = vmatpush1.bf16.msra.mxu0 %v8847
        %8871 = vmatprep.subr.bf16.mxu0 0
        %8872 = vmatpush1.bf16.msra.mxu0 %v8845
        %8873 = vmatprep.subr.bf16.mxu0 0
        %8874 = vmatpush1.bf16.msra.mxu0 %v8843
        %8875 = vmatprep.subr.bf16.mxu0 0
        %8876 = vmatpush1.bf16.msra.mxu0 %v8841
        %8877 = vmatprep.subr.bf16.mxu0 0
        %8878 = vmatpush2.bf16.msra.mxu0 0
        %8879 = vmatprep.subr.bf16.mxu0 0
        %8880 = vmatpush2.bf16.msra.mxu0 0
        %8881 = vmatprep.subr.bf16.mxu0 0
        %8882 = vmatpush2.bf16.msra.mxu0 0
        %8883 = vmatprep.subr.bf16.mxu0 0
        %8884 = vmatpush2.bf16.msra.mxu0 0
        %8885 = vmatprep.subr.bf16.mxu0 0
        %8886 = vmatpush2.bf16.msra.mxu0 0
        %8887 = vmatprep.subr.bf16.mxu0 0
        %8888 = vmatpush2.bf16.msra.mxu0 0
        %8889 = vmatprep.subr.bf16.mxu0 0
        %8890 = vmatpush2.bf16.msra.mxu0 0
        %8891 = vmatprep.subr.bf16.mxu0 0
        %8892 = vmatpush2.bf16.msra.mxu0 0
        %8893 = vmatprep.mubr.bf16.mxu0 0
        %8894 = vmatmul.mubr.bf16.gmra.mxu0 %v8859
        %v8895 = vpop.f32.mrf.mxu0
        %v8896 = vadd.f32 0.0, %v8895
        %v8897 = vpop.f32.mrf.mxu0
        %v8898 = vpop.f32.mrf.mxu0
        %v8899 = vpop.f32.mrf.mxu0
        %8900 = vdwg.mxu0
        %v8908 = vsel %vm4092, %v8808, 0
        %8910 = vmatprep.subr.bf16.mxu0 0
        %8911 = vmatpush1.bf16.msra.mxu0 0
        %8912 = vmatprep.subr.bf16.mxu0 0
        %8913 = vmatpush1.bf16.msra.mxu0 0
        %8914 = vmatprep.subr.bf16.mxu0 0
        %8915 = vmatpush1.bf16.msra.mxu0 %v8839
        %8916 = vmatprep.subr.bf16.mxu0 0
        %8917 = vmatpush1.bf16.msra.mxu0 %v8838
        %8918 = vmatprep.subr.bf16.mxu0 0
        %8919 = vmatpush1.bf16.msra.mxu0 %v8837
        %8920 = vmatprep.subr.bf16.mxu0 0
        %8921 = vmatpush1.bf16.msra.mxu0 %v8836
        %8922 = vmatprep.subr.bf16.mxu0 0
        %8923 = vmatpush1.bf16.msra.mxu0 %v8835
        %8924 = vmatprep.subr.bf16.mxu0 0
        %8925 = vmatpush1.bf16.msra.mxu0 %v8834
        %8926 = vmatprep.subr.bf16.mxu0 0
        %8927 = vmatpush2.bf16.msra.mxu0 0
        %8928 = vmatprep.subr.bf16.mxu0 0
        %8929 = vmatpush2.bf16.msra.mxu0 0
        %8930 = vmatprep.subr.bf16.mxu0 0
        %8931 = vmatpush2.bf16.msra.mxu0 0
        %8932 = vmatprep.subr.bf16.mxu0 0
        %8933 = vmatpush2.bf16.msra.mxu0 0
        %8934 = vmatprep.subr.bf16.mxu0 0
        %8935 = vmatpush2.bf16.msra.mxu0 0
        %8936 = vmatprep.subr.bf16.mxu0 0
        %8937 = vmatpush2.bf16.msra.mxu0 0
        %8938 = vmatprep.subr.bf16.mxu0 0
        %8939 = vmatpush2.bf16.msra.mxu0 0
        %8940 = vmatprep.subr.bf16.mxu0 0
        %8941 = vmatpush2.bf16.msra.mxu0 0
        %8942 = vmatprep.mubr.bf16.mxu0 0
        %8943 = vmatmul.mubr.bf16.gmra.mxu0 %v8908
        %v8944 = vpop.f32.mrf.mxu0
        %v8945 = vadd.f32 %v8896, %v8944
        %v8946 = vpop.f32.mrf.mxu0
        %v8947 = vpop.f32.mrf.mxu0
        %v8948 = vpop.f32.mrf.mxu0
        %8949 = vdwg.mxu0
        %v8950 = vld [vmem:[%s7768] sm:$0xf]
        %8951 = vrot.lane.b32.xlu0 %v8834, 126
        %v8952 = vpop.permute.xlu0 %8951
        %8953 = vrot.lane.b32.xlu0 %v8835, 126
        %v8954 = vpop.permute.xlu0 %8953
        %8955 = vrot.lane.b32.xlu0 %v8836, 126
        %v8956 = vpop.permute.xlu0 %8955
        %8957 = vrot.lane.b32.xlu0 %v8837, 126
        %v8958 = vpop.permute.xlu0 %8957
        %8959 = vrot.lane.b32.xlu0 %v8838, 126
        %v8960 = vpop.permute.xlu0 %8959
        %8961 = vrot.lane.b32.xlu0 %v8839, 126
        %v8962 = vpop.permute.xlu0 %8961
        %v8970 = vsel %vm4092, %v8950, 0
        %8972 = vmatprep.subr.bf16.mxu0 0
        %8973 = vmatpush1.bf16.msra.mxu0 0
        %8974 = vmatprep.subr.bf16.mxu0 0
        %8975 = vmatpush1.bf16.msra.mxu0 0
        %8976 = vmatprep.subr.bf16.mxu0 0
        %8977 = vmatpush1.bf16.msra.mxu0 %v8962
        %8978 = vmatprep.subr.bf16.mxu0 0
        %8979 = vmatpush1.bf16.msra.mxu0 %v8960
        %8980 = vmatprep.subr.bf16.mxu0 0
        %8981 = vmatpush1.bf16.msra.mxu0 %v8958
        %8982 = vmatprep.subr.bf16.mxu0 0
        %8983 = vmatpush1.bf16.msra.mxu0 %v8956
        %8984 = vmatprep.subr.bf16.mxu0 0
        %8985 = vmatpush1.bf16.msra.mxu0 %v8954
        %8986 = vmatprep.subr.bf16.mxu0 0
        %8987 = vmatpush1.bf16.msra.mxu0 %v8952
        %8988 = vmatprep.subr.bf16.mxu0 0
        %8989 = vmatpush2.bf16.msra.mxu0 0
        %8990 = vmatprep.subr.bf16.mxu0 0
        %8991 = vmatpush2.bf16.msra.mxu0 0
        %8992 = vmatprep.subr.bf16.mxu0 0
        %8993 = vmatpush2.bf16.msra.mxu0 0
        %8994 = vmatprep.subr.bf16.mxu0 0
        %8995 = vmatpush2.bf16.msra.mxu0 0
        %8996 = vmatprep.subr.bf16.mxu0 0
        %8997 = vmatpush2.bf16.msra.mxu0 0
        %8998 = vmatprep.subr.bf16.mxu0 0
        %8999 = vmatpush2.bf16.msra.mxu0 0
        %9000 = vmatprep.subr.bf16.mxu0 0
        %9001 = vmatpush2.bf16.msra.mxu0 0
        %9002 = vmatprep.subr.bf16.mxu0 0
        %9003 = vmatpush2.bf16.msra.mxu0 0
        %9004 = vmatprep.mubr.bf16.mxu0 0
        %9005 = vmatmul.mubr.bf16.gmra.mxu0 %v8970
        %v9006 = vpop.f32.mrf.mxu0
        %v9007 = vadd.f32 0.0, %v9006
        %v9008 = vpop.f32.mrf.mxu0
        %v9009 = vpop.f32.mrf.mxu0
        %v9010 = vpop.f32.mrf.mxu0
        %9011 = vdwg.mxu0
        %v9012 = vadd.f32 %v8945, %v9007
        %v9013 = vld [vmem:[#allocation4] sm:$0x1]
        %9015 = vset.pattern.permute.xlu0 0
        %9016 = vperm.xlu0 %9015, %v9013
        %v9017 = vpop.permute.xlu0 %9016
        %v9019 = vlaneseq
        %v9020 = vshrl.u32 %v9019, 7
        %v9021 = vsub.s32 0, %v9020
        %v9022 = vrot.slane %v9017, %v9021
        %v9023 = vadd.f32 %v9012, %v9022
        %v9024 = vxor.u32 %v9023, 2147483648
        %v9025 = vmul.f32 %v9024, 1.442695
        %v9026 = vpow.pop %v9025
        %v9027 = vadd.f32 %v9026, 1.0
        %v9028 = vrcp.pop %v9027
        %v9029 = vmul.f32 1.0, %v9028
        %v9030 = vmul.f32 %v9029, 10.0
        %9031 = vst.msk [vmem:[%s287 + $0x5] sm:$0x1] %vm7850, %v9030
        %v9032 = vld [vmem:[#allocation3 + $0x60] sm:$0xf]
        %v9033 = vld [vmem:[#allocation3 + $0x64] sm:$0xf]
        %v9034 = vld [vmem:[#allocation3 + $0x68] sm:$0xf]
        %v9035 = vld [vmem:[#allocation3 + $0x6c] sm:$0xf]
        %v9036 = vld [vmem:[#allocation3 + $0x70] sm:$0xf]
        %v9037 = vld [vmem:[#allocation3 + $0x74] sm:$0xf]
        %v9038 = vld [vmem:[#allocation3 + $0x78] sm:$0xf]
        %v9039 = vld [vmem:[#allocation3 + $0x7c] sm:$0xf]
        %v9040 = vld [vmem:[#allocation3 + $0x80] sm:$0xf]
        %v9041 = vld [vmem:[#allocation3 + $0x84] sm:$0xf]
        %v9042 = vld [vmem:[#allocation3 + $0x88] sm:$0xf]
        %v9043 = vld [vmem:[#allocation3 + $0x8c] sm:$0xf]
        %v9044 = vld [vmem:[%s3] sm:$0xf]
        %v9045 = vld [vmem:[%s7626] sm:$0xf]
        %v9058 = vunpack.c.l.b16 %v9032
        %v9059 = vunpack.c.l.b16 %v9033
        %v9060 = vunpack.c.l.b16 %v9034
        %v9061 = vunpack.c.l.b16 %v9035
        %v9062 = vunpack.c.l.b16 %v9036
        %v9063 = vunpack.c.l.b16 %v9037
        %v9064 = vunpack.c.l.b16 %v9038
        %v9065 = vunpack.c.l.b16 %v9039
        %v9066 = vunpack.c.l.b16 %v9040
        %v9067 = vunpack.c.l.b16 %v9041
        %v9068 = vunpack.c.l.b16 %v9042
        %v9069 = vunpack.c.l.b16 %v9043
        %v9070 = vpack.c.b16 %v9059, %v9058
        %v9071 = vpack.c.b16 %v9061, %v9060
        %v9072 = vpack.c.b16 %v9063, %v9062
        %v9073 = vpack.c.b16 %v9065, %v9064
        %v9074 = vpack.c.b16 %v9067, %v9066
        %v9075 = vpack.c.b16 %v9069, %v9068
        %9076 = vrot.lane.b32.xlu0 %v9070, 127
        %v9077 = vpop.permute.xlu0 %9076
        %9078 = vrot.lane.b32.xlu0 %v9071, 127
        %v9079 = vpop.permute.xlu0 %9078
        %9080 = vrot.lane.b32.xlu0 %v9072, 127
        %v9081 = vpop.permute.xlu0 %9080
        %9082 = vrot.lane.b32.xlu0 %v9073, 127
        %v9083 = vpop.permute.xlu0 %9082
        %9084 = vrot.lane.b32.xlu0 %v9074, 127
        %v9085 = vpop.permute.xlu0 %9084
        %9086 = vrot.lane.b32.xlu0 %v9075, 127
        %v9087 = vpop.permute.xlu0 %9086
        %v9095 = vsel %vm4092, %v9045, 0
        %9097 = vmatprep.subr.bf16.mxu0 0
        %9098 = vmatpush1.bf16.msra.mxu0 0
        %9099 = vmatprep.subr.bf16.mxu0 0
        %9100 = vmatpush1.bf16.msra.mxu0 0
        %9101 = vmatprep.subr.bf16.mxu0 0
        %9102 = vmatpush1.bf16.msra.mxu0 %v9087
        %9103 = vmatprep.subr.bf16.mxu0 0
        %9104 = vmatpush1.bf16.msra.mxu0 %v9085
        %9105 = vmatprep.subr.bf16.mxu0 0
        %9106 = vmatpush1.bf16.msra.mxu0 %v9083
        %9107 = vmatprep.subr.bf16.mxu0 0
        %9108 = vmatpush1.bf16.msra.mxu0 %v9081
        %9109 = vmatprep.subr.bf16.mxu0 0
        %9110 = vmatpush1.bf16.msra.mxu0 %v9079
        %9111 = vmatprep.subr.bf16.mxu0 0
        %9112 = vmatpush1.bf16.msra.mxu0 %v9077
        %9113 = vmatprep.subr.bf16.mxu0 0
        %9114 = vmatpush2.bf16.msra.mxu0 0
        %9115 = vmatprep.subr.bf16.mxu0 0
        %9116 = vmatpush2.bf16.msra.mxu0 0
        %9117 = vmatprep.subr.bf16.mxu0 0
        %9118 = vmatpush2.bf16.msra.mxu0 0
        %9119 = vmatprep.subr.bf16.mxu0 0
        %9120 = vmatpush2.bf16.msra.mxu0 0
        %9121 = vmatprep.subr.bf16.mxu0 0
        %9122 = vmatpush2.bf16.msra.mxu0 0
        %9123 = vmatprep.subr.bf16.mxu0 0
        %9124 = vmatpush2.bf16.msra.mxu0 0
        %9125 = vmatprep.subr.bf16.mxu0 0
        %9126 = vmatpush2.bf16.msra.mxu0 0
        %9127 = vmatprep.subr.bf16.mxu0 0
        %9128 = vmatpush2.bf16.msra.mxu0 0
        %9129 = vmatprep.mubr.bf16.mxu0 0
        %9130 = vmatmul.mubr.bf16.gmra.mxu0 %v9095
        %v9131 = vpop.f32.mrf.mxu0
        %v9132 = vadd.f32 0.0, %v9131
        %v9133 = vpop.f32.mrf.mxu0
        %v9134 = vpop.f32.mrf.mxu0
        %v9135 = vpop.f32.mrf.mxu0
        %9136 = vdwg.mxu0
        %v9144 = vsel %vm4092, %v9044, 0
        %9146 = vmatprep.subr.bf16.mxu0 0
        %9147 = vmatpush1.bf16.msra.mxu0 0
        %9148 = vmatprep.subr.bf16.mxu0 0
        %9149 = vmatpush1.bf16.msra.mxu0 0
        %9150 = vmatprep.subr.bf16.mxu0 0
        %9151 = vmatpush1.bf16.msra.mxu0 %v9075
        %9152 = vmatprep.subr.bf16.mxu0 0
        %9153 = vmatpush1.bf16.msra.mxu0 %v9074
        %9154 = vmatprep.subr.bf16.mxu0 0
        %9155 = vmatpush1.bf16.msra.mxu0 %v9073
        %9156 = vmatprep.subr.bf16.mxu0 0
        %9157 = vmatpush1.bf16.msra.mxu0 %v9072
        %9158 = vmatprep.subr.bf16.mxu0 0
        %9159 = vmatpush1.bf16.msra.mxu0 %v9071
        %9160 = vmatprep.subr.bf16.mxu0 0
        %9161 = vmatpush1.bf16.msra.mxu0 %v9070
        %9162 = vmatprep.subr.bf16.mxu0 0
        %9163 = vmatpush2.bf16.msra.mxu0 0
        %9164 = vmatprep.subr.bf16.mxu0 0
        %9165 = vmatpush2.bf16.msra.mxu0 0
        %9166 = vmatprep.subr.bf16.mxu0 0
        %9167 = vmatpush2.bf16.msra.mxu0 0
        %9168 = vmatprep.subr.bf16.mxu0 0
        %9169 = vmatpush2.bf16.msra.mxu0 0
        %9170 = vmatprep.subr.bf16.mxu0 0
        %9171 = vmatpush2.bf16.msra.mxu0 0
        %9172 = vmatprep.subr.bf16.mxu0 0
        %9173 = vmatpush2.bf16.msra.mxu0 0
        %9174 = vmatprep.subr.bf16.mxu0 0
        %9175 = vmatpush2.bf16.msra.mxu0 0
        %9176 = vmatprep.subr.bf16.mxu0 0
        %9177 = vmatpush2.bf16.msra.mxu0 0
        %9178 = vmatprep.mubr.bf16.mxu0 0
        %9179 = vmatmul.mubr.bf16.gmra.mxu0 %v9144
        %v9180 = vpop.f32.mrf.mxu0
        %v9181 = vadd.f32 %v9132, %v9180
        %v9182 = vpop.f32.mrf.mxu0
        %v9183 = vpop.f32.mrf.mxu0
        %v9184 = vpop.f32.mrf.mxu0
        %9185 = vdwg.mxu0
        %v9186 = vld [vmem:[%s7768] sm:$0xf]
        %9187 = vrot.lane.b32.xlu0 %v9070, 126
        %v9188 = vpop.permute.xlu0 %9187
        %9189 = vrot.lane.b32.xlu0 %v9071, 126
        %v9190 = vpop.permute.xlu0 %9189
        %9191 = vrot.lane.b32.xlu0 %v9072, 126
        %v9192 = vpop.permute.xlu0 %9191
        %9193 = vrot.lane.b32.xlu0 %v9073, 126
        %v9194 = vpop.permute.xlu0 %9193
        %9195 = vrot.lane.b32.xlu0 %v9074, 126
        %v9196 = vpop.permute.xlu0 %9195
        %9197 = vrot.lane.b32.xlu0 %v9075, 126
        %v9198 = vpop.permute.xlu0 %9197
        %v9206 = vsel %vm4092, %v9186, 0
        %9208 = vmatprep.subr.bf16.mxu0 0
        %9209 = vmatpush1.bf16.msra.mxu0 0
        %9210 = vmatprep.subr.bf16.mxu0 0
        %9211 = vmatpush1.bf16.msra.mxu0 0
        %9212 = vmatprep.subr.bf16.mxu0 0
        %9213 = vmatpush1.bf16.msra.mxu0 %v9198
        %9214 = vmatprep.subr.bf16.mxu0 0
        %9215 = vmatpush1.bf16.msra.mxu0 %v9196
        %9216 = vmatprep.subr.bf16.mxu0 0
        %9217 = vmatpush1.bf16.msra.mxu0 %v9194
        %9218 = vmatprep.subr.bf16.mxu0 0
        %9219 = vmatpush1.bf16.msra.mxu0 %v9192
        %9220 = vmatprep.subr.bf16.mxu0 0
        %9221 = vmatpush1.bf16.msra.mxu0 %v9190
        %9222 = vmatprep.subr.bf16.mxu0 0
        %9223 = vmatpush1.bf16.msra.mxu0 %v9188
        %9224 = vmatprep.subr.bf16.mxu0 0
        %9225 = vmatpush2.bf16.msra.mxu0 0
        %9226 = vmatprep.subr.bf16.mxu0 0
        %9227 = vmatpush2.bf16.msra.mxu0 0
        %9228 = vmatprep.subr.bf16.mxu0 0
        %9229 = vmatpush2.bf16.msra.mxu0 0
        %9230 = vmatprep.subr.bf16.mxu0 0
        %9231 = vmatpush2.bf16.msra.mxu0 0
        %9232 = vmatprep.subr.bf16.mxu0 0
        %9233 = vmatpush2.bf16.msra.mxu0 0
        %9234 = vmatprep.subr.bf16.mxu0 0
        %9235 = vmatpush2.bf16.msra.mxu0 0
        %9236 = vmatprep.subr.bf16.mxu0 0
        %9237 = vmatpush2.bf16.msra.mxu0 0
        %9238 = vmatprep.subr.bf16.mxu0 0
        %9239 = vmatpush2.bf16.msra.mxu0 0
        %9240 = vmatprep.mubr.bf16.mxu0 0
        %9241 = vmatmul.mubr.bf16.gmra.mxu0 %v9206
        %v9242 = vpop.f32.mrf.mxu0
        %v9243 = vadd.f32 0.0, %v9242
        %v9244 = vpop.f32.mrf.mxu0
        %v9245 = vpop.f32.mrf.mxu0
        %v9246 = vpop.f32.mrf.mxu0
        %9247 = vdwg.mxu0
        %v9248 = vadd.f32 %v9181, %v9243
        %v9249 = vld [vmem:[#allocation4] sm:$0x1]
        %9251 = vset.pattern.permute.xlu0 0
        %9252 = vperm.xlu0 %9251, %v9249
        %v9253 = vpop.permute.xlu0 %9252
        %v9255 = vlaneseq
        %v9256 = vshrl.u32 %v9255, 7
        %v9257 = vsub.s32 0, %v9256
        %v9258 = vrot.slane %v9253, %v9257
        %v9259 = vadd.f32 %v9248, %v9258
        %v9260 = vxor.u32 %v9259, 2147483648
        %v9261 = vmul.f32 %v9260, 1.442695
        %v9262 = vpow.pop %v9261
        %v9263 = vadd.f32 %v9262, 1.0
        %v9264 = vrcp.pop %v9263
        %v9265 = vmul.f32 1.0, %v9264
        %v9266 = vmul.f32 %v9265, 10.0
        %9267 = vst.msk [vmem:[%s287 + $0x6] sm:$0x1] %vm7850, %v9266
        %v9268 = vld [vmem:[#allocation3 + $0x70] sm:$0xf]
        %v9269 = vld [vmem:[#allocation3 + $0x74] sm:$0xf]
        %v9270 = vld [vmem:[#allocation3 + $0x78] sm:$0xf]
        %v9271 = vld [vmem:[#allocation3 + $0x7c] sm:$0xf]
        %v9272 = vld [vmem:[#allocation3 + $0x80] sm:$0xf]
        %v9273 = vld [vmem:[#allocation3 + $0x84] sm:$0xf]
        %v9274 = vld [vmem:[#allocation3 + $0x88] sm:$0xf]
        %v9275 = vld [vmem:[#allocation3 + $0x8c] sm:$0xf]
        %v9276 = vld [vmem:[#allocation3 + $0x90] sm:$0xf]
        %v9277 = vld [vmem:[#allocation3 + $0x94] sm:$0xf]
        %v9278 = vld [vmem:[#allocation3 + $0x98] sm:$0xf]
        %v9279 = vld [vmem:[#allocation3 + $0x9c] sm:$0xf]
        %v9280 = vld [vmem:[%s3] sm:$0xf]
        %v9281 = vld [vmem:[%s7626] sm:$0xf]
        %v9294 = vunpack.c.l.b16 %v9268
        %v9295 = vunpack.c.l.b16 %v9269
        %v9296 = vunpack.c.l.b16 %v9270
        %v9297 = vunpack.c.l.b16 %v9271
        %v9298 = vunpack.c.l.b16 %v9272
        %v9299 = vunpack.c.l.b16 %v9273
        %v9300 = vunpack.c.l.b16 %v9274
        %v9301 = vunpack.c.l.b16 %v9275
        %v9302 = vunpack.c.l.b16 %v9276
        %v9303 = vunpack.c.l.b16 %v9277
        %v9304 = vunpack.c.l.b16 %v9278
        %v9305 = vunpack.c.l.b16 %v9279
        %v9306 = vpack.c.b16 %v9295, %v9294
        %v9307 = vpack.c.b16 %v9297, %v9296
        %v9308 = vpack.c.b16 %v9299, %v9298
        %v9309 = vpack.c.b16 %v9301, %v9300
        %v9310 = vpack.c.b16 %v9303, %v9302
        %v9311 = vpack.c.b16 %v9305, %v9304
        %9312 = vrot.lane.b32.xlu0 %v9306, 127
        %v9313 = vpop.permute.xlu0 %9312
        %9314 = vrot.lane.b32.xlu0 %v9307, 127
        %v9315 = vpop.permute.xlu0 %9314
        %9316 = vrot.lane.b32.xlu0 %v9308, 127
        %v9317 = vpop.permute.xlu0 %9316
        %9318 = vrot.lane.b32.xlu0 %v9309, 127
        %v9319 = vpop.permute.xlu0 %9318
        %9320 = vrot.lane.b32.xlu0 %v9310, 127
        %v9321 = vpop.permute.xlu0 %9320
        %9322 = vrot.lane.b32.xlu0 %v9311, 127
        %v9323 = vpop.permute.xlu0 %9322
        %v9331 = vsel %vm4092, %v9281, 0
        %9333 = vmatprep.subr.bf16.mxu0 0
        %9334 = vmatpush1.bf16.msra.mxu0 0
        %9335 = vmatprep.subr.bf16.mxu0 0
        %9336 = vmatpush1.bf16.msra.mxu0 0
        %9337 = vmatprep.subr.bf16.mxu0 0
        %9338 = vmatpush1.bf16.msra.mxu0 %v9323
        %9339 = vmatprep.subr.bf16.mxu0 0
        %9340 = vmatpush1.bf16.msra.mxu0 %v9321
        %9341 = vmatprep.subr.bf16.mxu0 0
        %9342 = vmatpush1.bf16.msra.mxu0 %v9319
        %9343 = vmatprep.subr.bf16.mxu0 0
        %9344 = vmatpush1.bf16.msra.mxu0 %v9317
        %9345 = vmatprep.subr.bf16.mxu0 0
        %9346 = vmatpush1.bf16.msra.mxu0 %v9315
        %9347 = vmatprep.subr.bf16.mxu0 0
        %9348 = vmatpush1.bf16.msra.mxu0 %v9313
        %9349 = vmatprep.subr.bf16.mxu0 0
        %9350 = vmatpush2.bf16.msra.mxu0 0
        %9351 = vmatprep.subr.bf16.mxu0 0
        %9352 = vmatpush2.bf16.msra.mxu0 0
        %9353 = vmatprep.subr.bf16.mxu0 0
        %9354 = vmatpush2.bf16.msra.mxu0 0
        %9355 = vmatprep.subr.bf16.mxu0 0
        %9356 = vmatpush2.bf16.msra.mxu0 0
        %9357 = vmatprep.subr.bf16.mxu0 0
        %9358 = vmatpush2.bf16.msra.mxu0 0
        %9359 = vmatprep.subr.bf16.mxu0 0
        %9360 = vmatpush2.bf16.msra.mxu0 0
        %9361 = vmatprep.subr.bf16.mxu0 0
        %9362 = vmatpush2.bf16.msra.mxu0 0
        %9363 = vmatprep.subr.bf16.mxu0 0
        %9364 = vmatpush2.bf16.msra.mxu0 0
        %9365 = vmatprep.mubr.bf16.mxu0 0
        %9366 = vmatmul.mubr.bf16.gmra.mxu0 %v9331
        %v9367 = vpop.f32.mrf.mxu0
        %v9368 = vadd.f32 0.0, %v9367
        %v9369 = vpop.f32.mrf.mxu0
        %v9370 = vpop.f32.mrf.mxu0
        %v9371 = vpop.f32.mrf.mxu0
        %9372 = vdwg.mxu0
        %v9380 = vsel %vm4092, %v9280, 0
        %9382 = vmatprep.subr.bf16.mxu0 0
        %9383 = vmatpush1.bf16.msra.mxu0 0
        %9384 = vmatprep.subr.bf16.mxu0 0
        %9385 = vmatpush1.bf16.msra.mxu0 0
        %9386 = vmatprep.subr.bf16.mxu0 0
        %9387 = vmatpush1.bf16.msra.mxu0 %v9311
        %9388 = vmatprep.subr.bf16.mxu0 0
        %9389 = vmatpush1.bf16.msra.mxu0 %v9310
        %9390 = vmatprep.subr.bf16.mxu0 0
        %9391 = vmatpush1.bf16.msra.mxu0 %v9309
        %9392 = vmatprep.subr.bf16.mxu0 0
        %9393 = vmatpush1.bf16.msra.mxu0 %v9308
        %9394 = vmatprep.subr.bf16.mxu0 0
        %9395 = vmatpush1.bf16.msra.mxu0 %v9307
        %9396 = vmatprep.subr.bf16.mxu0 0
        %9397 = vmatpush1.bf16.msra.mxu0 %v9306
        %9398 = vmatprep.subr.bf16.mxu0 0
        %9399 = vmatpush2.bf16.msra.mxu0 0
        %9400 = vmatprep.subr.bf16.mxu0 0
        %9401 = vmatpush2.bf16.msra.mxu0 0
        %9402 = vmatprep.subr.bf16.mxu0 0
        %9403 = vmatpush2.bf16.msra.mxu0 0
        %9404 = vmatprep.subr.bf16.mxu0 0
        %9405 = vmatpush2.bf16.msra.mxu0 0
        %9406 = vmatprep.subr.bf16.mxu0 0
        %9407 = vmatpush2.bf16.msra.mxu0 0
        %9408 = vmatprep.subr.bf16.mxu0 0
        %9409 = vmatpush2.bf16.msra.mxu0 0
        %9410 = vmatprep.subr.bf16.mxu0 0
        %9411 = vmatpush2.bf16.msra.mxu0 0
        %9412 = vmatprep.subr.bf16.mxu0 0
        %9413 = vmatpush2.bf16.msra.mxu0 0
        %9414 = vmatprep.mubr.bf16.mxu0 0
        %9415 = vmatmul.mubr.bf16.gmra.mxu0 %v9380
        %v9416 = vpop.f32.mrf.mxu0
        %v9417 = vadd.f32 %v9368, %v9416
        %v9418 = vpop.f32.mrf.mxu0
        %v9419 = vpop.f32.mrf.mxu0
        %v9420 = vpop.f32.mrf.mxu0
        %9421 = vdwg.mxu0
        %v9422 = vld [vmem:[%s7768] sm:$0xf]
        %9423 = vrot.lane.b32.xlu0 %v9306, 126
        %v9424 = vpop.permute.xlu0 %9423
        %9425 = vrot.lane.b32.xlu0 %v9307, 126
        %v9426 = vpop.permute.xlu0 %9425
        %9427 = vrot.lane.b32.xlu0 %v9308, 126
        %v9428 = vpop.permute.xlu0 %9427
        %9429 = vrot.lane.b32.xlu0 %v9309, 126
        %v9430 = vpop.permute.xlu0 %9429
        %9431 = vrot.lane.b32.xlu0 %v9310, 126
        %v9432 = vpop.permute.xlu0 %9431
        %9433 = vrot.lane.b32.xlu0 %v9311, 126
        %v9434 = vpop.permute.xlu0 %9433
        %v9442 = vsel %vm4092, %v9422, 0
        %9444 = vmatprep.subr.bf16.mxu0 0
        %9445 = vmatpush1.bf16.msra.mxu0 0
        %9446 = vmatprep.subr.bf16.mxu0 0
        %9447 = vmatpush1.bf16.msra.mxu0 0
        %9448 = vmatprep.subr.bf16.mxu0 0
        %9449 = vmatpush1.bf16.msra.mxu0 %v9434
        %9450 = vmatprep.subr.bf16.mxu0 0
        %9451 = vmatpush1.bf16.msra.mxu0 %v9432
        %9452 = vmatprep.subr.bf16.mxu0 0
        %9453 = vmatpush1.bf16.msra.mxu0 %v9430
        %9454 = vmatprep.subr.bf16.mxu0 0
        %9455 = vmatpush1.bf16.msra.mxu0 %v9428
        %9456 = vmatprep.subr.bf16.mxu0 0
        %9457 = vmatpush1.bf16.msra.mxu0 %v9426
        %9458 = vmatprep.subr.bf16.mxu0 0
        %9459 = vmatpush1.bf16.msra.mxu0 %v9424
        %9460 = vmatprep.subr.bf16.mxu0 0
        %9461 = vmatpush2.bf16.msra.mxu0 0
        %9462 = vmatprep.subr.bf16.mxu0 0
        %9463 = vmatpush2.bf16.msra.mxu0 0
        %9464 = vmatprep.subr.bf16.mxu0 0
        %9465 = vmatpush2.bf16.msra.mxu0 0
        %9466 = vmatprep.subr.bf16.mxu0 0
        %9467 = vmatpush2.bf16.msra.mxu0 0
        %9468 = vmatprep.subr.bf16.mxu0 0
        %9469 = vmatpush2.bf16.msra.mxu0 0
        %9470 = vmatprep.subr.bf16.mxu0 0
        %9471 = vmatpush2.bf16.msra.mxu0 0
        %9472 = vmatprep.subr.bf16.mxu0 0
        %9473 = vmatpush2.bf16.msra.mxu0 0
        %9474 = vmatprep.subr.bf16.mxu0 0
        %9475 = vmatpush2.bf16.msra.mxu0 0
        %9476 = vmatprep.mubr.bf16.mxu0 0
        %9477 = vmatmul.mubr.bf16.gmra.mxu0 %v9442
        %v9478 = vpop.f32.mrf.mxu0
        %v9479 = vadd.f32 0.0, %v9478
        %v9480 = vpop.f32.mrf.mxu0
        %v9481 = vpop.f32.mrf.mxu0
        %v9482 = vpop.f32.mrf.mxu0
        %9483 = vdwg.mxu0
        %v9484 = vadd.f32 %v9417, %v9479
        %v9485 = vld [vmem:[#allocation4] sm:$0x1]
        %9487 = vset.pattern.permute.xlu0 0
        %9488 = vperm.xlu0 %9487, %v9485
        %v9489 = vpop.permute.xlu0 %9488
        %v9491 = vlaneseq
        %v9492 = vshrl.u32 %v9491, 7
        %v9493 = vsub.s32 0, %v9492
        %v9494 = vrot.slane %v9489, %v9493
        %v9495 = vadd.f32 %v9484, %v9494
        %v9496 = vxor.u32 %v9495, 2147483648
        %v9497 = vmul.f32 %v9496, 1.442695
        %v9498 = vpow.pop %v9497
        %v9499 = vadd.f32 %v9498, 1.0
        %v9500 = vrcp.pop %v9499
        %v9501 = vmul.f32 1.0, %v9500
        %v9502 = vmul.f32 %v9501, 10.0
        %9503 = vst.msk [vmem:[%s287 + $0x7] sm:$0x1] %vm7850, %v9502
        %s9504 = sand.u32 %s197, 1
        %s9505 = scalar_lea.sflag [#allocation6], %s9504
        %s9506 = sand.u32 %s197, 1
        %s9507 = smul.addr %s9506, 8
        %s9508 = scalar_lea.vmem [#allocation5], %s9507
        // Predicated region
        $region49: #{coex_height_forward.1} parent=47 // pred_check
          %p9509 = pneg %p207
        $region50: #{coex_height_forward.1} parent=47 // pred_check_branch
          %9511 = sbr.rel (%p9509) target = $region52
        $region51: #{coex_height_forward.1} parent=47 // pred_region
          %s9513 = ssub.s32 128, 128
          %9514 = vsyncadd %s9505, %s9513
          %s9515 = smul.addr %s27, 2
          %s9516 = sadd.s32 %s28, %s9515
          %s9517 = smul.addr %s9516, 128
          %s9518 = scalar_lea.hbm %s7, %s9517
          %s9520 = sshll.u32 %s9508, 4
          %s9521 = int_to_ptr.vmem [resolvable:$true] %s9520
          %9523 = dma.vmem_to_hbm [thread:$0]  %s9521, 128, %s9518, %s9505
        $region52: #{coex_height_forward.1} parent=47 // pred_fallthru
          _
      $region48: #{coex_height_forward.1} parent=5 // pred_fallthru
        _
      %p9524 = scmp.le.s32.totalorder 2, %s18
      // Predicated region
      $region53: #{coex_height_forward.1} parent=5 // pred_check
        %p9525 = pneg %p9524
      $region54: #{coex_height_forward.1} parent=5 // pred_check_branch
        %9527 = sbr.rel (%p9525) target = $region56
      $region55: #{coex_height_forward.1} parent=5 // pred_region
        %s9528 = ssub.s32 %s18, 2
        // Predicated region
        $region57: #{coex_height_forward.1} parent=55 // pred_check
          %p9529 = pneg %p213
        $region58: #{coex_height_forward.1} parent=55 // pred_check_branch
          %9531 = sbr.rel (%p9529) target = $region60
        $region59: #{coex_height_forward.1} parent=55 // pred_region
          %s9532 = sand.u32 %s198, 1
          %s9533 = scalar_lea.sflag [#allocation6], %s9532
          %s9534 = sand.u32 %s198, 1
          %s9535 = smul.addr %s9534, 8
          %s9536 = scalar_lea.vmem [#allocation5], %s9535
          %9537 = dma.done %s9533, 128
        $region60: #{coex_height_forward.1} parent=55 // pred_fallthru
          _
      $region56: #{coex_height_forward.1} parent=5 // pred_fallthru
        _
    $region6: #{coex_height_forward.1} parent=1 // loop_footer
      %s22 = sadd.s32 1, %s18
    $region7: #{coex_height_forward.1} parent=1 // loop_footer_branch
      %17 = sbr.rel target = $region3
    $region8: #{coex_height_forward.1} parent=1 // loop_exit
      _
    %9538 = vsyncpa [#allocation6], 1
    %s9539 = scalar_lea.sflag [#allocation6], 1
    %9540 = vsyncpa %s9539, 1

</llo_original>
